<compile_context>
chip_gen: v5e
topology: v5e:2x2
jax: 0.10.0
libtpu: 0.0.40
codegen_flags: <defaults>
</compile_context>

<pallas_src>
import functools
import math

import jax
import jax.numpy as jnp
from jax import lax
from jax.experimental import pallas as pl
from jax.experimental.pallas import tpu as pltpu

_EPS = 1e-5


# ------------------------- hardware-aware configuration -------------------------

def _default_vmem_limit():
    """~3/4 of physical VMEM, capped at 100 MiB (=> ~96 MiB v5e/v6e, ~48 MiB v7x)."""
    try:
        cap = int(pltpu.get_tpu_info().vmem_capacity_bytes)
    except Exception:
        cap = 64 * 1024 * 1024
    return int(max(32 * 1024 * 1024, min(cap * 3 // 4, 100 * 1024 * 1024)))


_VMEM_LIMIT = _default_vmem_limit()

_ROLL_MODE = None


def _roll_mode():
    """Resolve pltpu.roll once with a tiny probe kernel.

    Returns +1 if pltpu.roll follows jnp.roll semantics (out[i] = x[(i - shift) % n]),
    -1 if it rotates the other way, 0 if unusable (fall back to slice+concat shifts).
    """
    global _ROLL_MODE
    if _ROLL_MODE is None:
        try:
            def probe(x_ref, o_ref):
                o_ref[...] = pltpu.roll(x_ref[...], 239, 0)

            x = jnp.arange(256, dtype=jnp.float32)[:, None] * jnp.ones((1, 8), jnp.float32)
            out = pl.pallas_call(
                probe, out_shape=jax.ShapeDtypeStruct((256, 8), jnp.float32))(x)
            v = float(out[0, 0])
            _ROLL_MODE = 1 if v == 17.0 else (-1 if v == 239.0 else 0)
        except Exception:
            _ROLL_MODE = 0
    return _ROLL_MODE


# ------------------------------ in-kernel helpers ------------------------------

def _row_shift(x, s, size, mode):
    """result[r] = x[(r + s) % size]; wrapped (out-of-image) rows are zeroed by the caller."""
    if s == 0:
        return x
    if mode == 1:                                   # pltpu.roll == jnp.roll
        return pltpu.roll(x, (-s) % size, 0)
    if mode == -1:                                  # opposite rotation direction
        return pltpu.roll(x, s % size, 0)
    sp = s % size                                   # fallback: slice + concat
    return jnp.concatenate([x[sp:, :], x[:sp, :]], axis=0)


# ----------------------------------- kernels -----------------------------------

def _conv1_kernel(x_ref, w1_ref, y1_ref, stats1_ref):
    """Pass 1: y1 = conv1(x) (bf16 matmul, f32 accum); write bf16 y1 + per-sample bn1 stats."""
    y1 = jnp.dot(x_ref[...], w1_ref[...], preferred_element_type=jnp.float32)   # (HW, C1)
    y1_ref[...] = y1.astype(y1_ref.dtype)
    stats1_ref[...] = jnp.concatenate(
        [jnp.sum(y1, axis=0, keepdims=True),
         jnp.sum(y1 * y1, axis=0, keepdims=True)], axis=0)


def _branches_kernel(y1_ref, sc1_ref, sh1_ref, masks_ref, convw_ref, gw12_ref, gwout_ref,
                     cat_ref, statsb_ref,
                     *, H, W, width, nums, scale, roll_mode):
    """Pass 2: bn1 apply + Res2Net 3x3 branches (one packed 9-tap matmul each) + gates.

    Writes one lane-dense bf16 slab (pre-BN branch outputs + pass-through chunk) and
    per-sample per-branch BN statistics.
    """
    HW = H * W
    out1 = jnp.maximum(y1_ref[...].astype(jnp.float32) * sc1_ref[...] + sh1_ref[...], 0.0)
    spx = [out1[:, i * width:(i + 1) * width] for i in range(scale)]

    shifts = [oh * W + ow for oh in (-1, 0, 1) for ow in (-1, 0, 1)]
    m = masks_ref[...]                                                # (HW, 9), host-precomputed

    pre_list, sum_list, sq_list = [], [], []
    gate_sp = None
    for i in range(nums):
        sp_in = spx[0] if i == 0 else gate_sp + spx[i]

        # 3x3 conv (stride 1, pad 1): pack the 9 shifted+masked taps along lanes and do a
        # single (HW, 9*width) @ (9*width, width) bf16 matmul with f32 accumulation.
        taps = []
        for t, s in enumerate(shifts):
            if s == 0:
                taps.append(sp_in)                                    # center tap: mask == 1
            else:
                taps.append(_row_shift(sp_in, s, HW, roll_mode) * m[:, t:t + 1])
        tap_mat = jnp.concatenate(taps, axis=1).astype(jnp.bfloat16)  # (HW, 9*width)
        sp_pre = jnp.dot(tap_mat, convw_ref[i], preferred_element_type=jnp.float32)

        pre_list.append(sp_pre)
        sum_list.append(jnp.sum(sp_pre, axis=0, keepdims=True))
        sq_list.append(jnp.sum(sp_pre * sp_pre, axis=0, keepdims=True))

        if i < nums - 1:
            # NonlinearConcatGate(sp_pre, spx[i+1]) — consumes the *pre-BN* conv output.
            gap_prev = jnp.mean(sp_pre, axis=0, keepdims=True)        # (1, width)
            gap_next = jnp.mean(spx[i + 1], axis=0, keepdims=True)    # (1, width)
            gcat = jnp.concatenate([gap_prev, gap_next], axis=1)      # (1, 2*width)
            o = jnp.maximum(jnp.dot(gcat, gw12_ref[i],
                                    preferred_element_type=jnp.float32), 0.0)
            gate = jax.nn.sigmoid(jnp.dot(o, gwout_ref[i],
                                          preferred_element_type=jnp.float32))
            gate_sp = sp_pre * gate

    if scale != 1:
        pre_list.append(spx[nums])                    # pass-through chunk (already bn1+relu'd)
    cat_ref[...] = jnp.concatenate(pre_list, axis=1).astype(cat_ref.dtype)     # (HW, C1)
    statsb_ref[...] = jnp.concatenate(
        [jnp.concatenate(sum_list, axis=1),
         jnp.concatenate(sq_list, axis=1)], axis=0)                   # (2, nums*width)


def _conv3_kernel(cat_ref, scb_ref, shb_ref, w3_ref, pre3_ref, stats3_ref):
    """Pass 3: per-branch bn+relu (affine precomputed on host) + conv3 (1x1) + bn3 stats."""
    out_cat = jnp.maximum(cat_ref[...].astype(jnp.float32) * scb_ref[...] + shb_ref[...], 0.0)
    y3 = jnp.dot(out_cat.astype(jnp.bfloat16), w3_ref[...],
                 preferred_element_type=jnp.float32)                  # (HW, Cout)
    pre3_ref[...] = y3.astype(pre3_ref.dtype)
    stats3_ref[...] = jnp.concatenate(
        [jnp.sum(y3, axis=0, keepdims=True),
         jnp.sum(y3 * y3, axis=0, keepdims=True)], axis=0)


def _bn3_se_res_kernel(pre3_ref, sc3_ref, sh3_ref, sew1_ref, sew2_ref, res_ref, out_ref):
    """Pass 4: bn3 apply + SE + residual add + relu."""
    ybn = pre3_ref[...].astype(jnp.float32) * sc3_ref[...] + sh3_ref[...]       # (HW, Cout)
    gap = jnp.mean(ybn, axis=0, keepdims=True)                                  # (1, Cout)
    h = jnp.maximum(jnp.dot(gap, sew1_ref[...], preferred_element_type=jnp.float32), 0.0)
    se = jax.nn.sigmoid(jnp.dot(h, sew2_ref[...], preferred_element_type=jnp.float32))
    out_ref[...] = jnp.maximum(ybn * se + res_ref[...], 0.0)


# -------------------------------- host wrappers ---------------------------------

def _per_sample_spec(d0, d1):
    return pl.BlockSpec((None, d0, d1), lambda n: (n, 0, 0))


def _full_spec(shape):
    return pl.BlockSpec(shape, lambda n: (0,) * len(shape))


def _make_tap_masks(H, W):
    """(HW, 9) f32 validity masks for the 9 taps of a 3x3 / pad-1 conv (host side)."""
    r = jnp.arange(H * W, dtype=jnp.int32)
    hh, ww = r // W, r % W
    cols = []
    for oh in (-1, 0, 1):
        for ow in (-1, 0, 1):
            valid = ((hh + oh >= 0) & (hh + oh < H) & (ww + ow >= 0) & (ww + ow < W))
            cols.append(valid.astype(jnp.float32))
    return jnp.stack(cols, axis=1)


def _bn_affine(stats_per_sample, gamma, beta, count):
    """(N, 2, C) per-sample [sum; sum-of-squares] -> per-channel scale/shift (1, C)."""
    s = jnp.sum(stats_per_sample, axis=0)                             # (2, C)
    mean = s[0] / count
    var = jnp.maximum(s[1] / count - mean * mean, 0.0)                # biased (train-mode BN)
    sc = gamma.reshape(-1) * lax.rsqrt(var + _EPS)
    sh = beta.reshape(-1) - mean * sc
    return sc.reshape(1, -1), sh.reshape(1, -1)


def forward(x_nchw, params, cfg):
    N, Cin, H, W = x_nchw.shape
    width, scale, nums = cfg['width'], cfg['scale'], cfg['nums']
    HW = H * W
    C1 = width * scale
    Cout = params['w3'].shape[1]
    assert Cin == Cout, "downsample=None requires inplanes == planes*expansion"
    count = float(N * HW)
    roll_mode = _roll_mode()

    x3 = jnp.transpose(x_nchw, (0, 2, 3, 1)).reshape(N, HW, Cin).astype(jnp.float32)
    x3_b = x3.astype(jnp.bfloat16)                    # bf16 copy for pass 1 (f32 kept for residual)
    w1_b = params['w1'].astype(jnp.bfloat16)
    w3_b = params['w3'].astype(jnp.bfloat16)
    convw_b = params['conv_w_packed'].astype(jnp.bfloat16)            # (nums, 9*width, width)
    masks = _make_tap_masks(H, W)
    n_g, _, g2 = params['gate_w12'].shape
    se_h = params['se_w1'].shape[1]

    cp = pltpu.CompilerParams(dimension_semantics=("parallel",),
                              vmem_limit_bytes=_VMEM_LIMIT)

    # ---- pass 1: conv1 (+ per-sample bn1 stats, bf16 writeback of y1) ------------
    y1_b, stats1_per = pl.pallas_call(
        _conv1_kernel,
        grid=(N,),
        in_specs=[_per_sample_spec(HW, Cin), _full_spec((Cin, C1))],
        out_specs=(_per_sample_spec(HW, C1), _per_sample_spec(2, C1)),
        out_shape=(jax.ShapeDtypeStruct((N, HW, C1), jnp.bfloat16),
                   jax.ShapeDtypeStruct((N, 2, C1), jnp.float32)),
        compiler_params=cp,
    )(x3_b, w1_b)
    sc1, sh1 = _bn_affine(stats1_per, params['bn1_g'], params['bn1_b'], count)

    # ---- pass 2: bn1 apply + branches (packed 9-tap matmuls) + gates -------------
    cat_pre, statsb_per = pl.pallas_call(
        functools.partial(_branches_kernel, H=H, W=W, width=width, nums=nums,
                          scale=scale, roll_mode=roll_mode),
        grid=(N,),
        in_specs=[_per_sample_spec(HW, C1),
                  _full_spec((1, C1)), _full_spec((1, C1)),
                  _full_spec((HW, 9)),
                  _full_spec((nums, 9 * width, width)),
                  _full_spec((n_g, 2 * width, g2)),
                  _full_spec((n_g, g2, width))],
        out_specs=(_per_sample_spec(HW, C1), _per_sample_spec(2, nums * width)),
        out_shape=(jax.ShapeDtypeStruct((N, HW, C1), jnp.bfloat16),
                   jax.ShapeDtypeStruct((N, 2, nums * width), jnp.float32)),
        compiler_params=cp,
    )(y1_b, sc1, sh1, masks, convw_b, params['gate_w12'], params['gate_wout'])

    scb, shb = _bn_affine(statsb_per, params['bnb_g'], params['bnb_b'], count)
    if scale != 1:
        # identity affine on the pass-through chunk (relu there is a no-op, values >= 0)
        scb = jnp.concatenate([scb, jnp.ones((1, width), jnp.float32)], axis=1)
        shb = jnp.concatenate([shb, jnp.zeros((1, width), jnp.float32)], axis=1)

    # ---- pass 3: per-branch bn + relu + conv3 (+ per-sample bn3 stats) -----------
    pre3, stats3_per = pl.pallas_call(
        _conv3_kernel,
        grid=(N,),
        in_specs=[_per_sample_spec(HW, C1),
                  _full_spec((1, C1)), _full_spec((1, C1)),
                  _full_spec((C1, Cout))],
        out_specs=(_per_sample_spec(HW, Cout), _per_sample_spec(2, Cout)),
        out_shape=(jax.ShapeDtypeStruct((N, HW, Cout), jnp.bfloat16),
                   jax.ShapeDtypeStruct((N, 2, Cout), jnp.float32)),
        compiler_params=cp,
    )(cat_pre, scb, shb, w3_b)
    sc3, sh3 = _bn_affine(stats3_per, params['bn3_g'], params['bn3_b'], count)

    # ---- pass 4: bn3 apply + SE + residual + relu --------------------------------
    out = pl.pallas_call(
        _bn3_se_res_kernel,
        grid=(N,),
        in_specs=[_per_sample_spec(HW, Cout),
                  _full_spec((1, Cout)), _full_spec((1, Cout)),
                  _full_spec((Cout, se_h)), _full_spec((se_h, Cout)),
                  _per_sample_spec(HW, Cin)],
        out_specs=_per_sample_spec(HW, Cout),
        out_shape=jax.ShapeDtypeStruct((N, HW, Cout), jnp.float32),
        compiler_params=cp,
    )(pre3, sc3, sh3, params['se_w1'], params['se_w2'], x3)

    return jnp.transpose(out.reshape(N, H, W, Cout), (0, 3, 1, 2))


# ------------------------------ parameter creation ------------------------------

def init_params(key, inplanes, planes, baseWidth=26, scale=4, gate_reduction=4):
    expansion = 2
    width = int(math.floor(planes * (baseWidth / 64.0)))
    nums = 1 if scale == 1 else scale - 1
    g_hidden = int(width / gate_reduction)
    se_hidden = (planes * expansion) // 16
    assert width >= 1 and g_hidden >= 1 and se_hidden >= 1

    keys = iter(jax.random.split(key, 64))

    def rnd(shape, s=0.1):
        return jax.random.normal(next(keys), shape, jnp.float32) * s

    def bn_pair(c):
        g = 1.0 + 0.05 * jax.random.normal(next(keys), (1, c), jnp.float32)
        b = 0.05 * jax.random.normal(next(keys), (1, c), jnp.float32)
        return g, b

    p = {}
    # conv1: torch weight (C1, Cin, 1, 1) -> matmul form (Cin, C1)
    p['w1'] = rnd((inplanes, width * scale))
    p['bn1_g'], p['bn1_b'] = bn_pair(width * scale)

    # 3x3 branch convs, torch layout (O, I, 3, 3):
    #   packed form (9*width, width): tap t = kh*3+kw occupies rows [t*width, (t+1)*width)
    #   HWIO form kept for the pure-JAX reference.
    packed, hwio, bng, bnb = [], [], [], []
    for _ in range(nums):
        wt = rnd((width, width, 3, 3))
        taps = [wt[:, :, kh, kw].T for kh in range(3) for kw in range(3)]   # each (I, O)
        packed.append(jnp.concatenate(taps, axis=0))
        hwio.append(jnp.transpose(wt, (2, 3, 1, 0)))
        g, b = bn_pair(width)
        bng.append(g)
        bnb.append(b)
    p['conv_w_packed'] = jnp.stack(packed, axis=0)        # (nums, 9*width, width)
    p['convs_w_hwio'] = jnp.stack(hwio, axis=0)           # (nums, 3, 3, width, width)
    p['bnb_g'] = jnp.concatenate(bng, axis=1)             # (1, nums*width)
    p['bnb_b'] = jnp.concatenate(bnb, axis=1)

    # gates: fc1/fc2 fused block-diagonally into (2*width, 2*g); fc_out is (2*g, width)
    f1s, f2s, fos, w12s = [], [], [], []
    for i in range(max(nums - 1, 1)):
        if i < nums - 1:
            f1 = rnd((width, g_hidden))                    # fc1.weight.T
            f2 = rnd((width, g_hidden))                    # fc2.weight.T
            fo = rnd((2 * g_hidden, width))                # fc_out.weight.T
        else:                                              # scale == 1: dummy, never read
            f1 = jnp.zeros((width, g_hidden), jnp.float32)
            f2 = jnp.zeros((width, g_hidden), jnp.float32)
            fo = jnp.zeros((2 * g_hidden, width), jnp.float32)
        w12 = jnp.zeros((2 * width, 2 * g_hidden), jnp.float32)
        w12 = w12.at[:width, :g_hidden].set(f1).at[width:, g_hidden:].set(f2)
        f1s.append(f1); f2s.append(f2); fos.append(fo); w12s.append(w12)
    p['gate_f1'] = jnp.stack(f1s, axis=0)
    p['gate_f2'] = jnp.stack(f2s, axis=0)
    p['gate_w12'] = jnp.stack(w12s, axis=0)                # (nums-1, 2*width, 2*g)
    p['gate_wout'] = jnp.stack(fos, axis=0)                # (nums-1, 2*g, width)

    # conv3: torch (planes*2, width*scale, 1, 1) -> (width*scale, planes*2); bn3; SE
    p['w3'] = rnd((width * scale, planes * expansion))
    p['bn3_g'], p['bn3_b'] = bn_pair(planes * expansion)
    p['se_w1'] = rnd((planes * expansion, se_hidden))      # SE fc[0].weight.T
    p['se_w2'] = rnd((se_hidden, planes * expansion))      # SE fc[2].weight.T

    cfg = dict(width=width, scale=scale, nums=nums, expansion=expansion)
    return p, cfg


# ------------------------- pure-JAX reference (for checking) --------------------

def _reference_forward(x_nchw, params, cfg):
    width, scale, nums = cfg['width'], cfg['scale'], cfg['nums']
    x = jnp.transpose(x_nchw, (0, 2, 3, 1)).astype(jnp.float32)       # NHWC

    def bn(y, gamma, beta):
        mean = jnp.mean(y, axis=(0, 1, 2), keepdims=True)
        var = jnp.mean((y - mean) ** 2, axis=(0, 1, 2), keepdims=True)
        return ((y - mean) * lax.rsqrt(var + _EPS) * gamma.reshape(1, 1, 1, -1)
                + beta.reshape(1, 1, 1, -1))

    out = jnp.einsum('nhwc,cd->nhwd', x, params['w1'])
    out = jax.nn.relu(bn(out, params['bn1_g'], params['bn1_b']))
    spx = [out[..., i * width:(i + 1) * width] for i in range(scale)]

    cat, gate_sp = [], None
    for i in range(nums):
        sp_in = spx[0] if i == 0 else gate_sp + spx[i]
        sp = lax.conv_general_dilated(sp_in, params['convs_w_hwio'][i], (1, 1),
                                      ((1, 1), (1, 1)),
                                      dimension_numbers=('NHWC', 'HWIO', 'NHWC'))
        bn_sp = bn(sp, params['bnb_g'][:, i * width:(i + 1) * width],
                   params['bnb_b'][:, i * width:(i + 1) * width])
        if i < nums - 1:
            gap_prev = jnp.mean(sp, axis=(1, 2))
            gap_next = jnp.mean(spx[i + 1], axis=(1, 2))
            o1 = jax.nn.relu(gap_prev @ params['gate_f1'][i])
            o2 = jax.nn.relu(gap_next @ params['gate_f2'][i])
            gate = jax.nn.sigmoid(jnp.concatenate([o1, o2], axis=1) @ params['gate_wout'][i])
            gate_sp = sp * gate[:, None, None, :]
        cat.append(jax.nn.relu(bn_sp))
    if scale != 1:
        cat.append(spx[nums])
    out = jnp.concatenate(cat, axis=-1)

    out = jnp.einsum('nhwc,cd->nhwd', out, params['w3'])
    out = bn(out, params['bn3_g'], params['bn3_b'])
    gap = jnp.mean(out, axis=(1, 2))
    se = jax.nn.sigmoid(jax.nn.relu(gap @ params['se_w1']) @ params['se_w2'])
    out = jax.nn.relu(out * se[:, None, None, :] + x)
    return jnp.transpose(out, (0, 3, 1, 2))


if __name__ == "__main__":
    N, H, W = 2, 16, 16
    planes = 16
    inplanes = planes * 2          # downsample is None -> residual must match output channels

    key = jax.random.PRNGKey(0)
    kx, kp = jax.random.split(key)
    x = jax.random.normal(kx, (N, inplanes, H, W), jnp.float32)

    params, cfg = init_params(kp, inplanes, planes, baseWidth=26, scale=4, gate_reduction=4)

    _roll_mode()                   # resolve pltpu.roll direction/availability outside jit

    fwd = jax.jit(lambda xx, pp: forward(xx, pp, cfg))
    out = jax.block_until_ready(fwd(x, params))

    assert out.shape == (N, planes * 2, H, W), out.shape
    assert bool(jnp.all(jnp.isfinite(out)))

    ref = _reference_forward(x, params, cfg)
    err = float(jnp.max(jnp.abs(out - ref)))
    assert err < 0.2, f"max |kernel - reference| = {err}"

    print("KERNEL_OK")
</pallas_src>

<mosaic_0001>
module attributes {stable_mosaic.version = 11 : i64} {
  func.func @probe(%arg0: memref<256x8xf32, #tpu.memory_space<vmem>>, %arg1: memref<256x8xf32, #tpu.memory_space<vmem>>) attributes {dimension_semantics = [], scalar_prefetch = 0 : i64, scratch_operands = 0 : i64, tpu.core_type = #tpu.core_type<tc>} {
    %c0 = arith.constant 0 : index
    %c0_0 = arith.constant 0 : index
    %0 = vector.load %arg0[%c0, %c0_0] : memref<256x8xf32, #tpu.memory_space<vmem>>, vector<256x8xf32>
    %c239_i32 = arith.constant 239 : i32
    %1 = tpu.dynamic_rotate %0 by %c239_i32 dim 0 : vector<256x8xf32>, i32 -> vector<256x8xf32>
    %c0_1 = arith.constant 0 : index
    %c0_2 = arith.constant 0 : index
    %2 = vector.load %arg1[%c0_1, %c0_2] : memref<256x8xf32, #tpu.memory_space<vmem>>, vector<256x8xf32>
    tpu.vector_store %arg1[%c0_1, %c0_2], %1 {strides = array<i32>} : memref<256x8xf32, #tpu.memory_space<vmem>>, vector<256x8xf32>,
    return
  }
}

module attributes {stable_mosaic.version = 11 : i64} {
  func.func @_conv1_kernel(%arg0: i32, %arg1: memref<1x256x32xbf16, #tpu.memory_space<vmem>>, %arg2: memref<32x24xbf16, #tpu.memory_space<vmem>>, %arg3: memref<1x256x24xbf16, #tpu.memory_space<vmem>>, %arg4: memref<1x2x24xf32, #tpu.memory_space<vmem>>) attributes {dimension_semantics = [#tpu.dimension_semantics<parallel>], iteration_bounds = array<i64: 2>, scalar_prefetch = 0 : i64, scratch_operands = 0 : i64, tpu.core_type = #tpu.core_type<tc>, window_params = [{transform_indices = @transform_0, window_bounds = array<i64: 1, 256, 32>}, {pipeline_mode = #tpu.pipeline_mode<synchronous>, transform_indices = @transform_1, window_bounds = array<i64: 32, 24>}, {transform_indices = @transform_2, window_bounds = array<i64: 1, 256, 24>}, {transform_indices = @transform_3, window_bounds = array<i64: 1, 2, 24>}]} {
    %c0 = arith.constant 0 : index
    %c0_0 = arith.constant 0 : index
    %c0_1 = arith.constant 0 : index
    %0 = vector.load %arg1[%c0, %c0_0, %c0_1] : memref<1x256x32xbf16, #tpu.memory_space<vmem>>, vector<1x256x32xbf16>
    %1 = vector.shape_cast %0 : vector<1x256x32xbf16> to vector<256x32xbf16>
    %c0_2 = arith.constant 0 : index
    %c0_3 = arith.constant 0 : index
    %2 = vector.load %arg2[%c0_2, %c0_3] : memref<32x24xbf16, #tpu.memory_space<vmem>>, vector<32x24xbf16>
    %cst = arith.constant dense<0.000000e+00> : vector<256x24xf32>
    %3 = tpu.matmul %1, %2, %cst {dimension_numbers = #tpu.dot_dimension_numbers<[1], [0], [0], [1], [0, 0, 1, 1], [], []>} : vector<256x32xbf16>, vector<32x24xbf16>, vector<256x24xf32> -> vector<256x24xf32>
    %4 = arith.truncf %3 : vector<256x24xf32> to vector<256x24xbf16>
    %c0_4 = arith.constant 0 : index
    %c0_5 = arith.constant 0 : index
    %c0_6 = arith.constant 0 : index
    %5 = vector.load %arg3[%c0_4, %c0_5, %c0_6] : memref<1x256x24xbf16, #tpu.memory_space<vmem>>, vector<1x256x24xbf16>
    %6 = vector.shape_cast %5 : vector<1x256x24xbf16> to vector<256x24xbf16>
    %7 = vector.shape_cast %4 : vector<256x24xbf16> to vector<1x256x24xbf16>
    tpu.vector_store %arg3[%c0_4, %c0_5, %c0_6], %7 {strides = array<i32>} : memref<1x256x24xbf16, #tpu.memory_space<vmem>>, vector<1x256x24xbf16>,
    %cst_7 = arith.constant dense<0.000000e+00> : vector<24xf32>
    %8 = vector.multi_reduction <add>, %3, %cst_7 [0] : vector<256x24xf32> to vector<24xf32>
    %9 = vector.shape_cast %8 : vector<24xf32> to vector<1x24xf32>
    %10 = arith.mulf %3, %3 : vector<256x24xf32>
    %cst_8 = arith.constant dense<0.000000e+00> : vector<24xf32>
    %11 = vector.multi_reduction <add>, %10, %cst_8 [0] : vector<256x24xf32> to vector<24xf32>
    %12 = vector.shape_cast %11 : vector<24xf32> to vector<1x24xf32>
    %13 = tpu.concatenate %9, %12 in 0 : vector<1x24xf32>, vector<1x24xf32> -> vector<2x24xf32>
    %c0_9 = arith.constant 0 : index
    %c0_10 = arith.constant 0 : index
    %c0_11 = arith.constant 0 : index
    %14 = vector.load %arg4[%c0_9, %c0_10, %c0_11] : memref<1x2x24xf32, #tpu.memory_space<vmem>>, vector<1x2x24xf32>
    %15 = vector.shape_cast %14 : vector<1x2x24xf32> to vector<2x24xf32>
    %16 = vector.shape_cast %13 : vector<2x24xf32> to vector<1x2x24xf32>
    tpu.vector_store %arg4[%c0_9, %c0_10, %c0_11], %16 {strides = array<i32>} : memref<1x2x24xf32, #tpu.memory_space<vmem>>, vector<1x2x24xf32>,
    return
  }
  func.func @transform_0(%arg0: i32) -> (i32, i32, i32) {
    %c0_i32 = arith.constant 0 : i32
    %c0_i32_0 = arith.constant 0 : i32
    %c0_i32_1 = arith.constant 0 : i32
    return %arg0, %c0_i32, %c0_i32_0 : i32, i32, i32
  }
  func.func @transform_1(%arg0: i32) -> (i32, i32) {
    %c0_i32 = arith.constant 0 : i32
    %c0_i32_0 = arith.constant 0 : i32
    %c0_i32_1 = arith.constant 0 : i32
    return %c0_i32, %c0_i32_0 : i32, i32
  }
  func.func @transform_2(%arg0: i32) -> (i32, i32, i32) {
    %c0_i32 = arith.constant 0 : i32
    %c0_i32_0 = arith.constant 0 : i32
    %c0_i32_1 = arith.constant 0 : i32
    return %arg0, %c0_i32, %c0_i32_0 : i32, i32, i32
  }
  func.func @transform_3(%arg0: i32) -> (i32, i32, i32) {
    %c0_i32 = arith.constant 0 : i32
    %c0_i32_0 = arith.constant 0 : i32
    %c0_i32_1 = arith.constant 0 : i32
    return %arg0, %c0_i32, %c0_i32_0 : i32, i32, i32
  }
}

module attributes {stable_mosaic.version = 11 : i64} {
  func.func @_branches_kernel(%arg0: i32, %arg1: memref<1x256x24xbf16, #tpu.memory_space<vmem>>, %arg2: memref<1x24xf32, #tpu.memory_space<vmem>>, %arg3: memref<1x24xf32, #tpu.memory_space<vmem>>, %arg4: memref<256x9xf32, #tpu.memory_space<vmem>>, %arg5: memref<3x54x6xbf16, #tpu.memory_space<vmem>>, %arg6: memref<2x12x2xf32, #tpu.memory_space<vmem>>, %arg7: memref<2x2x6xf32, #tpu.memory_space<vmem>>, %arg8: memref<1x256x24xbf16, #tpu.memory_space<vmem>>, %arg9: memref<1x2x18xf32, #tpu.memory_space<vmem>>) attributes {dimension_semantics = [#tpu.dimension_semantics<parallel>], iteration_bounds = array<i64: 2>, scalar_prefetch = 0 : i64, scratch_operands = 0 : i64, tpu.core_type = #tpu.core_type<tc>, window_params = [{transform_indices = @transform_0, window_bounds = array<i64: 1, 256, 24>}, {pipeline_mode = #tpu.pipeline_mode<synchronous>, transform_indices = @transform_1, window_bounds = array<i64: 1, 24>}, {pipeline_mode = #tpu.pipeline_mode<synchronous>, transform_indices = @transform_2, window_bounds = array<i64: 1, 24>}, {pipeline_mode = #tpu.pipeline_mode<synchronous>, transform_indices = @transform_3, window_bounds = array<i64: 256, 9>}, {pipeline_mode = #tpu.pipeline_mode<synchronous>, transform_indices = @transform_4, window_bounds = array<i64: 3, 54, 6>}, {pipeline_mode = #tpu.pipeline_mode<synchronous>, transform_indices = @transform_5, window_bounds = array<i64: 2, 12, 2>}, {pipeline_mode = #tpu.pipeline_mode<synchronous>, transform_indices = @transform_6, window_bounds = array<i64: 2, 2, 6>}, {transform_indices = @transform_7, window_bounds = array<i64: 1, 256, 24>}, {transform_indices = @transform_8, window_bounds = array<i64: 1, 2, 18>}]} {
    %c0 = arith.constant 0 : index
    %c0_0 = arith.constant 0 : index
    %c0_1 = arith.constant 0 : index
    %0 = vector.load %arg1[%c0, %c0_0, %c0_1] : memref<1x256x24xbf16, #tpu.memory_space<vmem>>, vector<1x256x24xbf16>
    %1 = vector.shape_cast %0 : vector<1x256x24xbf16> to vector<256x24xbf16>
    %2 = arith.extf %1 : vector<256x24xbf16> to vector<256x24xf32>
    %c0_2 = arith.constant 0 : index
    %c0_3 = arith.constant 0 : index
    %3 = vector.load %arg2[%c0_2, %c0_3] : memref<1x24xf32, #tpu.memory_space<vmem>>, vector<1x24xf32>
    %4 = vector.broadcast %3 : vector<1x24xf32> to vector<256x24xf32>
    %5 = arith.mulf %2, %4 : vector<256x24xf32>
    %c0_4 = arith.constant 0 : index
    %c0_5 = arith.constant 0 : index
    %6 = vector.load %arg3[%c0_4, %c0_5] : memref<1x24xf32, #tpu.memory_space<vmem>>, vector<1x24xf32>
    %7 = vector.broadcast %6 : vector<1x24xf32> to vector<256x24xf32>
    %8 = arith.addf %5, %7 : vector<256x24xf32>
    %cst = arith.constant 0.000000e+00 : f32
    %9 = vector.broadcast %cst : f32 to vector<256x24xf32>
    %10 = arith.maximumf %8, %9 : vector<256x24xf32>
    %11 = vector.extract_strided_slice %10 {offsets = [0, 0], sizes = [256, 6], strides = [1, 1]} : vector<256x24xf32> to vector<256x6xf32>
    %12 = vector.extract_strided_slice %10 {offsets = [0, 6], sizes = [256, 6], strides = [1, 1]} : vector<256x24xf32> to vector<256x6xf32>
    %13 = vector.extract_strided_slice %10 {offsets = [0, 12], sizes = [256, 6], strides = [1, 1]} : vector<256x24xf32> to vector<256x6xf32>
    %14 = vector.extract_strided_slice %10 {offsets = [0, 18], sizes = [256, 6], strides = [1, 1]} : vector<256x24xf32> to vector<256x6xf32>
    %c0_6 = arith.constant 0 : index
    %c0_7 = arith.constant 0 : index
    %15 = vector.load %arg4[%c0_6, %c0_7] : memref<256x9xf32, #tpu.memory_space<vmem>>, vector<256x9xf32>
    %16 = vector.extract_strided_slice %11 {offsets = [239, 0], sizes = [17, 6], strides = [1, 1]} : vector<256x6xf32> to vector<17x6xf32>
    %17 = vector.extract_strided_slice %11 {offsets = [0, 0], sizes = [239, 6], strides = [1, 1]} : vector<256x6xf32> to vector<239x6xf32>
    %18 = tpu.concatenate %16, %17 in 0 : vector<17x6xf32>, vector<239x6xf32> -> vector<256x6xf32>
    %19 = vector.extract_strided_slice %15 {offsets = [0, 0], sizes = [256, 1], strides = [1, 1]} : vector<256x9xf32> to vector<256x1xf32>
    %20 = vector.broadcast %19 : vector<256x1xf32> to vector<256x6xf32>
    %21 = arith.mulf %18, %20 : vector<256x6xf32>
    %22 = vector.extract_strided_slice %11 {offsets = [240, 0], sizes = [16, 6], strides = [1, 1]} : vector<256x6xf32> to vector<16x6xf32>
    %23 = vector.extract_strided_slice %11 {offsets = [0, 0], sizes = [240, 6], strides = [1, 1]} : vector<256x6xf32> to vector<240x6xf32>
    %24 = tpu.concatenate %22, %23 in 0 : vector<16x6xf32>, vector<240x6xf32> -> vector<256x6xf32>
    %25 = vector.extract_strided_slice %15 {offsets = [0, 1], sizes = [256, 1], strides = [1, 1]} : vector<256x9xf32> to vector<256x1xf32>
    %26 = vector.broadcast %25 : vector<256x1xf32> to vector<256x6xf32>
    %27 = arith.mulf %24, %26 : vector<256x6xf32>
    %28 = vector.extract_strided_slice %11 {offsets = [241, 0], sizes = [15, 6], strides = [1, 1]} : vector<256x6xf32> to vector<15x6xf32>
    %29 = vector.extract_strided_slice %11 {offsets = [0, 0], sizes = [241, 6], strides = [1, 1]} : vector<256x6xf32> to vector<241x6xf32>
    %30 = tpu.concatenate %28, %29 in 0 : vector<15x6xf32>, vector<241x6xf32> -> vector<256x6xf32>
    %31 = vector.extract_strided_slice %15 {offsets = [0, 2], sizes = [256, 1], strides = [1, 1]} : vector<256x9xf32> to vector<256x1xf32>
    %32 = vector.broadcast %31 : vector<256x1xf32> to vector<256x6xf32>
    %33 = arith.mulf %30, %32 : vector<256x6xf32>
    %34 = vector.extract_strided_slice %11 {offsets = [255, 0], sizes = [1, 6], strides = [1, 1]} : vector<256x6xf32> to vector<1x6xf32>
    %35 = vector.extract_strided_slice %11 {offsets = [0, 0], sizes = [255, 6], strides = [1, 1]} : vector<256x6xf32> to vector<255x6xf32>
    %36 = tpu.concatenate %34, %35 in 0 : vector<1x6xf32>, vector<255x6xf32> -> vector<256x6xf32>
    %37 = vector.extract_strided_slice %15 {offsets = [0, 3], sizes = [256, 1], strides = [1, 1]} : vector<256x9xf32> to vector<256x1xf32>
    %38 = vector.broadcast %37 : vector<256x1xf32> to vector<256x6xf32>
    %39 = arith.mulf %36, %38 : vector<256x6xf32>
    %40 = vector.extract_strided_slice %11 {offsets = [1, 0], sizes = [255, 6], strides = [1, 1]} : vector<256x6xf32> to vector<255x6xf32>
    %41 = vector.extract_strided_slice %11 {offsets = [0, 0], sizes = [1, 6], strides = [1, 1]} : vector<256x6xf32> to vector<1x6xf32>
    %42 = tpu.concatenate %40, %41 in 0 : vector<255x6xf32>, vector<1x6xf32> -> vector<256x6xf32>
    %43 = vector.extract_strided_slice %15 {offsets = [0, 5], sizes = [256, 1], strides = [1, 1]} : vector<256x9xf32> to vector<256x1xf32>
    %44 = vector.broadcast %43 : vector<256x1xf32> to vector<256x6xf32>
    %45 = arith.mulf %42, %44 : vector<256x6xf32>
    %46 = vector.extract_strided_slice %11 {offsets = [15, 0], sizes = [241, 6], strides = [1, 1]} : vector<256x6xf32> to vector<241x6xf32>
    %47 = vector.extract_strided_slice %11 {offsets = [0, 0], sizes = [15, 6], strides = [1, 1]} : vector<256x6xf32> to vector<15x6xf32>
    %48 = tpu.concatenate %46, %47 in 0 : vector<241x6xf32>, vector<15x6xf32> -> vector<256x6xf32>
    %49 = vector.extract_strided_slice %15 {offsets = [0, 6], sizes = [256, 1], strides = [1, 1]} : vector<256x9xf32> to vector<256x1xf32>
    %50 = vector.broadcast %49 : vector<256x1xf32> to vector<256x6xf32>
    %51 = arith.mulf %48, %50 : vector<256x6xf32>
    %52 = vector.extract_strided_slice %11 {offsets = [16, 0], sizes = [240, 6], strides = [1, 1]} : vector<256x6xf32> to vector<240x6xf32>
    %53 = vector.extract_strided_slice %11 {offsets = [0, 0], sizes = [16, 6], strides = [1, 1]} : vector<256x6xf32> to vector<16x6xf32>
    %54 = tpu.concatenate %52, %53 in 0 : vector<240x6xf32>, vector<16x6xf32> -> vector<256x6xf32>
    %55 = vector.extract_strided_slice %15 {offsets = [0, 7], sizes = [256, 1], strides = [1, 1]} : vector<256x9xf32> to vector<256x1xf32>
    %56 = vector.broadcast %55 : vector<256x1xf32> to vector<256x6xf32>
    %57 = arith.mulf %54, %56 : vector<256x6xf32>
    %58 = vector.extract_strided_slice %11 {offsets = [17, 0], sizes = [239, 6], strides = [1, 1]} : vector<256x6xf32> to vector<239x6xf32>
    %59 = vector.extract_strided_slice %11 {offsets = [0, 0], sizes = [17, 6], strides = [1, 1]} : vector<256x6xf32> to vector<17x6xf32>
    %60 = tpu.concatenate %58, %59 in 0 : vector<239x6xf32>, vector<17x6xf32> -> vector<256x6xf32>
    %61 = vector.extract_strided_slice %15 {offsets = [0, 8], sizes = [256, 1], strides = [1, 1]} : vector<256x9xf32> to vector<256x1xf32>
    %62 = vector.broadcast %61 : vector<256x1xf32> to vector<256x6xf32>
    %63 = arith.mulf %60, %62 : vector<256x6xf32>
    %64 = tpu.concatenate %21, %27, %33, %39, %11, %45, %51, %57, %63 in 1 : vector<256x6xf32>, vector<256x6xf32>, vector<256x6xf32>, vector<256x6xf32>, vector<256x6xf32>, vector<256x6xf32>, vector<256x6xf32>, vector<256x6xf32>, vector<256x6xf32> -> vector<256x54xf32>
    %65 = arith.truncf %64 : vector<256x54xf32> to vector<256x54xbf16>
    %c0_8 = arith.constant 0 : index
    %c0_9 = arith.constant 0 : index
    %c0_10 = arith.constant 0 : index
    %66 = vector.load %arg5[%c0_8, %c0_9, %c0_10] : memref<3x54x6xbf16, #tpu.memory_space<vmem>>, vector<1x54x6xbf16>
    %67 = vector.shape_cast %66 : vector<1x54x6xbf16> to vector<54x6xbf16>
    %cst_11 = arith.constant dense<0.000000e+00> : vector<256x6xf32>
    %68 = tpu.matmul %65, %67, %cst_11 {dimension_numbers = #tpu.dot_dimension_numbers<[1], [0], [0], [1], [0, 0, 1, 1], [], []>} : vector<256x54xbf16>, vector<54x6xbf16>, vector<256x6xf32> -> vector<256x6xf32>
    %cst_12 = arith.constant dense<0.000000e+00> : vector<6xf32>
    %69 = vector.multi_reduction <add>, %68, %cst_12 [0] : vector<256x6xf32> to vector<6xf32>
    %70 = vector.shape_cast %69 : vector<6xf32> to vector<1x6xf32>
    %71 = arith.mulf %68, %68 : vector<256x6xf32>
    %cst_13 = arith.constant dense<0.000000e+00> : vector<6xf32>
    %72 = vector.multi_reduction <add>, %71, %cst_13 [0] : vector<256x6xf32> to vector<6xf32>
    %73 = vector.shape_cast %72 : vector<6xf32> to vector<1x6xf32>
    %cst_14 = arith.constant dense<0.000000e+00> : vector<6xf32>
    %74 = vector.multi_reduction <add>, %68, %cst_14 [0] : vector<256x6xf32> to vector<6xf32>
    %75 = vector.shape_cast %74 : vector<6xf32> to vector<1x6xf32>
    %cst_15 = arith.constant 2.560000e+02 : f32
    %76 = vector.broadcast %cst_15 : f32 to vector<1x6xf32>
    %77 = arith.divf %75, %76 : vector<1x6xf32>
    %cst_16 = arith.constant dense<0.000000e+00> : vector<6xf32>
    %78 = vector.multi_reduction <add>, %12, %cst_16 [0] : vector<256x6xf32> to vector<6xf32>
    %79 = vector.shape_cast %78 : vector<6xf32> to vector<1x6xf32>
    %cst_17 = arith.constant 2.560000e+02 : f32
    %80 = vector.broadcast %cst_17 : f32 to vector<1x6xf32>
    %81 = arith.divf %79, %80 : vector<1x6xf32>
    %82 = tpu.concatenate %77, %81 in 1 : vector<1x6xf32>, vector<1x6xf32> -> vector<1x12xf32>
    %c0_18 = arith.constant 0 : index
    %c0_19 = arith.constant 0 : index
    %c0_20 = arith.constant 0 : index
    %83 = vector.load %arg6[%c0_18, %c0_19, %c0_20] : memref<2x12x2xf32, #tpu.memory_space<vmem>>, vector<1x12x2xf32>
    %84 = vector.shape_cast %83 : vector<1x12x2xf32> to vector<12x2xf32>
    %cst_21 = arith.constant dense<0.000000e+00> : vector<1x2xf32>
    %85 = tpu.matmul %82, %84, %cst_21 {dimension_numbers = #tpu.dot_dimension_numbers<[1], [0], [0], [1], [0, 0, 1, 1], [], []>} : vector<1x12xf32>, vector<12x2xf32>, vector<1x2xf32> -> vector<1x2xf32>
    %cst_22 = arith.constant 0.000000e+00 : f32
    %86 = vector.broadcast %cst_22 : f32 to vector<1x2xf32>
    %87 = arith.maximumf %85, %86 : vector<1x2xf32>
    %c0_23 = arith.constant 0 : index
    %c0_24 = arith.constant 0 : index
    %c0_25 = arith.constant 0 : index
    %88 = vector.load %arg7[%c0_23, %c0_24, %c0_25] : memref<2x2x6xf32, #tpu.memory_space<vmem>>, vector<1x2x6xf32>
    %89 = vector.shape_cast %88 : vector<1x2x6xf32> to vector<2x6xf32>
    %cst_26 = arith.constant dense<0.000000e+00> : vector<1x6xf32>
    %90 = tpu.matmul %87, %89, %cst_26 {dimension_numbers = #tpu.dot_dimension_numbers<[1], [0], [0], [1], [0, 0, 1, 1], [], []>} : vector<1x2xf32>, vector<2x6xf32>, vector<1x6xf32> -> vector<1x6xf32>
    %91 = arith.negf %90 : vector<1x6xf32>
    %92 = math.exp %91 : vector<1x6xf32>
    %cst_27 = arith.constant 1.000000e+00 : f32
    %93 = vector.broadcast %cst_27 : f32 to vector<1x6xf32>
    %94 = arith.addf %93, %92 : vector<1x6xf32>
    %95 = arith.divf %93, %94 : vector<1x6xf32>
    %96 = vector.broadcast %95 : vector<1x6xf32> to vector<256x6xf32>
    %97 = arith.mulf %68, %96 : vector<256x6xf32>
    %98 = arith.addf %97, %12 : vector<256x6xf32>
    %99 = vector.extract_strided_slice %98 {offsets = [239, 0], sizes = [17, 6], strides = [1, 1]} : vector<256x6xf32> to vector<17x6xf32>
    %100 = vector.extract_strided_slice %98 {offsets = [0, 0], sizes = [239, 6], strides = [1, 1]} : vector<256x6xf32> to vector<239x6xf32>
    %101 = tpu.concatenate %99, %100 in 0 : vector<17x6xf32>, vector<239x6xf32> -> vector<256x6xf32>
    %102 = vector.extract_strided_slice %15 {offsets = [0, 0], sizes = [256, 1], strides = [1, 1]} : vector<256x9xf32> to vector<256x1xf32>
    %103 = vector.broadcast %102 : vector<256x1xf32> to vector<256x6xf32>
    %104 = arith.mulf %101, %103 : vector<256x6xf32>
    %105 = vector.extract_strided_slice %98 {offsets = [240, 0], sizes = [16, 6], strides = [1, 1]} : vector<256x6xf32> to vector<16x6xf32>
    %106 = vector.extract_strided_slice %98 {offsets = [0, 0], sizes = [240, 6], strides = [1, 1]} : vector<256x6xf32> to vector<240x6xf32>
    %107 = tpu.concatenate %105, %106 in 0 : vector<16x6xf32>, vector<240x6xf32> -> vector<256x6xf32>
    %108 = vector.extract_strided_slice %15 {offsets = [0, 1], sizes = [256, 1], strides = [1, 1]} : vector<256x9xf32> to vector<256x1xf32>
    %109 = vector.broadcast %108 : vector<256x1xf32> to vector<256x6xf32>
    %110 = arith.mulf %107, %109 : vector<256x6xf32>
    %111 = vector.extract_strided_slice %98 {offsets = [241, 0], sizes = [15, 6], strides = [1, 1]} : vector<256x6xf32> to vector<15x6xf32>
    %112 = vector.extract_strided_slice %98 {offsets = [0, 0], sizes = [241, 6], strides = [1, 1]} : vector<256x6xf32> to vector<241x6xf32>
    %113 = tpu.concatenate %111, %112 in 0 : vector<15x6xf32>, vector<241x6xf32> -> vector<256x6xf32>
    %114 = vector.extract_strided_slice %15 {offsets = [0, 2], sizes = [256, 1], strides = [1, 1]} : vector<256x9xf32> to vector<256x1xf32>
    %115 = vector.broadcast %114 : vector<256x1xf32> to vector<256x6xf32>
    %116 = arith.mulf %113, %115 : vector<256x6xf32>
    %117 = vector.extract_strided_slice %98 {offsets = [255, 0], sizes = [1, 6], strides = [1, 1]} : vector<256x6xf32> to vector<1x6xf32>
    %118 = vector.extract_strided_slice %98 {offsets = [0, 0], sizes = [255, 6], strides = [1, 1]} : vector<256x6xf32> to vector<255x6xf32>
    %119 = tpu.concatenate %117, %118 in 0 : vector<1x6xf32>, vector<255x6xf32> -> vector<256x6xf32>
    %120 = vector.extract_strided_slice %15 {offsets = [0, 3], sizes = [256, 1], strides = [1, 1]} : vector<256x9xf32> to vector<256x1xf32>
    %121 = vector.broadcast %120 : vector<256x1xf32> to vector<256x6xf32>
    %122 = arith.mulf %119, %121 : vector<256x6xf32>
    %123 = vector.extract_strided_slice %98 {offsets = [1, 0], sizes = [255, 6], strides = [1, 1]} : vector<256x6xf32> to vector<255x6xf32>
    %124 = vector.extract_strided_slice %98 {offsets = [0, 0], sizes = [1, 6], strides = [1, 1]} : vector<256x6xf32> to vector<1x6xf32>
    %125 = tpu.concatenate %123, %124 in 0 : vector<255x6xf32>, vector<1x6xf32> -> vector<256x6xf32>
    %126 = vector.extract_strided_slice %15 {offsets = [0, 5], sizes = [256, 1], strides = [1, 1]} : vector<256x9xf32> to vector<256x1xf32>
    %127 = vector.broadcast %126 : vector<256x1xf32> to vector<256x6xf32>
    %128 = arith.mulf %125, %127 : vector<256x6xf32>
    %129 = vector.extract_strided_slice %98 {offsets = [15, 0], sizes = [241, 6], strides = [1, 1]} : vector<256x6xf32> to vector<241x6xf32>
    %130 = vector.extract_strided_slice %98 {offsets = [0, 0], sizes = [15, 6], strides = [1, 1]} : vector<256x6xf32> to vector<15x6xf32>
    %131 = tpu.concatenate %129, %130 in 0 : vector<241x6xf32>, vector<15x6xf32> -> vector<256x6xf32>
    %132 = vector.extract_strided_slice %15 {offsets = [0, 6], sizes = [256, 1], strides = [1, 1]} : vector<256x9xf32> to vector<256x1xf32>
    %133 = vector.broadcast %132 : vector<256x1xf32> to vector<256x6xf32>
    %134 = arith.mulf %131, %133 : vector<256x6xf32>
    %135 = vector.extract_strided_slice %98 {offsets = [16, 0], sizes = [240, 6], strides = [1, 1]} : vector<256x6xf32> to vector<240x6xf32>
    %136 = vector.extract_strided_slice %98 {offsets = [0, 0], sizes = [16, 6], strides = [1, 1]} : vector<256x6xf32> to vector<16x6xf32>
    %137 = tpu.concatenate %135, %136 in 0 : vector<240x6xf32>, vector<16x6xf32> -> vector<256x6xf32>
    %138 = vector.extract_strided_slice %15 {offsets = [0, 7], sizes = [256, 1], strides = [1, 1]} : vector<256x9xf32> to vector<256x1xf32>
    %139 = vector.broadcast %138 : vector<256x1xf32> to vector<256x6xf32>
    %140 = arith.mulf %137, %139 : vector<256x6xf32>
    %141 = vector.extract_strided_slice %98 {offsets = [17, 0], sizes = [239, 6], strides = [1, 1]} : vector<256x6xf32> to vector<239x6xf32>
    %142 = vector.extract_strided_slice %98 {offsets = [0, 0], sizes = [17, 6], strides = [1, 1]} : vector<256x6xf32> to vector<17x6xf32>
    %143 = tpu.concatenate %141, %142 in 0 : vector<239x6xf32>, vector<17x6xf32> -> vector<256x6xf32>
    %144 = vector.extract_strided_slice %15 {offsets = [0, 8], sizes = [256, 1], strides = [1, 1]} : vector<256x9xf32> to vector<256x1xf32>
    %145 = vector.broadcast %144 : vector<256x1xf32> to vector<256x6xf32>
    %146 = arith.mulf %143, %145 : vector<256x6xf32>
    %147 = tpu.concatenate %104, %110, %116, %122, %98, %128, %134, %140, %146 in 1 : vector<256x6xf32>, vector<256x6xf32>, vector<256x6xf32>, vector<256x6xf32>, vector<256x6xf32>, vector<256x6xf32>, vector<256x6xf32>, vector<256x6xf32>, vector<256x6xf32> -> vector<256x54xf32>
    %148 = arith.truncf %147 : vector<256x54xf32> to vector<256x54xbf16>
    %c1 = arith.constant 1 : index
    %c0_28 = arith.constant 0 : index
    %c0_29 = arith.constant 0 : index
    %149 = vector.load %arg5[%c1, %c0_28, %c0_29] : memref<3x54x6xbf16, #tpu.memory_space<vmem>>, vector<1x54x6xbf16>
    %150 = vector.shape_cast %149 : vector<1x54x6xbf16> to vector<54x6xbf16>
    %cst_30 = arith.constant dense<0.000000e+00> : vector<256x6xf32>
    %151 = tpu.matmul %148, %150, %cst_30 {dimension_numbers = #tpu.dot_dimension_numbers<[1], [0], [0], [1], [0, 0, 1, 1], [], []>} : vector<256x54xbf16>, vector<54x6xbf16>, vector<256x6xf32> -> vector<256x6xf32>
    %cst_31 = arith.constant dense<0.000000e+00> : vector<6xf32>
    %152 = vector.multi_reduction <add>, %151, %cst_31 [0] : vector<256x6xf32> to vector<6xf32>
    %153 = vector.shape_cast %152 : vector<6xf32> to vector<1x6xf32>
    %154 = arith.mulf %151, %151 : vector<256x6xf32>
    %cst_32 = arith.constant dense<0.000000e+00> : vector<6xf32>
    %155 = vector.multi_reduction <add>, %154, %cst_32 [0] : vector<256x6xf32> to vector<6xf32>
    %156 = vector.shape_cast %155 : vector<6xf32> to vector<1x6xf32>
    %cst_33 = arith.constant dense<0.000000e+00> : vector<6xf32>
    %157 = vector.multi_reduction <add>, %151, %cst_33 [0] : vector<256x6xf32> to vector<6xf32>
    %158 = vector.shape_cast %157 : vector<6xf32> to vector<1x6xf32>
    %cst_34 = arith.constant 2.560000e+02 : f32
    %159 = vector.broadcast %cst_34 : f32 to vector<1x6xf32>
    %160 = arith.divf %158, %159 : vector<1x6xf32>
    %cst_35 = arith.constant dense<0.000000e+00> : vector<6xf32>
    %161 = vector.multi_reduction <add>, %13, %cst_35 [0] : vector<256x6xf32> to vector<6xf32>
    %162 = vector.shape_cast %161 : vector<6xf32> to vector<1x6xf32>
    %cst_36 = arith.constant 2.560000e+02 : f32
    %163 = vector.broadcast %cst_36 : f32 to vector<1x6xf32>
    %164 = arith.divf %162, %163 : vector<1x6xf32>
    %165 = tpu.concatenate %160, %164 in 1 : vector<1x6xf32>, vector<1x6xf32> -> vector<1x12xf32>
    %c1_37 = arith.constant 1 : index
    %c0_38 = arith.constant 0 : index
    %c0_39 = arith.constant 0 : index
    %166 = vector.load %arg6[%c1_37, %c0_38, %c0_39] : memref<2x12x2xf32, #tpu.memory_space<vmem>>, vector<1x12x2xf32>
    %167 = vector.shape_cast %166 : vector<1x12x2xf32> to vector<12x2xf32>
    %cst_40 = arith.constant dense<0.000000e+00> : vector<1x2xf32>
    %168 = tpu.matmul %165, %167, %cst_40 {dimension_numbers = #tpu.dot_dimension_numbers<[1], [0], [0], [1], [0, 0, 1, 1], [], []>} : vector<1x12xf32>, vector<12x2xf32>, vector<1x2xf32> -> vector<1x2xf32>
    %cst_41 = arith.constant 0.000000e+00 : f32
    %169 = vector.broadcast %cst_41 : f32 to vector<1x2xf32>
    %170 = arith.maximumf %168, %169 : vector<1x2xf32>
    %c1_42 = arith.constant 1 : index
    %c0_43 = arith.constant 0 : index
    %c0_44 = arith.constant 0 : index
    %171 = vector.load %arg7[%c1_42, %c0_43, %c0_44] : memref<2x2x6xf32, #tpu.memory_space<vmem>>, vector<1x2x6xf32>
    %172 = vector.shape_cast %171 : vector<1x2x6xf32> to vector<2x6xf32>
    %cst_45 = arith.constant dense<0.000000e+00> : vector<1x6xf32>
    %173 = tpu.matmul %170, %172, %cst_45 {dimension_numbers = #tpu.dot_dimension_numbers<[1], [0], [0], [1], [0, 0, 1, 1], [], []>} : vector<1x2xf32>, vector<2x6xf32>, vector<1x6xf32> -> vector<1x6xf32>
    %174 = arith.negf %173 : vector<1x6xf32>
    %175 = math.exp %174 : vector<1x6xf32>
    %cst_46 = arith.constant 1.000000e+00 : f32
    %176 = vector.broadcast %cst_46 : f32 to vector<1x6xf32>
    %177 = arith.addf %176, %175 : vector<1x6xf32>
    %178 = arith.divf %176, %177 : vector<1x6xf32>
    %179 = vector.broadcast %178 : vector<1x6xf32> to vector<256x6xf32>
    %180 = arith.mulf %151, %179 : vector<256x6xf32>
    %181 = arith.addf %180, %13 : vector<256x6xf32>
    %182 = vector.extract_strided_slice %181 {offsets = [239, 0], sizes = [17, 6], strides = [1, 1]} : vector<256x6xf32> to vector<17x6xf32>
    %183 = vector.extract_strided_slice %181 {offsets = [0, 0], sizes = [239, 6], strides = [1, 1]} : vector<256x6xf32> to vector<239x6xf32>
    %184 = tpu.concatenate %182, %183 in 0 : vector<17x6xf32>, vector<239x6xf32> -> vector<256x6xf32>
    %185 = vector.extract_strided_slice %15 {offsets = [0, 0], sizes = [256, 1], strides = [1, 1]} : vector<256x9xf32> to vector<256x1xf32>
    %186 = vector.broadcast %185 : vector<256x1xf32> to vector<256x6xf32>
    %187 = arith.mulf %184, %186 : vector<256x6xf32>
    %188 = vector.extract_strided_slice %181 {offsets = [240, 0], sizes = [16, 6], strides = [1, 1]} : vector<256x6xf32> to vector<16x6xf32>
    %189 = vector.extract_strided_slice %181 {offsets = [0, 0], sizes = [240, 6], strides = [1, 1]} : vector<256x6xf32> to vector<240x6xf32>
    %190 = tpu.concatenate %188, %189 in 0 : vector<16x6xf32>, vector<240x6xf32> -> vector<256x6xf32>
    %191 = vector.extract_strided_slice %15 {offsets = [0, 1], sizes = [256, 1], strides = [1, 1]} : vector<256x9xf32> to vector<256x1xf32>
    %192 = vector.broadcast %191 : vector<256x1xf32> to vector<256x6xf32>
    %193 = arith.mulf %190, %192 : vector<256x6xf32>
    %194 = vector.extract_strided_slice %181 {offsets = [241, 0], sizes = [15, 6], strides = [1, 1]} : vector<256x6xf32> to vector<15x6xf32>
    %195 = vector.extract_strided_slice %181 {offsets = [0, 0], sizes = [241, 6], strides = [1, 1]} : vector<256x6xf32> to vector<241x6xf32>
    %196 = tpu.concatenate %194, %195 in 0 : vector<15x6xf32>, vector<241x6xf32> -> vector<256x6xf32>
    %197 = vector.extract_strided_slice %15 {offsets = [0, 2], sizes = [256, 1], strides = [1, 1]} : vector<256x9xf32> to vector<256x1xf32>
    %198 = vector.broadcast %197 : vector<256x1xf32> to vector<256x6xf32>
    %199 = arith.mulf %196, %198 : vector<256x6xf32>
    %200 = vector.extract_strided_slice %181 {offsets = [255, 0], sizes = [1, 6], strides = [1, 1]} : vector<256x6xf32> to vector<1x6xf32>
    %201 = vector.extract_strided_slice %181 {offsets = [0, 0], sizes = [255, 6], strides = [1, 1]} : vector<256x6xf32> to vector<255x6xf32>
    %202 = tpu.concatenate %200, %201 in 0 : vector<1x6xf32>, vector<255x6xf32> -> vector<256x6xf32>
    %203 = vector.extract_strided_slice %15 {offsets = [0, 3], sizes = [256, 1], strides = [1, 1]} : vector<256x9xf32> to vector<256x1xf32>
    %204 = vector.broadcast %203 : vector<256x1xf32> to vector<256x6xf32>
    %205 = arith.mulf %202, %204 : vector<256x6xf32>
    %206 = vector.extract_strided_slice %181 {offsets = [1, 0], sizes = [255, 6], strides = [1, 1]} : vector<256x6xf32> to vector<255x6xf32>
    %207 = vector.extract_strided_slice %181 {offsets = [0, 0], sizes = [1, 6], strides = [1, 1]} : vector<256x6xf32> to vector<1x6xf32>
    %208 = tpu.concatenate %206, %207 in 0 : vector<255x6xf32>, vector<1x6xf32> -> vector<256x6xf32>
    %209 = vector.extract_strided_slice %15 {offsets = [0, 5], sizes = [256, 1], strides = [1, 1]} : vector<256x9xf32> to vector<256x1xf32>
    %210 = vector.broadcast %209 : vector<256x1xf32> to vector<256x6xf32>
    %211 = arith.mulf %208, %210 : vector<256x6xf32>
    %212 = vector.extract_strided_slice %181 {offsets = [15, 0], sizes = [241, 6], strides = [1, 1]} : vector<256x6xf32> to vector<241x6xf32>
    %213 = vector.extract_strided_slice %181 {offsets = [0, 0], sizes = [15, 6], strides = [1, 1]} : vector<256x6xf32> to vector<15x6xf32>
    %214 = tpu.concatenate %212, %213 in 0 : vector<241x6xf32>, vector<15x6xf32> -> vector<256x6xf32>
    %215 = vector.extract_strided_slice %15 {offsets = [0, 6], sizes = [256, 1], strides = [1, 1]} : vector<256x9xf32> to vector<256x1xf32>
    %216 = vector.broadcast %215 : vector<256x1xf32> to vector<256x6xf32>
    %217 = arith.mulf %214, %216 : vector<256x6xf32>
    %218 = vector.extract_strided_slice %181 {offsets = [16, 0], sizes = [240, 6], strides = [1, 1]} : vector<256x6xf32> to vector<240x6xf32>
    %219 = vector.extract_strided_slice %181 {offsets = [0, 0], sizes = [16, 6], strides = [1, 1]} : vector<256x6xf32> to vector<16x6xf32>
    %220 = tpu.concatenate %218, %219 in 0 : vector<240x6xf32>, vector<16x6xf32> -> vector<256x6xf32>
    %221 = vector.extract_strided_slice %15 {offsets = [0, 7], sizes = [256, 1], strides = [1, 1]} : vector<256x9xf32> to vector<256x1xf32>
    %222 = vector.broadcast %221 : vector<256x1xf32> to vector<256x6xf32>
    %223 = arith.mulf %220, %222 : vector<256x6xf32>
    %224 = vector.extract_strided_slice %181 {offsets = [17, 0], sizes = [239, 6], strides = [1, 1]} : vector<256x6xf32> to vector<239x6xf32>
    %225 = vector.extract_strided_slice %181 {offsets = [0, 0], sizes = [17, 6], strides = [1, 1]} : vector<256x6xf32> to vector<17x6xf32>
    %226 = tpu.concatenate %224, %225 in 0 : vector<239x6xf32>, vector<17x6xf32> -> vector<256x6xf32>
    %227 = vector.extract_strided_slice %15 {offsets = [0, 8], sizes = [256, 1], strides = [1, 1]} : vector<256x9xf32> to vector<256x1xf32>
    %228 = vector.broadcast %227 : vector<256x1xf32> to vector<256x6xf32>
    %229 = arith.mulf %226, %228 : vector<256x6xf32>
    %230 = tpu.concatenate %187, %193, %199, %205, %181, %211, %217, %223, %229 in 1 : vector<256x6xf32>, vector<256x6xf32>, vector<256x6xf32>, vector<256x6xf32>, vector<256x6xf32>, vector<256x6xf32>, vector<256x6xf32>, vector<256x6xf32>, vector<256x6xf32> -> vector<256x54xf32>
    %231 = arith.truncf %230 : vector<256x54xf32> to vector<256x54xbf16>
    %c2 = arith.constant 2 : index
    %c0_47 = arith.constant 0 : index
    %c0_48 = arith.constant 0 : index
    %232 = vector.load %arg5[%c2, %c0_47, %c0_48] : memref<3x54x6xbf16, #tpu.memory_space<vmem>>, vector<1x54x6xbf16>
    %233 = vector.shape_cast %232 : vector<1x54x6xbf16> to vector<54x6xbf16>
    %cst_49 = arith.constant dense<0.000000e+00> : vector<256x6xf32>
    %234 = tpu.matmul %231, %233, %cst_49 {dimension_numbers = #tpu.dot_dimension_numbers<[1], [0], [0], [1], [0, 0, 1, 1], [], []>} : vector<256x54xbf16>, vector<54x6xbf16>, vector<256x6xf32> -> vector<256x6xf32>
    %cst_50 = arith.constant dense<0.000000e+00> : vector<6xf32>
    %235 = vector.multi_reduction <add>, %234, %cst_50 [0] : vector<256x6xf32> to vector<6xf32>
    %236 = vector.shape_cast %235 : vector<6xf32> to vector<1x6xf32>
    %237 = arith.mulf %234, %234 : vector<256x6xf32>
    %cst_51 = arith.constant dense<0.000000e+00> : vector<6xf32>
    %238 = vector.multi_reduction <add>, %237, %cst_51 [0] : vector<256x6xf32> to vector<6xf32>
    %239 = vector.shape_cast %238 : vector<6xf32> to vector<1x6xf32>
    %240 = tpu.concatenate %68, %151, %234, %14 in 1 : vector<256x6xf32>, vector<256x6xf32>, vector<256x6xf32>, vector<256x6xf32> -> vector<256x24xf32>
    %241 = arith.truncf %240 : vector<256x24xf32> to vector<256x24xbf16>
    %c0_52 = arith.constant 0 : index
    %c0_53 = arith.constant 0 : index
    %c0_54 = arith.constant 0 : index
    %242 = vector.load %arg8[%c0_52, %c0_53, %c0_54] : memref<1x256x24xbf16, #tpu.memory_space<vmem>>, vector<1x256x24xbf16>
    %243 = vector.shape_cast %242 : vector<1x256x24xbf16> to vector<256x24xbf16>
    %244 = vector.shape_cast %241 : vector<256x24xbf16> to vector<1x256x24xbf16>
    tpu.vector_store %arg8[%c0_52, %c0_53, %c0_54], %244 {strides = array<i32>} : memref<1x256x24xbf16, #tpu.memory_space<vmem>>, vector<1x256x24xbf16>,
    %245 = tpu.concatenate %70, %153, %236 in 1 : vector<1x6xf32>, vector<1x6xf32>, vector<1x6xf32> -> vector<1x18xf32>
    %246 = tpu.concatenate %73, %156, %239 in 1 : vector<1x6xf32>, vector<1x6xf32>, vector<1x6xf32> -> vector<1x18xf32>
    %247 = tpu.concatenate %245, %246 in 0 : vector<1x18xf32>, vector<1x18xf32> -> vector<2x18xf32>
    %c0_55 = arith.constant 0 : index
    %c0_56 = arith.constant 0 : index
    %c0_57 = arith.constant 0 : index
    %248 = vector.load %arg9[%c0_55, %c0_56, %c0_57] : memref<1x2x18xf32, #tpu.memory_space<vmem>>, vector<1x2x18xf32>
    %249 = vector.shape_cast %248 : vector<1x2x18xf32> to vector<2x18xf32>
    %250 = vector.shape_cast %247 : vector<2x18xf32> to vector<1x2x18xf32>
    tpu.vector_store %arg9[%c0_55, %c0_56, %c0_57], %250 {strides = array<i32>} : memref<1x2x18xf32, #tpu.memory_space<vmem>>, vector<1x2x18xf32>,
    return
  }
  func.func @transform_0(%arg0: i32) -> (i32, i32, i32) {
    %c0_i32 = arith.constant 0 : i32
    %c0_i32_0 = arith.constant 0 : i32
    %c0_i32_1 = arith.constant 0 : i32
    return %arg0, %c0_i32, %c0_i32_0 : i32, i32, i32
  }
  func.func @transform_1(%arg0: i32) -> (i32, i32) {
    %c0_i32 = arith.constant 0 : i32
    %c0_i32_0 = arith.constant 0 : i32
    %c0_i32_1 = arith.constant 0 : i32
    return %c0_i32, %c0_i32_0 : i32, i32
  }
  func.func @transform_2(%arg0: i32) -> (i32, i32) {
    %c0_i32 = arith.constant 0 : i32
    %c0_i32_0 = arith.constant 0 : i32
    %c0_i32_1 = arith.constant 0 : i32
    return %c0_i32, %c0_i32_0 : i32, i32
  }
  func.func @transform_3(%arg0: i32) -> (i32, i32) {
    %c0_i32 = arith.constant 0 : i32
    %c0_i32_0 = arith.constant 0 : i32
    %c0_i32_1 = arith.constant 0 : i32
    return %c0_i32, %c0_i32_0 : i32, i32
  }
  func.func @transform_4(%arg0: i32) -> (i32, i32, i32) {
    %c0_i32 = arith.constant 0 : i32
    %c0_i32_0 = arith.constant 0 : i32
    %c0_i32_1 = arith.constant 0 : i32
    %c0_i32_2 = arith.constant 0 : i32
    return %c0_i32, %c0_i32_0, %c0_i32_1 : i32, i32, i32
  }
  func.func @transform_5(%arg0: i32) -> (i32, i32, i32) {
    %c0_i32 = arith.constant 0 : i32
    %c0_i32_0 = arith.constant 0 : i32
    %c0_i32_1 = arith.constant 0 : i32
    %c0_i32_2 = arith.constant 0 : i32
    return %c0_i32, %c0_i32_0, %c0_i32_1 : i32, i32, i32
  }
  func.func @transform_6(%arg0: i32) -> (i32, i32, i32) {
    %c0_i32 = arith.constant 0 : i32
    %c0_i32_0 = arith.constant 0 : i32
    %c0_i32_1 = arith.constant 0 : i32
    %c0_i32_2 = arith.constant 0 : i32
    return %c0_i32, %c0_i32_0, %c0_i32_1 : i32, i32, i32
  }
  func.func @transform_7(%arg0: i32) -> (i32, i32, i32) {
    %c0_i32 = arith.constant 0 : i32
    %c0_i32_0 = arith.constant 0 : i32
    %c0_i32_1 = arith.constant 0 : i32
    return %arg0, %c0_i32, %c0_i32_0 : i32, i32, i32
  }
  func.func @transform_8(%arg0: i32) -> (i32, i32, i32) {
    %c0_i32 = arith.constant 0 : i32
    %c0_i32_0 = arith.constant 0 : i32
    %c0_i32_1 = arith.constant 0 : i32
    return %arg0, %c0_i32, %c0_i32_0 : i32, i32, i32
  }
}

module attributes {stable_mosaic.version = 11 : i64} {
  func.func @_conv3_kernel(%arg0: i32, %arg1: memref<1x256x24xbf16, #tpu.memory_space<vmem>>, %arg2: memref<1x24xf32, #tpu.memory_space<vmem>>, %arg3: memref<1x24xf32, #tpu.memory_space<vmem>>, %arg4: memref<24x32xbf16, #tpu.memory_space<vmem>>, %arg5: memref<1x256x32xbf16, #tpu.memory_space<vmem>>, %arg6: memref<1x2x32xf32, #tpu.memory_space<vmem>>) attributes {dimension_semantics = [#tpu.dimension_semantics<parallel>], iteration_bounds = array<i64: 2>, scalar_prefetch = 0 : i64, scratch_operands = 0 : i64, tpu.core_type = #tpu.core_type<tc>, window_params = [{transform_indices = @transform_0, window_bounds = array<i64: 1, 256, 24>}, {pipeline_mode = #tpu.pipeline_mode<synchronous>, transform_indices = @transform_1, window_bounds = array<i64: 1, 24>}, {pipeline_mode = #tpu.pipeline_mode<synchronous>, transform_indices = @transform_2, window_bounds = array<i64: 1, 24>}, {pipeline_mode = #tpu.pipeline_mode<synchronous>, transform_indices = @transform_3, window_bounds = array<i64: 24, 32>}, {transform_indices = @transform_4, window_bounds = array<i64: 1, 256, 32>}, {transform_indices = @transform_5, window_bounds = array<i64: 1, 2, 32>}]} {
    %c0 = arith.constant 0 : index
    %c0_0 = arith.constant 0 : index
    %c0_1 = arith.constant 0 : index
    %0 = vector.load %arg1[%c0, %c0_0, %c0_1] : memref<1x256x24xbf16, #tpu.memory_space<vmem>>, vector<1x256x24xbf16>
    %1 = vector.shape_cast %0 : vector<1x256x24xbf16> to vector<256x24xbf16>
    %2 = arith.extf %1 : vector<256x24xbf16> to vector<256x24xf32>
    %c0_2 = arith.constant 0 : index
    %c0_3 = arith.constant 0 : index
    %3 = vector.load %arg2[%c0_2, %c0_3] : memref<1x24xf32, #tpu.memory_space<vmem>>, vector<1x24xf32>
    %4 = vector.broadcast %3 : vector<1x24xf32> to vector<256x24xf32>
    %5 = arith.mulf %2, %4 : vector<256x24xf32>
    %c0_4 = arith.constant 0 : index
    %c0_5 = arith.constant 0 : index
    %6 = vector.load %arg3[%c0_4, %c0_5] : memref<1x24xf32, #tpu.memory_space<vmem>>, vector<1x24xf32>
    %7 = vector.broadcast %6 : vector<1x24xf32> to vector<256x24xf32>
    %8 = arith.addf %5, %7 : vector<256x24xf32>
    %cst = arith.constant 0.000000e+00 : f32
    %9 = vector.broadcast %cst : f32 to vector<256x24xf32>
    %10 = arith.maximumf %8, %9 : vector<256x24xf32>
    %11 = arith.truncf %10 : vector<256x24xf32> to vector<256x24xbf16>
    %c0_6 = arith.constant 0 : index
    %c0_7 = arith.constant 0 : index
    %12 = vector.load %arg4[%c0_6, %c0_7] : memref<24x32xbf16, #tpu.memory_space<vmem>>, vector<24x32xbf16>
    %cst_8 = arith.constant dense<0.000000e+00> : vector<256x32xf32>
    %13 = tpu.matmul %11, %12, %cst_8 {dimension_numbers = #tpu.dot_dimension_numbers<[1], [0], [0], [1], [0, 0, 1, 1], [], []>} : vector<256x24xbf16>, vector<24x32xbf16>, vector<256x32xf32> -> vector<256x32xf32>
    %14 = arith.truncf %13 : vector<256x32xf32> to vector<256x32xbf16>
    %c0_9 = arith.constant 0 : index
    %c0_10 = arith.constant 0 : index
    %c0_11 = arith.constant 0 : index
    %15 = vector.load %arg5[%c0_9, %c0_10, %c0_11] : memref<1x256x32xbf16, #tpu.memory_space<vmem>>, vector<1x256x32xbf16>
    %16 = vector.shape_cast %15 : vector<1x256x32xbf16> to vector<256x32xbf16>
    %17 = vector.shape_cast %14 : vector<256x32xbf16> to vector<1x256x32xbf16>
    tpu.vector_store %arg5[%c0_9, %c0_10, %c0_11], %17 {strides = array<i32>} : memref<1x256x32xbf16, #tpu.memory_space<vmem>>, vector<1x256x32xbf16>,
    %cst_12 = arith.constant dense<0.000000e+00> : vector<32xf32>
    %18 = vector.multi_reduction <add>, %13, %cst_12 [0] : vector<256x32xf32> to vector<32xf32>
    %19 = vector.shape_cast %18 : vector<32xf32> to vector<1x32xf32>
    %20 = arith.mulf %13, %13 : vector<256x32xf32>
    %cst_13 = arith.constant dense<0.000000e+00> : vector<32xf32>
    %21 = vector.multi_reduction <add>, %20, %cst_13 [0] : vector<256x32xf32> to vector<32xf32>
    %22 = vector.shape_cast %21 : vector<32xf32> to vector<1x32xf32>
    %23 = tpu.concatenate %19, %22 in 0 : vector<1x32xf32>, vector<1x32xf32> -> vector<2x32xf32>
    %c0_14 = arith.constant 0 : index
    %c0_15 = arith.constant 0 : index
    %c0_16 = arith.constant 0 : index
    %24 = vector.load %arg6[%c0_14, %c0_15, %c0_16] : memref<1x2x32xf32, #tpu.memory_space<vmem>>, vector<1x2x32xf32>
    %25 = vector.shape_cast %24 : vector<1x2x32xf32> to vector<2x32xf32>
    %26 = vector.shape_cast %23 : vector<2x32xf32> to vector<1x2x32xf32>
    tpu.vector_store %arg6[%c0_14, %c0_15, %c0_16], %26 {strides = array<i32>} : memref<1x2x32xf32, #tpu.memory_space<vmem>>, vector<1x2x32xf32>,
    return
  }
  func.func @transform_0(%arg0: i32) -> (i32, i32, i32) {
    %c0_i32 = arith.constant 0 : i32
    %c0_i32_0 = arith.constant 0 : i32
    %c0_i32_1 = arith.constant 0 : i32
    return %arg0, %c0_i32, %c0_i32_0 : i32, i32, i32
  }
  func.func @transform_1(%arg0: i32) -> (i32, i32) {
    %c0_i32 = arith.constant 0 : i32
    %c0_i32_0 = arith.constant 0 : i32
    %c0_i32_1 = arith.constant 0 : i32
    return %c0_i32, %c0_i32_0 : i32, i32
  }
  func.func @transform_2(%arg0: i32) -> (i32, i32) {
    %c0_i32 = arith.constant 0 : i32
    %c0_i32_0 = arith.constant 0 : i32
    %c0_i32_1 = arith.constant 0 : i32
    return %c0_i32, %c0_i32_0 : i32, i32
  }
  func.func @transform_3(%arg0: i32) -> (i32, i32) {
    %c0_i32 = arith.constant 0 : i32
    %c0_i32_0 = arith.constant 0 : i32
    %c0_i32_1 = arith.constant 0 : i32
    return %c0_i32, %c0_i32_0 : i32, i32
  }
  func.func @transform_4(%arg0: i32) -> (i32, i32, i32) {
    %c0_i32 = arith.constant 0 : i32
    %c0_i32_0 = arith.constant 0 : i32
    %c0_i32_1 = arith.constant 0 : i32
    return %arg0, %c0_i32, %c0_i32_0 : i32, i32, i32
  }
  func.func @transform_5(%arg0: i32) -> (i32, i32, i32) {
    %c0_i32 = arith.constant 0 : i32
    %c0_i32_0 = arith.constant 0 : i32
    %c0_i32_1 = arith.constant 0 : i32
    return %arg0, %c0_i32, %c0_i32_0 : i32, i32, i32
  }
}

module attributes {stable_mosaic.version = 11 : i64} {
  func.func @_bn3_se_res_kernel(%arg0: i32, %arg1: memref<1x256x32xbf16, #tpu.memory_space<vmem>>, %arg2: memref<1x32xf32, #tpu.memory_space<vmem>>, %arg3: memref<1x32xf32, #tpu.memory_space<vmem>>, %arg4: memref<32x2xf32, #tpu.memory_space<vmem>>, %arg5: memref<2x32xf32, #tpu.memory_space<vmem>>, %arg6: memref<1x256x32xf32, #tpu.memory_space<vmem>>, %arg7: memref<1x256x32xf32, #tpu.memory_space<vmem>>) attributes {dimension_semantics = [#tpu.dimension_semantics<parallel>], iteration_bounds = array<i64: 2>, scalar_prefetch = 0 : i64, scratch_operands = 0 : i64, tpu.core_type = #tpu.core_type<tc>, window_params = [{transform_indices = @transform_0, window_bounds = array<i64: 1, 256, 32>}, {pipeline_mode = #tpu.pipeline_mode<synchronous>, transform_indices = @transform_1, window_bounds = array<i64: 1, 32>}, {pipeline_mode = #tpu.pipeline_mode<synchronous>, transform_indices = @transform_2, window_bounds = array<i64: 1, 32>}, {pipeline_mode = #tpu.pipeline_mode<synchronous>, transform_indices = @transform_3, window_bounds = array<i64: 32, 2>}, {pipeline_mode = #tpu.pipeline_mode<synchronous>, transform_indices = @transform_4, window_bounds = array<i64: 2, 32>}, {transform_indices = @transform_5, window_bounds = array<i64: 1, 256, 32>}, {transform_indices = @transform_6, window_bounds = array<i64: 1, 256, 32>}]} {
    %c0 = arith.constant 0 : index
    %c0_0 = arith.constant 0 : index
    %c0_1 = arith.constant 0 : index
    %0 = vector.load %arg1[%c0, %c0_0, %c0_1] : memref<1x256x32xbf16, #tpu.memory_space<vmem>>, vector<1x256x32xbf16>
    %1 = vector.shape_cast %0 : vector<1x256x32xbf16> to vector<256x32xbf16>
    %2 = arith.extf %1 : vector<256x32xbf16> to vector<256x32xf32>
    %c0_2 = arith.constant 0 : index
    %c0_3 = arith.constant 0 : index
    %3 = vector.load %arg2[%c0_2, %c0_3] : memref<1x32xf32, #tpu.memory_space<vmem>>, vector<1x32xf32>
    %4 = vector.broadcast %3 : vector<1x32xf32> to vector<256x32xf32>
    %5 = arith.mulf %2, %4 : vector<256x32xf32>
    %c0_4 = arith.constant 0 : index
    %c0_5 = arith.constant 0 : index
    %6 = vector.load %arg3[%c0_4, %c0_5] : memref<1x32xf32, #tpu.memory_space<vmem>>, vector<1x32xf32>
    %7 = vector.broadcast %6 : vector<1x32xf32> to vector<256x32xf32>
    %8 = arith.addf %5, %7 : vector<256x32xf32>
    %cst = arith.constant dense<0.000000e+00> : vector<32xf32>
    %9 = vector.multi_reduction <add>, %8, %cst [0] : vector<256x32xf32> to vector<32xf32>
    %10 = vector.shape_cast %9 : vector<32xf32> to vector<1x32xf32>
    %cst_6 = arith.constant 2.560000e+02 : f32
    %11 = vector.broadcast %cst_6 : f32 to vector<1x32xf32>
    %12 = arith.divf %10, %11 : vector<1x32xf32>
    %c0_7 = arith.constant 0 : index
    %c0_8 = arith.constant 0 : index
    %13 = vector.load %arg4[%c0_7, %c0_8] : memref<32x2xf32, #tpu.memory_space<vmem>>, vector<32x2xf32>
    %cst_9 = arith.constant dense<0.000000e+00> : vector<1x2xf32>
    %14 = tpu.matmul %12, %13, %cst_9 {dimension_numbers = #tpu.dot_dimension_numbers<[1], [0], [0], [1], [0, 0, 1, 1], [], []>} : vector<1x32xf32>, vector<32x2xf32>, vector<1x2xf32> -> vector<1x2xf32>
    %cst_10 = arith.constant 0.000000e+00 : f32
    %15 = vector.broadcast %cst_10 : f32 to vector<1x2xf32>
    %16 = arith.maximumf %14, %15 : vector<1x2xf32>
    %c0_11 = arith.constant 0 : index
    %c0_12 = arith.constant 0 : index
    %17 = vector.load %arg5[%c0_11, %c0_12] : memref<2x32xf32, #tpu.memory_space<vmem>>, vector<2x32xf32>
    %cst_13 = arith.constant dense<0.000000e+00> : vector<1x32xf32>
    %18 = tpu.matmul %16, %17, %cst_13 {dimension_numbers = #tpu.dot_dimension_numbers<[1], [0], [0], [1], [0, 0, 1, 1], [], []>} : vector<1x2xf32>, vector<2x32xf32>, vector<1x32xf32> -> vector<1x32xf32>
    %19 = arith.negf %18 : vector<1x32xf32>
    %20 = math.exp %19 : vector<1x32xf32>
    %cst_14 = arith.constant 1.000000e+00 : f32
    %21 = vector.broadcast %cst_14 : f32 to vector<1x32xf32>
    %22 = arith.addf %21, %20 : vector<1x32xf32>
    %23 = arith.divf %21, %22 : vector<1x32xf32>
    %24 = vector.broadcast %23 : vector<1x32xf32> to vector<256x32xf32>
    %25 = arith.mulf %8, %24 : vector<256x32xf32>
    %c0_15 = arith.constant 0 : index
    %c0_16 = arith.constant 0 : index
    %c0_17 = arith.constant 0 : index
    %26 = vector.load %arg6[%c0_15, %c0_16, %c0_17] : memref<1x256x32xf32, #tpu.memory_space<vmem>>, vector<1x256x32xf32>
    %27 = vector.shape_cast %26 : vector<1x256x32xf32> to vector<256x32xf32>
    %28 = arith.addf %25, %27 : vector<256x32xf32>
    %cst_18 = arith.constant 0.000000e+00 : f32
    %29 = vector.broadcast %cst_18 : f32 to vector<256x32xf32>
    %30 = arith.maximumf %28, %29 : vector<256x32xf32>
    %c0_19 = arith.constant 0 : index
    %c0_20 = arith.constant 0 : index
    %c0_21 = arith.constant 0 : index
    %31 = vector.load %arg7[%c0_19, %c0_20, %c0_21] : memref<1x256x32xf32, #tpu.memory_space<vmem>>, vector<1x256x32xf32>
    %32 = vector.shape_cast %31 : vector<1x256x32xf32> to vector<256x32xf32>
    %33 = vector.shape_cast %30 : vector<256x32xf32> to vector<1x256x32xf32>
    tpu.vector_store %arg7[%c0_19, %c0_20, %c0_21], %33 {strides = array<i32>} : memref<1x256x32xf32, #tpu.memory_space<vmem>>, vector<1x256x32xf32>,
    return
  }
  func.func @transform_0(%arg0: i32) -> (i32, i32, i32) {
    %c0_i32 = arith.constant 0 : i32
    %c0_i32_0 = arith.constant 0 : i32
    %c0_i32_1 = arith.constant 0 : i32
    return %arg0, %c0_i32, %c0_i32_0 : i32, i32, i32
  }
  func.func @transform_1(%arg0: i32) -> (i32, i32) {
    %c0_i32 = arith.constant 0 : i32
    %c0_i32_0 = arith.constant 0 : i32
    %c0_i32_1 = arith.constant 0 : i32
    return %c0_i32, %c0_i32_0 : i32, i32
  }
  func.func @transform_2(%arg0: i32) -> (i32, i32) {
    %c0_i32 = arith.constant 0 : i32
    %c0_i32_0 = arith.constant 0 : i32
    %c0_i32_1 = arith.constant 0 : i32
    return %c0_i32, %c0_i32_0 : i32, i32
  }
  func.func @transform_3(%arg0: i32) -> (i32, i32) {
    %c0_i32 = arith.constant 0 : i32
    %c0_i32_0 = arith.constant 0 : i32
    %c0_i32_1 = arith.constant 0 : i32
    return %c0_i32, %c0_i32_0 : i32, i32
  }
  func.func @transform_4(%arg0: i32) -> (i32, i32) {
    %c0_i32 = arith.constant 0 : i32
    %c0_i32_0 = arith.constant 0 : i32
    %c0_i32_1 = arith.constant 0 : i32
    return %c0_i32, %c0_i32_0 : i32, i32
  }
  func.func @transform_5(%arg0: i32) -> (i32, i32, i32) {
    %c0_i32 = arith.constant 0 : i32
    %c0_i32_0 = arith.constant 0 : i32
    %c0_i32_1 = arith.constant 0 : i32
    return %arg0, %c0_i32, %c0_i32_0 : i32, i32, i32
  }
  func.func @transform_6(%arg0: i32) -> (i32, i32, i32) {
    %c0_i32 = arith.constant 0 : i32
    %c0_i32_0 = arith.constant 0 : i32
    %c0_i32_1 = arith.constant 0 : i32
    return %arg0, %c0_i32, %c0_i32_0 : i32, i32, i32
  }
}

</mosaic_0001>

<llo_original>
// kernel: tpu_custom_call.1
$region0: #{tpu_custom_call.1}
  #allocation0 [shape = 'u32[]', space=smem, size = 0x4, offset = 0x4, fixed_abs, tag = 'smem constant byte address 0x4 - core index']
  #allocation1 [shape = 'u32[72,128]{1,0:T(1,128)}', space=vmem, size = 0x9000, scoped, tag = 'internal scratch']
  %s0 = inlined_call_operand.vmem [shape: f32[256,8], index: 0, kind: input, shape index: {}]
  %s1 = inlined_call_operand.vmem [shape: f32[256,8], index: 1, kind: output, shape index: {}]
  %s2 = sld [smem:[#allocation0]]
  $region14: #{tpu_custom_call.1} parent=0
    _
  %s4 = ssub.s32 1, %s2
  %s5 = scalar_select 0, %s4, %s2
  // Predicated region
  $region2: #{tpu_custom_call.1} parent=0 // pred_check
    _
  $region3: #{tpu_custom_call.1} parent=0 // pred_check_branch
    %7 = sbr.rel (0) target = $region5
  $region4: #{tpu_custom_call.1} parent=0 // pred_region
    _
  $region5: #{tpu_custom_call.1} parent=0 // pred_fallthru
    _
  %v8 = vld [vmem:[%s0] sm:$0xff]
  %v9 = vld [vmem:[%s0 + $0x8] sm:$0xff]
  %v10 = vld [vmem:[%s0 + $0x10] sm:$0xff]
  %v11 = vld [vmem:[%s0 + $0x18] sm:$0xff]
  %v12 = vld [vmem:[%s0 + $0x20] sm:$0xff]
  %v13 = vld [vmem:[%s0 + $0x28] sm:$0xff]
  %v14 = vld [vmem:[%s0 + $0x30] sm:$0xff]
  %v15 = vld [vmem:[%s0 + $0x38] sm:$0xff]
  %v16 = vld [vmem:[%s0 + $0x40] sm:$0xff]
  %v17 = vld [vmem:[%s0 + $0x48] sm:$0xff]
  %v18 = vld [vmem:[%s0 + $0x50] sm:$0xff]
  %v19 = vld [vmem:[%s0 + $0x58] sm:$0xff]
  %v20 = vld [vmem:[%s0 + $0x60] sm:$0xff]
  %v21 = vld [vmem:[%s0 + $0x68] sm:$0xff]
  %v22 = vld [vmem:[%s0 + $0x70] sm:$0xff]
  %v23 = vld [vmem:[%s0 + $0x78] sm:$0xff]
  %v24 = vld [vmem:[%s0 + $0x80] sm:$0xff]
  %v25 = vld [vmem:[%s0 + $0x88] sm:$0xff]
  %v26 = vld [vmem:[%s0 + $0x90] sm:$0xff]
  %v27 = vld [vmem:[%s0 + $0x98] sm:$0xff]
  %v28 = vld [vmem:[%s0 + $0xa0] sm:$0xff]
  %v29 = vld [vmem:[%s0 + $0xa8] sm:$0xff]
  %v30 = vld [vmem:[%s0 + $0xb0] sm:$0xff]
  %v31 = vld [vmem:[%s0 + $0xb8] sm:$0xff]
  %v32 = vld [vmem:[%s0 + $0xc0] sm:$0xff]
  %v33 = vld [vmem:[%s0 + $0xc8] sm:$0xff]
  %v34 = vld [vmem:[%s0 + $0xd0] sm:$0xff]
  %v35 = vld [vmem:[%s0 + $0xd8] sm:$0xff]
  %v36 = vld [vmem:[%s0 + $0xe0] sm:$0xff]
  %v37 = vld [vmem:[%s0 + $0xe8] sm:$0xff]
  %v38 = vld [vmem:[%s0 + $0xf0] sm:$0xff]
  %v39 = vld [vmem:[%s0 + $0xf8] sm:$0xff]
  %v40 = vrot.slane %v8, 1
  %v41 = vrot.slane %v9, 1
  %v42 = vrot.slane %v10, 1
  %v43 = vrot.slane %v11, 1
  %v44 = vrot.slane %v12, 1
  %v45 = vrot.slane %v13, 1
  %v46 = vrot.slane %v14, 1
  %v47 = vrot.slane %v15, 1
  %v48 = vrot.slane %v16, 1
  %v49 = vrot.slane %v17, 1
  %v50 = vrot.slane %v18, 1
  %v51 = vrot.slane %v19, 1
  %v52 = vrot.slane %v20, 1
  %v53 = vrot.slane %v21, 1
  %v54 = vrot.slane %v22, 1
  %v55 = vrot.slane %v23, 1
  %v56 = vrot.slane %v24, 1
  %v57 = vrot.slane %v25, 1
  %v58 = vrot.slane %v26, 1
  %v59 = vrot.slane %v27, 1
  %v60 = vrot.slane %v28, 1
  %v61 = vrot.slane %v29, 1
  %v62 = vrot.slane %v30, 1
  %v63 = vrot.slane %v31, 1
  %v64 = vrot.slane %v32, 1
  %v65 = vrot.slane %v33, 1
  %v66 = vrot.slane %v34, 1
  %v67 = vrot.slane %v35, 1
  %v68 = vrot.slane %v36, 1
  %v69 = vrot.slane %v37, 1
  %v70 = vrot.slane %v38, 1
  %v71 = vrot.slane %v39, 1
  %v72 = vlaneseq
  %v73 = vshrl.u32 %v72, 7
  %vm74 = vcmp.lt.s32.totalorder %v73, 7
  %v75 = vsel %vm74, %v70, %v71
  %v76 = vsel %vm74, %v69, %v70
  %v77 = vsel %vm74, %v68, %v69
  %v78 = vsel %vm74, %v67, %v68
  %v79 = vsel %vm74, %v66, %v67
  %v80 = vsel %vm74, %v65, %v66
  %v81 = vsel %vm74, %v64, %v65
  %v82 = vsel %vm74, %v63, %v64
  %v83 = vsel %vm74, %v62, %v63
  %v84 = vsel %vm74, %v61, %v62
  %v85 = vsel %vm74, %v60, %v61
  %v86 = vsel %vm74, %v59, %v60
  %v87 = vsel %vm74, %v58, %v59
  %v88 = vsel %vm74, %v57, %v58
  %v89 = vsel %vm74, %v56, %v57
  %v90 = vsel %vm74, %v55, %v56
  %v91 = vsel %vm74, %v54, %v55
  %v92 = vsel %vm74, %v53, %v54
  %v93 = vsel %vm74, %v52, %v53
  %v94 = vsel %vm74, %v51, %v52
  %v95 = vsel %vm74, %v50, %v51
  %v96 = vsel %vm74, %v49, %v50
  %v97 = vsel %vm74, %v48, %v49
  %v98 = vsel %vm74, %v47, %v48
  %v99 = vsel %vm74, %v46, %v47
  %v100 = vsel %vm74, %v45, %v46
  %v101 = vsel %vm74, %v44, %v45
  %v102 = vsel %vm74, %v43, %v44
  %v103 = vsel %vm74, %v42, %v43
  %v104 = vsel %vm74, %v41, %v42
  %v105 = vsel %vm74, %v40, %v41
  %v106 = vsel %vm74, %v71, %v40
  %vm107 = vcmask 64512
  %108 = vst.msk [vmem:[%s1] sm:$0xff] %vm107, %v103
  %109 = vst.msk [vmem:[%s1 + $0x8] sm:$0xff] %vm107, %v102
  %110 = vst.msk [vmem:[%s1 + $0x10] sm:$0xff] %vm107, %v101
  %111 = vst.msk [vmem:[%s1 + $0x18] sm:$0xff] %vm107, %v100
  %112 = vst.msk [vmem:[%s1 + $0x20] sm:$0xff] %vm107, %v99
  %113 = vst.msk [vmem:[%s1 + $0x28] sm:$0xff] %vm107, %v98
  %114 = vst.msk [vmem:[%s1 + $0x30] sm:$0xff] %vm107, %v97
  %115 = vst.msk [vmem:[%s1 + $0x38] sm:$0xff] %vm107, %v96
  %116 = vst.msk [vmem:[%s1 + $0x40] sm:$0xff] %vm107, %v95
  %117 = vst.msk [vmem:[%s1 + $0x48] sm:$0xff] %vm107, %v94
  %118 = vst.msk [vmem:[%s1 + $0x50] sm:$0xff] %vm107, %v93
  %119 = vst.msk [vmem:[%s1 + $0x58] sm:$0xff] %vm107, %v92
  %120 = vst.msk [vmem:[%s1 + $0x60] sm:$0xff] %vm107, %v91
  %121 = vst.msk [vmem:[%s1 + $0x68] sm:$0xff] %vm107, %v90
  %122 = vst.msk [vmem:[%s1 + $0x70] sm:$0xff] %vm107, %v89
  %123 = vst.msk [vmem:[%s1 + $0x78] sm:$0xff] %vm107, %v88
  %124 = vst.msk [vmem:[%s1 + $0x80] sm:$0xff] %vm107, %v87
  %125 = vst.msk [vmem:[%s1 + $0x88] sm:$0xff] %vm107, %v86
  %126 = vst.msk [vmem:[%s1 + $0x90] sm:$0xff] %vm107, %v85
  %127 = vst.msk [vmem:[%s1 + $0x98] sm:$0xff] %vm107, %v84
  %128 = vst.msk [vmem:[%s1 + $0xa0] sm:$0xff] %vm107, %v83
  %129 = vst.msk [vmem:[%s1 + $0xa8] sm:$0xff] %vm107, %v82
  %130 = vst.msk [vmem:[%s1 + $0xb0] sm:$0xff] %vm107, %v81
  %131 = vst.msk [vmem:[%s1 + $0xb8] sm:$0xff] %vm107, %v80
  %132 = vst.msk [vmem:[%s1 + $0xc0] sm:$0xff] %vm107, %v79
  %133 = vst.msk [vmem:[%s1 + $0xc8] sm:$0xff] %vm107, %v78
  %134 = vst.msk [vmem:[%s1 + $0xd0] sm:$0xff] %vm107, %v77
  %135 = vst.msk [vmem:[%s1 + $0xd8] sm:$0xff] %vm107, %v76
  %136 = vst.msk [vmem:[%s1 + $0xe0] sm:$0xff] %vm107, %v75
  %137 = vst.msk [vmem:[%s1 + $0xe8] sm:$0xff] %vm107, %v106
  %138 = vst.msk [vmem:[%s1 + $0xf0] sm:$0xff] %vm107, %v105
  %139 = vst.msk [vmem:[%s1 + $0xf8] sm:$0xff] %vm107, %v104
  // Predicated region
  $region6: #{tpu_custom_call.1} parent=0 // pred_check
    _
  $region7: #{tpu_custom_call.1} parent=0 // pred_check_branch
    %141 = sbr.rel (0) target = $region9
  $region8: #{tpu_custom_call.1} parent=0 // pred_region
    _
  $region9: #{tpu_custom_call.1} parent=0 // pred_fallthru
    _
  // Predicated region
  $region10: #{tpu_custom_call.1} parent=0 // pred_check
    _
  $region11: #{tpu_custom_call.1} parent=0 // pred_check_branch
    %143 = sbr.rel (0) target = $region13
  $region12: #{tpu_custom_call.1} parent=0 // pred_region
    _
  $region13: #{tpu_custom_call.1} parent=0 // pred_fallthru
    _

// kernel: _lambda_.4
$region0: #{_lambda_.4}
  #allocation0 [shape = 'u32[]', space=smem, size = 0x4, offset = 0x4, fixed_abs, tag = 'smem constant byte address 0x4 - core index']
  #allocation1 [shape = 'u32[72,128]{1,0:T(1,128)}', space=vmem, size = 0x9000, scoped, tag = 'internal scratch']
  %s0 = inlined_call_operand.vmem [shape: bf16[2,256,32], index: 0, kind: input, shape index: {}]
  %s1 = inlined_call_operand.vmem [shape: bf16[32,24], index: 1, kind: input, shape index: {}]
  %s2 = inlined_call_operand.vmem [shape: bf16[2,256,24], index: 2, kind: output, shape index: {0}]
  %s3 = inlined_call_operand.vmem [shape: f32[2,2,24], index: 3, kind: output, shape index: {1}]
  %4 = xla_tuple %s2, %s3
  %s5 = sld [smem:[#allocation0]]
  $region49: #{_lambda_.4} parent=0
    _
  %s7 = ssub.s32 1, %s5
  %s8 = scalar_select 0, %s7, %s5
  loop: start=0, step=1, limit=4
  $region2: #{_lambda_.4} parent=0 // loop_pre_header
    _
  $region3: #{_lambda_.4} parent=0 // loop_header
    %s10 = sphi 0, %s14
    %p11 = scmp.ge.s32.totalorder %s10, 4
    %s20 = sphi 0, %s22
    %s23 = sphi 0, %s20
    %s24 = sphi 0, %s23
    %s40 = sphi 0, %s24
    %s44 = sphi 0, %s44
    %s46 = sphi 0, %s44
    %s47 = sphi 0, %s46
    %s61 = sphi 0, %s47
    %s67 = sphi 0, %s69
    %s70 = sphi 0, %s67
    %s71 = sphi 0, %s70
    %s87 = sphi 0, %s71
    %s93 = sphi 0, %s95
    %s96 = sphi 0, %s93
    %s97 = sphi 0, %s96
    %s113 = sphi 0, %s97
  $region4: #{_lambda_.4} parent=0 // loop_header_branch
    %13 = sbr.rel (%p11) target = $region8
  $region5: #{_lambda_.4} parent=0 // loop_body
    %s15 = ssub.s32 %s10, 1
    %s16 = ssub.s32 %s10, 2
    %s17 = sadd.s32 %s10, 1
    %s18 = ssub.s32 %s10, %s17
    %p19 = scmp.eq.s32.totalorder %s18, 0
    %s21 = sadd.s32 %s20, 1
    %s22 = scalar_select %p19, %s20, %s21
    %p25 = pneg %p19
    %p26 = scmp.eq.s32.totalorder %s10, 1
    %p27 = por %p25, %p26
    %p28 = scmp.ne.s32.totalorder %s20, %s23
    %p29 = scmp.eq.s32.totalorder %s10, 0
    %p30 = por %p28, %p29
    %p31 = scmp.ne.s32.totalorder %s20, %s23
    %p32 = scmp.eq.s32.totalorder %s15, 1
    %p33 = por %p31, %p32
    %p34 = scmp.ne.s32.totalorder %s23, %s24
    %p35 = scmp.eq.s32.totalorder %s15, 0
    %p36 = por %p34, %p35
    %p37 = scmp.ne.s32.totalorder %s23, %s24
    %p38 = scmp.eq.s32.totalorder %s16, 1
    %p39 = por %p37, %p38
    %p41 = scmp.ne.s32.totalorder %s24, %s40
    %p42 = scmp.eq.s32.totalorder %s16, 0
    %p43 = por %p41, %p42
    %s45 = sadd.s32 %s44, 1
    %p48 = scmp.eq.s32.totalorder %s10, 1
    %p49 = scmp.ne.s32.totalorder %s44, %s46
    %p50 = scmp.eq.s32.totalorder %s10, 0
    %p51 = por %p49, %p50
    %p52 = scmp.ne.s32.totalorder %s44, %s46
    %p53 = scmp.eq.s32.totalorder %s15, 1
    %p54 = por %p52, %p53
    %p55 = scmp.ne.s32.totalorder %s46, %s47
    %p56 = scmp.eq.s32.totalorder %s15, 0
    %p57 = por %p55, %p56
    %p58 = scmp.ne.s32.totalorder %s46, %s47
    %p59 = scmp.eq.s32.totalorder %s16, 1
    %p60 = por %p58, %p59
    %p62 = scmp.ne.s32.totalorder %s47, %s61
    %p63 = scmp.eq.s32.totalorder %s16, 0
    %p64 = por %p62, %p63
    %s65 = ssub.s32 %s10, %s17
    %p66 = scmp.eq.s32.totalorder %s65, 0
    %s68 = sadd.s32 %s67, 1
    %s69 = scalar_select %p66, %s67, %s68
    %p72 = pneg %p66
    %p73 = scmp.eq.s32.totalorder %s10, 1
    %p74 = por %p72, %p73
    %p75 = scmp.ne.s32.totalorder %s67, %s70
    %p76 = scmp.eq.s32.totalorder %s10, 0
    %p77 = por %p75, %p76
    %p78 = scmp.ne.s32.totalorder %s67, %s70
    %p79 = scmp.eq.s32.totalorder %s15, 1
    %p80 = por %p78, %p79
    %p81 = scmp.ne.s32.totalorder %s70, %s71
    %p82 = scmp.eq.s32.totalorder %s15, 0
    %p83 = por %p81, %p82
    %p84 = scmp.ne.s32.totalorder %s70, %s71
    %p85 = scmp.eq.s32.totalorder %s16, 1
    %p86 = por %p84, %p85
    %p88 = scmp.ne.s32.totalorder %s71, %s87
    %p89 = scmp.eq.s32.totalorder %s16, 0
    %p90 = por %p88, %p89
    %s91 = ssub.s32 %s10, %s17
    %p92 = scmp.eq.s32.totalorder %s91, 0
    %s94 = sadd.s32 %s93, 1
    %s95 = scalar_select %p92, %s93, %s94
    %p98 = pneg %p92
    %p99 = scmp.eq.s32.totalorder %s10, 1
    %p100 = por %p98, %p99
    %p101 = scmp.ne.s32.totalorder %s93, %s96
    %p102 = scmp.eq.s32.totalorder %s10, 0
    %p103 = por %p101, %p102
    %p104 = scmp.ne.s32.totalorder %s93, %s96
    %p105 = scmp.eq.s32.totalorder %s15, 1
    %p106 = por %p104, %p105
    %p107 = scmp.ne.s32.totalorder %s96, %s97
    %p108 = scmp.eq.s32.totalorder %s15, 0
    %p109 = por %p107, %p108
    %p110 = scmp.ne.s32.totalorder %s96, %s97
    %p111 = scmp.eq.s32.totalorder %s16, 1
    %p112 = por %p110, %p111
    %p114 = scmp.ne.s32.totalorder %s97, %s113
    %p115 = scmp.eq.s32.totalorder %s16, 0
    %p116 = por %p114, %p115
    %p117 = scmp.le.s32.totalorder 1, %s10
    %p118 = scmp.lt.s32.totalorder %s10, 3
    %p119 = pnand %p117, %p118
    %p120 = pneg %p119
    // Predicated region
    $region9: #{_lambda_.4} parent=5 // pred_check
      _
    $region10: #{_lambda_.4} parent=5 // pred_check_branch
      %122 = sbr.rel (%p119) target = $region12
    $region11: #{_lambda_.4} parent=5 // pred_region
      %s123 = ssub.s32 %s10, 1
      // Predicated region
      $region13: #{_lambda_.4} parent=11 // pred_check
        %p124 = pneg %p57
      $region14: #{_lambda_.4} parent=11 // pred_check_branch
        %126 = sbr.rel (%p124) target = $region16
      $region15: #{_lambda_.4} parent=11 // pred_region
        _
      $region16: #{_lambda_.4} parent=11 // pred_fallthru
        _
    $region12: #{_lambda_.4} parent=5 // pred_fallthru
      _
    %p127 = scmp.lt.s32.totalorder %s10, 2
    // Predicated region
    $region17: #{_lambda_.4} parent=5 // pred_check
      %p128 = pneg %p127
    $region18: #{_lambda_.4} parent=5 // pred_check_branch
      %130 = sbr.rel (%p128) target = $region20
    $region19: #{_lambda_.4} parent=5 // pred_region
      // Predicated region
      $region21: #{_lambda_.4} parent=19 // pred_check
        %p131 = pneg %p30
      $region22: #{_lambda_.4} parent=19 // pred_check_branch
        %133 = sbr.rel (%p131) target = $region24
      $region23: #{_lambda_.4} parent=19 // pred_region
        %p134 = scmp.lt.s32.totalorder %s10, 1
        %s135 = scalar_select %p134, %s10, 1
        %s136 = smul.addr %s135, 32
        %s137 = smul.addr %s136, 4
        %s138 = scalar_lea.vmem %s0, %s137
      $region24: #{_lambda_.4} parent=19 // pred_fallthru
        _
    $region20: #{_lambda_.4} parent=5 // pred_fallthru
      _
    %p139 = scmp.le.s32.totalorder 1, %s10
    %p140 = scmp.lt.s32.totalorder %s10, 3
    %p141 = pnand %p139, %p140
    %p142 = pneg %p141
    // Predicated region
    $region25: #{_lambda_.4} parent=5 // pred_check
      _
    $region26: #{_lambda_.4} parent=5 // pred_check_branch
      %144 = sbr.rel (%p141) target = $region28
    $region27: #{_lambda_.4} parent=5 // pred_region
      %s145 = ssub.s32 %s10, 1
      %p146 = scmp.lt.s32.totalorder %s15, 1
      %s147 = scalar_select %p146, %s15, 1
      %s148 = smul.addr %s147, 32
      %s149 = smul.addr %s148, 4
      %s150 = scalar_lea.vmem %s0, %s149
      %p151 = pneg %p36
      %p152 = pneg %p33
      %p153 = pneg %p57
      %p154 = pneg %p54
      %p155 = pneg %p83
      %p156 = pneg %p80
      %p157 = scmp.lt.s32.totalorder %s15, 1
      %s158 = scalar_select %p157, %s15, 1
      %s159 = smul.addr %s158, 32
      %s160 = smul.addr %s159, 4
      %s161 = scalar_lea.vmem %s2, %s160
      %p162 = pneg %p109
      %p163 = pneg %p106
      %p164 = scmp.lt.s32.totalorder %s15, 1
      %s165 = scalar_select %p164, %s15, 1
      %s166 = smul.addr %s165, 2
      %s167 = scalar_lea.vmem %s3, %s166
      %p168 = scmp.lt.s32.totalorder %s15, 1
      %s169 = scalar_select %p168, %s15, 1
      %s170 = smul.addr %s169, 32
      %s171 = smul.addr %s170, 4
      %s172 = scalar_lea.vmem %s0, %s171
      %p173 = scmp.lt.s32.totalorder %s15, 1
      %s174 = scalar_select %p173, %s15, 1
      %s175 = smul.addr %s174, 32
      %s176 = smul.addr %s175, 4
      %s177 = scalar_lea.vmem %s2, %s176
      %p178 = scmp.lt.s32.totalorder %s15, 1
      %s179 = scalar_select %p178, %s15, 1
      %s180 = smul.addr %s179, 2
      %s181 = scalar_lea.vmem %s3, %s180
      %v183 = vld [vmem:[%s172] sm:$0xf]
      %v184 = vld [vmem:[%s172 + $0x4] sm:$0xf]
      %v185 = vld [vmem:[%s172 + $0x8] sm:$0xf]
      %v186 = vld [vmem:[%s172 + $0xc] sm:$0xf]
      %v187 = vld [vmem:[%s172 + $0x10] sm:$0xf]
      %v188 = vld [vmem:[%s172 + $0x14] sm:$0xf]
      %v189 = vld [vmem:[%s172 + $0x18] sm:$0xf]
      %v190 = vld [vmem:[%s172 + $0x1c] sm:$0xf]
      %v191 = vld [vmem:[%s172 + $0x20] sm:$0xf]
      %v192 = vld [vmem:[%s172 + $0x24] sm:$0xf]
      %v193 = vld [vmem:[%s172 + $0x28] sm:$0xf]
      %v194 = vld [vmem:[%s172 + $0x2c] sm:$0xf]
      %v195 = vld [vmem:[%s172 + $0x30] sm:$0xf]
      %v196 = vld [vmem:[%s172 + $0x34] sm:$0xf]
      %v197 = vld [vmem:[%s172 + $0x38] sm:$0xf]
      %v198 = vld [vmem:[%s172 + $0x3c] sm:$0xf]
      %v199 = vld [vmem:[%s172 + $0x40] sm:$0xf]
      %v200 = vld [vmem:[%s172 + $0x44] sm:$0xf]
      %v201 = vld [vmem:[%s172 + $0x48] sm:$0xf]
      %v202 = vld [vmem:[%s172 + $0x4c] sm:$0xf]
      %v203 = vld [vmem:[%s172 + $0x50] sm:$0xf]
      %v204 = vld [vmem:[%s172 + $0x54] sm:$0xf]
      %v205 = vld [vmem:[%s172 + $0x58] sm:$0xf]
      %v206 = vld [vmem:[%s172 + $0x5c] sm:$0xf]
      %v207 = vld [vmem:[%s172 + $0x60] sm:$0xf]
      %v208 = vld [vmem:[%s172 + $0x64] sm:$0xf]
      %v209 = vld [vmem:[%s172 + $0x68] sm:$0xf]
      %v210 = vld [vmem:[%s172 + $0x6c] sm:$0xf]
      %v211 = vld [vmem:[%s172 + $0x70] sm:$0xf]
      %v212 = vld [vmem:[%s172 + $0x74] sm:$0xf]
      %v213 = vld [vmem:[%s172 + $0x78] sm:$0xf]
      %v214 = vld [vmem:[%s172 + $0x7c] sm:$0xf]
      %v215 = vld [vmem:[%s1] sm:$0xf]
      %v216 = vld [vmem:[%s1 + $0x4] sm:$0xf]
      %v217 = vld [vmem:[%s1 + $0x8] sm:$0xf]
      %v218 = vld [vmem:[%s1 + $0xc] sm:$0xf]
      %v251 = vunpack.c.l.b16 %v183
      %v252 = vunpack.c.l.b16 %v184
      %v253 = vunpack.c.l.b16 %v185
      %v254 = vunpack.c.l.b16 %v186
      %v255 = vunpack.c.l.b16 %v187
      %v256 = vunpack.c.l.b16 %v188
      %v257 = vunpack.c.l.b16 %v189
      %v258 = vunpack.c.l.b16 %v190
      %v259 = vunpack.c.l.b16 %v191
      %v260 = vunpack.c.l.b16 %v192
      %v261 = vunpack.c.l.b16 %v193
      %v262 = vunpack.c.l.b16 %v194
      %v263 = vunpack.c.l.b16 %v195
      %v264 = vunpack.c.l.b16 %v196
      %v265 = vunpack.c.l.b16 %v197
      %v266 = vunpack.c.l.b16 %v198
      %v267 = vunpack.c.l.b16 %v199
      %v268 = vunpack.c.l.b16 %v200
      %v269 = vunpack.c.l.b16 %v201
      %v270 = vunpack.c.l.b16 %v202
      %v271 = vunpack.c.l.b16 %v203
      %v272 = vunpack.c.l.b16 %v204
      %v273 = vunpack.c.l.b16 %v205
      %v274 = vunpack.c.l.b16 %v206
      %v275 = vunpack.c.l.b16 %v207
      %v276 = vunpack.c.l.b16 %v208
      %v277 = vunpack.c.l.b16 %v209
      %v278 = vunpack.c.l.b16 %v210
      %v279 = vunpack.c.l.b16 %v211
      %v280 = vunpack.c.l.b16 %v212
      %v281 = vunpack.c.l.b16 %v213
      %v282 = vunpack.c.l.b16 %v214
      %v283 = vpack.c.b16 %v252, %v251
      %v284 = vpack.c.b16 %v254, %v253
      %v285 = vpack.c.b16 %v256, %v255
      %v286 = vpack.c.b16 %v258, %v257
      %v287 = vpack.c.b16 %v260, %v259
      %v288 = vpack.c.b16 %v262, %v261
      %v289 = vpack.c.b16 %v264, %v263
      %v290 = vpack.c.b16 %v266, %v265
      %v291 = vpack.c.b16 %v268, %v267
      %v292 = vpack.c.b16 %v270, %v269
      %v293 = vpack.c.b16 %v272, %v271
      %v294 = vpack.c.b16 %v274, %v273
      %v295 = vpack.c.b16 %v276, %v275
      %v296 = vpack.c.b16 %v278, %v277
      %v297 = vpack.c.b16 %v280, %v279
      %v298 = vpack.c.b16 %v282, %v281
      %v303 = vunpack.c.l.b16 %v215
      %v304 = vunpack.c.l.b16 %v216
      %v305 = vunpack.c.l.b16 %v217
      %v306 = vunpack.c.l.b16 %v218
      %v307 = vpack.c.b16 %v304, %v303
      %v308 = vpack.c.b16 %v306, %v305
      %vm311 = vcmask 261120
      %v313 = vsel %vm311, %v283, 0
      %v316 = vsel %vm311, %v284, 0
      %v319 = vsel %vm311, %v285, 0
      %v322 = vsel %vm311, %v286, 0
      %v325 = vsel %vm311, %v287, 0
      %v328 = vsel %vm311, %v288, 0
      %v331 = vsel %vm311, %v289, 0
      %v334 = vsel %vm311, %v290, 0
      %v337 = vsel %vm311, %v291, 0
      %v340 = vsel %vm311, %v292, 0
      %v343 = vsel %vm311, %v293, 0
      %v346 = vsel %vm311, %v294, 0
      %v349 = vsel %vm311, %v295, 0
      %v352 = vsel %vm311, %v296, 0
      %v355 = vsel %vm311, %v297, 0
      %v358 = vsel %vm311, %v298, 0
      %360 = vmatpush.bf16.msra.mxu0 0
      %361 = vmatpush.bf16.msra.mxu0 0
      %362 = vmatpush.bf16.msra.mxu0 0
      %363 = vmatpush.bf16.msra.mxu0 0
      %364 = vmatpush.bf16.msra.mxu0 0
      %365 = vmatpush.bf16.msra.mxu0 0
      %366 = vmatpush.bf16.msra.mxu0 %v308
      %367 = vmatpush.bf16.msra.mxu0 %v307
      %368 = vmatmul.bf16.gmra.mxu0 %v313
      %v369 = vpop.f32.mrf.mxu0
      %v370 = vadd.f32 0.0, %v369
      %v371 = vpop.f32.mrf.mxu0
      %v372 = vadd.f32 0.0, %v371
      %373 = vmatmul.bf16.gmra.mxu0 %v316
      %v374 = vpop.f32.mrf.mxu0
      %v375 = vadd.f32 0.0, %v374
      %v376 = vpop.f32.mrf.mxu0
      %v377 = vadd.f32 0.0, %v376
      %378 = vmatmul.bf16.gmra.mxu0 %v319
      %v379 = vpop.f32.mrf.mxu0
      %v380 = vadd.f32 0.0, %v379
      %v381 = vpop.f32.mrf.mxu0
      %v382 = vadd.f32 0.0, %v381
      %383 = vmatmul.bf16.gmra.mxu0 %v322
      %v384 = vpop.f32.mrf.mxu0
      %v385 = vadd.f32 0.0, %v384
      %v386 = vpop.f32.mrf.mxu0
      %v387 = vadd.f32 0.0, %v386
      %388 = vmatmul.bf16.gmra.mxu0 %v325
      %v389 = vpop.f32.mrf.mxu0
      %v390 = vadd.f32 0.0, %v389
      %v391 = vpop.f32.mrf.mxu0
      %v392 = vadd.f32 0.0, %v391
      %393 = vmatmul.bf16.gmra.mxu0 %v328
      %v394 = vpop.f32.mrf.mxu0
      %v395 = vadd.f32 0.0, %v394
      %v396 = vpop.f32.mrf.mxu0
      %v397 = vadd.f32 0.0, %v396
      %398 = vmatmul.bf16.gmra.mxu0 %v331
      %v399 = vpop.f32.mrf.mxu0
      %v400 = vadd.f32 0.0, %v399
      %v401 = vpop.f32.mrf.mxu0
      %v402 = vadd.f32 0.0, %v401
      %403 = vmatmul.bf16.gmra.mxu0 %v334
      %v404 = vpop.f32.mrf.mxu0
      %v405 = vadd.f32 0.0, %v404
      %v406 = vpop.f32.mrf.mxu0
      %v407 = vadd.f32 0.0, %v406
      %408 = vmatmul.bf16.gmra.mxu0 %v337
      %v409 = vpop.f32.mrf.mxu0
      %v410 = vadd.f32 0.0, %v409
      %v411 = vpop.f32.mrf.mxu0
      %v412 = vadd.f32 0.0, %v411
      %413 = vmatmul.bf16.gmra.mxu0 %v340
      %v414 = vpop.f32.mrf.mxu0
      %v415 = vadd.f32 0.0, %v414
      %v416 = vpop.f32.mrf.mxu0
      %v417 = vadd.f32 0.0, %v416
      %418 = vmatmul.bf16.gmra.mxu0 %v343
      %v419 = vpop.f32.mrf.mxu0
      %v420 = vadd.f32 0.0, %v419
      %v421 = vpop.f32.mrf.mxu0
      %v422 = vadd.f32 0.0, %v421
      %423 = vmatmul.bf16.gmra.mxu0 %v346
      %v424 = vpop.f32.mrf.mxu0
      %v425 = vadd.f32 0.0, %v424
      %v426 = vpop.f32.mrf.mxu0
      %v427 = vadd.f32 0.0, %v426
      %428 = vmatmul.bf16.gmra.mxu0 %v349
      %v429 = vpop.f32.mrf.mxu0
      %v430 = vadd.f32 0.0, %v429
      %v431 = vpop.f32.mrf.mxu0
      %v432 = vadd.f32 0.0, %v431
      %433 = vmatmul.bf16.gmra.mxu0 %v352
      %v434 = vpop.f32.mrf.mxu0
      %v435 = vadd.f32 0.0, %v434
      %v436 = vpop.f32.mrf.mxu0
      %v437 = vadd.f32 0.0, %v436
      %438 = vmatmul.bf16.gmra.mxu0 %v355
      %v439 = vpop.f32.mrf.mxu0
      %v440 = vadd.f32 0.0, %v439
      %v441 = vpop.f32.mrf.mxu0
      %v442 = vadd.f32 0.0, %v441
      %443 = vmatmul.bf16.gmra.mxu0 %v358
      %v444 = vpop.f32.mrf.mxu0
      %v445 = vadd.f32 0.0, %v444
      %v446 = vpop.f32.mrf.mxu0
      %v447 = vadd.f32 0.0, %v446
      %448 = vdwg.mxu0
      %v449 = vpack.c.bf16 %v370, %v370
      %v450 = vpack.c.bf16 %v372, %v372
      %v451 = vpack.c.bf16 %v375, %v375
      %v452 = vpack.c.bf16 %v377, %v377
      %v453 = vpack.c.bf16 %v380, %v380
      %v454 = vpack.c.bf16 %v382, %v382
      %v455 = vpack.c.bf16 %v385, %v385
      %v456 = vpack.c.bf16 %v387, %v387
      %v457 = vpack.c.bf16 %v390, %v390
      %v458 = vpack.c.bf16 %v392, %v392
      %v459 = vpack.c.bf16 %v395, %v395
      %v460 = vpack.c.bf16 %v397, %v397
      %v461 = vpack.c.bf16 %v400, %v400
      %v462 = vpack.c.bf16 %v402, %v402
      %v463 = vpack.c.bf16 %v405, %v405
      %v464 = vpack.c.bf16 %v407, %v407
      %v465 = vpack.c.bf16 %v410, %v410
      %v466 = vpack.c.bf16 %v412, %v412
      %v467 = vpack.c.bf16 %v415, %v415
      %v468 = vpack.c.bf16 %v417, %v417
      %v469 = vpack.c.bf16 %v420, %v420
      %v470 = vpack.c.bf16 %v422, %v422
      %v471 = vpack.c.bf16 %v425, %v425
      %v472 = vpack.c.bf16 %v427, %v427
      %v473 = vpack.c.bf16 %v430, %v430
      %v474 = vpack.c.bf16 %v432, %v432
      %v475 = vpack.c.bf16 %v435, %v435
      %v476 = vpack.c.bf16 %v437, %v437
      %v477 = vpack.c.bf16 %v440, %v440
      %v478 = vpack.c.bf16 %v442, %v442
      %v479 = vpack.c.bf16 %v445, %v445
      %v480 = vpack.c.bf16 %v447, %v447
      %vm481 = vcmask 191488
      %482 = vst.msk [vmem:[%s177] sm:$0xf] %vm481, %v449
      %483 = vst.msk [vmem:[%s177 + $0x4] sm:$0xf] %vm481, %v450
      %484 = vst.msk [vmem:[%s177 + $0x8] sm:$0xf] %vm481, %v451
      %485 = vst.msk [vmem:[%s177 + $0xc] sm:$0xf] %vm481, %v452
      %486 = vst.msk [vmem:[%s177 + $0x10] sm:$0xf] %vm481, %v453
      %487 = vst.msk [vmem:[%s177 + $0x14] sm:$0xf] %vm481, %v454
      %488 = vst.msk [vmem:[%s177 + $0x18] sm:$0xf] %vm481, %v455
      %489 = vst.msk [vmem:[%s177 + $0x1c] sm:$0xf] %vm481, %v456
      %490 = vst.msk [vmem:[%s177 + $0x20] sm:$0xf] %vm481, %v457
      %491 = vst.msk [vmem:[%s177 + $0x24] sm:$0xf] %vm481, %v458
      %492 = vst.msk [vmem:[%s177 + $0x28] sm:$0xf] %vm481, %v459
      %493 = vst.msk [vmem:[%s177 + $0x2c] sm:$0xf] %vm481, %v460
      %494 = vst.msk [vmem:[%s177 + $0x30] sm:$0xf] %vm481, %v461
      %495 = vst.msk [vmem:[%s177 + $0x34] sm:$0xf] %vm481, %v462
      %496 = vst.msk [vmem:[%s177 + $0x38] sm:$0xf] %vm481, %v463
      %497 = vst.msk [vmem:[%s177 + $0x3c] sm:$0xf] %vm481, %v464
      %498 = vst.msk [vmem:[%s177 + $0x40] sm:$0xf] %vm481, %v465
      %499 = vst.msk [vmem:[%s177 + $0x44] sm:$0xf] %vm481, %v466
      %500 = vst.msk [vmem:[%s177 + $0x48] sm:$0xf] %vm481, %v467
      %501 = vst.msk [vmem:[%s177 + $0x4c] sm:$0xf] %vm481, %v468
      %502 = vst.msk [vmem:[%s177 + $0x50] sm:$0xf] %vm481, %v469
      %503 = vst.msk [vmem:[%s177 + $0x54] sm:$0xf] %vm481, %v470
      %504 = vst.msk [vmem:[%s177 + $0x58] sm:$0xf] %vm481, %v471
      %505 = vst.msk [vmem:[%s177 + $0x5c] sm:$0xf] %vm481, %v472
      %506 = vst.msk [vmem:[%s177 + $0x60] sm:$0xf] %vm481, %v473
      %507 = vst.msk [vmem:[%s177 + $0x64] sm:$0xf] %vm481, %v474
      %508 = vst.msk [vmem:[%s177 + $0x68] sm:$0xf] %vm481, %v475
      %509 = vst.msk [vmem:[%s177 + $0x6c] sm:$0xf] %vm481, %v476
      %510 = vst.msk [vmem:[%s177 + $0x70] sm:$0xf] %vm481, %v477
      %511 = vst.msk [vmem:[%s177 + $0x74] sm:$0xf] %vm481, %v478
      %512 = vst.msk [vmem:[%s177 + $0x78] sm:$0xf] %vm481, %v479
      %513 = vst.msk [vmem:[%s177 + $0x7c] sm:$0xf] %vm481, %v480
      %vm514 = vcmask 195584
      %v515 = vsel %vm514, %v370, 0.0
      %v516 = vsel %vm514, %v372, 0.0
      %v517 = vadd.f32 %v515, %v516
      %v518 = vsel %vm514, %v375, 0.0
      %v519 = vadd.f32 %v517, %v518
      %v520 = vsel %vm514, %v377, 0.0
      %v521 = vadd.f32 %v519, %v520
      %v522 = vsel %vm514, %v380, 0.0
      %v523 = vadd.f32 %v521, %v522
      %v524 = vsel %vm514, %v382, 0.0
      %v525 = vadd.f32 %v523, %v524
      %v526 = vsel %vm514, %v385, 0.0
      %v527 = vadd.f32 %v525, %v526
      %v528 = vsel %vm514, %v387, 0.0
      %v529 = vadd.f32 %v527, %v528
      %v530 = vsel %vm514, %v390, 0.0
      %v531 = vadd.f32 %v529, %v530
      %v532 = vsel %vm514, %v392, 0.0
      %v533 = vadd.f32 %v531, %v532
      %v534 = vsel %vm514, %v395, 0.0
      %v535 = vadd.f32 %v533, %v534
      %v536 = vsel %vm514, %v397, 0.0
      %v537 = vadd.f32 %v535, %v536
      %v538 = vsel %vm514, %v400, 0.0
      %v539 = vadd.f32 %v537, %v538
      %v540 = vsel %vm514, %v402, 0.0
      %v541 = vadd.f32 %v539, %v540
      %v542 = vsel %vm514, %v405, 0.0
      %v543 = vadd.f32 %v541, %v542
      %v544 = vsel %vm514, %v407, 0.0
      %v545 = vadd.f32 %v543, %v544
      %v546 = vsel %vm514, %v410, 0.0
      %v547 = vadd.f32 %v545, %v546
      %v548 = vsel %vm514, %v412, 0.0
      %v549 = vadd.f32 %v547, %v548
      %v550 = vsel %vm514, %v415, 0.0
      %v551 = vadd.f32 %v549, %v550
      %v552 = vsel %vm514, %v417, 0.0
      %v553 = vadd.f32 %v551, %v552
      %v554 = vsel %vm514, %v420, 0.0
      %v555 = vadd.f32 %v553, %v554
      %v556 = vsel %vm514, %v422, 0.0
      %v557 = vadd.f32 %v555, %v556
      %v558 = vsel %vm514, %v425, 0.0
      %v559 = vadd.f32 %v557, %v558
      %v560 = vsel %vm514, %v427, 0.0
      %v561 = vadd.f32 %v559, %v560
      %v562 = vsel %vm514, %v430, 0.0
      %v563 = vadd.f32 %v561, %v562
      %v564 = vsel %vm514, %v432, 0.0
      %v565 = vadd.f32 %v563, %v564
      %v566 = vsel %vm514, %v435, 0.0
      %v567 = vadd.f32 %v565, %v566
      %v568 = vsel %vm514, %v437, 0.0
      %v569 = vadd.f32 %v567, %v568
      %v570 = vsel %vm514, %v440, 0.0
      %v571 = vadd.f32 %v569, %v570
      %v572 = vsel %vm514, %v442, 0.0
      %v573 = vadd.f32 %v571, %v572
      %v574 = vsel %vm514, %v445, 0.0
      %v575 = vadd.f32 %v573, %v574
      %v576 = vsel %vm514, %v447, 0.0
      %v577 = vadd.f32 %v575, %v576
      %v578 = vrot.slane %v577, 4
      %v579 = vadd.f32 %v577, %v578
      %v580 = vrot.slane %v579, 2
      %v581 = vadd.f32 %v579, %v580
      %v582 = vrot.slane %v581, 1
      %v583 = vadd.f32 %v581, %v582
      %v584 = vmul.f32 %v370, %v370
      %v585 = vmul.f32 %v372, %v372
      %v586 = vmul.f32 %v375, %v375
      %v587 = vmul.f32 %v377, %v377
      %v588 = vmul.f32 %v380, %v380
      %v589 = vmul.f32 %v382, %v382
      %v590 = vmul.f32 %v385, %v385
      %v591 = vmul.f32 %v387, %v387
      %v592 = vmul.f32 %v390, %v390
      %v593 = vmul.f32 %v392, %v392
      %v594 = vmul.f32 %v395, %v395
      %v595 = vmul.f32 %v397, %v397
      %v596 = vmul.f32 %v400, %v400
      %v597 = vmul.f32 %v402, %v402
      %v598 = vmul.f32 %v405, %v405
      %v599 = vmul.f32 %v407, %v407
      %v600 = vmul.f32 %v410, %v410
      %v601 = vmul.f32 %v412, %v412
      %v602 = vmul.f32 %v415, %v415
      %v603 = vmul.f32 %v417, %v417
      %v604 = vmul.f32 %v420, %v420
      %v605 = vmul.f32 %v422, %v422
      %v606 = vmul.f32 %v425, %v425
      %v607 = vmul.f32 %v427, %v427
      %v608 = vmul.f32 %v430, %v430
      %v609 = vmul.f32 %v432, %v432
      %v610 = vmul.f32 %v435, %v435
      %v611 = vmul.f32 %v437, %v437
      %v612 = vmul.f32 %v440, %v440
      %v613 = vmul.f32 %v442, %v442
      %v614 = vmul.f32 %v445, %v445
      %v615 = vmul.f32 %v447, %v447
      %v616 = vsel %vm514, %v584, 0.0
      %v617 = vsel %vm514, %v585, 0.0
      %v618 = vadd.f32 %v616, %v617
      %v619 = vsel %vm514, %v586, 0.0
      %v620 = vadd.f32 %v618, %v619
      %v621 = vsel %vm514, %v587, 0.0
      %v622 = vadd.f32 %v620, %v621
      %v623 = vsel %vm514, %v588, 0.0
      %v624 = vadd.f32 %v622, %v623
      %v625 = vsel %vm514, %v589, 0.0
      %v626 = vadd.f32 %v624, %v625
      %v627 = vsel %vm514, %v590, 0.0
      %v628 = vadd.f32 %v626, %v627
      %v629 = vsel %vm514, %v591, 0.0
      %v630 = vadd.f32 %v628, %v629
      %v631 = vsel %vm514, %v592, 0.0
      %v632 = vadd.f32 %v630, %v631
      %v633 = vsel %vm514, %v593, 0.0
      %v634 = vadd.f32 %v632, %v633
      %v635 = vsel %vm514, %v594, 0.0
      %v636 = vadd.f32 %v634, %v635
      %v637 = vsel %vm514, %v595, 0.0
      %v638 = vadd.f32 %v636, %v637
      %v639 = vsel %vm514, %v596, 0.0
      %v640 = vadd.f32 %v638, %v639
      %v641 = vsel %vm514, %v597, 0.0
      %v642 = vadd.f32 %v640, %v641
      %v643 = vsel %vm514, %v598, 0.0
      %v644 = vadd.f32 %v642, %v643
      %v645 = vsel %vm514, %v599, 0.0
      %v646 = vadd.f32 %v644, %v645
      %v647 = vsel %vm514, %v600, 0.0
      %v648 = vadd.f32 %v646, %v647
      %v649 = vsel %vm514, %v601, 0.0
      %v650 = vadd.f32 %v648, %v649
      %v651 = vsel %vm514, %v602, 0.0
      %v652 = vadd.f32 %v650, %v651
      %v653 = vsel %vm514, %v603, 0.0
      %v654 = vadd.f32 %v652, %v653
      %v655 = vsel %vm514, %v604, 0.0
      %v656 = vadd.f32 %v654, %v655
      %v657 = vsel %vm514, %v605, 0.0
      %v658 = vadd.f32 %v656, %v657
      %v659 = vsel %vm514, %v606, 0.0
      %v660 = vadd.f32 %v658, %v659
      %v661 = vsel %vm514, %v607, 0.0
      %v662 = vadd.f32 %v660, %v661
      %v663 = vsel %vm514, %v608, 0.0
      %v664 = vadd.f32 %v662, %v663
      %v665 = vsel %vm514, %v609, 0.0
      %v666 = vadd.f32 %v664, %v665
      %v667 = vsel %vm514, %v610, 0.0
      %v668 = vadd.f32 %v666, %v667
      %v669 = vsel %vm514, %v611, 0.0
      %v670 = vadd.f32 %v668, %v669
      %v671 = vsel %vm514, %v612, 0.0
      %v672 = vadd.f32 %v670, %v671
      %v673 = vsel %vm514, %v613, 0.0
      %v674 = vadd.f32 %v672, %v673
      %v675 = vsel %vm514, %v614, 0.0
      %v676 = vadd.f32 %v674, %v675
      %v677 = vsel %vm514, %v615, 0.0
      %v678 = vadd.f32 %v676, %v677
      %v679 = vrot.slane %v678, 4
      %v680 = vadd.f32 %v678, %v679
      %v681 = vrot.slane %v680, 2
      %v682 = vadd.f32 %v680, %v681
      %v683 = vrot.slane %v682, 1
      %v684 = vadd.f32 %v682, %v683
      %vm685 = vcmask 1040384
      %v686 = vsel %vm685, %v583, %v684
      %vm687 = vcmask 189440
      %688 = vst.msk [vmem:[%s181] sm:$0x3] %vm687, %v686
      %p689 = scmp.lt.s32.totalorder %s15, 1
      %s690 = scalar_select %p689, %s15, 1
      %s691 = smul.addr %s690, 32
      %s692 = smul.addr %s691, 4
      %s693 = scalar_lea.vmem %s2, %s692
      %p694 = scmp.lt.s32.totalorder %s15, 1
      %s695 = scalar_select %p694, %s15, 1
      %s696 = smul.addr %s695, 2
      %s697 = scalar_lea.vmem %s3, %s696
      // Predicated region
      $region29: #{_lambda_.4} parent=27 // pred_check
        %p698 = pneg %p80
      $region30: #{_lambda_.4} parent=27 // pred_check_branch
        %700 = sbr.rel (%p698) target = $region32
      $region31: #{_lambda_.4} parent=27 // pred_region
        _
      $region32: #{_lambda_.4} parent=27 // pred_fallthru
        _
      // Predicated region
      $region33: #{_lambda_.4} parent=27 // pred_check
        %p701 = pneg %p106
      $region34: #{_lambda_.4} parent=27 // pred_check_branch
        %703 = sbr.rel (%p701) target = $region36
      $region35: #{_lambda_.4} parent=27 // pred_region
        _
      $region36: #{_lambda_.4} parent=27 // pred_fallthru
        _
    $region28: #{_lambda_.4} parent=5 // pred_fallthru
      _
    %p704 = scmp.le.s32.totalorder 2, %s10
    // Predicated region
    $region37: #{_lambda_.4} parent=5 // pred_check
      %p705 = pneg %p704
    $region38: #{_lambda_.4} parent=5 // pred_check_branch
      %707 = sbr.rel (%p705) target = $region40
    $region39: #{_lambda_.4} parent=5 // pred_region
      %s708 = ssub.s32 %s10, 2
      // Predicated region
      $region41: #{_lambda_.4} parent=39 // pred_check
        %p709 = pneg %p86
      $region42: #{_lambda_.4} parent=39 // pred_check_branch
        %711 = sbr.rel (%p709) target = $region44
      $region43: #{_lambda_.4} parent=39 // pred_region
        %p712 = scmp.lt.s32.totalorder %s16, 1
        %s713 = scalar_select %p712, %s16, 1
        %s714 = smul.addr %s713, 32
        %s715 = smul.addr %s714, 4
        %s716 = scalar_lea.vmem %s2, %s715
      $region44: #{_lambda_.4} parent=39 // pred_fallthru
        _
      // Predicated region
      $region45: #{_lambda_.4} parent=39 // pred_check
        %p717 = pneg %p112
      $region46: #{_lambda_.4} parent=39 // pred_check_branch
        %719 = sbr.rel (%p717) target = $region48
      $region47: #{_lambda_.4} parent=39 // pred_region
        %p720 = scmp.lt.s32.totalorder %s16, 1
        %s721 = scalar_select %p720, %s16, 1
        %s722 = smul.addr %s721, 2
        %s723 = scalar_lea.vmem %s3, %s722
      $region48: #{_lambda_.4} parent=39 // pred_fallthru
        _
    $region40: #{_lambda_.4} parent=5 // pred_fallthru
      _
  $region6: #{_lambda_.4} parent=0 // loop_footer
    %s14 = sadd.s32 1, %s10
  $region7: #{_lambda_.4} parent=0 // loop_footer_branch
    %9 = sbr.rel target = $region3
  $region8: #{_lambda_.4} parent=0 // loop_exit
    _

// kernel: _lambda_.6
$region0: #{_lambda_.6}
  #allocation0 [shape = 'u32[]', space=smem, size = 0x4, offset = 0x4, fixed_abs, tag = 'smem constant byte address 0x4 - core index']
  #allocation1 [shape = 'u32[72,128]{1,0:T(1,128)}', space=vmem, size = 0x9000, scoped, tag = 'internal scratch']
  %s0 = inlined_call_operand.vmem [shape: bf16[2,256,24], index: 0, kind: input, shape index: {}]
  %s1 = inlined_call_operand.vmem [shape: f32[1,24], index: 1, kind: input, shape index: {}]
  %s2 = inlined_call_operand.vmem [shape: f32[1,24], index: 2, kind: input, shape index: {}]
  %s3 = inlined_call_operand.vmem [shape: bf16[24,32], index: 3, kind: input, shape index: {}]
  %s4 = inlined_call_operand.vmem [shape: bf16[2,256,32], index: 4, kind: output, shape index: {0}]
  %s5 = inlined_call_operand.vmem [shape: f32[2,2,32], index: 5, kind: output, shape index: {1}]
  %6 = xla_tuple %s4, %s5
  %s7 = sld [smem:[#allocation0]]
  $region57: #{_lambda_.6} parent=0
    _
  %s9 = ssub.s32 1, %s7
  %s10 = scalar_select 0, %s9, %s7
  loop: start=0, step=1, limit=4
  $region2: #{_lambda_.6} parent=0 // loop_pre_header
    _
  $region3: #{_lambda_.6} parent=0 // loop_header
    %s12 = sphi 0, %s16
    %p13 = scmp.ge.s32.totalorder %s12, 4
    %s22 = sphi 0, %s24
    %s25 = sphi 0, %s22
    %s26 = sphi 0, %s25
    %s42 = sphi 0, %s26
    %s46 = sphi 0, %s46
    %s48 = sphi 0, %s46
    %s49 = sphi 0, %s48
    %s63 = sphi 0, %s49
    %s67 = sphi 0, %s67
    %s69 = sphi 0, %s67
    %s70 = sphi 0, %s69
    %s84 = sphi 0, %s70
    %s88 = sphi 0, %s88
    %s90 = sphi 0, %s88
    %s91 = sphi 0, %s90
    %s105 = sphi 0, %s91
    %s111 = sphi 0, %s113
    %s114 = sphi 0, %s111
    %s115 = sphi 0, %s114
    %s131 = sphi 0, %s115
    %s137 = sphi 0, %s139
    %s140 = sphi 0, %s137
    %s141 = sphi 0, %s140
    %s157 = sphi 0, %s141
  $region4: #{_lambda_.6} parent=0 // loop_header_branch
    %15 = sbr.rel (%p13) target = $region8
  $region5: #{_lambda_.6} parent=0 // loop_body
    %s17 = ssub.s32 %s12, 1
    %s18 = ssub.s32 %s12, 2
    %s19 = sadd.s32 %s12, 1
    %s20 = ssub.s32 %s12, %s19
    %p21 = scmp.eq.s32.totalorder %s20, 0
    %s23 = sadd.s32 %s22, 1
    %s24 = scalar_select %p21, %s22, %s23
    %p27 = pneg %p21
    %p28 = scmp.eq.s32.totalorder %s12, 1
    %p29 = por %p27, %p28
    %p30 = scmp.ne.s32.totalorder %s22, %s25
    %p31 = scmp.eq.s32.totalorder %s12, 0
    %p32 = por %p30, %p31
    %p33 = scmp.ne.s32.totalorder %s22, %s25
    %p34 = scmp.eq.s32.totalorder %s17, 1
    %p35 = por %p33, %p34
    %p36 = scmp.ne.s32.totalorder %s25, %s26
    %p37 = scmp.eq.s32.totalorder %s17, 0
    %p38 = por %p36, %p37
    %p39 = scmp.ne.s32.totalorder %s25, %s26
    %p40 = scmp.eq.s32.totalorder %s18, 1
    %p41 = por %p39, %p40
    %p43 = scmp.ne.s32.totalorder %s26, %s42
    %p44 = scmp.eq.s32.totalorder %s18, 0
    %p45 = por %p43, %p44
    %s47 = sadd.s32 %s46, 1
    %p50 = scmp.eq.s32.totalorder %s12, 1
    %p51 = scmp.ne.s32.totalorder %s46, %s48
    %p52 = scmp.eq.s32.totalorder %s12, 0
    %p53 = por %p51, %p52
    %p54 = scmp.ne.s32.totalorder %s46, %s48
    %p55 = scmp.eq.s32.totalorder %s17, 1
    %p56 = por %p54, %p55
    %p57 = scmp.ne.s32.totalorder %s48, %s49
    %p58 = scmp.eq.s32.totalorder %s17, 0
    %p59 = por %p57, %p58
    %p60 = scmp.ne.s32.totalorder %s48, %s49
    %p61 = scmp.eq.s32.totalorder %s18, 1
    %p62 = por %p60, %p61
    %p64 = scmp.ne.s32.totalorder %s49, %s63
    %p65 = scmp.eq.s32.totalorder %s18, 0
    %p66 = por %p64, %p65
    %s68 = sadd.s32 %s67, 1
    %p71 = scmp.eq.s32.totalorder %s12, 1
    %p72 = scmp.ne.s32.totalorder %s67, %s69
    %p73 = scmp.eq.s32.totalorder %s12, 0
    %p74 = por %p72, %p73
    %p75 = scmp.ne.s32.totalorder %s67, %s69
    %p76 = scmp.eq.s32.totalorder %s17, 1
    %p77 = por %p75, %p76
    %p78 = scmp.ne.s32.totalorder %s69, %s70
    %p79 = scmp.eq.s32.totalorder %s17, 0
    %p80 = por %p78, %p79
    %p81 = scmp.ne.s32.totalorder %s69, %s70
    %p82 = scmp.eq.s32.totalorder %s18, 1
    %p83 = por %p81, %p82
    %p85 = scmp.ne.s32.totalorder %s70, %s84
    %p86 = scmp.eq.s32.totalorder %s18, 0
    %p87 = por %p85, %p86
    %s89 = sadd.s32 %s88, 1
    %p92 = scmp.eq.s32.totalorder %s12, 1
    %p93 = scmp.ne.s32.totalorder %s88, %s90
    %p94 = scmp.eq.s32.totalorder %s12, 0
    %p95 = por %p93, %p94
    %p96 = scmp.ne.s32.totalorder %s88, %s90
    %p97 = scmp.eq.s32.totalorder %s17, 1
    %p98 = por %p96, %p97
    %p99 = scmp.ne.s32.totalorder %s90, %s91
    %p100 = scmp.eq.s32.totalorder %s17, 0
    %p101 = por %p99, %p100
    %p102 = scmp.ne.s32.totalorder %s90, %s91
    %p103 = scmp.eq.s32.totalorder %s18, 1
    %p104 = por %p102, %p103
    %p106 = scmp.ne.s32.totalorder %s91, %s105
    %p107 = scmp.eq.s32.totalorder %s18, 0
    %p108 = por %p106, %p107
    %s109 = ssub.s32 %s12, %s19
    %p110 = scmp.eq.s32.totalorder %s109, 0
    %s112 = sadd.s32 %s111, 1
    %s113 = scalar_select %p110, %s111, %s112
    %p116 = pneg %p110
    %p117 = scmp.eq.s32.totalorder %s12, 1
    %p118 = por %p116, %p117
    %p119 = scmp.ne.s32.totalorder %s111, %s114
    %p120 = scmp.eq.s32.totalorder %s12, 0
    %p121 = por %p119, %p120
    %p122 = scmp.ne.s32.totalorder %s111, %s114
    %p123 = scmp.eq.s32.totalorder %s17, 1
    %p124 = por %p122, %p123
    %p125 = scmp.ne.s32.totalorder %s114, %s115
    %p126 = scmp.eq.s32.totalorder %s17, 0
    %p127 = por %p125, %p126
    %p128 = scmp.ne.s32.totalorder %s114, %s115
    %p129 = scmp.eq.s32.totalorder %s18, 1
    %p130 = por %p128, %p129
    %p132 = scmp.ne.s32.totalorder %s115, %s131
    %p133 = scmp.eq.s32.totalorder %s18, 0
    %p134 = por %p132, %p133
    %s135 = ssub.s32 %s12, %s19
    %p136 = scmp.eq.s32.totalorder %s135, 0
    %s138 = sadd.s32 %s137, 1
    %s139 = scalar_select %p136, %s137, %s138
    %p142 = pneg %p136
    %p143 = scmp.eq.s32.totalorder %s12, 1
    %p144 = por %p142, %p143
    %p145 = scmp.ne.s32.totalorder %s137, %s140
    %p146 = scmp.eq.s32.totalorder %s12, 0
    %p147 = por %p145, %p146
    %p148 = scmp.ne.s32.totalorder %s137, %s140
    %p149 = scmp.eq.s32.totalorder %s17, 1
    %p150 = por %p148, %p149
    %p151 = scmp.ne.s32.totalorder %s140, %s141
    %p152 = scmp.eq.s32.totalorder %s17, 0
    %p153 = por %p151, %p152
    %p154 = scmp.ne.s32.totalorder %s140, %s141
    %p155 = scmp.eq.s32.totalorder %s18, 1
    %p156 = por %p154, %p155
    %p158 = scmp.ne.s32.totalorder %s141, %s157
    %p159 = scmp.eq.s32.totalorder %s18, 0
    %p160 = por %p158, %p159
    %p161 = scmp.le.s32.totalorder 1, %s12
    %p162 = scmp.lt.s32.totalorder %s12, 3
    %p163 = pnand %p161, %p162
    %p164 = pneg %p163
    // Predicated region
    $region9: #{_lambda_.6} parent=5 // pred_check
      _
    $region10: #{_lambda_.6} parent=5 // pred_check_branch
      %166 = sbr.rel (%p163) target = $region12
    $region11: #{_lambda_.6} parent=5 // pred_region
      %s167 = ssub.s32 %s12, 1
      // Predicated region
      $region13: #{_lambda_.6} parent=11 // pred_check
        %p168 = pneg %p59
      $region14: #{_lambda_.6} parent=11 // pred_check_branch
        %170 = sbr.rel (%p168) target = $region16
      $region15: #{_lambda_.6} parent=11 // pred_region
        _
      $region16: #{_lambda_.6} parent=11 // pred_fallthru
        _
      // Predicated region
      $region17: #{_lambda_.6} parent=11 // pred_check
        %p171 = pneg %p80
      $region18: #{_lambda_.6} parent=11 // pred_check_branch
        %173 = sbr.rel (%p171) target = $region20
      $region19: #{_lambda_.6} parent=11 // pred_region
        _
      $region20: #{_lambda_.6} parent=11 // pred_fallthru
        _
      // Predicated region
      $region21: #{_lambda_.6} parent=11 // pred_check
        %p174 = pneg %p101
      $region22: #{_lambda_.6} parent=11 // pred_check_branch
        %176 = sbr.rel (%p174) target = $region24
      $region23: #{_lambda_.6} parent=11 // pred_region
        _
      $region24: #{_lambda_.6} parent=11 // pred_fallthru
        _
    $region12: #{_lambda_.6} parent=5 // pred_fallthru
      _
    %p177 = scmp.lt.s32.totalorder %s12, 2
    // Predicated region
    $region25: #{_lambda_.6} parent=5 // pred_check
      %p178 = pneg %p177
    $region26: #{_lambda_.6} parent=5 // pred_check_branch
      %180 = sbr.rel (%p178) target = $region28
    $region27: #{_lambda_.6} parent=5 // pred_region
      // Predicated region
      $region29: #{_lambda_.6} parent=27 // pred_check
        %p181 = pneg %p32
      $region30: #{_lambda_.6} parent=27 // pred_check_branch
        %183 = sbr.rel (%p181) target = $region32
      $region31: #{_lambda_.6} parent=27 // pred_region
        %p184 = scmp.lt.s32.totalorder %s12, 1
        %s185 = scalar_select %p184, %s12, 1
        %s186 = smul.addr %s185, 32
        %s187 = smul.addr %s186, 4
        %s188 = scalar_lea.vmem %s0, %s187
      $region32: #{_lambda_.6} parent=27 // pred_fallthru
        _
    $region28: #{_lambda_.6} parent=5 // pred_fallthru
      _
    %p189 = scmp.le.s32.totalorder 1, %s12
    %p190 = scmp.lt.s32.totalorder %s12, 3
    %p191 = pnand %p189, %p190
    %p192 = pneg %p191
    // Predicated region
    $region33: #{_lambda_.6} parent=5 // pred_check
      _
    $region34: #{_lambda_.6} parent=5 // pred_check_branch
      %194 = sbr.rel (%p191) target = $region36
    $region35: #{_lambda_.6} parent=5 // pred_region
      %s195 = ssub.s32 %s12, 1
      %p196 = scmp.lt.s32.totalorder %s17, 1
      %s197 = scalar_select %p196, %s17, 1
      %s198 = smul.addr %s197, 32
      %s199 = smul.addr %s198, 4
      %s200 = scalar_lea.vmem %s0, %s199
      %p201 = pneg %p38
      %p202 = pneg %p35
      %p203 = pneg %p59
      %p204 = pneg %p56
      %p205 = pneg %p80
      %p206 = pneg %p77
      %p207 = pneg %p101
      %p208 = pneg %p98
      %p209 = pneg %p127
      %p210 = pneg %p124
      %p211 = scmp.lt.s32.totalorder %s17, 1
      %s212 = scalar_select %p211, %s17, 1
      %s213 = smul.addr %s212, 32
      %s214 = smul.addr %s213, 4
      %s215 = scalar_lea.vmem %s4, %s214
      %p216 = pneg %p153
      %p217 = pneg %p150
      %p218 = scmp.lt.s32.totalorder %s17, 1
      %s219 = scalar_select %p218, %s17, 1
      %s220 = smul.addr %s219, 2
      %s221 = scalar_lea.vmem %s5, %s220
      %p222 = scmp.lt.s32.totalorder %s17, 1
      %s223 = scalar_select %p222, %s17, 1
      %s224 = smul.addr %s223, 32
      %s225 = smul.addr %s224, 4
      %s226 = scalar_lea.vmem %s0, %s225
      %p227 = scmp.lt.s32.totalorder %s17, 1
      %s228 = scalar_select %p227, %s17, 1
      %s229 = smul.addr %s228, 32
      %s230 = smul.addr %s229, 4
      %s231 = scalar_lea.vmem %s4, %s230
      %p232 = scmp.lt.s32.totalorder %s17, 1
      %s233 = scalar_select %p232, %s17, 1
      %s234 = smul.addr %s233, 2
      %s235 = scalar_lea.vmem %s5, %s234
      %v237 = vld [vmem:[%s226] sm:$0xf]
      %v238 = vld [vmem:[%s226 + $0x4] sm:$0xf]
      %v239 = vld [vmem:[%s226 + $0x8] sm:$0xf]
      %v240 = vld [vmem:[%s226 + $0xc] sm:$0xf]
      %v241 = vld [vmem:[%s226 + $0x10] sm:$0xf]
      %v242 = vld [vmem:[%s226 + $0x14] sm:$0xf]
      %v243 = vld [vmem:[%s226 + $0x18] sm:$0xf]
      %v244 = vld [vmem:[%s226 + $0x1c] sm:$0xf]
      %v245 = vld [vmem:[%s226 + $0x20] sm:$0xf]
      %v246 = vld [vmem:[%s226 + $0x24] sm:$0xf]
      %v247 = vld [vmem:[%s226 + $0x28] sm:$0xf]
      %v248 = vld [vmem:[%s226 + $0x2c] sm:$0xf]
      %v249 = vld [vmem:[%s226 + $0x30] sm:$0xf]
      %v250 = vld [vmem:[%s226 + $0x34] sm:$0xf]
      %v251 = vld [vmem:[%s226 + $0x38] sm:$0xf]
      %v252 = vld [vmem:[%s226 + $0x3c] sm:$0xf]
      %v253 = vld [vmem:[%s226 + $0x40] sm:$0xf]
      %v254 = vld [vmem:[%s226 + $0x44] sm:$0xf]
      %v255 = vld [vmem:[%s226 + $0x48] sm:$0xf]
      %v256 = vld [vmem:[%s226 + $0x4c] sm:$0xf]
      %v257 = vld [vmem:[%s226 + $0x50] sm:$0xf]
      %v258 = vld [vmem:[%s226 + $0x54] sm:$0xf]
      %v259 = vld [vmem:[%s226 + $0x58] sm:$0xf]
      %v260 = vld [vmem:[%s226 + $0x5c] sm:$0xf]
      %v261 = vld [vmem:[%s226 + $0x60] sm:$0xf]
      %v262 = vld [vmem:[%s226 + $0x64] sm:$0xf]
      %v263 = vld [vmem:[%s226 + $0x68] sm:$0xf]
      %v264 = vld [vmem:[%s226 + $0x6c] sm:$0xf]
      %v265 = vld [vmem:[%s226 + $0x70] sm:$0xf]
      %v266 = vld [vmem:[%s226 + $0x74] sm:$0xf]
      %v267 = vld [vmem:[%s226 + $0x78] sm:$0xf]
      %v268 = vld [vmem:[%s226 + $0x7c] sm:$0xf]
      %v269 = vunpack.c.l.bf16 %v237
      %v270 = vunpack.c.l.bf16 %v238
      %v271 = vunpack.c.l.bf16 %v239
      %v272 = vunpack.c.l.bf16 %v240
      %v273 = vunpack.c.l.bf16 %v241
      %v274 = vunpack.c.l.bf16 %v242
      %v275 = vunpack.c.l.bf16 %v243
      %v276 = vunpack.c.l.bf16 %v244
      %v277 = vunpack.c.l.bf16 %v245
      %v278 = vunpack.c.l.bf16 %v246
      %v279 = vunpack.c.l.bf16 %v247
      %v280 = vunpack.c.l.bf16 %v248
      %v281 = vunpack.c.l.bf16 %v249
      %v282 = vunpack.c.l.bf16 %v250
      %v283 = vunpack.c.l.bf16 %v251
      %v284 = vunpack.c.l.bf16 %v252
      %v285 = vunpack.c.l.bf16 %v253
      %v286 = vunpack.c.l.bf16 %v254
      %v287 = vunpack.c.l.bf16 %v255
      %v288 = vunpack.c.l.bf16 %v256
      %v289 = vunpack.c.l.bf16 %v257
      %v290 = vunpack.c.l.bf16 %v258
      %v291 = vunpack.c.l.bf16 %v259
      %v292 = vunpack.c.l.bf16 %v260
      %v293 = vunpack.c.l.bf16 %v261
      %v294 = vunpack.c.l.bf16 %v262
      %v295 = vunpack.c.l.bf16 %v263
      %v296 = vunpack.c.l.bf16 %v264
      %v297 = vunpack.c.l.bf16 %v265
      %v298 = vunpack.c.l.bf16 %v266
      %v299 = vunpack.c.l.bf16 %v267
      %v300 = vunpack.c.l.bf16 %v268
      %v301 = vld [vmem:[%s1] sm:$0x1]
      %v303 = vperm.slane %v301, 0
      %v305 = vmul.f32 %v269, %v303
      %v306 = vmul.f32 %v270, %v303
      %v307 = vmul.f32 %v271, %v303
      %v308 = vmul.f32 %v272, %v303
      %v309 = vmul.f32 %v273, %v303
      %v310 = vmul.f32 %v274, %v303
      %v311 = vmul.f32 %v275, %v303
      %v312 = vmul.f32 %v276, %v303
      %v313 = vmul.f32 %v277, %v303
      %v314 = vmul.f32 %v278, %v303
      %v315 = vmul.f32 %v279, %v303
      %v316 = vmul.f32 %v280, %v303
      %v317 = vmul.f32 %v281, %v303
      %v318 = vmul.f32 %v282, %v303
      %v319 = vmul.f32 %v283, %v303
      %v320 = vmul.f32 %v284, %v303
      %v321 = vmul.f32 %v285, %v303
      %v322 = vmul.f32 %v286, %v303
      %v323 = vmul.f32 %v287, %v303
      %v324 = vmul.f32 %v288, %v303
      %v325 = vmul.f32 %v289, %v303
      %v326 = vmul.f32 %v290, %v303
      %v327 = vmul.f32 %v291, %v303
      %v328 = vmul.f32 %v292, %v303
      %v329 = vmul.f32 %v293, %v303
      %v330 = vmul.f32 %v294, %v303
      %v331 = vmul.f32 %v295, %v303
      %v332 = vmul.f32 %v296, %v303
      %v333 = vmul.f32 %v297, %v303
      %v334 = vmul.f32 %v298, %v303
      %v335 = vmul.f32 %v299, %v303
      %v336 = vmul.f32 %v300, %v303
      %v337 = vld [vmem:[%s2] sm:$0x1]
      %v339 = vperm.slane %v337, 0
      %v341 = vadd.f32 %v305, %v339
      %v342 = vadd.f32 %v306, %v339
      %v343 = vadd.f32 %v307, %v339
      %v344 = vadd.f32 %v308, %v339
      %v345 = vadd.f32 %v309, %v339
      %v346 = vadd.f32 %v310, %v339
      %v347 = vadd.f32 %v311, %v339
      %v348 = vadd.f32 %v312, %v339
      %v349 = vadd.f32 %v313, %v339
      %v350 = vadd.f32 %v314, %v339
      %v351 = vadd.f32 %v315, %v339
      %v352 = vadd.f32 %v316, %v339
      %v353 = vadd.f32 %v317, %v339
      %v354 = vadd.f32 %v318, %v339
      %v355 = vadd.f32 %v319, %v339
      %v356 = vadd.f32 %v320, %v339
      %v357 = vadd.f32 %v321, %v339
      %v358 = vadd.f32 %v322, %v339
      %v359 = vadd.f32 %v323, %v339
      %v360 = vadd.f32 %v324, %v339
      %v361 = vadd.f32 %v325, %v339
      %v362 = vadd.f32 %v326, %v339
      %v363 = vadd.f32 %v327, %v339
      %v364 = vadd.f32 %v328, %v339
      %v365 = vadd.f32 %v329, %v339
      %v366 = vadd.f32 %v330, %v339
      %v367 = vadd.f32 %v331, %v339
      %v368 = vadd.f32 %v332, %v339
      %v369 = vadd.f32 %v333, %v339
      %v370 = vadd.f32 %v334, %v339
      %v371 = vadd.f32 %v335, %v339
      %v372 = vadd.f32 %v336, %v339
      %v373 = vmax.f32 %v341, 0.0
      %v374 = vmax.f32 %v342, 0.0
      %v375 = vmax.f32 %v343, 0.0
      %v376 = vmax.f32 %v344, 0.0
      %v377 = vmax.f32 %v345, 0.0
      %v378 = vmax.f32 %v346, 0.0
      %v379 = vmax.f32 %v347, 0.0
      %v380 = vmax.f32 %v348, 0.0
      %v381 = vmax.f32 %v349, 0.0
      %v382 = vmax.f32 %v350, 0.0
      %v383 = vmax.f32 %v351, 0.0
      %v384 = vmax.f32 %v352, 0.0
      %v385 = vmax.f32 %v353, 0.0
      %v386 = vmax.f32 %v354, 0.0
      %v387 = vmax.f32 %v355, 0.0
      %v388 = vmax.f32 %v356, 0.0
      %v389 = vmax.f32 %v357, 0.0
      %v390 = vmax.f32 %v358, 0.0
      %v391 = vmax.f32 %v359, 0.0
      %v392 = vmax.f32 %v360, 0.0
      %v393 = vmax.f32 %v361, 0.0
      %v394 = vmax.f32 %v362, 0.0
      %v395 = vmax.f32 %v363, 0.0
      %v396 = vmax.f32 %v364, 0.0
      %v397 = vmax.f32 %v365, 0.0
      %v398 = vmax.f32 %v366, 0.0
      %v399 = vmax.f32 %v367, 0.0
      %v400 = vmax.f32 %v368, 0.0
      %v401 = vmax.f32 %v369, 0.0
      %v402 = vmax.f32 %v370, 0.0
      %v403 = vmax.f32 %v371, 0.0
      %v404 = vmax.f32 %v372, 0.0
      %v405 = vpack.c.bf16 %v374, %v373
      %v406 = vpack.c.bf16 %v376, %v375
      %v407 = vpack.c.bf16 %v378, %v377
      %v408 = vpack.c.bf16 %v380, %v379
      %v409 = vpack.c.bf16 %v382, %v381
      %v410 = vpack.c.bf16 %v384, %v383
      %v411 = vpack.c.bf16 %v386, %v385
      %v412 = vpack.c.bf16 %v388, %v387
      %v413 = vpack.c.bf16 %v390, %v389
      %v414 = vpack.c.bf16 %v392, %v391
      %v415 = vpack.c.bf16 %v394, %v393
      %v416 = vpack.c.bf16 %v396, %v395
      %v417 = vpack.c.bf16 %v398, %v397
      %v418 = vpack.c.bf16 %v400, %v399
      %v419 = vpack.c.bf16 %v402, %v401
      %v420 = vpack.c.bf16 %v404, %v403
      %v421 = vld [vmem:[%s3] sm:$0xf]
      %v422 = vld [vmem:[%s3 + $0x4] sm:$0xf]
      %v423 = vld [vmem:[%s3 + $0x8] sm:$0xf]
      %v427 = vunpack.c.l.b16 %v421
      %v428 = vunpack.c.l.b16 %v422
      %v429 = vunpack.c.l.b16 %v423
      %v430 = vpack.c.b16 %v428, %v427
      %v431 = vpack.c.b16 %v429, %v429
      %vm433 = vcmask 195584
      %v435 = vsel %vm433, %v405, 0
      %v438 = vsel %vm433, %v406, 0
      %v441 = vsel %vm433, %v407, 0
      %v444 = vsel %vm433, %v408, 0
      %v447 = vsel %vm433, %v409, 0
      %v450 = vsel %vm433, %v410, 0
      %v453 = vsel %vm433, %v411, 0
      %v456 = vsel %vm433, %v412, 0
      %v459 = vsel %vm433, %v413, 0
      %v462 = vsel %vm433, %v414, 0
      %v465 = vsel %vm433, %v415, 0
      %v468 = vsel %vm433, %v416, 0
      %v471 = vsel %vm433, %v417, 0
      %v474 = vsel %vm433, %v418, 0
      %v477 = vsel %vm433, %v419, 0
      %v480 = vsel %vm433, %v420, 0
      %vm482 = vcmask 1043456
      %v484 = vsel %vm482, %v431, 0
      %486 = vmatpush.bf16.msra.mxu0 0
      %487 = vmatpush.bf16.msra.mxu0 0
      %488 = vmatpush.bf16.msra.mxu0 0
      %489 = vmatpush.bf16.msra.mxu0 0
      %490 = vmatpush.bf16.msra.mxu0 0
      %491 = vmatpush.bf16.msra.mxu0 0
      %492 = vmatpush.bf16.msra.mxu0 %v484
      %493 = vmatpush.bf16.msra.mxu0 %v430
      %494 = vmatmul.bf16.gmra.mxu0 %v435
      %v495 = vpop.f32.mrf.mxu0
      %v496 = vadd.f32 0.0, %v495
      %v497 = vpop.f32.mrf.mxu0
      %v498 = vadd.f32 0.0, %v497
      %499 = vmatmul.bf16.gmra.mxu0 %v438
      %v500 = vpop.f32.mrf.mxu0
      %v501 = vadd.f32 0.0, %v500
      %v502 = vpop.f32.mrf.mxu0
      %v503 = vadd.f32 0.0, %v502
      %504 = vmatmul.bf16.gmra.mxu0 %v441
      %v505 = vpop.f32.mrf.mxu0
      %v506 = vadd.f32 0.0, %v505
      %v507 = vpop.f32.mrf.mxu0
      %v508 = vadd.f32 0.0, %v507
      %509 = vmatmul.bf16.gmra.mxu0 %v444
      %v510 = vpop.f32.mrf.mxu0
      %v511 = vadd.f32 0.0, %v510
      %v512 = vpop.f32.mrf.mxu0
      %v513 = vadd.f32 0.0, %v512
      %514 = vmatmul.bf16.gmra.mxu0 %v447
      %v515 = vpop.f32.mrf.mxu0
      %v516 = vadd.f32 0.0, %v515
      %v517 = vpop.f32.mrf.mxu0
      %v518 = vadd.f32 0.0, %v517
      %519 = vmatmul.bf16.gmra.mxu0 %v450
      %v520 = vpop.f32.mrf.mxu0
      %v521 = vadd.f32 0.0, %v520
      %v522 = vpop.f32.mrf.mxu0
      %v523 = vadd.f32 0.0, %v522
      %524 = vmatmul.bf16.gmra.mxu0 %v453
      %v525 = vpop.f32.mrf.mxu0
      %v526 = vadd.f32 0.0, %v525
      %v527 = vpop.f32.mrf.mxu0
      %v528 = vadd.f32 0.0, %v527
      %529 = vmatmul.bf16.gmra.mxu0 %v456
      %v530 = vpop.f32.mrf.mxu0
      %v531 = vadd.f32 0.0, %v530
      %v532 = vpop.f32.mrf.mxu0
      %v533 = vadd.f32 0.0, %v532
      %534 = vmatmul.bf16.gmra.mxu0 %v459
      %v535 = vpop.f32.mrf.mxu0
      %v536 = vadd.f32 0.0, %v535
      %v537 = vpop.f32.mrf.mxu0
      %v538 = vadd.f32 0.0, %v537
      %539 = vmatmul.bf16.gmra.mxu0 %v462
      %v540 = vpop.f32.mrf.mxu0
      %v541 = vadd.f32 0.0, %v540
      %v542 = vpop.f32.mrf.mxu0
      %v543 = vadd.f32 0.0, %v542
      %544 = vmatmul.bf16.gmra.mxu0 %v465
      %v545 = vpop.f32.mrf.mxu0
      %v546 = vadd.f32 0.0, %v545
      %v547 = vpop.f32.mrf.mxu0
      %v548 = vadd.f32 0.0, %v547
      %549 = vmatmul.bf16.gmra.mxu0 %v468
      %v550 = vpop.f32.mrf.mxu0
      %v551 = vadd.f32 0.0, %v550
      %v552 = vpop.f32.mrf.mxu0
      %v553 = vadd.f32 0.0, %v552
      %554 = vmatmul.bf16.gmra.mxu0 %v471
      %v555 = vpop.f32.mrf.mxu0
      %v556 = vadd.f32 0.0, %v555
      %v557 = vpop.f32.mrf.mxu0
      %v558 = vadd.f32 0.0, %v557
      %559 = vmatmul.bf16.gmra.mxu0 %v474
      %v560 = vpop.f32.mrf.mxu0
      %v561 = vadd.f32 0.0, %v560
      %v562 = vpop.f32.mrf.mxu0
      %v563 = vadd.f32 0.0, %v562
      %564 = vmatmul.bf16.gmra.mxu0 %v477
      %v565 = vpop.f32.mrf.mxu0
      %v566 = vadd.f32 0.0, %v565
      %v567 = vpop.f32.mrf.mxu0
      %v568 = vadd.f32 0.0, %v567
      %569 = vmatmul.bf16.gmra.mxu0 %v480
      %v570 = vpop.f32.mrf.mxu0
      %v571 = vadd.f32 0.0, %v570
      %v572 = vpop.f32.mrf.mxu0
      %v573 = vadd.f32 0.0, %v572
      %574 = vdwg.mxu0
      %v575 = vpack.c.bf16 %v496, %v496
      %v576 = vpack.c.bf16 %v498, %v498
      %v577 = vpack.c.bf16 %v501, %v501
      %v578 = vpack.c.bf16 %v503, %v503
      %v579 = vpack.c.bf16 %v506, %v506
      %v580 = vpack.c.bf16 %v508, %v508
      %v581 = vpack.c.bf16 %v511, %v511
      %v582 = vpack.c.bf16 %v513, %v513
      %v583 = vpack.c.bf16 %v516, %v516
      %v584 = vpack.c.bf16 %v518, %v518
      %v585 = vpack.c.bf16 %v521, %v521
      %v586 = vpack.c.bf16 %v523, %v523
      %v587 = vpack.c.bf16 %v526, %v526
      %v588 = vpack.c.bf16 %v528, %v528
      %v589 = vpack.c.bf16 %v531, %v531
      %v590 = vpack.c.bf16 %v533, %v533
      %v591 = vpack.c.bf16 %v536, %v536
      %v592 = vpack.c.bf16 %v538, %v538
      %v593 = vpack.c.bf16 %v541, %v541
      %v594 = vpack.c.bf16 %v543, %v543
      %v595 = vpack.c.bf16 %v546, %v546
      %v596 = vpack.c.bf16 %v548, %v548
      %v597 = vpack.c.bf16 %v551, %v551
      %v598 = vpack.c.bf16 %v553, %v553
      %v599 = vpack.c.bf16 %v556, %v556
      %v600 = vpack.c.bf16 %v558, %v558
      %v601 = vpack.c.bf16 %v561, %v561
      %v602 = vpack.c.bf16 %v563, %v563
      %v603 = vpack.c.bf16 %v566, %v566
      %v604 = vpack.c.bf16 %v568, %v568
      %v605 = vpack.c.bf16 %v571, %v571
      %v606 = vpack.c.bf16 %v573, %v573
      %vm607 = vcmask 257024
      %608 = vst.msk [vmem:[%s231] sm:$0xf] %vm607, %v575
      %609 = vst.msk [vmem:[%s231 + $0x4] sm:$0xf] %vm607, %v576
      %610 = vst.msk [vmem:[%s231 + $0x8] sm:$0xf] %vm607, %v577
      %611 = vst.msk [vmem:[%s231 + $0xc] sm:$0xf] %vm607, %v578
      %612 = vst.msk [vmem:[%s231 + $0x10] sm:$0xf] %vm607, %v579
      %613 = vst.msk [vmem:[%s231 + $0x14] sm:$0xf] %vm607, %v580
      %614 = vst.msk [vmem:[%s231 + $0x18] sm:$0xf] %vm607, %v581
      %615 = vst.msk [vmem:[%s231 + $0x1c] sm:$0xf] %vm607, %v582
      %616 = vst.msk [vmem:[%s231 + $0x20] sm:$0xf] %vm607, %v583
      %617 = vst.msk [vmem:[%s231 + $0x24] sm:$0xf] %vm607, %v584
      %618 = vst.msk [vmem:[%s231 + $0x28] sm:$0xf] %vm607, %v585
      %619 = vst.msk [vmem:[%s231 + $0x2c] sm:$0xf] %vm607, %v586
      %620 = vst.msk [vmem:[%s231 + $0x30] sm:$0xf] %vm607, %v587
      %621 = vst.msk [vmem:[%s231 + $0x34] sm:$0xf] %vm607, %v588
      %622 = vst.msk [vmem:[%s231 + $0x38] sm:$0xf] %vm607, %v589
      %623 = vst.msk [vmem:[%s231 + $0x3c] sm:$0xf] %vm607, %v590
      %624 = vst.msk [vmem:[%s231 + $0x40] sm:$0xf] %vm607, %v591
      %625 = vst.msk [vmem:[%s231 + $0x44] sm:$0xf] %vm607, %v592
      %626 = vst.msk [vmem:[%s231 + $0x48] sm:$0xf] %vm607, %v593
      %627 = vst.msk [vmem:[%s231 + $0x4c] sm:$0xf] %vm607, %v594
      %628 = vst.msk [vmem:[%s231 + $0x50] sm:$0xf] %vm607, %v595
      %629 = vst.msk [vmem:[%s231 + $0x54] sm:$0xf] %vm607, %v596
      %630 = vst.msk [vmem:[%s231 + $0x58] sm:$0xf] %vm607, %v597
      %631 = vst.msk [vmem:[%s231 + $0x5c] sm:$0xf] %vm607, %v598
      %632 = vst.msk [vmem:[%s231 + $0x60] sm:$0xf] %vm607, %v599
      %633 = vst.msk [vmem:[%s231 + $0x64] sm:$0xf] %vm607, %v600
      %634 = vst.msk [vmem:[%s231 + $0x68] sm:$0xf] %vm607, %v601
      %635 = vst.msk [vmem:[%s231 + $0x6c] sm:$0xf] %vm607, %v602
      %636 = vst.msk [vmem:[%s231 + $0x70] sm:$0xf] %vm607, %v603
      %637 = vst.msk [vmem:[%s231 + $0x74] sm:$0xf] %vm607, %v604
      %638 = vst.msk [vmem:[%s231 + $0x78] sm:$0xf] %vm607, %v605
      %639 = vst.msk [vmem:[%s231 + $0x7c] sm:$0xf] %vm607, %v606
      %vm640 = vcmask 261120
      %v641 = vsel %vm640, %v496, 0.0
      %v642 = vsel %vm640, %v498, 0.0
      %v643 = vadd.f32 %v641, %v642
      %v644 = vsel %vm640, %v501, 0.0
      %v645 = vadd.f32 %v643, %v644
      %v646 = vsel %vm640, %v503, 0.0
      %v647 = vadd.f32 %v645, %v646
      %v648 = vsel %vm640, %v506, 0.0
      %v649 = vadd.f32 %v647, %v648
      %v650 = vsel %vm640, %v508, 0.0
      %v651 = vadd.f32 %v649, %v650
      %v652 = vsel %vm640, %v511, 0.0
      %v653 = vadd.f32 %v651, %v652
      %v654 = vsel %vm640, %v513, 0.0
      %v655 = vadd.f32 %v653, %v654
      %v656 = vsel %vm640, %v516, 0.0
      %v657 = vadd.f32 %v655, %v656
      %v658 = vsel %vm640, %v518, 0.0
      %v659 = vadd.f32 %v657, %v658
      %v660 = vsel %vm640, %v521, 0.0
      %v661 = vadd.f32 %v659, %v660
      %v662 = vsel %vm640, %v523, 0.0
      %v663 = vadd.f32 %v661, %v662
      %v664 = vsel %vm640, %v526, 0.0
      %v665 = vadd.f32 %v663, %v664
      %v666 = vsel %vm640, %v528, 0.0
      %v667 = vadd.f32 %v665, %v666
      %v668 = vsel %vm640, %v531, 0.0
      %v669 = vadd.f32 %v667, %v668
      %v670 = vsel %vm640, %v533, 0.0
      %v671 = vadd.f32 %v669, %v670
      %v672 = vsel %vm640, %v536, 0.0
      %v673 = vadd.f32 %v671, %v672
      %v674 = vsel %vm640, %v538, 0.0
      %v675 = vadd.f32 %v673, %v674
      %v676 = vsel %vm640, %v541, 0.0
      %v677 = vadd.f32 %v675, %v676
      %v678 = vsel %vm640, %v543, 0.0
      %v679 = vadd.f32 %v677, %v678
      %v680 = vsel %vm640, %v546, 0.0
      %v681 = vadd.f32 %v679, %v680
      %v682 = vsel %vm640, %v548, 0.0
      %v683 = vadd.f32 %v681, %v682
      %v684 = vsel %vm640, %v551, 0.0
      %v685 = vadd.f32 %v683, %v684
      %v686 = vsel %vm640, %v553, 0.0
      %v687 = vadd.f32 %v685, %v686
      %v688 = vsel %vm640, %v556, 0.0
      %v689 = vadd.f32 %v687, %v688
      %v690 = vsel %vm640, %v558, 0.0
      %v691 = vadd.f32 %v689, %v690
      %v692 = vsel %vm640, %v561, 0.0
      %v693 = vadd.f32 %v691, %v692
      %v694 = vsel %vm640, %v563, 0.0
      %v695 = vadd.f32 %v693, %v694
      %v696 = vsel %vm640, %v566, 0.0
      %v697 = vadd.f32 %v695, %v696
      %v698 = vsel %vm640, %v568, 0.0
      %v699 = vadd.f32 %v697, %v698
      %v700 = vsel %vm640, %v571, 0.0
      %v701 = vadd.f32 %v699, %v700
      %v702 = vsel %vm640, %v573, 0.0
      %v703 = vadd.f32 %v701, %v702
      %v704 = vrot.slane %v703, 4
      %v705 = vadd.f32 %v703, %v704
      %v706 = vrot.slane %v705, 2
      %v707 = vadd.f32 %v705, %v706
      %v708 = vrot.slane %v707, 1
      %v709 = vadd.f32 %v707, %v708
      %v710 = vmul.f32 %v496, %v496
      %v711 = vmul.f32 %v498, %v498
      %v712 = vmul.f32 %v501, %v501
      %v713 = vmul.f32 %v503, %v503
      %v714 = vmul.f32 %v506, %v506
      %v715 = vmul.f32 %v508, %v508
      %v716 = vmul.f32 %v511, %v511
      %v717 = vmul.f32 %v513, %v513
      %v718 = vmul.f32 %v516, %v516
      %v719 = vmul.f32 %v518, %v518
      %v720 = vmul.f32 %v521, %v521
      %v721 = vmul.f32 %v523, %v523
      %v722 = vmul.f32 %v526, %v526
      %v723 = vmul.f32 %v528, %v528
      %v724 = vmul.f32 %v531, %v531
      %v725 = vmul.f32 %v533, %v533
      %v726 = vmul.f32 %v536, %v536
      %v727 = vmul.f32 %v538, %v538
      %v728 = vmul.f32 %v541, %v541
      %v729 = vmul.f32 %v543, %v543
      %v730 = vmul.f32 %v546, %v546
      %v731 = vmul.f32 %v548, %v548
      %v732 = vmul.f32 %v551, %v551
      %v733 = vmul.f32 %v553, %v553
      %v734 = vmul.f32 %v556, %v556
      %v735 = vmul.f32 %v558, %v558
      %v736 = vmul.f32 %v561, %v561
      %v737 = vmul.f32 %v563, %v563
      %v738 = vmul.f32 %v566, %v566
      %v739 = vmul.f32 %v568, %v568
      %v740 = vmul.f32 %v571, %v571
      %v741 = vmul.f32 %v573, %v573
      %v742 = vsel %vm640, %v710, 0.0
      %v743 = vsel %vm640, %v711, 0.0
      %v744 = vadd.f32 %v742, %v743
      %v745 = vsel %vm640, %v712, 0.0
      %v746 = vadd.f32 %v744, %v745
      %v747 = vsel %vm640, %v713, 0.0
      %v748 = vadd.f32 %v746, %v747
      %v749 = vsel %vm640, %v714, 0.0
      %v750 = vadd.f32 %v748, %v749
      %v751 = vsel %vm640, %v715, 0.0
      %v752 = vadd.f32 %v750, %v751
      %v753 = vsel %vm640, %v716, 0.0
      %v754 = vadd.f32 %v752, %v753
      %v755 = vsel %vm640, %v717, 0.0
      %v756 = vadd.f32 %v754, %v755
      %v757 = vsel %vm640, %v718, 0.0
      %v758 = vadd.f32 %v756, %v757
      %v759 = vsel %vm640, %v719, 0.0
      %v760 = vadd.f32 %v758, %v759
      %v761 = vsel %vm640, %v720, 0.0
      %v762 = vadd.f32 %v760, %v761
      %v763 = vsel %vm640, %v721, 0.0
      %v764 = vadd.f32 %v762, %v763
      %v765 = vsel %vm640, %v722, 0.0
      %v766 = vadd.f32 %v764, %v765
      %v767 = vsel %vm640, %v723, 0.0
      %v768 = vadd.f32 %v766, %v767
      %v769 = vsel %vm640, %v724, 0.0
      %v770 = vadd.f32 %v768, %v769
      %v771 = vsel %vm640, %v725, 0.0
      %v772 = vadd.f32 %v770, %v771
      %v773 = vsel %vm640, %v726, 0.0
      %v774 = vadd.f32 %v772, %v773
      %v775 = vsel %vm640, %v727, 0.0
      %v776 = vadd.f32 %v774, %v775
      %v777 = vsel %vm640, %v728, 0.0
      %v778 = vadd.f32 %v776, %v777
      %v779 = vsel %vm640, %v729, 0.0
      %v780 = vadd.f32 %v778, %v779
      %v781 = vsel %vm640, %v730, 0.0
      %v782 = vadd.f32 %v780, %v781
      %v783 = vsel %vm640, %v731, 0.0
      %v784 = vadd.f32 %v782, %v783
      %v785 = vsel %vm640, %v732, 0.0
      %v786 = vadd.f32 %v784, %v785
      %v787 = vsel %vm640, %v733, 0.0
      %v788 = vadd.f32 %v786, %v787
      %v789 = vsel %vm640, %v734, 0.0
      %v790 = vadd.f32 %v788, %v789
      %v791 = vsel %vm640, %v735, 0.0
      %v792 = vadd.f32 %v790, %v791
      %v793 = vsel %vm640, %v736, 0.0
      %v794 = vadd.f32 %v792, %v793
      %v795 = vsel %vm640, %v737, 0.0
      %v796 = vadd.f32 %v794, %v795
      %v797 = vsel %vm640, %v738, 0.0
      %v798 = vadd.f32 %v796, %v797
      %v799 = vsel %vm640, %v739, 0.0
      %v800 = vadd.f32 %v798, %v799
      %v801 = vsel %vm640, %v740, 0.0
      %v802 = vadd.f32 %v800, %v801
      %v803 = vsel %vm640, %v741, 0.0
      %v804 = vadd.f32 %v802, %v803
      %v805 = vrot.slane %v804, 4
      %v806 = vadd.f32 %v804, %v805
      %v807 = vrot.slane %v806, 2
      %v808 = vadd.f32 %v806, %v807
      %v809 = vrot.slane %v808, 1
      %v810 = vadd.f32 %v808, %v809
      %vm811 = vcmask 1040384
      %v812 = vsel %vm811, %v709, %v810
      %vm813 = vcmask 254976
      %814 = vst.msk [vmem:[%s235] sm:$0x3] %vm813, %v812
      %p815 = scmp.lt.s32.totalorder %s17, 1
      %s816 = scalar_select %p815, %s17, 1
      %s817 = smul.addr %s816, 32
      %s818 = smul.addr %s817, 4
      %s819 = scalar_lea.vmem %s4, %s818
      %p820 = scmp.lt.s32.totalorder %s17, 1
      %s821 = scalar_select %p820, %s17, 1
      %s822 = smul.addr %s821, 2
      %s823 = scalar_lea.vmem %s5, %s822
      // Predicated region
      $region37: #{_lambda_.6} parent=35 // pred_check
        %p824 = pneg %p124
      $region38: #{_lambda_.6} parent=35 // pred_check_branch
        %826 = sbr.rel (%p824) target = $region40
      $region39: #{_lambda_.6} parent=35 // pred_region
        _
      $region40: #{_lambda_.6} parent=35 // pred_fallthru
        _
      // Predicated region
      $region41: #{_lambda_.6} parent=35 // pred_check
        %p827 = pneg %p150
      $region42: #{_lambda_.6} parent=35 // pred_check_branch
        %829 = sbr.rel (%p827) target = $region44
      $region43: #{_lambda_.6} parent=35 // pred_region
        _
      $region44: #{_lambda_.6} parent=35 // pred_fallthru
        _
    $region36: #{_lambda_.6} parent=5 // pred_fallthru
      _
    %p830 = scmp.le.s32.totalorder 2, %s12
    // Predicated region
    $region45: #{_lambda_.6} parent=5 // pred_check
      %p831 = pneg %p830
    $region46: #{_lambda_.6} parent=5 // pred_check_branch
      %833 = sbr.rel (%p831) target = $region48
    $region47: #{_lambda_.6} parent=5 // pred_region
      %s834 = ssub.s32 %s12, 2
      // Predicated region
      $region49: #{_lambda_.6} parent=47 // pred_check
        %p835 = pneg %p130
      $region50: #{_lambda_.6} parent=47 // pred_check_branch
        %837 = sbr.rel (%p835) target = $region52
      $region51: #{_lambda_.6} parent=47 // pred_region
        %p838 = scmp.lt.s32.totalorder %s18, 1
        %s839 = scalar_select %p838, %s18, 1
        %s840 = smul.addr %s839, 32
        %s841 = smul.addr %s840, 4
        %s842 = scalar_lea.vmem %s4, %s841
      $region52: #{_lambda_.6} parent=47 // pred_fallthru
        _
      // Predicated region
      $region53: #{_lambda_.6} parent=47 // pred_check
        %p843 = pneg %p156
      $region54: #{_lambda_.6} parent=47 // pred_check_branch
        %845 = sbr.rel (%p843) target = $region56
      $region55: #{_lambda_.6} parent=47 // pred_region
        %p846 = scmp.lt.s32.totalorder %s18, 1
        %s847 = scalar_select %p846, %s18, 1
        %s848 = smul.addr %s847, 2
        %s849 = scalar_lea.vmem %s5, %s848
      $region56: #{_lambda_.6} parent=47 // pred_fallthru
        _
    $region48: #{_lambda_.6} parent=5 // pred_fallthru
      _
  $region6: #{_lambda_.6} parent=0 // loop_footer
    %s16 = sadd.s32 1, %s12
  $region7: #{_lambda_.6} parent=0 // loop_footer_branch
    %11 = sbr.rel target = $region3
  $region8: #{_lambda_.6} parent=0 // loop_exit
    _

// kernel: _lambda_.7
$region0: #{_lambda_.7}
  #allocation0 [shape = 'u32[]', space=smem, size = 0x4, offset = 0x4, fixed_abs, tag = 'smem constant byte address 0x4 - core index']
  #allocation1 [shape = 'u32[72,128]{1,0:T(1,128)}', space=vmem, size = 0x9000, scoped, tag = 'internal scratch']
  %s0 = inlined_call_operand.vmem [shape: bf16[2,256,32], index: 0, kind: input, shape index: {}]
  %s1 = inlined_call_operand.vmem [shape: f32[1,32], index: 1, kind: input, shape index: {}]
  %s2 = inlined_call_operand.vmem [shape: f32[1,32], index: 2, kind: input, shape index: {}]
  %s3 = inlined_call_operand.vmem [shape: f32[32,2], index: 3, kind: input, shape index: {}]
  %s4 = inlined_call_operand.vmem [shape: f32[2,32], index: 4, kind: input, shape index: {}]
  %s5 = inlined_call_operand.vmem [shape: f32[2,256,32], index: 5, kind: input, shape index: {}]
  %s6 = inlined_call_operand.hbm [shape: f32[2,256,32], index: 6, kind: output, shape index: {}]
  %s7 = sld [smem:[#allocation0]]
  $region57: #{_lambda_.7} parent=0
    _
  %s9 = ssub.s32 1, %s7
  %s10 = scalar_select 0, %s9, %s7
  $region1: #{_lambda_.7} parent=0
    #allocation2 [shape = 'u8[262144]{0}', space=vmem, size = 0x40000, scoped, tag = 'output window, operand 0']
    #allocation3 [shape = 's32[2]{0}', space=sflag, size = 0x8, scoped, tag = 'scoped memory for _lambda_.7']
    %11 = vsyncpa [#allocation3], 0
    %s12 = scalar_lea.sflag [#allocation3], 1
    %13 = vsyncpa %s12, 0
    loop: start=0, step=1, limit=4
    $region2: #{_lambda_.7} parent=1 // loop_pre_header
      _
    $region3: #{_lambda_.7} parent=1 // loop_header
      %s15 = sphi 0, %s19
      %p16 = scmp.ge.s32.totalorder %s15, 4
      %s25 = sphi 0, %s27
      %s28 = sphi 0, %s25
      %s29 = sphi 0, %s28
      %s45 = sphi 0, %s29
      %s49 = sphi 0, %s49
      %s51 = sphi 0, %s49
      %s52 = sphi 0, %s51
      %s66 = sphi 0, %s52
      %s70 = sphi 0, %s70
      %s72 = sphi 0, %s70
      %s73 = sphi 0, %s72
      %s87 = sphi 0, %s73
      %s91 = sphi 0, %s91
      %s93 = sphi 0, %s91
      %s94 = sphi 0, %s93
      %s108 = sphi 0, %s94
      %s112 = sphi 0, %s112
      %s114 = sphi 0, %s112
      %s115 = sphi 0, %s114
      %s129 = sphi 0, %s115
      %s135 = sphi 0, %s137
      %s138 = sphi 0, %s135
      %s139 = sphi 0, %s138
      %s155 = sphi 0, %s139
      %s161 = sphi 0, %s163
      %s164 = sphi 0, %s161
      %s165 = sphi 0, %s164
      %s181 = sphi 0, %s165
    $region4: #{_lambda_.7} parent=1 // loop_header_branch
      %18 = sbr.rel (%p16) target = $region8
    $region5: #{_lambda_.7} parent=1 // loop_body
      %s20 = ssub.s32 %s15, 1
      %s21 = ssub.s32 %s15, 2
      %s22 = sadd.s32 %s15, 1
      %s23 = ssub.s32 %s15, %s22
      %p24 = scmp.eq.s32.totalorder %s23, 0
      %s26 = sadd.s32 %s25, 1
      %s27 = scalar_select %p24, %s25, %s26
      %p30 = pneg %p24
      %p31 = scmp.eq.s32.totalorder %s15, 1
      %p32 = por %p30, %p31
      %p33 = scmp.ne.s32.totalorder %s25, %s28
      %p34 = scmp.eq.s32.totalorder %s15, 0
      %p35 = por %p33, %p34
      %p36 = scmp.ne.s32.totalorder %s25, %s28
      %p37 = scmp.eq.s32.totalorder %s20, 1
      %p38 = por %p36, %p37
      %p39 = scmp.ne.s32.totalorder %s28, %s29
      %p40 = scmp.eq.s32.totalorder %s20, 0
      %p41 = por %p39, %p40
      %p42 = scmp.ne.s32.totalorder %s28, %s29
      %p43 = scmp.eq.s32.totalorder %s21, 1
      %p44 = por %p42, %p43
      %p46 = scmp.ne.s32.totalorder %s29, %s45
      %p47 = scmp.eq.s32.totalorder %s21, 0
      %p48 = por %p46, %p47
      %s50 = sadd.s32 %s49, 1
      %p53 = scmp.eq.s32.totalorder %s15, 1
      %p54 = scmp.ne.s32.totalorder %s49, %s51
      %p55 = scmp.eq.s32.totalorder %s15, 0
      %p56 = por %p54, %p55
      %p57 = scmp.ne.s32.totalorder %s49, %s51
      %p58 = scmp.eq.s32.totalorder %s20, 1
      %p59 = por %p57, %p58
      %p60 = scmp.ne.s32.totalorder %s51, %s52
      %p61 = scmp.eq.s32.totalorder %s20, 0
      %p62 = por %p60, %p61
      %p63 = scmp.ne.s32.totalorder %s51, %s52
      %p64 = scmp.eq.s32.totalorder %s21, 1
      %p65 = por %p63, %p64
      %p67 = scmp.ne.s32.totalorder %s52, %s66
      %p68 = scmp.eq.s32.totalorder %s21, 0
      %p69 = por %p67, %p68
      %s71 = sadd.s32 %s70, 1
      %p74 = scmp.eq.s32.totalorder %s15, 1
      %p75 = scmp.ne.s32.totalorder %s70, %s72
      %p76 = scmp.eq.s32.totalorder %s15, 0
      %p77 = por %p75, %p76
      %p78 = scmp.ne.s32.totalorder %s70, %s72
      %p79 = scmp.eq.s32.totalorder %s20, 1
      %p80 = por %p78, %p79
      %p81 = scmp.ne.s32.totalorder %s72, %s73
      %p82 = scmp.eq.s32.totalorder %s20, 0
      %p83 = por %p81, %p82
      %p84 = scmp.ne.s32.totalorder %s72, %s73
      %p85 = scmp.eq.s32.totalorder %s21, 1
      %p86 = por %p84, %p85
      %p88 = scmp.ne.s32.totalorder %s73, %s87
      %p89 = scmp.eq.s32.totalorder %s21, 0
      %p90 = por %p88, %p89
      %s92 = sadd.s32 %s91, 1
      %p95 = scmp.eq.s32.totalorder %s15, 1
      %p96 = scmp.ne.s32.totalorder %s91, %s93
      %p97 = scmp.eq.s32.totalorder %s15, 0
      %p98 = por %p96, %p97
      %p99 = scmp.ne.s32.totalorder %s91, %s93
      %p100 = scmp.eq.s32.totalorder %s20, 1
      %p101 = por %p99, %p100
      %p102 = scmp.ne.s32.totalorder %s93, %s94
      %p103 = scmp.eq.s32.totalorder %s20, 0
      %p104 = por %p102, %p103
      %p105 = scmp.ne.s32.totalorder %s93, %s94
      %p106 = scmp.eq.s32.totalorder %s21, 1
      %p107 = por %p105, %p106
      %p109 = scmp.ne.s32.totalorder %s94, %s108
      %p110 = scmp.eq.s32.totalorder %s21, 0
      %p111 = por %p109, %p110
      %s113 = sadd.s32 %s112, 1
      %p116 = scmp.eq.s32.totalorder %s15, 1
      %p117 = scmp.ne.s32.totalorder %s112, %s114
      %p118 = scmp.eq.s32.totalorder %s15, 0
      %p119 = por %p117, %p118
      %p120 = scmp.ne.s32.totalorder %s112, %s114
      %p121 = scmp.eq.s32.totalorder %s20, 1
      %p122 = por %p120, %p121
      %p123 = scmp.ne.s32.totalorder %s114, %s115
      %p124 = scmp.eq.s32.totalorder %s20, 0
      %p125 = por %p123, %p124
      %p126 = scmp.ne.s32.totalorder %s114, %s115
      %p127 = scmp.eq.s32.totalorder %s21, 1
      %p128 = por %p126, %p127
      %p130 = scmp.ne.s32.totalorder %s115, %s129
      %p131 = scmp.eq.s32.totalorder %s21, 0
      %p132 = por %p130, %p131
      %s133 = ssub.s32 %s15, %s22
      %p134 = scmp.eq.s32.totalorder %s133, 0
      %s136 = sadd.s32 %s135, 1
      %s137 = scalar_select %p134, %s135, %s136
      %p140 = pneg %p134
      %p141 = scmp.eq.s32.totalorder %s15, 1
      %p142 = por %p140, %p141
      %p143 = scmp.ne.s32.totalorder %s135, %s138
      %p144 = scmp.eq.s32.totalorder %s15, 0
      %p145 = por %p143, %p144
      %p146 = scmp.ne.s32.totalorder %s135, %s138
      %p147 = scmp.eq.s32.totalorder %s20, 1
      %p148 = por %p146, %p147
      %p149 = scmp.ne.s32.totalorder %s138, %s139
      %p150 = scmp.eq.s32.totalorder %s20, 0
      %p151 = por %p149, %p150
      %p152 = scmp.ne.s32.totalorder %s138, %s139
      %p153 = scmp.eq.s32.totalorder %s21, 1
      %p154 = por %p152, %p153
      %p156 = scmp.ne.s32.totalorder %s139, %s155
      %p157 = scmp.eq.s32.totalorder %s21, 0
      %p158 = por %p156, %p157
      %s159 = ssub.s32 %s15, %s22
      %p160 = scmp.eq.s32.totalorder %s159, 0
      %s162 = sadd.s32 %s161, 1
      %s163 = scalar_select %p160, %s161, %s162
      %p166 = pneg %p160
      %p167 = scmp.eq.s32.totalorder %s15, 1
      %p168 = por %p166, %p167
      %p169 = scmp.ne.s32.totalorder %s161, %s164
      %p170 = scmp.eq.s32.totalorder %s15, 0
      %p171 = por %p169, %p170
      %p172 = scmp.ne.s32.totalorder %s161, %s164
      %p173 = scmp.eq.s32.totalorder %s20, 1
      %p174 = por %p172, %p173
      %p175 = scmp.ne.s32.totalorder %s164, %s165
      %p176 = scmp.eq.s32.totalorder %s20, 0
      %p177 = por %p175, %p176
      %p178 = scmp.ne.s32.totalorder %s164, %s165
      %p179 = scmp.eq.s32.totalorder %s21, 1
      %p180 = por %p178, %p179
      %p182 = scmp.ne.s32.totalorder %s165, %s181
      %p183 = scmp.eq.s32.totalorder %s21, 0
      %p184 = por %p182, %p183
      %p185 = scmp.le.s32.totalorder 1, %s15
      %p186 = scmp.lt.s32.totalorder %s15, 3
      %p187 = pnand %p185, %p186
      %p188 = pneg %p187
      // Predicated region
      $region9: #{_lambda_.7} parent=5 // pred_check
        _
      $region10: #{_lambda_.7} parent=5 // pred_check_branch
        %190 = sbr.rel (%p187) target = $region12
      $region11: #{_lambda_.7} parent=5 // pred_region
        %s191 = ssub.s32 %s15, 1
        // Predicated region
        $region13: #{_lambda_.7} parent=11 // pred_check
          %p192 = pneg %p62
        $region14: #{_lambda_.7} parent=11 // pred_check_branch
          %194 = sbr.rel (%p192) target = $region16
        $region15: #{_lambda_.7} parent=11 // pred_region
          _
        $region16: #{_lambda_.7} parent=11 // pred_fallthru
          _
        // Predicated region
        $region17: #{_lambda_.7} parent=11 // pred_check
          %p195 = pneg %p83
        $region18: #{_lambda_.7} parent=11 // pred_check_branch
          %197 = sbr.rel (%p195) target = $region20
        $region19: #{_lambda_.7} parent=11 // pred_region
          _
        $region20: #{_lambda_.7} parent=11 // pred_fallthru
          _
        // Predicated region
        $region21: #{_lambda_.7} parent=11 // pred_check
          %p198 = pneg %p104
        $region22: #{_lambda_.7} parent=11 // pred_check_branch
          %200 = sbr.rel (%p198) target = $region24
        $region23: #{_lambda_.7} parent=11 // pred_region
          _
        $region24: #{_lambda_.7} parent=11 // pred_fallthru
          _
        // Predicated region
        $region25: #{_lambda_.7} parent=11 // pred_check
          %p201 = pneg %p125
        $region26: #{_lambda_.7} parent=11 // pred_check_branch
          %203 = sbr.rel (%p201) target = $region28
        $region27: #{_lambda_.7} parent=11 // pred_region
          _
        $region28: #{_lambda_.7} parent=11 // pred_fallthru
          _
      $region12: #{_lambda_.7} parent=5 // pred_fallthru
        _
      %p204 = scmp.lt.s32.totalorder %s15, 2
      // Predicated region
      $region29: #{_lambda_.7} parent=5 // pred_check
        %p205 = pneg %p204
      $region30: #{_lambda_.7} parent=5 // pred_check_branch
        %207 = sbr.rel (%p205) target = $region32
      $region31: #{_lambda_.7} parent=5 // pred_region
        // Predicated region
        $region33: #{_lambda_.7} parent=31 // pred_check
          %p208 = pneg %p35
        $region34: #{_lambda_.7} parent=31 // pred_check_branch
          %210 = sbr.rel (%p208) target = $region36
        $region35: #{_lambda_.7} parent=31 // pred_region
          %p211 = scmp.lt.s32.totalorder %s15, 1
          %s212 = scalar_select %p211, %s15, 1
          %s213 = smul.addr %s212, 32
          %s214 = smul.addr %s213, 4
          %s215 = scalar_lea.vmem %s0, %s214
        $region36: #{_lambda_.7} parent=31 // pred_fallthru
          _
        // Predicated region
        $region37: #{_lambda_.7} parent=31 // pred_check
          %p216 = pneg %p145
        $region38: #{_lambda_.7} parent=31 // pred_check_branch
          %218 = sbr.rel (%p216) target = $region40
        $region39: #{_lambda_.7} parent=31 // pred_region
          %p219 = scmp.lt.s32.totalorder %s15, 1
          %s220 = scalar_select %p219, %s15, 1
          %s221 = smul.addr %s220, 32
          %s222 = smul.addr %s221, 8
          %s223 = scalar_lea.vmem %s5, %s222
        $region40: #{_lambda_.7} parent=31 // pred_fallthru
          _
      $region32: #{_lambda_.7} parent=5 // pred_fallthru
        _
      %p224 = scmp.le.s32.totalorder 1, %s15
      %p225 = scmp.lt.s32.totalorder %s15, 3
      %p226 = pnand %p224, %p225
      %p227 = pneg %p226
      // Predicated region
      $region41: #{_lambda_.7} parent=5 // pred_check
        _
      $region42: #{_lambda_.7} parent=5 // pred_check_branch
        %229 = sbr.rel (%p226) target = $region44
      $region43: #{_lambda_.7} parent=5 // pred_region
        %s230 = ssub.s32 %s15, 1
        %p231 = scmp.lt.s32.totalorder %s20, 1
        %s232 = scalar_select %p231, %s20, 1
        %s233 = smul.addr %s232, 32
        %s234 = smul.addr %s233, 4
        %s235 = scalar_lea.vmem %s0, %s234
        %p236 = pneg %p41
        %p237 = pneg %p38
        %p238 = pneg %p62
        %p239 = pneg %p59
        %p240 = pneg %p83
        %p241 = pneg %p80
        %p242 = pneg %p104
        %p243 = pneg %p101
        %p244 = pneg %p125
        %p245 = pneg %p122
        %p246 = scmp.lt.s32.totalorder %s20, 1
        %s247 = scalar_select %p246, %s20, 1
        %s248 = smul.addr %s247, 32
        %s249 = smul.addr %s248, 8
        %s250 = scalar_lea.vmem %s5, %s249
        %p251 = pneg %p151
        %p252 = pneg %p148
        %p253 = pneg %p177
        %p254 = pneg %p174
        %s255 = sand.u32 %s164, 1
        %s256 = scalar_lea.sflag [#allocation3], %s255
        %s257 = sand.u32 %s164, 1
        %s258 = smul.addr %s257, 256
        %s259 = scalar_lea.vmem [#allocation2], %s258
        %p260 = scmp.lt.s32.totalorder %s20, 1
        %s261 = scalar_select %p260, %s20, 1
        %s262 = smul.addr %s261, 32
        %s263 = smul.addr %s262, 4
        %s264 = scalar_lea.vmem %s0, %s263
        %p265 = scmp.lt.s32.totalorder %s20, 1
        %s266 = scalar_select %p265, %s20, 1
        %s267 = smul.addr %s266, 32
        %s268 = smul.addr %s267, 8
        %s269 = scalar_lea.vmem %s5, %s268
        %v270 = vld [vmem:[%s264] sm:$0xf]
        %v271 = vld [vmem:[%s264 + $0x4] sm:$0xf]
        %v272 = vld [vmem:[%s264 + $0x8] sm:$0xf]
        %v273 = vld [vmem:[%s264 + $0xc] sm:$0xf]
        %v274 = vld [vmem:[%s264 + $0x10] sm:$0xf]
        %v275 = vld [vmem:[%s264 + $0x14] sm:$0xf]
        %v276 = vld [vmem:[%s264 + $0x18] sm:$0xf]
        %v277 = vld [vmem:[%s264 + $0x1c] sm:$0xf]
        %v278 = vld [vmem:[%s264 + $0x20] sm:$0xf]
        %v279 = vld [vmem:[%s264 + $0x24] sm:$0xf]
        %v280 = vld [vmem:[%s264 + $0x28] sm:$0xf]
        %v281 = vld [vmem:[%s264 + $0x2c] sm:$0xf]
        %v282 = vld [vmem:[%s264 + $0x30] sm:$0xf]
        %v283 = vld [vmem:[%s264 + $0x34] sm:$0xf]
        %v284 = vld [vmem:[%s264 + $0x38] sm:$0xf]
        %v285 = vld [vmem:[%s264 + $0x3c] sm:$0xf]
        %v286 = vld [vmem:[%s264 + $0x40] sm:$0xf]
        %v287 = vld [vmem:[%s264 + $0x44] sm:$0xf]
        %v288 = vld [vmem:[%s264 + $0x48] sm:$0xf]
        %v289 = vld [vmem:[%s264 + $0x4c] sm:$0xf]
        %v290 = vld [vmem:[%s264 + $0x50] sm:$0xf]
        %v291 = vld [vmem:[%s264 + $0x54] sm:$0xf]
        %v292 = vld [vmem:[%s264 + $0x58] sm:$0xf]
        %v293 = vld [vmem:[%s264 + $0x5c] sm:$0xf]
        %v294 = vld [vmem:[%s264 + $0x60] sm:$0xf]
        %v295 = vld [vmem:[%s264 + $0x64] sm:$0xf]
        %v296 = vld [vmem:[%s264 + $0x68] sm:$0xf]
        %v297 = vld [vmem:[%s264 + $0x6c] sm:$0xf]
        %v298 = vld [vmem:[%s264 + $0x70] sm:$0xf]
        %v299 = vld [vmem:[%s264 + $0x74] sm:$0xf]
        %v300 = vld [vmem:[%s264 + $0x78] sm:$0xf]
        %v301 = vld [vmem:[%s264 + $0x7c] sm:$0xf]
        %v302 = vunpack.c.l.bf16 %v270
        %v303 = vunpack.c.l.bf16 %v271
        %v304 = vunpack.c.l.bf16 %v272
        %v305 = vunpack.c.l.bf16 %v273
        %v306 = vunpack.c.l.bf16 %v274
        %v307 = vunpack.c.l.bf16 %v275
        %v308 = vunpack.c.l.bf16 %v276
        %v309 = vunpack.c.l.bf16 %v277
        %v310 = vunpack.c.l.bf16 %v278
        %v311 = vunpack.c.l.bf16 %v279
        %v312 = vunpack.c.l.bf16 %v280
        %v313 = vunpack.c.l.bf16 %v281
        %v314 = vunpack.c.l.bf16 %v282
        %v315 = vunpack.c.l.bf16 %v283
        %v316 = vunpack.c.l.bf16 %v284
        %v317 = vunpack.c.l.bf16 %v285
        %v318 = vunpack.c.l.bf16 %v286
        %v319 = vunpack.c.l.bf16 %v287
        %v320 = vunpack.c.l.bf16 %v288
        %v321 = vunpack.c.l.bf16 %v289
        %v322 = vunpack.c.l.bf16 %v290
        %v323 = vunpack.c.l.bf16 %v291
        %v324 = vunpack.c.l.bf16 %v292
        %v325 = vunpack.c.l.bf16 %v293
        %v326 = vunpack.c.l.bf16 %v294
        %v327 = vunpack.c.l.bf16 %v295
        %v328 = vunpack.c.l.bf16 %v296
        %v329 = vunpack.c.l.bf16 %v297
        %v330 = vunpack.c.l.bf16 %v298
        %v331 = vunpack.c.l.bf16 %v299
        %v332 = vunpack.c.l.bf16 %v300
        %v333 = vunpack.c.l.bf16 %v301
        %v334 = vld [vmem:[%s1] sm:$0x1]
        %v336 = vperm.slane %v334, 0
        %v338 = vmul.f32 %v302, %v336
        %v339 = vmul.f32 %v303, %v336
        %v340 = vmul.f32 %v304, %v336
        %v341 = vmul.f32 %v305, %v336
        %v342 = vmul.f32 %v306, %v336
        %v343 = vmul.f32 %v307, %v336
        %v344 = vmul.f32 %v308, %v336
        %v345 = vmul.f32 %v309, %v336
        %v346 = vmul.f32 %v310, %v336
        %v347 = vmul.f32 %v311, %v336
        %v348 = vmul.f32 %v312, %v336
        %v349 = vmul.f32 %v313, %v336
        %v350 = vmul.f32 %v314, %v336
        %v351 = vmul.f32 %v315, %v336
        %v352 = vmul.f32 %v316, %v336
        %v353 = vmul.f32 %v317, %v336
        %v354 = vmul.f32 %v318, %v336
        %v355 = vmul.f32 %v319, %v336
        %v356 = vmul.f32 %v320, %v336
        %v357 = vmul.f32 %v321, %v336
        %v358 = vmul.f32 %v322, %v336
        %v359 = vmul.f32 %v323, %v336
        %v360 = vmul.f32 %v324, %v336
        %v361 = vmul.f32 %v325, %v336
        %v362 = vmul.f32 %v326, %v336
        %v363 = vmul.f32 %v327, %v336
        %v364 = vmul.f32 %v328, %v336
        %v365 = vmul.f32 %v329, %v336
        %v366 = vmul.f32 %v330, %v336
        %v367 = vmul.f32 %v331, %v336
        %v368 = vmul.f32 %v332, %v336
        %v369 = vmul.f32 %v333, %v336
        %v370 = vld [vmem:[%s2] sm:$0x1]
        %v372 = vperm.slane %v370, 0
        %v374 = vadd.f32 %v338, %v372
        %v375 = vadd.f32 %v339, %v372
        %v376 = vadd.f32 %v340, %v372
        %v377 = vadd.f32 %v341, %v372
        %v378 = vadd.f32 %v342, %v372
        %v379 = vadd.f32 %v343, %v372
        %v380 = vadd.f32 %v344, %v372
        %v381 = vadd.f32 %v345, %v372
        %v382 = vadd.f32 %v346, %v372
        %v383 = vadd.f32 %v347, %v372
        %v384 = vadd.f32 %v348, %v372
        %v385 = vadd.f32 %v349, %v372
        %v386 = vadd.f32 %v350, %v372
        %v387 = vadd.f32 %v351, %v372
        %v388 = vadd.f32 %v352, %v372
        %v389 = vadd.f32 %v353, %v372
        %v390 = vadd.f32 %v354, %v372
        %v391 = vadd.f32 %v355, %v372
        %v392 = vadd.f32 %v356, %v372
        %v393 = vadd.f32 %v357, %v372
        %v394 = vadd.f32 %v358, %v372
        %v395 = vadd.f32 %v359, %v372
        %v396 = vadd.f32 %v360, %v372
        %v397 = vadd.f32 %v361, %v372
        %v398 = vadd.f32 %v362, %v372
        %v399 = vadd.f32 %v363, %v372
        %v400 = vadd.f32 %v364, %v372
        %v401 = vadd.f32 %v365, %v372
        %v402 = vadd.f32 %v366, %v372
        %v403 = vadd.f32 %v367, %v372
        %v404 = vadd.f32 %v368, %v372
        %v405 = vadd.f32 %v369, %v372
        %vm406 = vcmask 261120
        %v407 = vsel %vm406, %v374, 0.0
        %v408 = vsel %vm406, %v375, 0.0
        %v409 = vadd.f32 %v407, %v408
        %v410 = vsel %vm406, %v376, 0.0
        %v411 = vadd.f32 %v409, %v410
        %v412 = vsel %vm406, %v377, 0.0
        %v413 = vadd.f32 %v411, %v412
        %v414 = vsel %vm406, %v378, 0.0
        %v415 = vadd.f32 %v413, %v414
        %v416 = vsel %vm406, %v379, 0.0
        %v417 = vadd.f32 %v415, %v416
        %v418 = vsel %vm406, %v380, 0.0
        %v419 = vadd.f32 %v417, %v418
        %v420 = vsel %vm406, %v381, 0.0
        %v421 = vadd.f32 %v419, %v420
        %v422 = vsel %vm406, %v382, 0.0
        %v423 = vadd.f32 %v421, %v422
        %v424 = vsel %vm406, %v383, 0.0
        %v425 = vadd.f32 %v423, %v424
        %v426 = vsel %vm406, %v384, 0.0
        %v427 = vadd.f32 %v425, %v426
        %v428 = vsel %vm406, %v385, 0.0
        %v429 = vadd.f32 %v427, %v428
        %v430 = vsel %vm406, %v386, 0.0
        %v431 = vadd.f32 %v429, %v430
        %v432 = vsel %vm406, %v387, 0.0
        %v433 = vadd.f32 %v431, %v432
        %v434 = vsel %vm406, %v388, 0.0
        %v435 = vadd.f32 %v433, %v434
        %v436 = vsel %vm406, %v389, 0.0
        %v437 = vadd.f32 %v435, %v436
        %v438 = vsel %vm406, %v390, 0.0
        %v439 = vadd.f32 %v437, %v438
        %v440 = vsel %vm406, %v391, 0.0
        %v441 = vadd.f32 %v439, %v440
        %v442 = vsel %vm406, %v392, 0.0
        %v443 = vadd.f32 %v441, %v442
        %v444 = vsel %vm406, %v393, 0.0
        %v445 = vadd.f32 %v443, %v444
        %v446 = vsel %vm406, %v394, 0.0
        %v447 = vadd.f32 %v445, %v446
        %v448 = vsel %vm406, %v395, 0.0
        %v449 = vadd.f32 %v447, %v448
        %v450 = vsel %vm406, %v396, 0.0
        %v451 = vadd.f32 %v449, %v450
        %v452 = vsel %vm406, %v397, 0.0
        %v453 = vadd.f32 %v451, %v452
        %v454 = vsel %vm406, %v398, 0.0
        %v455 = vadd.f32 %v453, %v454
        %v456 = vsel %vm406, %v399, 0.0
        %v457 = vadd.f32 %v455, %v456
        %v458 = vsel %vm406, %v400, 0.0
        %v459 = vadd.f32 %v457, %v458
        %v460 = vsel %vm406, %v401, 0.0
        %v461 = vadd.f32 %v459, %v460
        %v462 = vsel %vm406, %v402, 0.0
        %v463 = vadd.f32 %v461, %v462
        %v464 = vsel %vm406, %v403, 0.0
        %v465 = vadd.f32 %v463, %v464
        %v466 = vsel %vm406, %v404, 0.0
        %v467 = vadd.f32 %v465, %v466
        %v468 = vsel %vm406, %v405, 0.0
        %v469 = vadd.f32 %v467, %v468
        %v470 = vrot.slane %v469, 4
        %v471 = vadd.f32 %v469, %v470
        %v472 = vrot.slane %v471, 2
        %v473 = vadd.f32 %v471, %v472
        %v474 = vrot.slane %v473, 1
        %v475 = vadd.f32 %v473, %v474
        %v476 = vrcp.pop 256.0
        %v477 = vmul.f32 256.0, %v476
        %v478 = vsub.f32 1.0, %v477
        %v479 = vmul.f32 %v476, %v478
        %v480 = vadd.f32 %v476, %v479
        %vm481 = vweird.f32 %v476
        %v482 = vsel %vm481, %v476, %v480
        %v483 = vmul.f32 %v475, %v482
        %v484 = vld [vmem:[%s3] sm:$0xff]
        %v485 = vld [vmem:[%s3 + $0x8] sm:$0xff]
        %v486 = vld [vmem:[%s3 + $0x10] sm:$0xff]
        %v487 = vld [vmem:[%s3 + $0x18] sm:$0xff]
        %v489 = vsel %vm406, %v483, 0
        %491 = vmatpush.msra.mxu0 0.0
        %492 = vmatpush.msra.mxu0 0.0
        %493 = vmatpush.msra.mxu0 0.0
        %494 = vmatpush.msra.mxu0 0.0
        %495 = vmatpush.msra.mxu0 0.0
        %496 = vmatpush.msra.mxu0 0.0
        %497 = vmatpush.msra.mxu0 0.0
        %498 = vmatpush.msra.mxu0 0.0
        %499 = vmatpush.msra.mxu0 0.0
        %500 = vmatpush.msra.mxu0 0.0
        %501 = vmatpush.msra.mxu0 0.0
        %502 = vmatpush.msra.mxu0 0.0
        %503 = vmatpush.msra.mxu0 %v487
        %504 = vmatpush.msra.mxu0 %v486
        %505 = vmatpush.msra.mxu0 %v485
        %506 = vmatpush.msra.mxu0 %v484
        %507 = vmatmul.f32.gmra.mxu0 %v489
        %v508 = vpop.f32.mrf.mxu0
        %v509 = vadd.f32 0.0, %v508
        %510 = vdwg.mxu0
        %v511 = vmax.f32 %v509, 0.0
        %v512 = vld [vmem:[%s4] sm:$0x3]
        %vm513 = vcmask 15360
        %v515 = vsel %vm513, %v511, 0
        %vm517 = vcmask 1041408
        %v519 = vsel %vm517, %v512, 0
        %521 = vmatpush.msra.mxu0 0.0
        %522 = vmatpush.msra.mxu0 0.0
        %523 = vmatpush.msra.mxu0 0.0
        %524 = vmatpush.msra.mxu0 0.0
        %525 = vmatpush.msra.mxu0 0.0
        %526 = vmatpush.msra.mxu0 0.0
        %527 = vmatpush.msra.mxu0 0.0
        %528 = vmatpush.msra.mxu0 0.0
        %529 = vmatpush.msra.mxu0 0.0
        %530 = vmatpush.msra.mxu0 0.0
        %531 = vmatpush.msra.mxu0 0.0
        %532 = vmatpush.msra.mxu0 0.0
        %533 = vmatpush.msra.mxu0 0.0
        %534 = vmatpush.msra.mxu0 0.0
        %535 = vmatpush.msra.mxu0 0.0
        %536 = vmatpush.msra.mxu0 %v519
        %537 = vmatmul.f32.gmra.mxu0 %v515
        %v538 = vpop.f32.mrf.mxu0
        %v539 = vadd.f32 0.0, %v538
        %540 = vdwg.mxu0
        %v541 = vxor.u32 %v539, 2147483648
        %v542 = vmul.f32 %v541, 1.442695
        %v543 = vpow.pop %v542
        %v544 = vadd.f32 %v543, 1.0
        %v545 = vrcp.pop %v544
        %v546 = vmul.f32 %v544, %v545
        %v547 = vsub.f32 1.0, %v546
        %v548 = vmul.f32 %v545, %v547
        %v549 = vadd.f32 %v545, %v548
        %vm550 = vweird.f32 %v544
        %vm551 = vweird.f32 %v545
        %vm552 = vmor %vm550, %vm551
        %v553 = vsel %vm552, %v545, %v549
        %v554 = vand.u32 2147483647, %v544
        %vm555 = vcmp.eq.f32.partialorder %v554, 8.507059e+37
        %v556 = vand.u32 %v544, 2147483648
        %v557 = vor.u32 1.1754944e-38, %v556
        %v558 = vsel %vm555, %v557, %v553
        %v559 = vmul.f32 1.0, %v558
        %v560 = vperm.slane %v559, 0
        %v561 = vmul.f32 %v374, %v560
        %v562 = vmul.f32 %v375, %v560
        %v563 = vmul.f32 %v376, %v560
        %v564 = vmul.f32 %v377, %v560
        %v565 = vmul.f32 %v378, %v560
        %v566 = vmul.f32 %v379, %v560
        %v567 = vmul.f32 %v380, %v560
        %v568 = vmul.f32 %v381, %v560
        %v569 = vmul.f32 %v382, %v560
        %v570 = vmul.f32 %v383, %v560
        %v571 = vmul.f32 %v384, %v560
        %v572 = vmul.f32 %v385, %v560
        %v573 = vmul.f32 %v386, %v560
        %v574 = vmul.f32 %v387, %v560
        %v575 = vmul.f32 %v388, %v560
        %v576 = vmul.f32 %v389, %v560
        %v577 = vmul.f32 %v390, %v560
        %v578 = vmul.f32 %v391, %v560
        %v579 = vmul.f32 %v392, %v560
        %v580 = vmul.f32 %v393, %v560
        %v581 = vmul.f32 %v394, %v560
        %v582 = vmul.f32 %v395, %v560
        %v583 = vmul.f32 %v396, %v560
        %v584 = vmul.f32 %v397, %v560
        %v585 = vmul.f32 %v398, %v560
        %v586 = vmul.f32 %v399, %v560
        %v587 = vmul.f32 %v400, %v560
        %v588 = vmul.f32 %v401, %v560
        %v589 = vmul.f32 %v402, %v560
        %v590 = vmul.f32 %v403, %v560
        %v591 = vmul.f32 %v404, %v560
        %v592 = vmul.f32 %v405, %v560
        %v593 = vld [vmem:[%s269] sm:$0xff]
        %v594 = vld [vmem:[%s269 + $0x8] sm:$0xff]
        %v595 = vld [vmem:[%s269 + $0x10] sm:$0xff]
        %v596 = vld [vmem:[%s269 + $0x18] sm:$0xff]
        %v597 = vld [vmem:[%s269 + $0x20] sm:$0xff]
        %v598 = vld [vmem:[%s269 + $0x28] sm:$0xff]
        %v599 = vld [vmem:[%s269 + $0x30] sm:$0xff]
        %v600 = vld [vmem:[%s269 + $0x38] sm:$0xff]
        %v601 = vld [vmem:[%s269 + $0x40] sm:$0xff]
        %v602 = vld [vmem:[%s269 + $0x48] sm:$0xff]
        %v603 = vld [vmem:[%s269 + $0x50] sm:$0xff]
        %v604 = vld [vmem:[%s269 + $0x58] sm:$0xff]
        %v605 = vld [vmem:[%s269 + $0x60] sm:$0xff]
        %v606 = vld [vmem:[%s269 + $0x68] sm:$0xff]
        %v607 = vld [vmem:[%s269 + $0x70] sm:$0xff]
        %v608 = vld [vmem:[%s269 + $0x78] sm:$0xff]
        %v609 = vld [vmem:[%s269 + $0x80] sm:$0xff]
        %v610 = vld [vmem:[%s269 + $0x88] sm:$0xff]
        %v611 = vld [vmem:[%s269 + $0x90] sm:$0xff]
        %v612 = vld [vmem:[%s269 + $0x98] sm:$0xff]
        %v613 = vld [vmem:[%s269 + $0xa0] sm:$0xff]
        %v614 = vld [vmem:[%s269 + $0xa8] sm:$0xff]
        %v615 = vld [vmem:[%s269 + $0xb0] sm:$0xff]
        %v616 = vld [vmem:[%s269 + $0xb8] sm:$0xff]
        %v617 = vld [vmem:[%s269 + $0xc0] sm:$0xff]
        %v618 = vld [vmem:[%s269 + $0xc8] sm:$0xff]
        %v619 = vld [vmem:[%s269 + $0xd0] sm:$0xff]
        %v620 = vld [vmem:[%s269 + $0xd8] sm:$0xff]
        %v621 = vld [vmem:[%s269 + $0xe0] sm:$0xff]
        %v622 = vld [vmem:[%s269 + $0xe8] sm:$0xff]
        %v623 = vld [vmem:[%s269 + $0xf0] sm:$0xff]
        %v624 = vld [vmem:[%s269 + $0xf8] sm:$0xff]
        %v625 = vadd.f32 %v561, %v593
        %v626 = vadd.f32 %v562, %v594
        %v627 = vadd.f32 %v563, %v595
        %v628 = vadd.f32 %v564, %v596
        %v629 = vadd.f32 %v565, %v597
        %v630 = vadd.f32 %v566, %v598
        %v631 = vadd.f32 %v567, %v599
        %v632 = vadd.f32 %v568, %v600
        %v633 = vadd.f32 %v569, %v601
        %v634 = vadd.f32 %v570, %v602
        %v635 = vadd.f32 %v571, %v603
        %v636 = vadd.f32 %v572, %v604
        %v637 = vadd.f32 %v573, %v605
        %v638 = vadd.f32 %v574, %v606
        %v639 = vadd.f32 %v575, %v607
        %v640 = vadd.f32 %v576, %v608
        %v641 = vadd.f32 %v577, %v609
        %v642 = vadd.f32 %v578, %v610
        %v643 = vadd.f32 %v579, %v611
        %v644 = vadd.f32 %v580, %v612
        %v645 = vadd.f32 %v581, %v613
        %v646 = vadd.f32 %v582, %v614
        %v647 = vadd.f32 %v583, %v615
        %v648 = vadd.f32 %v584, %v616
        %v649 = vadd.f32 %v585, %v617
        %v650 = vadd.f32 %v586, %v618
        %v651 = vadd.f32 %v587, %v619
        %v652 = vadd.f32 %v588, %v620
        %v653 = vadd.f32 %v589, %v621
        %v654 = vadd.f32 %v590, %v622
        %v655 = vadd.f32 %v591, %v623
        %v656 = vadd.f32 %v592, %v624
        %v657 = vmax.f32 %v625, 0.0
        %v658 = vmax.f32 %v626, 0.0
        %v659 = vmax.f32 %v627, 0.0
        %v660 = vmax.f32 %v628, 0.0
        %v661 = vmax.f32 %v629, 0.0
        %v662 = vmax.f32 %v630, 0.0
        %v663 = vmax.f32 %v631, 0.0
        %v664 = vmax.f32 %v632, 0.0
        %v665 = vmax.f32 %v633, 0.0
        %v666 = vmax.f32 %v634, 0.0
        %v667 = vmax.f32 %v635, 0.0
        %v668 = vmax.f32 %v636, 0.0
        %v669 = vmax.f32 %v637, 0.0
        %v670 = vmax.f32 %v638, 0.0
        %v671 = vmax.f32 %v639, 0.0
        %v672 = vmax.f32 %v640, 0.0
        %v673 = vmax.f32 %v641, 0.0
        %v674 = vmax.f32 %v642, 0.0
        %v675 = vmax.f32 %v643, 0.0
        %v676 = vmax.f32 %v644, 0.0
        %v677 = vmax.f32 %v645, 0.0
        %v678 = vmax.f32 %v646, 0.0
        %v679 = vmax.f32 %v647, 0.0
        %v680 = vmax.f32 %v648, 0.0
        %v681 = vmax.f32 %v649, 0.0
        %v682 = vmax.f32 %v650, 0.0
        %v683 = vmax.f32 %v651, 0.0
        %v684 = vmax.f32 %v652, 0.0
        %v685 = vmax.f32 %v653, 0.0
        %v686 = vmax.f32 %v654, 0.0
        %v687 = vmax.f32 %v655, 0.0
        %v688 = vmax.f32 %v656, 0.0
        %689 = vst.msk [vmem:[%s259] sm:$0xff] %vm406, %v657
        %690 = vst.msk [vmem:[%s259 + $0x8] sm:$0xff] %vm406, %v658
        %691 = vst.msk [vmem:[%s259 + $0x10] sm:$0xff] %vm406, %v659
        %692 = vst.msk [vmem:[%s259 + $0x18] sm:$0xff] %vm406, %v660
        %693 = vst.msk [vmem:[%s259 + $0x20] sm:$0xff] %vm406, %v661
        %694 = vst.msk [vmem:[%s259 + $0x28] sm:$0xff] %vm406, %v662
        %695 = vst.msk [vmem:[%s259 + $0x30] sm:$0xff] %vm406, %v663
        %696 = vst.msk [vmem:[%s259 + $0x38] sm:$0xff] %vm406, %v664
        %697 = vst.msk [vmem:[%s259 + $0x40] sm:$0xff] %vm406, %v665
        %698 = vst.msk [vmem:[%s259 + $0x48] sm:$0xff] %vm406, %v666
        %699 = vst.msk [vmem:[%s259 + $0x50] sm:$0xff] %vm406, %v667
        %700 = vst.msk [vmem:[%s259 + $0x58] sm:$0xff] %vm406, %v668
        %701 = vst.msk [vmem:[%s259 + $0x60] sm:$0xff] %vm406, %v669
        %702 = vst.msk [vmem:[%s259 + $0x68] sm:$0xff] %vm406, %v670
        %703 = vst.msk [vmem:[%s259 + $0x70] sm:$0xff] %vm406, %v671
        %704 = vst.msk [vmem:[%s259 + $0x78] sm:$0xff] %vm406, %v672
        %705 = vst.msk [vmem:[%s259 + $0x80] sm:$0xff] %vm406, %v673
        %706 = vst.msk [vmem:[%s259 + $0x88] sm:$0xff] %vm406, %v674
        %707 = vst.msk [vmem:[%s259 + $0x90] sm:$0xff] %vm406, %v675
        %708 = vst.msk [vmem:[%s259 + $0x98] sm:$0xff] %vm406, %v676
        %709 = vst.msk [vmem:[%s259 + $0xa0] sm:$0xff] %vm406, %v677
        %710 = vst.msk [vmem:[%s259 + $0xa8] sm:$0xff] %vm406, %v678
        %711 = vst.msk [vmem:[%s259 + $0xb0] sm:$0xff] %vm406, %v679
        %712 = vst.msk [vmem:[%s259 + $0xb8] sm:$0xff] %vm406, %v680
        %713 = vst.msk [vmem:[%s259 + $0xc0] sm:$0xff] %vm406, %v681
        %714 = vst.msk [vmem:[%s259 + $0xc8] sm:$0xff] %vm406, %v682
        %715 = vst.msk [vmem:[%s259 + $0xd0] sm:$0xff] %vm406, %v683
        %716 = vst.msk [vmem:[%s259 + $0xd8] sm:$0xff] %vm406, %v684
        %717 = vst.msk [vmem:[%s259 + $0xe0] sm:$0xff] %vm406, %v685
        %718 = vst.msk [vmem:[%s259 + $0xe8] sm:$0xff] %vm406, %v686
        %719 = vst.msk [vmem:[%s259 + $0xf0] sm:$0xff] %vm406, %v687
        %720 = vst.msk [vmem:[%s259 + $0xf8] sm:$0xff] %vm406, %v688
        %s721 = sand.u32 %s164, 1
        %s722 = scalar_lea.sflag [#allocation3], %s721
        %s723 = sand.u32 %s164, 1
        %s724 = smul.addr %s723, 256
        %s725 = scalar_lea.vmem [#allocation2], %s724
        // Predicated region
        $region45: #{_lambda_.7} parent=43 // pred_check
          %p726 = pneg %p174
        $region46: #{_lambda_.7} parent=43 // pred_check_branch
          %728 = sbr.rel (%p726) target = $region48
        $region47: #{_lambda_.7} parent=43 // pred_region
          %730 = vsyncadd %s722, 0
          %s731 = smul.addr %s20, 32
          %s732 = smul.addr %s731, 8
          %s733 = scalar_lea.hbm %s6, %s732
          %s734 = sshll.u32 %s725, 4
          %s735 = int_to_ptr.vmem [resolvable:$true] %s734
          %s736 = sshll.u32 %s733, 4
          %s737 = int_to_ptr.hbm [resolvable:$true] %s736
          %742 = dma.vmem_to_hbm [thread:$0]  %s735, 4096, %s737, %s722, 128, 128, 8
        $region48: #{_lambda_.7} parent=43 // pred_fallthru
          _
      $region44: #{_lambda_.7} parent=5 // pred_fallthru
        _
      %p743 = scmp.le.s32.totalorder 2, %s15
      // Predicated region
      $region49: #{_lambda_.7} parent=5 // pred_check
        %p744 = pneg %p743
      $region50: #{_lambda_.7} parent=5 // pred_check_branch
        %746 = sbr.rel (%p744) target = $region52
      $region51: #{_lambda_.7} parent=5 // pred_region
        %s747 = ssub.s32 %s15, 2
        // Predicated region
        $region53: #{_lambda_.7} parent=51 // pred_check
          %p748 = pneg %p180
        $region54: #{_lambda_.7} parent=51 // pred_check_branch
          %750 = sbr.rel (%p748) target = $region56
        $region55: #{_lambda_.7} parent=51 // pred_region
          %s751 = sand.u32 %s165, 1
          %s752 = scalar_lea.sflag [#allocation3], %s751
          %s753 = sand.u32 %s165, 1
          %s754 = smul.addr %s753, 256
          %s755 = scalar_lea.vmem [#allocation2], %s754
          %757 = dma.done %s752, 4096
        $region56: #{_lambda_.7} parent=51 // pred_fallthru
          _
      $region52: #{_lambda_.7} parent=5 // pred_fallthru
        _
    $region6: #{_lambda_.7} parent=1 // loop_footer
      %s19 = sadd.s32 1, %s15
    $region7: #{_lambda_.7} parent=1 // loop_footer_branch
      %14 = sbr.rel target = $region3
    $region8: #{_lambda_.7} parent=1 // loop_exit
      _
    %758 = vsyncpa [#allocation3], 1
    %s759 = scalar_lea.sflag [#allocation3], 1
    %760 = vsyncpa %s759, 1

// kernel: _lambda_.5
$region0: #{_lambda_.5}
  #allocation0 [shape = 'u32[]', space=smem, size = 0x4, offset = 0x4, fixed_abs, tag = 'smem constant byte address 0x4 - core index']
  #allocation1 [shape = 'u32[72,128]{1,0:T(1,128)}', space=vmem, size = 0x9000, scoped, tag = 'internal scratch']
  %s0 = inlined_call_operand.vmem [shape: bf16[2,256,24], index: 0, kind: input, shape index: {}]
  %s1 = inlined_call_operand.vmem [shape: f32[1,24], index: 1, kind: input, shape index: {}]
  %s2 = inlined_call_operand.vmem [shape: f32[1,24], index: 2, kind: input, shape index: {}]
  %s3 = inlined_call_operand.vmem [shape: f32[256,9], index: 3, kind: input, shape index: {}]
  %s4 = inlined_call_operand.vmem [shape: bf16[3,54,6], index: 4, kind: input, shape index: {}]
  %s5 = inlined_call_operand.vmem [shape: f32[2,12,2], index: 5, kind: input, shape index: {}]
  %s6 = inlined_call_operand.vmem [shape: f32[2,2,6], index: 6, kind: input, shape index: {}]
  %s7 = inlined_call_operand.vmem [shape: bf16[2,256,24], index: 7, kind: output, shape index: {0}]
  %s8 = inlined_call_operand.vmem [shape: f32[2,2,18], index: 8, kind: output, shape index: {1}]
  %9 = xla_tuple %s7, %s8
  %s10 = sld [smem:[#allocation0]]
  $region69: #{_lambda_.5} parent=0
    _
  %s12 = ssub.s32 1, %s10
  %s13 = scalar_select 0, %s12, %s10
  loop: start=0, step=1, limit=4
  $region2: #{_lambda_.5} parent=0 // loop_pre_header
    _
  $region3: #{_lambda_.5} parent=0 // loop_header
    %s15 = sphi 0, %s19
    %p16 = scmp.ge.s32.totalorder %s15, 4
    %s25 = sphi 0, %s27
    %s28 = sphi 0, %s25
    %s29 = sphi 0, %s28
    %s45 = sphi 0, %s29
    %s49 = sphi 0, %s49
    %s51 = sphi 0, %s49
    %s52 = sphi 0, %s51
    %s66 = sphi 0, %s52
    %s70 = sphi 0, %s70
    %s72 = sphi 0, %s70
    %s73 = sphi 0, %s72
    %s87 = sphi 0, %s73
    %s91 = sphi 0, %s91
    %s93 = sphi 0, %s91
    %s94 = sphi 0, %s93
    %s108 = sphi 0, %s94
    %s112 = sphi 0, %s112
    %s114 = sphi 0, %s112
    %s115 = sphi 0, %s114
    %s129 = sphi 0, %s115
    %s133 = sphi 0, %s133
    %s135 = sphi 0, %s133
    %s136 = sphi 0, %s135
    %s150 = sphi 0, %s136
    %s154 = sphi 0, %s154
    %s156 = sphi 0, %s154
    %s157 = sphi 0, %s156
    %s171 = sphi 0, %s157
    %s177 = sphi 0, %s179
    %s180 = sphi 0, %s177
    %s181 = sphi 0, %s180
    %s197 = sphi 0, %s181
    %s203 = sphi 0, %s205
    %s206 = sphi 0, %s203
    %s207 = sphi 0, %s206
    %s223 = sphi 0, %s207
  $region4: #{_lambda_.5} parent=0 // loop_header_branch
    %18 = sbr.rel (%p16) target = $region8
  $region5: #{_lambda_.5} parent=0 // loop_body
    %s20 = ssub.s32 %s15, 1
    %s21 = ssub.s32 %s15, 2
    %s22 = sadd.s32 %s15, 1
    %s23 = ssub.s32 %s15, %s22
    %p24 = scmp.eq.s32.totalorder %s23, 0
    %s26 = sadd.s32 %s25, 1
    %s27 = scalar_select %p24, %s25, %s26
    %p30 = pneg %p24
    %p31 = scmp.eq.s32.totalorder %s15, 1
    %p32 = por %p30, %p31
    %p33 = scmp.ne.s32.totalorder %s25, %s28
    %p34 = scmp.eq.s32.totalorder %s15, 0
    %p35 = por %p33, %p34
    %p36 = scmp.ne.s32.totalorder %s25, %s28
    %p37 = scmp.eq.s32.totalorder %s20, 1
    %p38 = por %p36, %p37
    %p39 = scmp.ne.s32.totalorder %s28, %s29
    %p40 = scmp.eq.s32.totalorder %s20, 0
    %p41 = por %p39, %p40
    %p42 = scmp.ne.s32.totalorder %s28, %s29
    %p43 = scmp.eq.s32.totalorder %s21, 1
    %p44 = por %p42, %p43
    %p46 = scmp.ne.s32.totalorder %s29, %s45
    %p47 = scmp.eq.s32.totalorder %s21, 0
    %p48 = por %p46, %p47
    %s50 = sadd.s32 %s49, 1
    %p53 = scmp.eq.s32.totalorder %s15, 1
    %p54 = scmp.ne.s32.totalorder %s49, %s51
    %p55 = scmp.eq.s32.totalorder %s15, 0
    %p56 = por %p54, %p55
    %p57 = scmp.ne.s32.totalorder %s49, %s51
    %p58 = scmp.eq.s32.totalorder %s20, 1
    %p59 = por %p57, %p58
    %p60 = scmp.ne.s32.totalorder %s51, %s52
    %p61 = scmp.eq.s32.totalorder %s20, 0
    %p62 = por %p60, %p61
    %p63 = scmp.ne.s32.totalorder %s51, %s52
    %p64 = scmp.eq.s32.totalorder %s21, 1
    %p65 = por %p63, %p64
    %p67 = scmp.ne.s32.totalorder %s52, %s66
    %p68 = scmp.eq.s32.totalorder %s21, 0
    %p69 = por %p67, %p68
    %s71 = sadd.s32 %s70, 1
    %p74 = scmp.eq.s32.totalorder %s15, 1
    %p75 = scmp.ne.s32.totalorder %s70, %s72
    %p76 = scmp.eq.s32.totalorder %s15, 0
    %p77 = por %p75, %p76
    %p78 = scmp.ne.s32.totalorder %s70, %s72
    %p79 = scmp.eq.s32.totalorder %s20, 1
    %p80 = por %p78, %p79
    %p81 = scmp.ne.s32.totalorder %s72, %s73
    %p82 = scmp.eq.s32.totalorder %s20, 0
    %p83 = por %p81, %p82
    %p84 = scmp.ne.s32.totalorder %s72, %s73
    %p85 = scmp.eq.s32.totalorder %s21, 1
    %p86 = por %p84, %p85
    %p88 = scmp.ne.s32.totalorder %s73, %s87
    %p89 = scmp.eq.s32.totalorder %s21, 0
    %p90 = por %p88, %p89
    %s92 = sadd.s32 %s91, 1
    %p95 = scmp.eq.s32.totalorder %s15, 1
    %p96 = scmp.ne.s32.totalorder %s91, %s93
    %p97 = scmp.eq.s32.totalorder %s15, 0
    %p98 = por %p96, %p97
    %p99 = scmp.ne.s32.totalorder %s91, %s93
    %p100 = scmp.eq.s32.totalorder %s20, 1
    %p101 = por %p99, %p100
    %p102 = scmp.ne.s32.totalorder %s93, %s94
    %p103 = scmp.eq.s32.totalorder %s20, 0
    %p104 = por %p102, %p103
    %p105 = scmp.ne.s32.totalorder %s93, %s94
    %p106 = scmp.eq.s32.totalorder %s21, 1
    %p107 = por %p105, %p106
    %p109 = scmp.ne.s32.totalorder %s94, %s108
    %p110 = scmp.eq.s32.totalorder %s21, 0
    %p111 = por %p109, %p110
    %s113 = sadd.s32 %s112, 1
    %p116 = scmp.eq.s32.totalorder %s15, 1
    %p117 = scmp.ne.s32.totalorder %s112, %s114
    %p118 = scmp.eq.s32.totalorder %s15, 0
    %p119 = por %p117, %p118
    %p120 = scmp.ne.s32.totalorder %s112, %s114
    %p121 = scmp.eq.s32.totalorder %s20, 1
    %p122 = por %p120, %p121
    %p123 = scmp.ne.s32.totalorder %s114, %s115
    %p124 = scmp.eq.s32.totalorder %s20, 0
    %p125 = por %p123, %p124
    %p126 = scmp.ne.s32.totalorder %s114, %s115
    %p127 = scmp.eq.s32.totalorder %s21, 1
    %p128 = por %p126, %p127
    %p130 = scmp.ne.s32.totalorder %s115, %s129
    %p131 = scmp.eq.s32.totalorder %s21, 0
    %p132 = por %p130, %p131
    %s134 = sadd.s32 %s133, 1
    %p137 = scmp.eq.s32.totalorder %s15, 1
    %p138 = scmp.ne.s32.totalorder %s133, %s135
    %p139 = scmp.eq.s32.totalorder %s15, 0
    %p140 = por %p138, %p139
    %p141 = scmp.ne.s32.totalorder %s133, %s135
    %p142 = scmp.eq.s32.totalorder %s20, 1
    %p143 = por %p141, %p142
    %p144 = scmp.ne.s32.totalorder %s135, %s136
    %p145 = scmp.eq.s32.totalorder %s20, 0
    %p146 = por %p144, %p145
    %p147 = scmp.ne.s32.totalorder %s135, %s136
    %p148 = scmp.eq.s32.totalorder %s21, 1
    %p149 = por %p147, %p148
    %p151 = scmp.ne.s32.totalorder %s136, %s150
    %p152 = scmp.eq.s32.totalorder %s21, 0
    %p153 = por %p151, %p152
    %s155 = sadd.s32 %s154, 1
    %p158 = scmp.eq.s32.totalorder %s15, 1
    %p159 = scmp.ne.s32.totalorder %s154, %s156
    %p160 = scmp.eq.s32.totalorder %s15, 0
    %p161 = por %p159, %p160
    %p162 = scmp.ne.s32.totalorder %s154, %s156
    %p163 = scmp.eq.s32.totalorder %s20, 1
    %p164 = por %p162, %p163
    %p165 = scmp.ne.s32.totalorder %s156, %s157
    %p166 = scmp.eq.s32.totalorder %s20, 0
    %p167 = por %p165, %p166
    %p168 = scmp.ne.s32.totalorder %s156, %s157
    %p169 = scmp.eq.s32.totalorder %s21, 1
    %p170 = por %p168, %p169
    %p172 = scmp.ne.s32.totalorder %s157, %s171
    %p173 = scmp.eq.s32.totalorder %s21, 0
    %p174 = por %p172, %p173
    %s175 = ssub.s32 %s15, %s22
    %p176 = scmp.eq.s32.totalorder %s175, 0
    %s178 = sadd.s32 %s177, 1
    %s179 = scalar_select %p176, %s177, %s178
    %p182 = pneg %p176
    %p183 = scmp.eq.s32.totalorder %s15, 1
    %p184 = por %p182, %p183
    %p185 = scmp.ne.s32.totalorder %s177, %s180
    %p186 = scmp.eq.s32.totalorder %s15, 0
    %p187 = por %p185, %p186
    %p188 = scmp.ne.s32.totalorder %s177, %s180
    %p189 = scmp.eq.s32.totalorder %s20, 1
    %p190 = por %p188, %p189
    %p191 = scmp.ne.s32.totalorder %s180, %s181
    %p192 = scmp.eq.s32.totalorder %s20, 0
    %p193 = por %p191, %p192
    %p194 = scmp.ne.s32.totalorder %s180, %s181
    %p195 = scmp.eq.s32.totalorder %s21, 1
    %p196 = por %p194, %p195
    %p198 = scmp.ne.s32.totalorder %s181, %s197
    %p199 = scmp.eq.s32.totalorder %s21, 0
    %p200 = por %p198, %p199
    %s201 = ssub.s32 %s15, %s22
    %p202 = scmp.eq.s32.totalorder %s201, 0
    %s204 = sadd.s32 %s203, 1
    %s205 = scalar_select %p202, %s203, %s204
    %p208 = pneg %p202
    %p209 = scmp.eq.s32.totalorder %s15, 1
    %p210 = por %p208, %p209
    %p211 = scmp.ne.s32.totalorder %s203, %s206
    %p212 = scmp.eq.s32.totalorder %s15, 0
    %p213 = por %p211, %p212
    %p214 = scmp.ne.s32.totalorder %s203, %s206
    %p215 = scmp.eq.s32.totalorder %s20, 1
    %p216 = por %p214, %p215
    %p217 = scmp.ne.s32.totalorder %s206, %s207
    %p218 = scmp.eq.s32.totalorder %s20, 0
    %p219 = por %p217, %p218
    %p220 = scmp.ne.s32.totalorder %s206, %s207
    %p221 = scmp.eq.s32.totalorder %s21, 1
    %p222 = por %p220, %p221
    %p224 = scmp.ne.s32.totalorder %s207, %s223
    %p225 = scmp.eq.s32.totalorder %s21, 0
    %p226 = por %p224, %p225
    %p227 = scmp.le.s32.totalorder 1, %s15
    %p228 = scmp.lt.s32.totalorder %s15, 3
    %p229 = pnand %p227, %p228
    %p230 = pneg %p229
    // Predicated region
    $region9: #{_lambda_.5} parent=5 // pred_check
      _
    $region10: #{_lambda_.5} parent=5 // pred_check_branch
      %232 = sbr.rel (%p229) target = $region12
    $region11: #{_lambda_.5} parent=5 // pred_region
      %s233 = ssub.s32 %s15, 1
      // Predicated region
      $region13: #{_lambda_.5} parent=11 // pred_check
        %p234 = pneg %p62
      $region14: #{_lambda_.5} parent=11 // pred_check_branch
        %236 = sbr.rel (%p234) target = $region16
      $region15: #{_lambda_.5} parent=11 // pred_region
        _
      $region16: #{_lambda_.5} parent=11 // pred_fallthru
        _
      // Predicated region
      $region17: #{_lambda_.5} parent=11 // pred_check
        %p237 = pneg %p83
      $region18: #{_lambda_.5} parent=11 // pred_check_branch
        %239 = sbr.rel (%p237) target = $region20
      $region19: #{_lambda_.5} parent=11 // pred_region
        _
      $region20: #{_lambda_.5} parent=11 // pred_fallthru
        _
      // Predicated region
      $region21: #{_lambda_.5} parent=11 // pred_check
        %p240 = pneg %p104
      $region22: #{_lambda_.5} parent=11 // pred_check_branch
        %242 = sbr.rel (%p240) target = $region24
      $region23: #{_lambda_.5} parent=11 // pred_region
        _
      $region24: #{_lambda_.5} parent=11 // pred_fallthru
        _
      // Predicated region
      $region25: #{_lambda_.5} parent=11 // pred_check
        %p243 = pneg %p125
      $region26: #{_lambda_.5} parent=11 // pred_check_branch
        %245 = sbr.rel (%p243) target = $region28
      $region27: #{_lambda_.5} parent=11 // pred_region
        _
      $region28: #{_lambda_.5} parent=11 // pred_fallthru
        _
      // Predicated region
      $region29: #{_lambda_.5} parent=11 // pred_check
        %p246 = pneg %p146
      $region30: #{_lambda_.5} parent=11 // pred_check_branch
        %248 = sbr.rel (%p246) target = $region32
      $region31: #{_lambda_.5} parent=11 // pred_region
        _
      $region32: #{_lambda_.5} parent=11 // pred_fallthru
        _
      // Predicated region
      $region33: #{_lambda_.5} parent=11 // pred_check
        %p249 = pneg %p167
      $region34: #{_lambda_.5} parent=11 // pred_check_branch
        %251 = sbr.rel (%p249) target = $region36
      $region35: #{_lambda_.5} parent=11 // pred_region
        _
      $region36: #{_lambda_.5} parent=11 // pred_fallthru
        _
    $region12: #{_lambda_.5} parent=5 // pred_fallthru
      _
    %p252 = scmp.lt.s32.totalorder %s15, 2
    // Predicated region
    $region37: #{_lambda_.5} parent=5 // pred_check
      %p253 = pneg %p252
    $region38: #{_lambda_.5} parent=5 // pred_check_branch
      %255 = sbr.rel (%p253) target = $region40
    $region39: #{_lambda_.5} parent=5 // pred_region
      // Predicated region
      $region41: #{_lambda_.5} parent=39 // pred_check
        %p256 = pneg %p35
      $region42: #{_lambda_.5} parent=39 // pred_check_branch
        %258 = sbr.rel (%p256) target = $region44
      $region43: #{_lambda_.5} parent=39 // pred_region
        %p259 = scmp.lt.s32.totalorder %s15, 1
        %s260 = scalar_select %p259, %s15, 1
        %s261 = smul.addr %s260, 32
        %s262 = smul.addr %s261, 4
        %s263 = scalar_lea.vmem %s0, %s262
      $region44: #{_lambda_.5} parent=39 // pred_fallthru
        _
    $region40: #{_lambda_.5} parent=5 // pred_fallthru
      _
    %p264 = scmp.le.s32.totalorder 1, %s15
    %p265 = scmp.lt.s32.totalorder %s15, 3
    %p266 = pnand %p264, %p265
    %p267 = pneg %p266
    // Predicated region
    $region45: #{_lambda_.5} parent=5 // pred_check
      _
    $region46: #{_lambda_.5} parent=5 // pred_check_branch
      %269 = sbr.rel (%p266) target = $region48
    $region47: #{_lambda_.5} parent=5 // pred_region
      %s270 = ssub.s32 %s15, 1
      %p271 = scmp.lt.s32.totalorder %s20, 1
      %s272 = scalar_select %p271, %s20, 1
      %s273 = smul.addr %s272, 32
      %s274 = smul.addr %s273, 4
      %s275 = scalar_lea.vmem %s0, %s274
      %p276 = pneg %p41
      %p277 = pneg %p38
      %p278 = pneg %p62
      %p279 = pneg %p59
      %p280 = pneg %p83
      %p281 = pneg %p80
      %p282 = pneg %p104
      %p283 = pneg %p101
      %p284 = pneg %p125
      %p285 = pneg %p122
      %p286 = pneg %p146
      %p287 = pneg %p143
      %p288 = pneg %p167
      %p289 = pneg %p164
      %p290 = pneg %p193
      %p291 = pneg %p190
      %p292 = scmp.lt.s32.totalorder %s20, 1
      %s293 = scalar_select %p292, %s20, 1
      %s294 = smul.addr %s293, 32
      %s295 = smul.addr %s294, 4
      %s296 = scalar_lea.vmem %s7, %s295
      %p297 = pneg %p219
      %p298 = pneg %p216
      %p299 = scmp.lt.s32.totalorder %s20, 1
      %s300 = scalar_select %p299, %s20, 1
      %s301 = smul.addr %s300, 2
      %s302 = scalar_lea.vmem %s8, %s301
      %p303 = scmp.lt.s32.totalorder %s20, 1
      %s304 = scalar_select %p303, %s20, 1
      %s305 = smul.addr %s304, 32
      %s306 = smul.addr %s305, 4
      %s307 = scalar_lea.vmem %s0, %s306
      %p308 = scmp.lt.s32.totalorder %s20, 1
      %s309 = scalar_select %p308, %s20, 1
      %s310 = smul.addr %s309, 32
      %s311 = smul.addr %s310, 4
      %s312 = scalar_lea.vmem %s7, %s311
      %p313 = scmp.lt.s32.totalorder %s20, 1
      %s314 = scalar_select %p313, %s20, 1
      %s315 = smul.addr %s314, 2
      %s316 = scalar_lea.vmem %s8, %s315
      %v318 = vld [vmem:[%s307] sm:$0xf]
      %v319 = vld [vmem:[%s307 + $0x4] sm:$0xf]
      %v320 = vld [vmem:[%s307 + $0x8] sm:$0xf]
      %v321 = vld [vmem:[%s307 + $0xc] sm:$0xf]
      %v322 = vld [vmem:[%s307 + $0x10] sm:$0xf]
      %v323 = vld [vmem:[%s307 + $0x14] sm:$0xf]
      %v324 = vld [vmem:[%s307 + $0x18] sm:$0xf]
      %v325 = vld [vmem:[%s307 + $0x1c] sm:$0xf]
      %v326 = vld [vmem:[%s307 + $0x20] sm:$0xf]
      %v327 = vld [vmem:[%s307 + $0x24] sm:$0xf]
      %v328 = vld [vmem:[%s307 + $0x28] sm:$0xf]
      %v329 = vld [vmem:[%s307 + $0x2c] sm:$0xf]
      %v330 = vld [vmem:[%s307 + $0x30] sm:$0xf]
      %v331 = vld [vmem:[%s307 + $0x34] sm:$0xf]
      %v332 = vld [vmem:[%s307 + $0x38] sm:$0xf]
      %v333 = vld [vmem:[%s307 + $0x3c] sm:$0xf]
      %v334 = vld [vmem:[%s307 + $0x40] sm:$0xf]
      %v335 = vld [vmem:[%s307 + $0x44] sm:$0xf]
      %v336 = vld [vmem:[%s307 + $0x48] sm:$0xf]
      %v337 = vld [vmem:[%s307 + $0x4c] sm:$0xf]
      %v338 = vld [vmem:[%s307 + $0x50] sm:$0xf]
      %v339 = vld [vmem:[%s307 + $0x54] sm:$0xf]
      %v340 = vld [vmem:[%s307 + $0x58] sm:$0xf]
      %v341 = vld [vmem:[%s307 + $0x5c] sm:$0xf]
      %v342 = vld [vmem:[%s307 + $0x60] sm:$0xf]
      %v343 = vld [vmem:[%s307 + $0x64] sm:$0xf]
      %v344 = vld [vmem:[%s307 + $0x68] sm:$0xf]
      %v345 = vld [vmem:[%s307 + $0x6c] sm:$0xf]
      %v346 = vld [vmem:[%s307 + $0x70] sm:$0xf]
      %v347 = vld [vmem:[%s307 + $0x74] sm:$0xf]
      %v348 = vld [vmem:[%s307 + $0x78] sm:$0xf]
      %v349 = vld [vmem:[%s307 + $0x7c] sm:$0xf]
      %v350 = vunpack.c.l.bf16 %v318
      %v351 = vunpack.c.l.bf16 %v319
      %v352 = vunpack.c.l.bf16 %v320
      %v353 = vunpack.c.l.bf16 %v321
      %v354 = vunpack.c.l.bf16 %v322
      %v355 = vunpack.c.l.bf16 %v323
      %v356 = vunpack.c.l.bf16 %v324
      %v357 = vunpack.c.l.bf16 %v325
      %v358 = vunpack.c.l.bf16 %v326
      %v359 = vunpack.c.l.bf16 %v327
      %v360 = vunpack.c.l.bf16 %v328
      %v361 = vunpack.c.l.bf16 %v329
      %v362 = vunpack.c.l.bf16 %v330
      %v363 = vunpack.c.l.bf16 %v331
      %v364 = vunpack.c.l.bf16 %v332
      %v365 = vunpack.c.l.bf16 %v333
      %v366 = vunpack.c.l.bf16 %v334
      %v367 = vunpack.c.l.bf16 %v335
      %v368 = vunpack.c.l.bf16 %v336
      %v369 = vunpack.c.l.bf16 %v337
      %v370 = vunpack.c.l.bf16 %v338
      %v371 = vunpack.c.l.bf16 %v339
      %v372 = vunpack.c.l.bf16 %v340
      %v373 = vunpack.c.l.bf16 %v341
      %v374 = vunpack.c.l.bf16 %v342
      %v375 = vunpack.c.l.bf16 %v343
      %v376 = vunpack.c.l.bf16 %v344
      %v377 = vunpack.c.l.bf16 %v345
      %v378 = vunpack.c.l.bf16 %v346
      %v379 = vunpack.c.l.bf16 %v347
      %v380 = vunpack.c.l.bf16 %v348
      %v381 = vunpack.c.l.bf16 %v349
      %v382 = vld [vmem:[%s1] sm:$0x1]
      %v384 = vperm.slane %v382, 0
      %v386 = vmul.f32 %v350, %v384
      %v387 = vmul.f32 %v351, %v384
      %v388 = vmul.f32 %v352, %v384
      %v389 = vmul.f32 %v353, %v384
      %v390 = vmul.f32 %v354, %v384
      %v391 = vmul.f32 %v355, %v384
      %v392 = vmul.f32 %v356, %v384
      %v393 = vmul.f32 %v357, %v384
      %v394 = vmul.f32 %v358, %v384
      %v395 = vmul.f32 %v359, %v384
      %v396 = vmul.f32 %v360, %v384
      %v397 = vmul.f32 %v361, %v384
      %v398 = vmul.f32 %v362, %v384
      %v399 = vmul.f32 %v363, %v384
      %v400 = vmul.f32 %v364, %v384
      %v401 = vmul.f32 %v365, %v384
      %v402 = vmul.f32 %v366, %v384
      %v403 = vmul.f32 %v367, %v384
      %v404 = vmul.f32 %v368, %v384
      %v405 = vmul.f32 %v369, %v384
      %v406 = vmul.f32 %v370, %v384
      %v407 = vmul.f32 %v371, %v384
      %v408 = vmul.f32 %v372, %v384
      %v409 = vmul.f32 %v373, %v384
      %v410 = vmul.f32 %v374, %v384
      %v411 = vmul.f32 %v375, %v384
      %v412 = vmul.f32 %v376, %v384
      %v413 = vmul.f32 %v377, %v384
      %v414 = vmul.f32 %v378, %v384
      %v415 = vmul.f32 %v379, %v384
      %v416 = vmul.f32 %v380, %v384
      %v417 = vmul.f32 %v381, %v384
      %v418 = vld [vmem:[%s2] sm:$0x1]
      %v420 = vperm.slane %v418, 0
      %v422 = vadd.f32 %v386, %v420
      %v423 = vadd.f32 %v387, %v420
      %v424 = vadd.f32 %v388, %v420
      %v425 = vadd.f32 %v389, %v420
      %v426 = vadd.f32 %v390, %v420
      %v427 = vadd.f32 %v391, %v420
      %v428 = vadd.f32 %v392, %v420
      %v429 = vadd.f32 %v393, %v420
      %v430 = vadd.f32 %v394, %v420
      %v431 = vadd.f32 %v395, %v420
      %v432 = vadd.f32 %v396, %v420
      %v433 = vadd.f32 %v397, %v420
      %v434 = vadd.f32 %v398, %v420
      %v435 = vadd.f32 %v399, %v420
      %v436 = vadd.f32 %v400, %v420
      %v437 = vadd.f32 %v401, %v420
      %v438 = vadd.f32 %v402, %v420
      %v439 = vadd.f32 %v403, %v420
      %v440 = vadd.f32 %v404, %v420
      %v441 = vadd.f32 %v405, %v420
      %v442 = vadd.f32 %v406, %v420
      %v443 = vadd.f32 %v407, %v420
      %v444 = vadd.f32 %v408, %v420
      %v445 = vadd.f32 %v409, %v420
      %v446 = vadd.f32 %v410, %v420
      %v447 = vadd.f32 %v411, %v420
      %v448 = vadd.f32 %v412, %v420
      %v449 = vadd.f32 %v413, %v420
      %v450 = vadd.f32 %v414, %v420
      %v451 = vadd.f32 %v415, %v420
      %v452 = vadd.f32 %v416, %v420
      %v453 = vadd.f32 %v417, %v420
      %v454 = vmax.f32 %v422, 0.0
      %v455 = vmax.f32 %v423, 0.0
      %v456 = vmax.f32 %v424, 0.0
      %v457 = vmax.f32 %v425, 0.0
      %v458 = vmax.f32 %v426, 0.0
      %v459 = vmax.f32 %v427, 0.0
      %v460 = vmax.f32 %v428, 0.0
      %v461 = vmax.f32 %v429, 0.0
      %v462 = vmax.f32 %v430, 0.0
      %v463 = vmax.f32 %v431, 0.0
      %v464 = vmax.f32 %v432, 0.0
      %v465 = vmax.f32 %v433, 0.0
      %v466 = vmax.f32 %v434, 0.0
      %v467 = vmax.f32 %v435, 0.0
      %v468 = vmax.f32 %v436, 0.0
      %v469 = vmax.f32 %v437, 0.0
      %v470 = vmax.f32 %v438, 0.0
      %v471 = vmax.f32 %v439, 0.0
      %v472 = vmax.f32 %v440, 0.0
      %v473 = vmax.f32 %v441, 0.0
      %v474 = vmax.f32 %v442, 0.0
      %v475 = vmax.f32 %v443, 0.0
      %v476 = vmax.f32 %v444, 0.0
      %v477 = vmax.f32 %v445, 0.0
      %v478 = vmax.f32 %v446, 0.0
      %v479 = vmax.f32 %v447, 0.0
      %v480 = vmax.f32 %v448, 0.0
      %v481 = vmax.f32 %v449, 0.0
      %v482 = vmax.f32 %v450, 0.0
      %v483 = vmax.f32 %v451, 0.0
      %v484 = vmax.f32 %v452, 0.0
      %v485 = vmax.f32 %v453, 0.0
      %v486 = vld [vmem:[%s3] sm:$0xff]
      %v487 = vld [vmem:[%s3 + $0x8] sm:$0xff]
      %v488 = vld [vmem:[%s3 + $0x10] sm:$0xff]
      %v489 = vld [vmem:[%s3 + $0x18] sm:$0xff]
      %v490 = vld [vmem:[%s3 + $0x20] sm:$0xff]
      %v491 = vld [vmem:[%s3 + $0x28] sm:$0xff]
      %v492 = vld [vmem:[%s3 + $0x30] sm:$0xff]
      %v493 = vld [vmem:[%s3 + $0x38] sm:$0xff]
      %v494 = vld [vmem:[%s3 + $0x40] sm:$0xff]
      %v495 = vld [vmem:[%s3 + $0x48] sm:$0xff]
      %v496 = vld [vmem:[%s3 + $0x50] sm:$0xff]
      %v497 = vld [vmem:[%s3 + $0x58] sm:$0xff]
      %v498 = vld [vmem:[%s3 + $0x60] sm:$0xff]
      %v499 = vld [vmem:[%s3 + $0x68] sm:$0xff]
      %v500 = vld [vmem:[%s3 + $0x70] sm:$0xff]
      %v501 = vld [vmem:[%s3 + $0x78] sm:$0xff]
      %v502 = vld [vmem:[%s3 + $0x80] sm:$0xff]
      %v503 = vld [vmem:[%s3 + $0x88] sm:$0xff]
      %v504 = vld [vmem:[%s3 + $0x90] sm:$0xff]
      %v505 = vld [vmem:[%s3 + $0x98] sm:$0xff]
      %v506 = vld [vmem:[%s3 + $0xa0] sm:$0xff]
      %v507 = vld [vmem:[%s3 + $0xa8] sm:$0xff]
      %v508 = vld [vmem:[%s3 + $0xb0] sm:$0xff]
      %v509 = vld [vmem:[%s3 + $0xb8] sm:$0xff]
      %v510 = vld [vmem:[%s3 + $0xc0] sm:$0xff]
      %v511 = vld [vmem:[%s3 + $0xc8] sm:$0xff]
      %v512 = vld [vmem:[%s3 + $0xd0] sm:$0xff]
      %v513 = vld [vmem:[%s3 + $0xd8] sm:$0xff]
      %v514 = vld [vmem:[%s3 + $0xe0] sm:$0xff]
      %v515 = vld [vmem:[%s3 + $0xe8] sm:$0xff]
      %v516 = vld [vmem:[%s3 + $0xf0] sm:$0xff]
      %v517 = vld [vmem:[%s3 + $0xf8] sm:$0xff]
      %vm521 = vcmask 1040384
      %v522 = vrot.slane %v483, 7
      %v523 = vrot.slane %v484, 7
      %v524 = vsel %vm521, %v522, %v523
      %v525 = vrot.slane %v485, 7
      %v526 = vsel %vm521, %v523, %v525
      %v559 = vrot.slane %v454, 7
      %v560 = vrot.slane %v455, 7
      %v561 = vsel %vm521, %v559, %v560
      %v562 = vrot.slane %v456, 7
      %v563 = vsel %vm521, %v560, %v562
      %v564 = vrot.slane %v457, 7
      %v565 = vsel %vm521, %v562, %v564
      %v566 = vrot.slane %v458, 7
      %v567 = vsel %vm521, %v564, %v566
      %v568 = vrot.slane %v459, 7
      %v569 = vsel %vm521, %v566, %v568
      %v570 = vrot.slane %v460, 7
      %v571 = vsel %vm521, %v568, %v570
      %v572 = vrot.slane %v461, 7
      %v573 = vsel %vm521, %v570, %v572
      %v574 = vrot.slane %v462, 7
      %v575 = vsel %vm521, %v572, %v574
      %v576 = vrot.slane %v463, 7
      %v577 = vsel %vm521, %v574, %v576
      %v578 = vrot.slane %v464, 7
      %v579 = vsel %vm521, %v576, %v578
      %v580 = vrot.slane %v465, 7
      %v581 = vsel %vm521, %v578, %v580
      %v582 = vrot.slane %v466, 7
      %v583 = vsel %vm521, %v580, %v582
      %v584 = vrot.slane %v467, 7
      %v585 = vsel %vm521, %v582, %v584
      %v586 = vrot.slane %v468, 7
      %v587 = vsel %vm521, %v584, %v586
      %v588 = vrot.slane %v469, 7
      %v589 = vsel %vm521, %v586, %v588
      %v590 = vrot.slane %v470, 7
      %v591 = vsel %vm521, %v588, %v590
      %v592 = vrot.slane %v471, 7
      %v593 = vsel %vm521, %v590, %v592
      %v594 = vrot.slane %v472, 7
      %v595 = vsel %vm521, %v592, %v594
      %v596 = vrot.slane %v473, 7
      %v597 = vsel %vm521, %v594, %v596
      %v598 = vrot.slane %v474, 7
      %v599 = vsel %vm521, %v596, %v598
      %v600 = vrot.slane %v475, 7
      %v601 = vsel %vm521, %v598, %v600
      %v602 = vrot.slane %v476, 7
      %v603 = vsel %vm521, %v600, %v602
      %v604 = vrot.slane %v477, 7
      %v605 = vsel %vm521, %v602, %v604
      %v606 = vrot.slane %v478, 7
      %v607 = vsel %vm521, %v604, %v606
      %v608 = vrot.slane %v479, 7
      %v609 = vsel %vm521, %v606, %v608
      %v610 = vrot.slane %v480, 7
      %v611 = vsel %vm521, %v608, %v610
      %v612 = vrot.slane %v481, 7
      %v613 = vsel %vm521, %v610, %v612
      %v614 = vrot.slane %v482, 7
      %v615 = vsel %vm521, %v612, %v614
      %v616 = vsel %vm521, %v614, %v522
      %v647 = vsel %vm521, %v525, %v559
      %649 = vset.pattern.permute.xlu0 0
      %650 = vperm.xlu0 %649, %v486
      %v651 = vpop.permute.xlu0 %650
      %654 = vset.pattern.permute.xlu0 0
      %655 = vperm.xlu0 %654, %v487
      %v656 = vpop.permute.xlu0 %655
      %659 = vset.pattern.permute.xlu0 0
      %660 = vperm.xlu0 %659, %v488
      %v661 = vpop.permute.xlu0 %660
      %664 = vset.pattern.permute.xlu0 0
      %665 = vperm.xlu0 %664, %v489
      %v666 = vpop.permute.xlu0 %665
      %669 = vset.pattern.permute.xlu0 0
      %670 = vperm.xlu0 %669, %v490
      %v671 = vpop.permute.xlu0 %670
      %674 = vset.pattern.permute.xlu0 0
      %675 = vperm.xlu0 %674, %v491
      %v676 = vpop.permute.xlu0 %675
      %679 = vset.pattern.permute.xlu0 0
      %680 = vperm.xlu0 %679, %v492
      %v681 = vpop.permute.xlu0 %680
      %684 = vset.pattern.permute.xlu0 0
      %685 = vperm.xlu0 %684, %v493
      %v686 = vpop.permute.xlu0 %685
      %689 = vset.pattern.permute.xlu0 0
      %690 = vperm.xlu0 %689, %v494
      %v691 = vpop.permute.xlu0 %690
      %694 = vset.pattern.permute.xlu0 0
      %695 = vperm.xlu0 %694, %v495
      %v696 = vpop.permute.xlu0 %695
      %699 = vset.pattern.permute.xlu0 0
      %700 = vperm.xlu0 %699, %v496
      %v701 = vpop.permute.xlu0 %700
      %704 = vset.pattern.permute.xlu0 0
      %705 = vperm.xlu0 %704, %v497
      %v706 = vpop.permute.xlu0 %705
      %709 = vset.pattern.permute.xlu0 0
      %710 = vperm.xlu0 %709, %v498
      %v711 = vpop.permute.xlu0 %710
      %714 = vset.pattern.permute.xlu0 0
      %715 = vperm.xlu0 %714, %v499
      %v716 = vpop.permute.xlu0 %715
      %719 = vset.pattern.permute.xlu0 0
      %720 = vperm.xlu0 %719, %v500
      %v721 = vpop.permute.xlu0 %720
      %724 = vset.pattern.permute.xlu0 0
      %725 = vperm.xlu0 %724, %v501
      %v726 = vpop.permute.xlu0 %725
      %729 = vset.pattern.permute.xlu0 0
      %730 = vperm.xlu0 %729, %v502
      %v731 = vpop.permute.xlu0 %730
      %734 = vset.pattern.permute.xlu0 0
      %735 = vperm.xlu0 %734, %v503
      %v736 = vpop.permute.xlu0 %735
      %739 = vset.pattern.permute.xlu0 0
      %740 = vperm.xlu0 %739, %v504
      %v741 = vpop.permute.xlu0 %740
      %744 = vset.pattern.permute.xlu0 0
      %745 = vperm.xlu0 %744, %v505
      %v746 = vpop.permute.xlu0 %745
      %749 = vset.pattern.permute.xlu0 0
      %750 = vperm.xlu0 %749, %v506
      %v751 = vpop.permute.xlu0 %750
      %754 = vset.pattern.permute.xlu0 0
      %755 = vperm.xlu0 %754, %v507
      %v756 = vpop.permute.xlu0 %755
      %759 = vset.pattern.permute.xlu0 0
      %760 = vperm.xlu0 %759, %v508
      %v761 = vpop.permute.xlu0 %760
      %764 = vset.pattern.permute.xlu0 0
      %765 = vperm.xlu0 %764, %v509
      %v766 = vpop.permute.xlu0 %765
      %769 = vset.pattern.permute.xlu0 0
      %770 = vperm.xlu0 %769, %v510
      %v771 = vpop.permute.xlu0 %770
      %774 = vset.pattern.permute.xlu0 0
      %775 = vperm.xlu0 %774, %v511
      %v776 = vpop.permute.xlu0 %775
      %779 = vset.pattern.permute.xlu0 0
      %780 = vperm.xlu0 %779, %v512
      %v781 = vpop.permute.xlu0 %780
      %784 = vset.pattern.permute.xlu0 0
      %785 = vperm.xlu0 %784, %v513
      %v786 = vpop.permute.xlu0 %785
      %789 = vset.pattern.permute.xlu0 0
      %790 = vperm.xlu0 %789, %v514
      %v791 = vpop.permute.xlu0 %790
      %794 = vset.pattern.permute.xlu0 0
      %795 = vperm.xlu0 %794, %v515
      %v796 = vpop.permute.xlu0 %795
      %799 = vset.pattern.permute.xlu0 0
      %800 = vperm.xlu0 %799, %v516
      %v801 = vpop.permute.xlu0 %800
      %804 = vset.pattern.permute.xlu0 0
      %805 = vperm.xlu0 %804, %v517
      %v806 = vpop.permute.xlu0 %805
      %v808 = vmul.f32 %v524, %v651
      %v809 = vmul.f32 %v526, %v656
      %v810 = vmul.f32 %v647, %v661
      %v811 = vmul.f32 %v561, %v666
      %v812 = vmul.f32 %v563, %v671
      %v813 = vmul.f32 %v565, %v676
      %v814 = vmul.f32 %v567, %v681
      %v815 = vmul.f32 %v569, %v686
      %v816 = vmul.f32 %v571, %v691
      %v817 = vmul.f32 %v573, %v696
      %v818 = vmul.f32 %v575, %v701
      %v819 = vmul.f32 %v577, %v706
      %v820 = vmul.f32 %v579, %v711
      %v821 = vmul.f32 %v581, %v716
      %v822 = vmul.f32 %v583, %v721
      %v823 = vmul.f32 %v585, %v726
      %v824 = vmul.f32 %v587, %v731
      %v825 = vmul.f32 %v589, %v736
      %v826 = vmul.f32 %v591, %v741
      %v827 = vmul.f32 %v593, %v746
      %v828 = vmul.f32 %v595, %v751
      %v829 = vmul.f32 %v597, %v756
      %v830 = vmul.f32 %v599, %v761
      %v831 = vmul.f32 %v601, %v766
      %v832 = vmul.f32 %v603, %v771
      %v833 = vmul.f32 %v605, %v776
      %v834 = vmul.f32 %v607, %v781
      %v835 = vmul.f32 %v609, %v786
      %v836 = vmul.f32 %v611, %v791
      %v837 = vmul.f32 %v613, %v796
      %v838 = vmul.f32 %v615, %v801
      %v839 = vmul.f32 %v616, %v806
      %840 = vset.pattern.permute.xlu0 1
      %841 = vperm.xlu0 %840, %v486
      %v842 = vpop.permute.xlu0 %841
      %844 = vset.pattern.permute.xlu0 1
      %845 = vperm.xlu0 %844, %v487
      %v846 = vpop.permute.xlu0 %845
      %848 = vset.pattern.permute.xlu0 1
      %849 = vperm.xlu0 %848, %v488
      %v850 = vpop.permute.xlu0 %849
      %852 = vset.pattern.permute.xlu0 1
      %853 = vperm.xlu0 %852, %v489
      %v854 = vpop.permute.xlu0 %853
      %856 = vset.pattern.permute.xlu0 1
      %857 = vperm.xlu0 %856, %v490
      %v858 = vpop.permute.xlu0 %857
      %860 = vset.pattern.permute.xlu0 1
      %861 = vperm.xlu0 %860, %v491
      %v862 = vpop.permute.xlu0 %861
      %864 = vset.pattern.permute.xlu0 1
      %865 = vperm.xlu0 %864, %v492
      %v866 = vpop.permute.xlu0 %865
      %868 = vset.pattern.permute.xlu0 1
      %869 = vperm.xlu0 %868, %v493
      %v870 = vpop.permute.xlu0 %869
      %872 = vset.pattern.permute.xlu0 1
      %873 = vperm.xlu0 %872, %v494
      %v874 = vpop.permute.xlu0 %873
      %876 = vset.pattern.permute.xlu0 1
      %877 = vperm.xlu0 %876, %v495
      %v878 = vpop.permute.xlu0 %877
      %880 = vset.pattern.permute.xlu0 1
      %881 = vperm.xlu0 %880, %v496
      %v882 = vpop.permute.xlu0 %881
      %884 = vset.pattern.permute.xlu0 1
      %885 = vperm.xlu0 %884, %v497
      %v886 = vpop.permute.xlu0 %885
      %888 = vset.pattern.permute.xlu0 1
      %889 = vperm.xlu0 %888, %v498
      %v890 = vpop.permute.xlu0 %889
      %892 = vset.pattern.permute.xlu0 1
      %893 = vperm.xlu0 %892, %v499
      %v894 = vpop.permute.xlu0 %893
      %896 = vset.pattern.permute.xlu0 1
      %897 = vperm.xlu0 %896, %v500
      %v898 = vpop.permute.xlu0 %897
      %900 = vset.pattern.permute.xlu0 1
      %901 = vperm.xlu0 %900, %v501
      %v902 = vpop.permute.xlu0 %901
      %904 = vset.pattern.permute.xlu0 1
      %905 = vperm.xlu0 %904, %v502
      %v906 = vpop.permute.xlu0 %905
      %908 = vset.pattern.permute.xlu0 1
      %909 = vperm.xlu0 %908, %v503
      %v910 = vpop.permute.xlu0 %909
      %912 = vset.pattern.permute.xlu0 1
      %913 = vperm.xlu0 %912, %v504
      %v914 = vpop.permute.xlu0 %913
      %916 = vset.pattern.permute.xlu0 1
      %917 = vperm.xlu0 %916, %v505
      %v918 = vpop.permute.xlu0 %917
      %920 = vset.pattern.permute.xlu0 1
      %921 = vperm.xlu0 %920, %v506
      %v922 = vpop.permute.xlu0 %921
      %924 = vset.pattern.permute.xlu0 1
      %925 = vperm.xlu0 %924, %v507
      %v926 = vpop.permute.xlu0 %925
      %928 = vset.pattern.permute.xlu0 1
      %929 = vperm.xlu0 %928, %v508
      %v930 = vpop.permute.xlu0 %929
      %932 = vset.pattern.permute.xlu0 1
      %933 = vperm.xlu0 %932, %v509
      %v934 = vpop.permute.xlu0 %933
      %936 = vset.pattern.permute.xlu0 1
      %937 = vperm.xlu0 %936, %v510
      %v938 = vpop.permute.xlu0 %937
      %940 = vset.pattern.permute.xlu0 1
      %941 = vperm.xlu0 %940, %v511
      %v942 = vpop.permute.xlu0 %941
      %944 = vset.pattern.permute.xlu0 1
      %945 = vperm.xlu0 %944, %v512
      %v946 = vpop.permute.xlu0 %945
      %948 = vset.pattern.permute.xlu0 1
      %949 = vperm.xlu0 %948, %v513
      %v950 = vpop.permute.xlu0 %949
      %952 = vset.pattern.permute.xlu0 1
      %953 = vperm.xlu0 %952, %v514
      %v954 = vpop.permute.xlu0 %953
      %956 = vset.pattern.permute.xlu0 1
      %957 = vperm.xlu0 %956, %v515
      %v958 = vpop.permute.xlu0 %957
      %960 = vset.pattern.permute.xlu0 1
      %961 = vperm.xlu0 %960, %v516
      %v962 = vpop.permute.xlu0 %961
      %964 = vset.pattern.permute.xlu0 1
      %965 = vperm.xlu0 %964, %v517
      %v966 = vpop.permute.xlu0 %965
      %v968 = vmul.f32 %v484, %v842
      %v969 = vmul.f32 %v485, %v846
      %v970 = vmul.f32 %v454, %v850
      %v971 = vmul.f32 %v455, %v854
      %v972 = vmul.f32 %v456, %v858
      %v973 = vmul.f32 %v457, %v862
      %v974 = vmul.f32 %v458, %v866
      %v975 = vmul.f32 %v459, %v870
      %v976 = vmul.f32 %v460, %v874
      %v977 = vmul.f32 %v461, %v878
      %v978 = vmul.f32 %v462, %v882
      %v979 = vmul.f32 %v463, %v886
      %v980 = vmul.f32 %v464, %v890
      %v981 = vmul.f32 %v465, %v894
      %v982 = vmul.f32 %v466, %v898
      %v983 = vmul.f32 %v467, %v902
      %v984 = vmul.f32 %v468, %v906
      %v985 = vmul.f32 %v469, %v910
      %v986 = vmul.f32 %v470, %v914
      %v987 = vmul.f32 %v471, %v918
      %v988 = vmul.f32 %v472, %v922
      %v989 = vmul.f32 %v473, %v926
      %v990 = vmul.f32 %v474, %v930
      %v991 = vmul.f32 %v475, %v934
      %v992 = vmul.f32 %v476, %v938
      %v993 = vmul.f32 %v477, %v942
      %v994 = vmul.f32 %v478, %v946
      %v995 = vmul.f32 %v479, %v950
      %v996 = vmul.f32 %v480, %v954
      %v997 = vmul.f32 %v481, %v958
      %v998 = vmul.f32 %v482, %v962
      %v999 = vmul.f32 %v483, %v966
      %vm1000 = vcmask 1046528
      %v1001 = vrot.slane %v484, 1
      %v1002 = vrot.slane %v485, 1
      %v1003 = vsel %vm1000, %v1001, %v1002
      %v1006 = vrot.slane %v454, 1
      %v1007 = vrot.slane %v455, 1
      %v1008 = vsel %vm1000, %v1006, %v1007
      %v1009 = vrot.slane %v456, 1
      %v1010 = vsel %vm1000, %v1007, %v1009
      %v1011 = vrot.slane %v457, 1
      %v1012 = vsel %vm1000, %v1009, %v1011
      %v1013 = vrot.slane %v458, 1
      %v1014 = vsel %vm1000, %v1011, %v1013
      %v1015 = vrot.slane %v459, 1
      %v1016 = vsel %vm1000, %v1013, %v1015
      %v1017 = vrot.slane %v460, 1
      %v1018 = vsel %vm1000, %v1015, %v1017
      %v1019 = vrot.slane %v461, 1
      %v1020 = vsel %vm1000, %v1017, %v1019
      %v1021 = vrot.slane %v462, 1
      %v1022 = vsel %vm1000, %v1019, %v1021
      %v1023 = vrot.slane %v463, 1
      %v1024 = vsel %vm1000, %v1021, %v1023
      %v1025 = vrot.slane %v464, 1
      %v1026 = vsel %vm1000, %v1023, %v1025
      %v1027 = vrot.slane %v465, 1
      %v1028 = vsel %vm1000, %v1025, %v1027
      %v1029 = vrot.slane %v466, 1
      %v1030 = vsel %vm1000, %v1027, %v1029
      %v1031 = vrot.slane %v467, 1
      %v1032 = vsel %vm1000, %v1029, %v1031
      %v1033 = vrot.slane %v468, 1
      %v1034 = vsel %vm1000, %v1031, %v1033
      %v1035 = vrot.slane %v469, 1
      %v1036 = vsel %vm1000, %v1033, %v1035
      %v1037 = vrot.slane %v470, 1
      %v1038 = vsel %vm1000, %v1035, %v1037
      %v1039 = vrot.slane %v471, 1
      %v1040 = vsel %vm1000, %v1037, %v1039
      %v1041 = vrot.slane %v472, 1
      %v1042 = vsel %vm1000, %v1039, %v1041
      %v1043 = vrot.slane %v473, 1
      %v1044 = vsel %vm1000, %v1041, %v1043
      %v1045 = vrot.slane %v474, 1
      %v1046 = vsel %vm1000, %v1043, %v1045
      %v1047 = vrot.slane %v475, 1
      %v1048 = vsel %vm1000, %v1045, %v1047
      %v1049 = vrot.slane %v476, 1
      %v1050 = vsel %vm1000, %v1047, %v1049
      %v1051 = vrot.slane %v477, 1
      %v1052 = vsel %vm1000, %v1049, %v1051
      %v1053 = vrot.slane %v478, 1
      %v1054 = vsel %vm1000, %v1051, %v1053
      %v1055 = vrot.slane %v479, 1
      %v1056 = vsel %vm1000, %v1053, %v1055
      %v1057 = vrot.slane %v480, 1
      %v1058 = vsel %vm1000, %v1055, %v1057
      %v1059 = vrot.slane %v481, 1
      %v1060 = vsel %vm1000, %v1057, %v1059
      %v1061 = vrot.slane %v482, 1
      %v1062 = vsel %vm1000, %v1059, %v1061
      %v1063 = vrot.slane %v483, 1
      %v1064 = vsel %vm1000, %v1061, %v1063
      %v1065 = vsel %vm1000, %v1063, %v1001
      %v1097 = vsel %vm1000, %v1002, %v1006
      %1098 = vset.pattern.permute.xlu0 2
      %1099 = vperm.xlu0 %1098, %v486
      %v1100 = vpop.permute.xlu0 %1099
      %1102 = vset.pattern.permute.xlu0 2
      %1103 = vperm.xlu0 %1102, %v487
      %v1104 = vpop.permute.xlu0 %1103
      %1106 = vset.pattern.permute.xlu0 2
      %1107 = vperm.xlu0 %1106, %v488
      %v1108 = vpop.permute.xlu0 %1107
      %1110 = vset.pattern.permute.xlu0 2
      %1111 = vperm.xlu0 %1110, %v489
      %v1112 = vpop.permute.xlu0 %1111
      %1114 = vset.pattern.permute.xlu0 2
      %1115 = vperm.xlu0 %1114, %v490
      %v1116 = vpop.permute.xlu0 %1115
      %1118 = vset.pattern.permute.xlu0 2
      %1119 = vperm.xlu0 %1118, %v491
      %v1120 = vpop.permute.xlu0 %1119
      %1122 = vset.pattern.permute.xlu0 2
      %1123 = vperm.xlu0 %1122, %v492
      %v1124 = vpop.permute.xlu0 %1123
      %1126 = vset.pattern.permute.xlu0 2
      %1127 = vperm.xlu0 %1126, %v493
      %v1128 = vpop.permute.xlu0 %1127
      %1130 = vset.pattern.permute.xlu0 2
      %1131 = vperm.xlu0 %1130, %v494
      %v1132 = vpop.permute.xlu0 %1131
      %1134 = vset.pattern.permute.xlu0 2
      %1135 = vperm.xlu0 %1134, %v495
      %v1136 = vpop.permute.xlu0 %1135
      %1138 = vset.pattern.permute.xlu0 2
      %1139 = vperm.xlu0 %1138, %v496
      %v1140 = vpop.permute.xlu0 %1139
      %1142 = vset.pattern.permute.xlu0 2
      %1143 = vperm.xlu0 %1142, %v497
      %v1144 = vpop.permute.xlu0 %1143
      %1146 = vset.pattern.permute.xlu0 2
      %1147 = vperm.xlu0 %1146, %v498
      %v1148 = vpop.permute.xlu0 %1147
      %1150 = vset.pattern.permute.xlu0 2
      %1151 = vperm.xlu0 %1150, %v499
      %v1152 = vpop.permute.xlu0 %1151
      %1154 = vset.pattern.permute.xlu0 2
      %1155 = vperm.xlu0 %1154, %v500
      %v1156 = vpop.permute.xlu0 %1155
      %1158 = vset.pattern.permute.xlu0 2
      %1159 = vperm.xlu0 %1158, %v501
      %v1160 = vpop.permute.xlu0 %1159
      %1162 = vset.pattern.permute.xlu0 2
      %1163 = vperm.xlu0 %1162, %v502
      %v1164 = vpop.permute.xlu0 %1163
      %1166 = vset.pattern.permute.xlu0 2
      %1167 = vperm.xlu0 %1166, %v503
      %v1168 = vpop.permute.xlu0 %1167
      %1170 = vset.pattern.permute.xlu0 2
      %1171 = vperm.xlu0 %1170, %v504
      %v1172 = vpop.permute.xlu0 %1171
      %1174 = vset.pattern.permute.xlu0 2
      %1175 = vperm.xlu0 %1174, %v505
      %v1176 = vpop.permute.xlu0 %1175
      %1178 = vset.pattern.permute.xlu0 2
      %1179 = vperm.xlu0 %1178, %v506
      %v1180 = vpop.permute.xlu0 %1179
      %1182 = vset.pattern.permute.xlu0 2
      %1183 = vperm.xlu0 %1182, %v507
      %v1184 = vpop.permute.xlu0 %1183
      %1186 = vset.pattern.permute.xlu0 2
      %1187 = vperm.xlu0 %1186, %v508
      %v1188 = vpop.permute.xlu0 %1187
      %1190 = vset.pattern.permute.xlu0 2
      %1191 = vperm.xlu0 %1190, %v509
      %v1192 = vpop.permute.xlu0 %1191
      %1194 = vset.pattern.permute.xlu0 2
      %1195 = vperm.xlu0 %1194, %v510
      %v1196 = vpop.permute.xlu0 %1195
      %1198 = vset.pattern.permute.xlu0 2
      %1199 = vperm.xlu0 %1198, %v511
      %v1200 = vpop.permute.xlu0 %1199
      %1202 = vset.pattern.permute.xlu0 2
      %1203 = vperm.xlu0 %1202, %v512
      %v1204 = vpop.permute.xlu0 %1203
      %1206 = vset.pattern.permute.xlu0 2
      %1207 = vperm.xlu0 %1206, %v513
      %v1208 = vpop.permute.xlu0 %1207
      %1210 = vset.pattern.permute.xlu0 2
      %1211 = vperm.xlu0 %1210, %v514
      %v1212 = vpop.permute.xlu0 %1211
      %1214 = vset.pattern.permute.xlu0 2
      %1215 = vperm.xlu0 %1214, %v515
      %v1216 = vpop.permute.xlu0 %1215
      %1218 = vset.pattern.permute.xlu0 2
      %1219 = vperm.xlu0 %1218, %v516
      %v1220 = vpop.permute.xlu0 %1219
      %1222 = vset.pattern.permute.xlu0 2
      %1223 = vperm.xlu0 %1222, %v517
      %v1224 = vpop.permute.xlu0 %1223
      %v1226 = vmul.f32 %v1003, %v1100
      %v1227 = vmul.f32 %v1097, %v1104
      %v1228 = vmul.f32 %v1008, %v1108
      %v1229 = vmul.f32 %v1010, %v1112
      %v1230 = vmul.f32 %v1012, %v1116
      %v1231 = vmul.f32 %v1014, %v1120
      %v1232 = vmul.f32 %v1016, %v1124
      %v1233 = vmul.f32 %v1018, %v1128
      %v1234 = vmul.f32 %v1020, %v1132
      %v1235 = vmul.f32 %v1022, %v1136
      %v1236 = vmul.f32 %v1024, %v1140
      %v1237 = vmul.f32 %v1026, %v1144
      %v1238 = vmul.f32 %v1028, %v1148
      %v1239 = vmul.f32 %v1030, %v1152
      %v1240 = vmul.f32 %v1032, %v1156
      %v1241 = vmul.f32 %v1034, %v1160
      %v1242 = vmul.f32 %v1036, %v1164
      %v1243 = vmul.f32 %v1038, %v1168
      %v1244 = vmul.f32 %v1040, %v1172
      %v1245 = vmul.f32 %v1042, %v1176
      %v1246 = vmul.f32 %v1044, %v1180
      %v1247 = vmul.f32 %v1046, %v1184
      %v1248 = vmul.f32 %v1048, %v1188
      %v1249 = vmul.f32 %v1050, %v1192
      %v1250 = vmul.f32 %v1052, %v1196
      %v1251 = vmul.f32 %v1054, %v1200
      %v1252 = vmul.f32 %v1056, %v1204
      %v1253 = vmul.f32 %v1058, %v1208
      %v1254 = vmul.f32 %v1060, %v1212
      %v1255 = vmul.f32 %v1062, %v1216
      %v1256 = vmul.f32 %v1064, %v1220
      %v1257 = vmul.f32 %v1065, %v1224
      %1258 = vset.pattern.permute.xlu0 3
      %1259 = vperm.xlu0 %1258, %v486
      %v1260 = vpop.permute.xlu0 %1259
      %1262 = vset.pattern.permute.xlu0 3
      %1263 = vperm.xlu0 %1262, %v487
      %v1264 = vpop.permute.xlu0 %1263
      %1266 = vset.pattern.permute.xlu0 3
      %1267 = vperm.xlu0 %1266, %v488
      %v1268 = vpop.permute.xlu0 %1267
      %1270 = vset.pattern.permute.xlu0 3
      %1271 = vperm.xlu0 %1270, %v489
      %v1272 = vpop.permute.xlu0 %1271
      %1274 = vset.pattern.permute.xlu0 3
      %1275 = vperm.xlu0 %1274, %v490
      %v1276 = vpop.permute.xlu0 %1275
      %1278 = vset.pattern.permute.xlu0 3
      %1279 = vperm.xlu0 %1278, %v491
      %v1280 = vpop.permute.xlu0 %1279
      %1282 = vset.pattern.permute.xlu0 3
      %1283 = vperm.xlu0 %1282, %v492
      %v1284 = vpop.permute.xlu0 %1283
      %1286 = vset.pattern.permute.xlu0 3
      %1287 = vperm.xlu0 %1286, %v493
      %v1288 = vpop.permute.xlu0 %1287
      %1290 = vset.pattern.permute.xlu0 3
      %1291 = vperm.xlu0 %1290, %v494
      %v1292 = vpop.permute.xlu0 %1291
      %1294 = vset.pattern.permute.xlu0 3
      %1295 = vperm.xlu0 %1294, %v495
      %v1296 = vpop.permute.xlu0 %1295
      %1298 = vset.pattern.permute.xlu0 3
      %1299 = vperm.xlu0 %1298, %v496
      %v1300 = vpop.permute.xlu0 %1299
      %1302 = vset.pattern.permute.xlu0 3
      %1303 = vperm.xlu0 %1302, %v497
      %v1304 = vpop.permute.xlu0 %1303
      %1306 = vset.pattern.permute.xlu0 3
      %1307 = vperm.xlu0 %1306, %v498
      %v1308 = vpop.permute.xlu0 %1307
      %1310 = vset.pattern.permute.xlu0 3
      %1311 = vperm.xlu0 %1310, %v499
      %v1312 = vpop.permute.xlu0 %1311
      %1314 = vset.pattern.permute.xlu0 3
      %1315 = vperm.xlu0 %1314, %v500
      %v1316 = vpop.permute.xlu0 %1315
      %1318 = vset.pattern.permute.xlu0 3
      %1319 = vperm.xlu0 %1318, %v501
      %v1320 = vpop.permute.xlu0 %1319
      %1322 = vset.pattern.permute.xlu0 3
      %1323 = vperm.xlu0 %1322, %v502
      %v1324 = vpop.permute.xlu0 %1323
      %1326 = vset.pattern.permute.xlu0 3
      %1327 = vperm.xlu0 %1326, %v503
      %v1328 = vpop.permute.xlu0 %1327
      %1330 = vset.pattern.permute.xlu0 3
      %1331 = vperm.xlu0 %1330, %v504
      %v1332 = vpop.permute.xlu0 %1331
      %1334 = vset.pattern.permute.xlu0 3
      %1335 = vperm.xlu0 %1334, %v505
      %v1336 = vpop.permute.xlu0 %1335
      %1338 = vset.pattern.permute.xlu0 3
      %1339 = vperm.xlu0 %1338, %v506
      %v1340 = vpop.permute.xlu0 %1339
      %1342 = vset.pattern.permute.xlu0 3
      %1343 = vperm.xlu0 %1342, %v507
      %v1344 = vpop.permute.xlu0 %1343
      %1346 = vset.pattern.permute.xlu0 3
      %1347 = vperm.xlu0 %1346, %v508
      %v1348 = vpop.permute.xlu0 %1347
      %1350 = vset.pattern.permute.xlu0 3
      %1351 = vperm.xlu0 %1350, %v509
      %v1352 = vpop.permute.xlu0 %1351
      %1354 = vset.pattern.permute.xlu0 3
      %1355 = vperm.xlu0 %1354, %v510
      %v1356 = vpop.permute.xlu0 %1355
      %1358 = vset.pattern.permute.xlu0 3
      %1359 = vperm.xlu0 %1358, %v511
      %v1360 = vpop.permute.xlu0 %1359
      %1362 = vset.pattern.permute.xlu0 3
      %1363 = vperm.xlu0 %1362, %v512
      %v1364 = vpop.permute.xlu0 %1363
      %1366 = vset.pattern.permute.xlu0 3
      %1367 = vperm.xlu0 %1366, %v513
      %v1368 = vpop.permute.xlu0 %1367
      %1370 = vset.pattern.permute.xlu0 3
      %1371 = vperm.xlu0 %1370, %v514
      %v1372 = vpop.permute.xlu0 %1371
      %1374 = vset.pattern.permute.xlu0 3
      %1375 = vperm.xlu0 %1374, %v515
      %v1376 = vpop.permute.xlu0 %1375
      %1378 = vset.pattern.permute.xlu0 3
      %1379 = vperm.xlu0 %1378, %v516
      %v1380 = vpop.permute.xlu0 %1379
      %1382 = vset.pattern.permute.xlu0 3
      %1383 = vperm.xlu0 %1382, %v517
      %v1384 = vpop.permute.xlu0 %1383
      %v1386 = vmul.f32 %v647, %v1260
      %v1387 = vmul.f32 %v561, %v1264
      %v1388 = vmul.f32 %v563, %v1268
      %v1389 = vmul.f32 %v565, %v1272
      %v1390 = vmul.f32 %v567, %v1276
      %v1391 = vmul.f32 %v569, %v1280
      %v1392 = vmul.f32 %v571, %v1284
      %v1393 = vmul.f32 %v573, %v1288
      %v1394 = vmul.f32 %v575, %v1292
      %v1395 = vmul.f32 %v577, %v1296
      %v1396 = vmul.f32 %v579, %v1300
      %v1397 = vmul.f32 %v581, %v1304
      %v1398 = vmul.f32 %v583, %v1308
      %v1399 = vmul.f32 %v585, %v1312
      %v1400 = vmul.f32 %v587, %v1316
      %v1401 = vmul.f32 %v589, %v1320
      %v1402 = vmul.f32 %v591, %v1324
      %v1403 = vmul.f32 %v593, %v1328
      %v1404 = vmul.f32 %v595, %v1332
      %v1405 = vmul.f32 %v597, %v1336
      %v1406 = vmul.f32 %v599, %v1340
      %v1407 = vmul.f32 %v601, %v1344
      %v1408 = vmul.f32 %v603, %v1348
      %v1409 = vmul.f32 %v605, %v1352
      %v1410 = vmul.f32 %v607, %v1356
      %v1411 = vmul.f32 %v609, %v1360
      %v1412 = vmul.f32 %v611, %v1364
      %v1413 = vmul.f32 %v613, %v1368
      %v1414 = vmul.f32 %v615, %v1372
      %v1415 = vmul.f32 %v616, %v1376
      %v1416 = vmul.f32 %v524, %v1380
      %v1417 = vmul.f32 %v526, %v1384
      %1418 = vset.pattern.permute.xlu0 5
      %1419 = vperm.xlu0 %1418, %v486
      %v1420 = vpop.permute.xlu0 %1419
      %1422 = vset.pattern.permute.xlu0 5
      %1423 = vperm.xlu0 %1422, %v487
      %v1424 = vpop.permute.xlu0 %1423
      %1426 = vset.pattern.permute.xlu0 5
      %1427 = vperm.xlu0 %1426, %v488
      %v1428 = vpop.permute.xlu0 %1427
      %1430 = vset.pattern.permute.xlu0 5
      %1431 = vperm.xlu0 %1430, %v489
      %v1432 = vpop.permute.xlu0 %1431
      %1434 = vset.pattern.permute.xlu0 5
      %1435 = vperm.xlu0 %1434, %v490
      %v1436 = vpop.permute.xlu0 %1435
      %1438 = vset.pattern.permute.xlu0 5
      %1439 = vperm.xlu0 %1438, %v491
      %v1440 = vpop.permute.xlu0 %1439
      %1442 = vset.pattern.permute.xlu0 5
      %1443 = vperm.xlu0 %1442, %v492
      %v1444 = vpop.permute.xlu0 %1443
      %1446 = vset.pattern.permute.xlu0 5
      %1447 = vperm.xlu0 %1446, %v493
      %v1448 = vpop.permute.xlu0 %1447
      %1450 = vset.pattern.permute.xlu0 5
      %1451 = vperm.xlu0 %1450, %v494
      %v1452 = vpop.permute.xlu0 %1451
      %1454 = vset.pattern.permute.xlu0 5
      %1455 = vperm.xlu0 %1454, %v495
      %v1456 = vpop.permute.xlu0 %1455
      %1458 = vset.pattern.permute.xlu0 5
      %1459 = vperm.xlu0 %1458, %v496
      %v1460 = vpop.permute.xlu0 %1459
      %1462 = vset.pattern.permute.xlu0 5
      %1463 = vperm.xlu0 %1462, %v497
      %v1464 = vpop.permute.xlu0 %1463
      %1466 = vset.pattern.permute.xlu0 5
      %1467 = vperm.xlu0 %1466, %v498
      %v1468 = vpop.permute.xlu0 %1467
      %1470 = vset.pattern.permute.xlu0 5
      %1471 = vperm.xlu0 %1470, %v499
      %v1472 = vpop.permute.xlu0 %1471
      %1474 = vset.pattern.permute.xlu0 5
      %1475 = vperm.xlu0 %1474, %v500
      %v1476 = vpop.permute.xlu0 %1475
      %1478 = vset.pattern.permute.xlu0 5
      %1479 = vperm.xlu0 %1478, %v501
      %v1480 = vpop.permute.xlu0 %1479
      %1482 = vset.pattern.permute.xlu0 5
      %1483 = vperm.xlu0 %1482, %v502
      %v1484 = vpop.permute.xlu0 %1483
      %1486 = vset.pattern.permute.xlu0 5
      %1487 = vperm.xlu0 %1486, %v503
      %v1488 = vpop.permute.xlu0 %1487
      %1490 = vset.pattern.permute.xlu0 5
      %1491 = vperm.xlu0 %1490, %v504
      %v1492 = vpop.permute.xlu0 %1491
      %1494 = vset.pattern.permute.xlu0 5
      %1495 = vperm.xlu0 %1494, %v505
      %v1496 = vpop.permute.xlu0 %1495
      %1498 = vset.pattern.permute.xlu0 5
      %1499 = vperm.xlu0 %1498, %v506
      %v1500 = vpop.permute.xlu0 %1499
      %1502 = vset.pattern.permute.xlu0 5
      %1503 = vperm.xlu0 %1502, %v507
      %v1504 = vpop.permute.xlu0 %1503
      %1506 = vset.pattern.permute.xlu0 5
      %1507 = vperm.xlu0 %1506, %v508
      %v1508 = vpop.permute.xlu0 %1507
      %1510 = vset.pattern.permute.xlu0 5
      %1511 = vperm.xlu0 %1510, %v509
      %v1512 = vpop.permute.xlu0 %1511
      %1514 = vset.pattern.permute.xlu0 5
      %1515 = vperm.xlu0 %1514, %v510
      %v1516 = vpop.permute.xlu0 %1515
      %1518 = vset.pattern.permute.xlu0 5
      %1519 = vperm.xlu0 %1518, %v511
      %v1520 = vpop.permute.xlu0 %1519
      %1522 = vset.pattern.permute.xlu0 5
      %1523 = vperm.xlu0 %1522, %v512
      %v1524 = vpop.permute.xlu0 %1523
      %1526 = vset.pattern.permute.xlu0 5
      %1527 = vperm.xlu0 %1526, %v513
      %v1528 = vpop.permute.xlu0 %1527
      %1530 = vset.pattern.permute.xlu0 5
      %1531 = vperm.xlu0 %1530, %v514
      %v1532 = vpop.permute.xlu0 %1531
      %1534 = vset.pattern.permute.xlu0 5
      %1535 = vperm.xlu0 %1534, %v515
      %v1536 = vpop.permute.xlu0 %1535
      %1538 = vset.pattern.permute.xlu0 5
      %1539 = vperm.xlu0 %1538, %v516
      %v1540 = vpop.permute.xlu0 %1539
      %1542 = vset.pattern.permute.xlu0 5
      %1543 = vperm.xlu0 %1542, %v517
      %v1544 = vpop.permute.xlu0 %1543
      %v1546 = vmul.f32 %v1008, %v1420
      %v1547 = vmul.f32 %v1010, %v1424
      %v1548 = vmul.f32 %v1012, %v1428
      %v1549 = vmul.f32 %v1014, %v1432
      %v1550 = vmul.f32 %v1016, %v1436
      %v1551 = vmul.f32 %v1018, %v1440
      %v1552 = vmul.f32 %v1020, %v1444
      %v1553 = vmul.f32 %v1022, %v1448
      %v1554 = vmul.f32 %v1024, %v1452
      %v1555 = vmul.f32 %v1026, %v1456
      %v1556 = vmul.f32 %v1028, %v1460
      %v1557 = vmul.f32 %v1030, %v1464
      %v1558 = vmul.f32 %v1032, %v1468
      %v1559 = vmul.f32 %v1034, %v1472
      %v1560 = vmul.f32 %v1036, %v1476
      %v1561 = vmul.f32 %v1038, %v1480
      %v1562 = vmul.f32 %v1040, %v1484
      %v1563 = vmul.f32 %v1042, %v1488
      %v1564 = vmul.f32 %v1044, %v1492
      %v1565 = vmul.f32 %v1046, %v1496
      %v1566 = vmul.f32 %v1048, %v1500
      %v1567 = vmul.f32 %v1050, %v1504
      %v1568 = vmul.f32 %v1052, %v1508
      %v1569 = vmul.f32 %v1054, %v1512
      %v1570 = vmul.f32 %v1056, %v1516
      %v1571 = vmul.f32 %v1058, %v1520
      %v1572 = vmul.f32 %v1060, %v1524
      %v1573 = vmul.f32 %v1062, %v1528
      %v1574 = vmul.f32 %v1064, %v1532
      %v1575 = vmul.f32 %v1065, %v1536
      %v1576 = vmul.f32 %v1003, %v1540
      %v1577 = vmul.f32 %v1097, %v1544
      %1578 = vset.pattern.permute.xlu0 6
      %1579 = vperm.xlu0 %1578, %v486
      %v1580 = vpop.permute.xlu0 %1579
      %1582 = vset.pattern.permute.xlu0 6
      %1583 = vperm.xlu0 %1582, %v487
      %v1584 = vpop.permute.xlu0 %1583
      %1586 = vset.pattern.permute.xlu0 6
      %1587 = vperm.xlu0 %1586, %v488
      %v1588 = vpop.permute.xlu0 %1587
      %1590 = vset.pattern.permute.xlu0 6
      %1591 = vperm.xlu0 %1590, %v489
      %v1592 = vpop.permute.xlu0 %1591
      %1594 = vset.pattern.permute.xlu0 6
      %1595 = vperm.xlu0 %1594, %v490
      %v1596 = vpop.permute.xlu0 %1595
      %1598 = vset.pattern.permute.xlu0 6
      %1599 = vperm.xlu0 %1598, %v491
      %v1600 = vpop.permute.xlu0 %1599
      %1602 = vset.pattern.permute.xlu0 6
      %1603 = vperm.xlu0 %1602, %v492
      %v1604 = vpop.permute.xlu0 %1603
      %1606 = vset.pattern.permute.xlu0 6
      %1607 = vperm.xlu0 %1606, %v493
      %v1608 = vpop.permute.xlu0 %1607
      %1610 = vset.pattern.permute.xlu0 6
      %1611 = vperm.xlu0 %1610, %v494
      %v1612 = vpop.permute.xlu0 %1611
      %1614 = vset.pattern.permute.xlu0 6
      %1615 = vperm.xlu0 %1614, %v495
      %v1616 = vpop.permute.xlu0 %1615
      %1618 = vset.pattern.permute.xlu0 6
      %1619 = vperm.xlu0 %1618, %v496
      %v1620 = vpop.permute.xlu0 %1619
      %1622 = vset.pattern.permute.xlu0 6
      %1623 = vperm.xlu0 %1622, %v497
      %v1624 = vpop.permute.xlu0 %1623
      %1626 = vset.pattern.permute.xlu0 6
      %1627 = vperm.xlu0 %1626, %v498
      %v1628 = vpop.permute.xlu0 %1627
      %1630 = vset.pattern.permute.xlu0 6
      %1631 = vperm.xlu0 %1630, %v499
      %v1632 = vpop.permute.xlu0 %1631
      %1634 = vset.pattern.permute.xlu0 6
      %1635 = vperm.xlu0 %1634, %v500
      %v1636 = vpop.permute.xlu0 %1635
      %1638 = vset.pattern.permute.xlu0 6
      %1639 = vperm.xlu0 %1638, %v501
      %v1640 = vpop.permute.xlu0 %1639
      %1642 = vset.pattern.permute.xlu0 6
      %1643 = vperm.xlu0 %1642, %v502
      %v1644 = vpop.permute.xlu0 %1643
      %1646 = vset.pattern.permute.xlu0 6
      %1647 = vperm.xlu0 %1646, %v503
      %v1648 = vpop.permute.xlu0 %1647
      %1650 = vset.pattern.permute.xlu0 6
      %1651 = vperm.xlu0 %1650, %v504
      %v1652 = vpop.permute.xlu0 %1651
      %1654 = vset.pattern.permute.xlu0 6
      %1655 = vperm.xlu0 %1654, %v505
      %v1656 = vpop.permute.xlu0 %1655
      %1658 = vset.pattern.permute.xlu0 6
      %1659 = vperm.xlu0 %1658, %v506
      %v1660 = vpop.permute.xlu0 %1659
      %1662 = vset.pattern.permute.xlu0 6
      %1663 = vperm.xlu0 %1662, %v507
      %v1664 = vpop.permute.xlu0 %1663
      %1666 = vset.pattern.permute.xlu0 6
      %1667 = vperm.xlu0 %1666, %v508
      %v1668 = vpop.permute.xlu0 %1667
      %1670 = vset.pattern.permute.xlu0 6
      %1671 = vperm.xlu0 %1670, %v509
      %v1672 = vpop.permute.xlu0 %1671
      %1674 = vset.pattern.permute.xlu0 6
      %1675 = vperm.xlu0 %1674, %v510
      %v1676 = vpop.permute.xlu0 %1675
      %1678 = vset.pattern.permute.xlu0 6
      %1679 = vperm.xlu0 %1678, %v511
      %v1680 = vpop.permute.xlu0 %1679
      %1682 = vset.pattern.permute.xlu0 6
      %1683 = vperm.xlu0 %1682, %v512
      %v1684 = vpop.permute.xlu0 %1683
      %1686 = vset.pattern.permute.xlu0 6
      %1687 = vperm.xlu0 %1686, %v513
      %v1688 = vpop.permute.xlu0 %1687
      %1690 = vset.pattern.permute.xlu0 6
      %1691 = vperm.xlu0 %1690, %v514
      %v1692 = vpop.permute.xlu0 %1691
      %1694 = vset.pattern.permute.xlu0 6
      %1695 = vperm.xlu0 %1694, %v515
      %v1696 = vpop.permute.xlu0 %1695
      %1698 = vset.pattern.permute.xlu0 6
      %1699 = vperm.xlu0 %1698, %v516
      %v1700 = vpop.permute.xlu0 %1699
      %1702 = vset.pattern.permute.xlu0 6
      %1703 = vperm.xlu0 %1702, %v517
      %v1704 = vpop.permute.xlu0 %1703
      %v1706 = vmul.f32 %v563, %v1580
      %v1707 = vmul.f32 %v565, %v1584
      %v1708 = vmul.f32 %v567, %v1588
      %v1709 = vmul.f32 %v569, %v1592
      %v1710 = vmul.f32 %v571, %v1596
      %v1711 = vmul.f32 %v573, %v1600
      %v1712 = vmul.f32 %v575, %v1604
      %v1713 = vmul.f32 %v577, %v1608
      %v1714 = vmul.f32 %v579, %v1612
      %v1715 = vmul.f32 %v581, %v1616
      %v1716 = vmul.f32 %v583, %v1620
      %v1717 = vmul.f32 %v585, %v1624
      %v1718 = vmul.f32 %v587, %v1628
      %v1719 = vmul.f32 %v589, %v1632
      %v1720 = vmul.f32 %v591, %v1636
      %v1721 = vmul.f32 %v593, %v1640
      %v1722 = vmul.f32 %v595, %v1644
      %v1723 = vmul.f32 %v597, %v1648
      %v1724 = vmul.f32 %v599, %v1652
      %v1725 = vmul.f32 %v601, %v1656
      %v1726 = vmul.f32 %v603, %v1660
      %v1727 = vmul.f32 %v605, %v1664
      %v1728 = vmul.f32 %v607, %v1668
      %v1729 = vmul.f32 %v609, %v1672
      %v1730 = vmul.f32 %v611, %v1676
      %v1731 = vmul.f32 %v613, %v1680
      %v1732 = vmul.f32 %v615, %v1684
      %v1733 = vmul.f32 %v616, %v1688
      %v1734 = vmul.f32 %v524, %v1692
      %v1735 = vmul.f32 %v526, %v1696
      %v1736 = vmul.f32 %v647, %v1700
      %v1737 = vmul.f32 %v561, %v1704
      %1738 = vset.pattern.permute.xlu0 7
      %1739 = vperm.xlu0 %1738, %v486
      %v1740 = vpop.permute.xlu0 %1739
      %1742 = vset.pattern.permute.xlu0 7
      %1743 = vperm.xlu0 %1742, %v487
      %v1744 = vpop.permute.xlu0 %1743
      %1746 = vset.pattern.permute.xlu0 7
      %1747 = vperm.xlu0 %1746, %v488
      %v1748 = vpop.permute.xlu0 %1747
      %1750 = vset.pattern.permute.xlu0 7
      %1751 = vperm.xlu0 %1750, %v489
      %v1752 = vpop.permute.xlu0 %1751
      %1754 = vset.pattern.permute.xlu0 7
      %1755 = vperm.xlu0 %1754, %v490
      %v1756 = vpop.permute.xlu0 %1755
      %1758 = vset.pattern.permute.xlu0 7
      %1759 = vperm.xlu0 %1758, %v491
      %v1760 = vpop.permute.xlu0 %1759
      %1762 = vset.pattern.permute.xlu0 7
      %1763 = vperm.xlu0 %1762, %v492
      %v1764 = vpop.permute.xlu0 %1763
      %1766 = vset.pattern.permute.xlu0 7
      %1767 = vperm.xlu0 %1766, %v493
      %v1768 = vpop.permute.xlu0 %1767
      %1770 = vset.pattern.permute.xlu0 7
      %1771 = vperm.xlu0 %1770, %v494
      %v1772 = vpop.permute.xlu0 %1771
      %1774 = vset.pattern.permute.xlu0 7
      %1775 = vperm.xlu0 %1774, %v495
      %v1776 = vpop.permute.xlu0 %1775
      %1778 = vset.pattern.permute.xlu0 7
      %1779 = vperm.xlu0 %1778, %v496
      %v1780 = vpop.permute.xlu0 %1779
      %1782 = vset.pattern.permute.xlu0 7
      %1783 = vperm.xlu0 %1782, %v497
      %v1784 = vpop.permute.xlu0 %1783
      %1786 = vset.pattern.permute.xlu0 7
      %1787 = vperm.xlu0 %1786, %v498
      %v1788 = vpop.permute.xlu0 %1787
      %1790 = vset.pattern.permute.xlu0 7
      %1791 = vperm.xlu0 %1790, %v499
      %v1792 = vpop.permute.xlu0 %1791
      %1794 = vset.pattern.permute.xlu0 7
      %1795 = vperm.xlu0 %1794, %v500
      %v1796 = vpop.permute.xlu0 %1795
      %1798 = vset.pattern.permute.xlu0 7
      %1799 = vperm.xlu0 %1798, %v501
      %v1800 = vpop.permute.xlu0 %1799
      %1802 = vset.pattern.permute.xlu0 7
      %1803 = vperm.xlu0 %1802, %v502
      %v1804 = vpop.permute.xlu0 %1803
      %1806 = vset.pattern.permute.xlu0 7
      %1807 = vperm.xlu0 %1806, %v503
      %v1808 = vpop.permute.xlu0 %1807
      %1810 = vset.pattern.permute.xlu0 7
      %1811 = vperm.xlu0 %1810, %v504
      %v1812 = vpop.permute.xlu0 %1811
      %1814 = vset.pattern.permute.xlu0 7
      %1815 = vperm.xlu0 %1814, %v505
      %v1816 = vpop.permute.xlu0 %1815
      %1818 = vset.pattern.permute.xlu0 7
      %1819 = vperm.xlu0 %1818, %v506
      %v1820 = vpop.permute.xlu0 %1819
      %1822 = vset.pattern.permute.xlu0 7
      %1823 = vperm.xlu0 %1822, %v507
      %v1824 = vpop.permute.xlu0 %1823
      %1826 = vset.pattern.permute.xlu0 7
      %1827 = vperm.xlu0 %1826, %v508
      %v1828 = vpop.permute.xlu0 %1827
      %1830 = vset.pattern.permute.xlu0 7
      %1831 = vperm.xlu0 %1830, %v509
      %v1832 = vpop.permute.xlu0 %1831
      %1834 = vset.pattern.permute.xlu0 7
      %1835 = vperm.xlu0 %1834, %v510
      %v1836 = vpop.permute.xlu0 %1835
      %1838 = vset.pattern.permute.xlu0 7
      %1839 = vperm.xlu0 %1838, %v511
      %v1840 = vpop.permute.xlu0 %1839
      %1842 = vset.pattern.permute.xlu0 7
      %1843 = vperm.xlu0 %1842, %v512
      %v1844 = vpop.permute.xlu0 %1843
      %1846 = vset.pattern.permute.xlu0 7
      %1847 = vperm.xlu0 %1846, %v513
      %v1848 = vpop.permute.xlu0 %1847
      %1850 = vset.pattern.permute.xlu0 7
      %1851 = vperm.xlu0 %1850, %v514
      %v1852 = vpop.permute.xlu0 %1851
      %1854 = vset.pattern.permute.xlu0 7
      %1855 = vperm.xlu0 %1854, %v515
      %v1856 = vpop.permute.xlu0 %1855
      %1858 = vset.pattern.permute.xlu0 7
      %1859 = vperm.xlu0 %1858, %v516
      %v1860 = vpop.permute.xlu0 %1859
      %1862 = vset.pattern.permute.xlu0 7
      %1863 = vperm.xlu0 %1862, %v517
      %v1864 = vpop.permute.xlu0 %1863
      %v1866 = vmul.f32 %v456, %v1740
      %v1867 = vmul.f32 %v457, %v1744
      %v1868 = vmul.f32 %v458, %v1748
      %v1869 = vmul.f32 %v459, %v1752
      %v1870 = vmul.f32 %v460, %v1756
      %v1871 = vmul.f32 %v461, %v1760
      %v1872 = vmul.f32 %v462, %v1764
      %v1873 = vmul.f32 %v463, %v1768
      %v1874 = vmul.f32 %v464, %v1772
      %v1875 = vmul.f32 %v465, %v1776
      %v1876 = vmul.f32 %v466, %v1780
      %v1877 = vmul.f32 %v467, %v1784
      %v1878 = vmul.f32 %v468, %v1788
      %v1879 = vmul.f32 %v469, %v1792
      %v1880 = vmul.f32 %v470, %v1796
      %v1881 = vmul.f32 %v471, %v1800
      %v1882 = vmul.f32 %v472, %v1804
      %v1883 = vmul.f32 %v473, %v1808
      %v1884 = vmul.f32 %v474, %v1812
      %v1885 = vmul.f32 %v475, %v1816
      %v1886 = vmul.f32 %v476, %v1820
      %v1887 = vmul.f32 %v477, %v1824
      %v1888 = vmul.f32 %v478, %v1828
      %v1889 = vmul.f32 %v479, %v1832
      %v1890 = vmul.f32 %v480, %v1836
      %v1891 = vmul.f32 %v481, %v1840
      %v1892 = vmul.f32 %v482, %v1844
      %v1893 = vmul.f32 %v483, %v1848
      %v1894 = vmul.f32 %v484, %v1852
      %v1895 = vmul.f32 %v485, %v1856
      %v1896 = vmul.f32 %v454, %v1860
      %v1897 = vmul.f32 %v455, %v1864
      %1898 = vset.pattern.permute.xlu0 8
      %1899 = vperm.xlu0 %1898, %v486
      %v1900 = vpop.permute.xlu0 %1899
      %1902 = vset.pattern.permute.xlu0 8
      %1903 = vperm.xlu0 %1902, %v487
      %v1904 = vpop.permute.xlu0 %1903
      %1906 = vset.pattern.permute.xlu0 8
      %1907 = vperm.xlu0 %1906, %v488
      %v1908 = vpop.permute.xlu0 %1907
      %1910 = vset.pattern.permute.xlu0 8
      %1911 = vperm.xlu0 %1910, %v489
      %v1912 = vpop.permute.xlu0 %1911
      %1914 = vset.pattern.permute.xlu0 8
      %1915 = vperm.xlu0 %1914, %v490
      %v1916 = vpop.permute.xlu0 %1915
      %1918 = vset.pattern.permute.xlu0 8
      %1919 = vperm.xlu0 %1918, %v491
      %v1920 = vpop.permute.xlu0 %1919
      %1922 = vset.pattern.permute.xlu0 8
      %1923 = vperm.xlu0 %1922, %v492
      %v1924 = vpop.permute.xlu0 %1923
      %1926 = vset.pattern.permute.xlu0 8
      %1927 = vperm.xlu0 %1926, %v493
      %v1928 = vpop.permute.xlu0 %1927
      %1930 = vset.pattern.permute.xlu0 8
      %1931 = vperm.xlu0 %1930, %v494
      %v1932 = vpop.permute.xlu0 %1931
      %1934 = vset.pattern.permute.xlu0 8
      %1935 = vperm.xlu0 %1934, %v495
      %v1936 = vpop.permute.xlu0 %1935
      %1938 = vset.pattern.permute.xlu0 8
      %1939 = vperm.xlu0 %1938, %v496
      %v1940 = vpop.permute.xlu0 %1939
      %1942 = vset.pattern.permute.xlu0 8
      %1943 = vperm.xlu0 %1942, %v497
      %v1944 = vpop.permute.xlu0 %1943
      %1946 = vset.pattern.permute.xlu0 8
      %1947 = vperm.xlu0 %1946, %v498
      %v1948 = vpop.permute.xlu0 %1947
      %1950 = vset.pattern.permute.xlu0 8
      %1951 = vperm.xlu0 %1950, %v499
      %v1952 = vpop.permute.xlu0 %1951
      %1954 = vset.pattern.permute.xlu0 8
      %1955 = vperm.xlu0 %1954, %v500
      %v1956 = vpop.permute.xlu0 %1955
      %1958 = vset.pattern.permute.xlu0 8
      %1959 = vperm.xlu0 %1958, %v501
      %v1960 = vpop.permute.xlu0 %1959
      %1962 = vset.pattern.permute.xlu0 8
      %1963 = vperm.xlu0 %1962, %v502
      %v1964 = vpop.permute.xlu0 %1963
      %1966 = vset.pattern.permute.xlu0 8
      %1967 = vperm.xlu0 %1966, %v503
      %v1968 = vpop.permute.xlu0 %1967
      %1970 = vset.pattern.permute.xlu0 8
      %1971 = vperm.xlu0 %1970, %v504
      %v1972 = vpop.permute.xlu0 %1971
      %1974 = vset.pattern.permute.xlu0 8
      %1975 = vperm.xlu0 %1974, %v505
      %v1976 = vpop.permute.xlu0 %1975
      %1978 = vset.pattern.permute.xlu0 8
      %1979 = vperm.xlu0 %1978, %v506
      %v1980 = vpop.permute.xlu0 %1979
      %1982 = vset.pattern.permute.xlu0 8
      %1983 = vperm.xlu0 %1982, %v507
      %v1984 = vpop.permute.xlu0 %1983
      %1986 = vset.pattern.permute.xlu0 8
      %1987 = vperm.xlu0 %1986, %v508
      %v1988 = vpop.permute.xlu0 %1987
      %1990 = vset.pattern.permute.xlu0 8
      %1991 = vperm.xlu0 %1990, %v509
      %v1992 = vpop.permute.xlu0 %1991
      %1994 = vset.pattern.permute.xlu0 8
      %1995 = vperm.xlu0 %1994, %v510
      %v1996 = vpop.permute.xlu0 %1995
      %1998 = vset.pattern.permute.xlu0 8
      %1999 = vperm.xlu0 %1998, %v511
      %v2000 = vpop.permute.xlu0 %1999
      %2002 = vset.pattern.permute.xlu0 8
      %2003 = vperm.xlu0 %2002, %v512
      %v2004 = vpop.permute.xlu0 %2003
      %2006 = vset.pattern.permute.xlu0 8
      %2007 = vperm.xlu0 %2006, %v513
      %v2008 = vpop.permute.xlu0 %2007
      %2010 = vset.pattern.permute.xlu0 8
      %2011 = vperm.xlu0 %2010, %v514
      %v2012 = vpop.permute.xlu0 %2011
      %2014 = vset.pattern.permute.xlu0 8
      %2015 = vperm.xlu0 %2014, %v515
      %v2016 = vpop.permute.xlu0 %2015
      %2018 = vset.pattern.permute.xlu0 8
      %2019 = vperm.xlu0 %2018, %v516
      %v2020 = vpop.permute.xlu0 %2019
      %2022 = vset.pattern.permute.xlu0 8
      %2023 = vperm.xlu0 %2022, %v517
      %v2024 = vpop.permute.xlu0 %2023
      %v2026 = vmul.f32 %v1012, %v1900
      %v2027 = vmul.f32 %v1014, %v1904
      %v2028 = vmul.f32 %v1016, %v1908
      %v2029 = vmul.f32 %v1018, %v1912
      %v2030 = vmul.f32 %v1020, %v1916
      %v2031 = vmul.f32 %v1022, %v1920
      %v2032 = vmul.f32 %v1024, %v1924
      %v2033 = vmul.f32 %v1026, %v1928
      %v2034 = vmul.f32 %v1028, %v1932
      %v2035 = vmul.f32 %v1030, %v1936
      %v2036 = vmul.f32 %v1032, %v1940
      %v2037 = vmul.f32 %v1034, %v1944
      %v2038 = vmul.f32 %v1036, %v1948
      %v2039 = vmul.f32 %v1038, %v1952
      %v2040 = vmul.f32 %v1040, %v1956
      %v2041 = vmul.f32 %v1042, %v1960
      %v2042 = vmul.f32 %v1044, %v1964
      %v2043 = vmul.f32 %v1046, %v1968
      %v2044 = vmul.f32 %v1048, %v1972
      %v2045 = vmul.f32 %v1050, %v1976
      %v2046 = vmul.f32 %v1052, %v1980
      %v2047 = vmul.f32 %v1054, %v1984
      %v2048 = vmul.f32 %v1056, %v1988
      %v2049 = vmul.f32 %v1058, %v1992
      %v2050 = vmul.f32 %v1060, %v1996
      %v2051 = vmul.f32 %v1062, %v2000
      %v2052 = vmul.f32 %v1064, %v2004
      %v2053 = vmul.f32 %v1065, %v2008
      %v2054 = vmul.f32 %v1003, %v2012
      %v2055 = vmul.f32 %v1097, %v2016
      %v2056 = vmul.f32 %v1008, %v2020
      %v2057 = vmul.f32 %v1010, %v2024
      %2090 = vrot.lane.b32.xlu0 %v968, 6
      %v2091 = vpop.permute.xlu0 %2090
      %2092 = vrot.lane.b32.xlu0 %v969, 6
      %v2093 = vpop.permute.xlu0 %2092
      %2094 = vrot.lane.b32.xlu0 %v970, 6
      %v2095 = vpop.permute.xlu0 %2094
      %2096 = vrot.lane.b32.xlu0 %v971, 6
      %v2097 = vpop.permute.xlu0 %2096
      %2098 = vrot.lane.b32.xlu0 %v972, 6
      %v2099 = vpop.permute.xlu0 %2098
      %2100 = vrot.lane.b32.xlu0 %v973, 6
      %v2101 = vpop.permute.xlu0 %2100
      %2102 = vrot.lane.b32.xlu0 %v974, 6
      %v2103 = vpop.permute.xlu0 %2102
      %2104 = vrot.lane.b32.xlu0 %v975, 6
      %v2105 = vpop.permute.xlu0 %2104
      %2106 = vrot.lane.b32.xlu0 %v976, 6
      %v2107 = vpop.permute.xlu0 %2106
      %2108 = vrot.lane.b32.xlu0 %v977, 6
      %v2109 = vpop.permute.xlu0 %2108
      %2110 = vrot.lane.b32.xlu0 %v978, 6
      %v2111 = vpop.permute.xlu0 %2110
      %2112 = vrot.lane.b32.xlu0 %v979, 6
      %v2113 = vpop.permute.xlu0 %2112
      %2114 = vrot.lane.b32.xlu0 %v980, 6
      %v2115 = vpop.permute.xlu0 %2114
      %2116 = vrot.lane.b32.xlu0 %v981, 6
      %v2117 = vpop.permute.xlu0 %2116
      %2118 = vrot.lane.b32.xlu0 %v982, 6
      %v2119 = vpop.permute.xlu0 %2118
      %2120 = vrot.lane.b32.xlu0 %v983, 6
      %v2121 = vpop.permute.xlu0 %2120
      %2122 = vrot.lane.b32.xlu0 %v984, 6
      %v2123 = vpop.permute.xlu0 %2122
      %2124 = vrot.lane.b32.xlu0 %v985, 6
      %v2125 = vpop.permute.xlu0 %2124
      %2126 = vrot.lane.b32.xlu0 %v986, 6
      %v2127 = vpop.permute.xlu0 %2126
      %2128 = vrot.lane.b32.xlu0 %v987, 6
      %v2129 = vpop.permute.xlu0 %2128
      %2130 = vrot.lane.b32.xlu0 %v988, 6
      %v2131 = vpop.permute.xlu0 %2130
      %2132 = vrot.lane.b32.xlu0 %v989, 6
      %v2133 = vpop.permute.xlu0 %2132
      %2134 = vrot.lane.b32.xlu0 %v990, 6
      %v2135 = vpop.permute.xlu0 %2134
      %2136 = vrot.lane.b32.xlu0 %v991, 6
      %v2137 = vpop.permute.xlu0 %2136
      %2138 = vrot.lane.b32.xlu0 %v992, 6
      %v2139 = vpop.permute.xlu0 %2138
      %2140 = vrot.lane.b32.xlu0 %v993, 6
      %v2141 = vpop.permute.xlu0 %2140
      %2142 = vrot.lane.b32.xlu0 %v994, 6
      %v2143 = vpop.permute.xlu0 %2142
      %2144 = vrot.lane.b32.xlu0 %v995, 6
      %v2145 = vpop.permute.xlu0 %2144
      %2146 = vrot.lane.b32.xlu0 %v996, 6
      %v2147 = vpop.permute.xlu0 %2146
      %2148 = vrot.lane.b32.xlu0 %v997, 6
      %v2149 = vpop.permute.xlu0 %2148
      %2150 = vrot.lane.b32.xlu0 %v998, 6
      %v2151 = vpop.permute.xlu0 %2150
      %2152 = vrot.lane.b32.xlu0 %v999, 6
      %v2153 = vpop.permute.xlu0 %2152
      %2218 = vrot.lane.b32.xlu0 %v1226, 12
      %v2219 = vpop.permute.xlu0 %2218
      %2220 = vrot.lane.b32.xlu0 %v1227, 12
      %v2221 = vpop.permute.xlu0 %2220
      %2222 = vrot.lane.b32.xlu0 %v1228, 12
      %v2223 = vpop.permute.xlu0 %2222
      %2224 = vrot.lane.b32.xlu0 %v1229, 12
      %v2225 = vpop.permute.xlu0 %2224
      %2226 = vrot.lane.b32.xlu0 %v1230, 12
      %v2227 = vpop.permute.xlu0 %2226
      %2228 = vrot.lane.b32.xlu0 %v1231, 12
      %v2229 = vpop.permute.xlu0 %2228
      %2230 = vrot.lane.b32.xlu0 %v1232, 12
      %v2231 = vpop.permute.xlu0 %2230
      %2232 = vrot.lane.b32.xlu0 %v1233, 12
      %v2233 = vpop.permute.xlu0 %2232
      %2234 = vrot.lane.b32.xlu0 %v1234, 12
      %v2235 = vpop.permute.xlu0 %2234
      %2236 = vrot.lane.b32.xlu0 %v1235, 12
      %v2237 = vpop.permute.xlu0 %2236
      %2238 = vrot.lane.b32.xlu0 %v1236, 12
      %v2239 = vpop.permute.xlu0 %2238
      %2240 = vrot.lane.b32.xlu0 %v1237, 12
      %v2241 = vpop.permute.xlu0 %2240
      %2242 = vrot.lane.b32.xlu0 %v1238, 12
      %v2243 = vpop.permute.xlu0 %2242
      %2244 = vrot.lane.b32.xlu0 %v1239, 12
      %v2245 = vpop.permute.xlu0 %2244
      %2246 = vrot.lane.b32.xlu0 %v1240, 12
      %v2247 = vpop.permute.xlu0 %2246
      %2248 = vrot.lane.b32.xlu0 %v1241, 12
      %v2249 = vpop.permute.xlu0 %2248
      %2250 = vrot.lane.b32.xlu0 %v1242, 12
      %v2251 = vpop.permute.xlu0 %2250
      %2252 = vrot.lane.b32.xlu0 %v1243, 12
      %v2253 = vpop.permute.xlu0 %2252
      %2254 = vrot.lane.b32.xlu0 %v1244, 12
      %v2255 = vpop.permute.xlu0 %2254
      %2256 = vrot.lane.b32.xlu0 %v1245, 12
      %v2257 = vpop.permute.xlu0 %2256
      %2258 = vrot.lane.b32.xlu0 %v1246, 12
      %v2259 = vpop.permute.xlu0 %2258
      %2260 = vrot.lane.b32.xlu0 %v1247, 12
      %v2261 = vpop.permute.xlu0 %2260
      %2262 = vrot.lane.b32.xlu0 %v1248, 12
      %v2263 = vpop.permute.xlu0 %2262
      %2264 = vrot.lane.b32.xlu0 %v1249, 12
      %v2265 = vpop.permute.xlu0 %2264
      %2266 = vrot.lane.b32.xlu0 %v1250, 12
      %v2267 = vpop.permute.xlu0 %2266
      %2268 = vrot.lane.b32.xlu0 %v1251, 12
      %v2269 = vpop.permute.xlu0 %2268
      %2270 = vrot.lane.b32.xlu0 %v1252, 12
      %v2271 = vpop.permute.xlu0 %2270
      %2272 = vrot.lane.b32.xlu0 %v1253, 12
      %v2273 = vpop.permute.xlu0 %2272
      %2274 = vrot.lane.b32.xlu0 %v1254, 12
      %v2275 = vpop.permute.xlu0 %2274
      %2276 = vrot.lane.b32.xlu0 %v1255, 12
      %v2277 = vpop.permute.xlu0 %2276
      %2278 = vrot.lane.b32.xlu0 %v1256, 12
      %v2279 = vpop.permute.xlu0 %2278
      %2280 = vrot.lane.b32.xlu0 %v1257, 12
      %v2281 = vpop.permute.xlu0 %2280
      %2346 = vrot.lane.b32.xlu0 %v1386, 18
      %v2347 = vpop.permute.xlu0 %2346
      %2348 = vrot.lane.b32.xlu0 %v1387, 18
      %v2349 = vpop.permute.xlu0 %2348
      %2350 = vrot.lane.b32.xlu0 %v1388, 18
      %v2351 = vpop.permute.xlu0 %2350
      %2352 = vrot.lane.b32.xlu0 %v1389, 18
      %v2353 = vpop.permute.xlu0 %2352
      %2354 = vrot.lane.b32.xlu0 %v1390, 18
      %v2355 = vpop.permute.xlu0 %2354
      %2356 = vrot.lane.b32.xlu0 %v1391, 18
      %v2357 = vpop.permute.xlu0 %2356
      %2358 = vrot.lane.b32.xlu0 %v1392, 18
      %v2359 = vpop.permute.xlu0 %2358
      %2360 = vrot.lane.b32.xlu0 %v1393, 18
      %v2361 = vpop.permute.xlu0 %2360
      %2362 = vrot.lane.b32.xlu0 %v1394, 18
      %v2363 = vpop.permute.xlu0 %2362
      %2364 = vrot.lane.b32.xlu0 %v1395, 18
      %v2365 = vpop.permute.xlu0 %2364
      %2366 = vrot.lane.b32.xlu0 %v1396, 18
      %v2367 = vpop.permute.xlu0 %2366
      %2368 = vrot.lane.b32.xlu0 %v1397, 18
      %v2369 = vpop.permute.xlu0 %2368
      %2370 = vrot.lane.b32.xlu0 %v1398, 18
      %v2371 = vpop.permute.xlu0 %2370
      %2372 = vrot.lane.b32.xlu0 %v1399, 18
      %v2373 = vpop.permute.xlu0 %2372
      %2374 = vrot.lane.b32.xlu0 %v1400, 18
      %v2375 = vpop.permute.xlu0 %2374
      %2376 = vrot.lane.b32.xlu0 %v1401, 18
      %v2377 = vpop.permute.xlu0 %2376
      %2378 = vrot.lane.b32.xlu0 %v1402, 18
      %v2379 = vpop.permute.xlu0 %2378
      %2380 = vrot.lane.b32.xlu0 %v1403, 18
      %v2381 = vpop.permute.xlu0 %2380
      %2382 = vrot.lane.b32.xlu0 %v1404, 18
      %v2383 = vpop.permute.xlu0 %2382
      %2384 = vrot.lane.b32.xlu0 %v1405, 18
      %v2385 = vpop.permute.xlu0 %2384
      %2386 = vrot.lane.b32.xlu0 %v1406, 18
      %v2387 = vpop.permute.xlu0 %2386
      %2388 = vrot.lane.b32.xlu0 %v1407, 18
      %v2389 = vpop.permute.xlu0 %2388
      %2390 = vrot.lane.b32.xlu0 %v1408, 18
      %v2391 = vpop.permute.xlu0 %2390
      %2392 = vrot.lane.b32.xlu0 %v1409, 18
      %v2393 = vpop.permute.xlu0 %2392
      %2394 = vrot.lane.b32.xlu0 %v1410, 18
      %v2395 = vpop.permute.xlu0 %2394
      %2396 = vrot.lane.b32.xlu0 %v1411, 18
      %v2397 = vpop.permute.xlu0 %2396
      %2398 = vrot.lane.b32.xlu0 %v1412, 18
      %v2399 = vpop.permute.xlu0 %2398
      %2400 = vrot.lane.b32.xlu0 %v1413, 18
      %v2401 = vpop.permute.xlu0 %2400
      %2402 = vrot.lane.b32.xlu0 %v1414, 18
      %v2403 = vpop.permute.xlu0 %2402
      %2404 = vrot.lane.b32.xlu0 %v1415, 18
      %v2405 = vpop.permute.xlu0 %2404
      %2406 = vrot.lane.b32.xlu0 %v1416, 18
      %v2407 = vpop.permute.xlu0 %2406
      %2408 = vrot.lane.b32.xlu0 %v1417, 18
      %v2409 = vpop.permute.xlu0 %2408
      %2442 = vrot.lane.b32.xlu0 %v454, 24
      %v2443 = vpop.permute.xlu0 %2442
      %2444 = vrot.lane.b32.xlu0 %v455, 24
      %v2445 = vpop.permute.xlu0 %2444
      %2446 = vrot.lane.b32.xlu0 %v456, 24
      %v2447 = vpop.permute.xlu0 %2446
      %2448 = vrot.lane.b32.xlu0 %v457, 24
      %v2449 = vpop.permute.xlu0 %2448
      %2450 = vrot.lane.b32.xlu0 %v458, 24
      %v2451 = vpop.permute.xlu0 %2450
      %2452 = vrot.lane.b32.xlu0 %v459, 24
      %v2453 = vpop.permute.xlu0 %2452
      %2454 = vrot.lane.b32.xlu0 %v460, 24
      %v2455 = vpop.permute.xlu0 %2454
      %2456 = vrot.lane.b32.xlu0 %v461, 24
      %v2457 = vpop.permute.xlu0 %2456
      %2458 = vrot.lane.b32.xlu0 %v462, 24
      %v2459 = vpop.permute.xlu0 %2458
      %2460 = vrot.lane.b32.xlu0 %v463, 24
      %v2461 = vpop.permute.xlu0 %2460
      %2462 = vrot.lane.b32.xlu0 %v464, 24
      %v2463 = vpop.permute.xlu0 %2462
      %2464 = vrot.lane.b32.xlu0 %v465, 24
      %v2465 = vpop.permute.xlu0 %2464
      %2466 = vrot.lane.b32.xlu0 %v466, 24
      %v2467 = vpop.permute.xlu0 %2466
      %2468 = vrot.lane.b32.xlu0 %v467, 24
      %v2469 = vpop.permute.xlu0 %2468
      %2470 = vrot.lane.b32.xlu0 %v468, 24
      %v2471 = vpop.permute.xlu0 %2470
      %2472 = vrot.lane.b32.xlu0 %v469, 24
      %v2473 = vpop.permute.xlu0 %2472
      %2474 = vrot.lane.b32.xlu0 %v470, 24
      %v2475 = vpop.permute.xlu0 %2474
      %2476 = vrot.lane.b32.xlu0 %v471, 24
      %v2477 = vpop.permute.xlu0 %2476
      %2478 = vrot.lane.b32.xlu0 %v472, 24
      %v2479 = vpop.permute.xlu0 %2478
      %2480 = vrot.lane.b32.xlu0 %v473, 24
      %v2481 = vpop.permute.xlu0 %2480
      %2482 = vrot.lane.b32.xlu0 %v474, 24
      %v2483 = vpop.permute.xlu0 %2482
      %2484 = vrot.lane.b32.xlu0 %v475, 24
      %v2485 = vpop.permute.xlu0 %2484
      %2486 = vrot.lane.b32.xlu0 %v476, 24
      %v2487 = vpop.permute.xlu0 %2486
      %2488 = vrot.lane.b32.xlu0 %v477, 24
      %v2489 = vpop.permute.xlu0 %2488
      %2490 = vrot.lane.b32.xlu0 %v478, 24
      %v2491 = vpop.permute.xlu0 %2490
      %2492 = vrot.lane.b32.xlu0 %v479, 24
      %v2493 = vpop.permute.xlu0 %2492
      %2494 = vrot.lane.b32.xlu0 %v480, 24
      %v2495 = vpop.permute.xlu0 %2494
      %2496 = vrot.lane.b32.xlu0 %v481, 24
      %v2497 = vpop.permute.xlu0 %2496
      %2498 = vrot.lane.b32.xlu0 %v482, 24
      %v2499 = vpop.permute.xlu0 %2498
      %2500 = vrot.lane.b32.xlu0 %v483, 24
      %v2501 = vpop.permute.xlu0 %2500
      %2502 = vrot.lane.b32.xlu0 %v484, 24
      %v2503 = vpop.permute.xlu0 %2502
      %2504 = vrot.lane.b32.xlu0 %v485, 24
      %v2505 = vpop.permute.xlu0 %2504
      %2570 = vrot.lane.b32.xlu0 %v1546, 30
      %v2571 = vpop.permute.xlu0 %2570
      %2572 = vrot.lane.b32.xlu0 %v1547, 30
      %v2573 = vpop.permute.xlu0 %2572
      %2574 = vrot.lane.b32.xlu0 %v1548, 30
      %v2575 = vpop.permute.xlu0 %2574
      %2576 = vrot.lane.b32.xlu0 %v1549, 30
      %v2577 = vpop.permute.xlu0 %2576
      %2578 = vrot.lane.b32.xlu0 %v1550, 30
      %v2579 = vpop.permute.xlu0 %2578
      %2580 = vrot.lane.b32.xlu0 %v1551, 30
      %v2581 = vpop.permute.xlu0 %2580
      %2582 = vrot.lane.b32.xlu0 %v1552, 30
      %v2583 = vpop.permute.xlu0 %2582
      %2584 = vrot.lane.b32.xlu0 %v1553, 30
      %v2585 = vpop.permute.xlu0 %2584
      %2586 = vrot.lane.b32.xlu0 %v1554, 30
      %v2587 = vpop.permute.xlu0 %2586
      %2588 = vrot.lane.b32.xlu0 %v1555, 30
      %v2589 = vpop.permute.xlu0 %2588
      %2590 = vrot.lane.b32.xlu0 %v1556, 30
      %v2591 = vpop.permute.xlu0 %2590
      %2592 = vrot.lane.b32.xlu0 %v1557, 30
      %v2593 = vpop.permute.xlu0 %2592
      %2594 = vrot.lane.b32.xlu0 %v1558, 30
      %v2595 = vpop.permute.xlu0 %2594
      %2596 = vrot.lane.b32.xlu0 %v1559, 30
      %v2597 = vpop.permute.xlu0 %2596
      %2598 = vrot.lane.b32.xlu0 %v1560, 30
      %v2599 = vpop.permute.xlu0 %2598
      %2600 = vrot.lane.b32.xlu0 %v1561, 30
      %v2601 = vpop.permute.xlu0 %2600
      %2602 = vrot.lane.b32.xlu0 %v1562, 30
      %v2603 = vpop.permute.xlu0 %2602
      %2604 = vrot.lane.b32.xlu0 %v1563, 30
      %v2605 = vpop.permute.xlu0 %2604
      %2606 = vrot.lane.b32.xlu0 %v1564, 30
      %v2607 = vpop.permute.xlu0 %2606
      %2608 = vrot.lane.b32.xlu0 %v1565, 30
      %v2609 = vpop.permute.xlu0 %2608
      %2610 = vrot.lane.b32.xlu0 %v1566, 30
      %v2611 = vpop.permute.xlu0 %2610
      %2612 = vrot.lane.b32.xlu0 %v1567, 30
      %v2613 = vpop.permute.xlu0 %2612
      %2614 = vrot.lane.b32.xlu0 %v1568, 30
      %v2615 = vpop.permute.xlu0 %2614
      %2616 = vrot.lane.b32.xlu0 %v1569, 30
      %v2617 = vpop.permute.xlu0 %2616
      %2618 = vrot.lane.b32.xlu0 %v1570, 30
      %v2619 = vpop.permute.xlu0 %2618
      %2620 = vrot.lane.b32.xlu0 %v1571, 30
      %v2621 = vpop.permute.xlu0 %2620
      %2622 = vrot.lane.b32.xlu0 %v1572, 30
      %v2623 = vpop.permute.xlu0 %2622
      %2624 = vrot.lane.b32.xlu0 %v1573, 30
      %v2625 = vpop.permute.xlu0 %2624
      %2626 = vrot.lane.b32.xlu0 %v1574, 30
      %v2627 = vpop.permute.xlu0 %2626
      %2628 = vrot.lane.b32.xlu0 %v1575, 30
      %v2629 = vpop.permute.xlu0 %2628
      %2630 = vrot.lane.b32.xlu0 %v1576, 30
      %v2631 = vpop.permute.xlu0 %2630
      %2632 = vrot.lane.b32.xlu0 %v1577, 30
      %v2633 = vpop.permute.xlu0 %2632
      %2698 = vrot.lane.b32.xlu0 %v1706, 36
      %v2699 = vpop.permute.xlu0 %2698
      %2700 = vrot.lane.b32.xlu0 %v1707, 36
      %v2701 = vpop.permute.xlu0 %2700
      %2702 = vrot.lane.b32.xlu0 %v1708, 36
      %v2703 = vpop.permute.xlu0 %2702
      %2704 = vrot.lane.b32.xlu0 %v1709, 36
      %v2705 = vpop.permute.xlu0 %2704
      %2706 = vrot.lane.b32.xlu0 %v1710, 36
      %v2707 = vpop.permute.xlu0 %2706
      %2708 = vrot.lane.b32.xlu0 %v1711, 36
      %v2709 = vpop.permute.xlu0 %2708
      %2710 = vrot.lane.b32.xlu0 %v1712, 36
      %v2711 = vpop.permute.xlu0 %2710
      %2712 = vrot.lane.b32.xlu0 %v1713, 36
      %v2713 = vpop.permute.xlu0 %2712
      %2714 = vrot.lane.b32.xlu0 %v1714, 36
      %v2715 = vpop.permute.xlu0 %2714
      %2716 = vrot.lane.b32.xlu0 %v1715, 36
      %v2717 = vpop.permute.xlu0 %2716
      %2718 = vrot.lane.b32.xlu0 %v1716, 36
      %v2719 = vpop.permute.xlu0 %2718
      %2720 = vrot.lane.b32.xlu0 %v1717, 36
      %v2721 = vpop.permute.xlu0 %2720
      %2722 = vrot.lane.b32.xlu0 %v1718, 36
      %v2723 = vpop.permute.xlu0 %2722
      %2724 = vrot.lane.b32.xlu0 %v1719, 36
      %v2725 = vpop.permute.xlu0 %2724
      %2726 = vrot.lane.b32.xlu0 %v1720, 36
      %v2727 = vpop.permute.xlu0 %2726
      %2728 = vrot.lane.b32.xlu0 %v1721, 36
      %v2729 = vpop.permute.xlu0 %2728
      %2730 = vrot.lane.b32.xlu0 %v1722, 36
      %v2731 = vpop.permute.xlu0 %2730
      %2732 = vrot.lane.b32.xlu0 %v1723, 36
      %v2733 = vpop.permute.xlu0 %2732
      %2734 = vrot.lane.b32.xlu0 %v1724, 36
      %v2735 = vpop.permute.xlu0 %2734
      %2736 = vrot.lane.b32.xlu0 %v1725, 36
      %v2737 = vpop.permute.xlu0 %2736
      %2738 = vrot.lane.b32.xlu0 %v1726, 36
      %v2739 = vpop.permute.xlu0 %2738
      %2740 = vrot.lane.b32.xlu0 %v1727, 36
      %v2741 = vpop.permute.xlu0 %2740
      %2742 = vrot.lane.b32.xlu0 %v1728, 36
      %v2743 = vpop.permute.xlu0 %2742
      %2744 = vrot.lane.b32.xlu0 %v1729, 36
      %v2745 = vpop.permute.xlu0 %2744
      %2746 = vrot.lane.b32.xlu0 %v1730, 36
      %v2747 = vpop.permute.xlu0 %2746
      %2748 = vrot.lane.b32.xlu0 %v1731, 36
      %v2749 = vpop.permute.xlu0 %2748
      %2750 = vrot.lane.b32.xlu0 %v1732, 36
      %v2751 = vpop.permute.xlu0 %2750
      %2752 = vrot.lane.b32.xlu0 %v1733, 36
      %v2753 = vpop.permute.xlu0 %2752
      %2754 = vrot.lane.b32.xlu0 %v1734, 36
      %v2755 = vpop.permute.xlu0 %2754
      %2756 = vrot.lane.b32.xlu0 %v1735, 36
      %v2757 = vpop.permute.xlu0 %2756
      %2758 = vrot.lane.b32.xlu0 %v1736, 36
      %v2759 = vpop.permute.xlu0 %2758
      %2760 = vrot.lane.b32.xlu0 %v1737, 36
      %v2761 = vpop.permute.xlu0 %2760
      %2826 = vrot.lane.b32.xlu0 %v1866, 42
      %v2827 = vpop.permute.xlu0 %2826
      %2828 = vrot.lane.b32.xlu0 %v1867, 42
      %v2829 = vpop.permute.xlu0 %2828
      %2830 = vrot.lane.b32.xlu0 %v1868, 42
      %v2831 = vpop.permute.xlu0 %2830
      %2832 = vrot.lane.b32.xlu0 %v1869, 42
      %v2833 = vpop.permute.xlu0 %2832
      %2834 = vrot.lane.b32.xlu0 %v1870, 42
      %v2835 = vpop.permute.xlu0 %2834
      %2836 = vrot.lane.b32.xlu0 %v1871, 42
      %v2837 = vpop.permute.xlu0 %2836
      %2838 = vrot.lane.b32.xlu0 %v1872, 42
      %v2839 = vpop.permute.xlu0 %2838
      %2840 = vrot.lane.b32.xlu0 %v1873, 42
      %v2841 = vpop.permute.xlu0 %2840
      %2842 = vrot.lane.b32.xlu0 %v1874, 42
      %v2843 = vpop.permute.xlu0 %2842
      %2844 = vrot.lane.b32.xlu0 %v1875, 42
      %v2845 = vpop.permute.xlu0 %2844
      %2846 = vrot.lane.b32.xlu0 %v1876, 42
      %v2847 = vpop.permute.xlu0 %2846
      %2848 = vrot.lane.b32.xlu0 %v1877, 42
      %v2849 = vpop.permute.xlu0 %2848
      %2850 = vrot.lane.b32.xlu0 %v1878, 42
      %v2851 = vpop.permute.xlu0 %2850
      %2852 = vrot.lane.b32.xlu0 %v1879, 42
      %v2853 = vpop.permute.xlu0 %2852
      %2854 = vrot.lane.b32.xlu0 %v1880, 42
      %v2855 = vpop.permute.xlu0 %2854
      %2856 = vrot.lane.b32.xlu0 %v1881, 42
      %v2857 = vpop.permute.xlu0 %2856
      %2858 = vrot.lane.b32.xlu0 %v1882, 42
      %v2859 = vpop.permute.xlu0 %2858
      %2860 = vrot.lane.b32.xlu0 %v1883, 42
      %v2861 = vpop.permute.xlu0 %2860
      %2862 = vrot.lane.b32.xlu0 %v1884, 42
      %v2863 = vpop.permute.xlu0 %2862
      %2864 = vrot.lane.b32.xlu0 %v1885, 42
      %v2865 = vpop.permute.xlu0 %2864
      %2866 = vrot.lane.b32.xlu0 %v1886, 42
      %v2867 = vpop.permute.xlu0 %2866
      %2868 = vrot.lane.b32.xlu0 %v1887, 42
      %v2869 = vpop.permute.xlu0 %2868
      %2870 = vrot.lane.b32.xlu0 %v1888, 42
      %v2871 = vpop.permute.xlu0 %2870
      %2872 = vrot.lane.b32.xlu0 %v1889, 42
      %v2873 = vpop.permute.xlu0 %2872
      %2874 = vrot.lane.b32.xlu0 %v1890, 42
      %v2875 = vpop.permute.xlu0 %2874
      %2876 = vrot.lane.b32.xlu0 %v1891, 42
      %v2877 = vpop.permute.xlu0 %2876
      %2878 = vrot.lane.b32.xlu0 %v1892, 42
      %v2879 = vpop.permute.xlu0 %2878
      %2880 = vrot.lane.b32.xlu0 %v1893, 42
      %v2881 = vpop.permute.xlu0 %2880
      %2882 = vrot.lane.b32.xlu0 %v1894, 42
      %v2883 = vpop.permute.xlu0 %2882
      %2884 = vrot.lane.b32.xlu0 %v1895, 42
      %v2885 = vpop.permute.xlu0 %2884
      %2886 = vrot.lane.b32.xlu0 %v1896, 42
      %v2887 = vpop.permute.xlu0 %2886
      %2888 = vrot.lane.b32.xlu0 %v1897, 42
      %v2889 = vpop.permute.xlu0 %2888
      %2954 = vrot.lane.b32.xlu0 %v2026, 48
      %v2955 = vpop.permute.xlu0 %2954
      %2956 = vrot.lane.b32.xlu0 %v2027, 48
      %v2957 = vpop.permute.xlu0 %2956
      %2958 = vrot.lane.b32.xlu0 %v2028, 48
      %v2959 = vpop.permute.xlu0 %2958
      %2960 = vrot.lane.b32.xlu0 %v2029, 48
      %v2961 = vpop.permute.xlu0 %2960
      %2962 = vrot.lane.b32.xlu0 %v2030, 48
      %v2963 = vpop.permute.xlu0 %2962
      %2964 = vrot.lane.b32.xlu0 %v2031, 48
      %v2965 = vpop.permute.xlu0 %2964
      %2966 = vrot.lane.b32.xlu0 %v2032, 48
      %v2967 = vpop.permute.xlu0 %2966
      %2968 = vrot.lane.b32.xlu0 %v2033, 48
      %v2969 = vpop.permute.xlu0 %2968
      %2970 = vrot.lane.b32.xlu0 %v2034, 48
      %v2971 = vpop.permute.xlu0 %2970
      %2972 = vrot.lane.b32.xlu0 %v2035, 48
      %v2973 = vpop.permute.xlu0 %2972
      %2974 = vrot.lane.b32.xlu0 %v2036, 48
      %v2975 = vpop.permute.xlu0 %2974
      %2976 = vrot.lane.b32.xlu0 %v2037, 48
      %v2977 = vpop.permute.xlu0 %2976
      %2978 = vrot.lane.b32.xlu0 %v2038, 48
      %v2979 = vpop.permute.xlu0 %2978
      %2980 = vrot.lane.b32.xlu0 %v2039, 48
      %v2981 = vpop.permute.xlu0 %2980
      %2982 = vrot.lane.b32.xlu0 %v2040, 48
      %v2983 = vpop.permute.xlu0 %2982
      %2984 = vrot.lane.b32.xlu0 %v2041, 48
      %v2985 = vpop.permute.xlu0 %2984
      %2986 = vrot.lane.b32.xlu0 %v2042, 48
      %v2987 = vpop.permute.xlu0 %2986
      %2988 = vrot.lane.b32.xlu0 %v2043, 48
      %v2989 = vpop.permute.xlu0 %2988
      %2990 = vrot.lane.b32.xlu0 %v2044, 48
      %v2991 = vpop.permute.xlu0 %2990
      %2992 = vrot.lane.b32.xlu0 %v2045, 48
      %v2993 = vpop.permute.xlu0 %2992
      %2994 = vrot.lane.b32.xlu0 %v2046, 48
      %v2995 = vpop.permute.xlu0 %2994
      %2996 = vrot.lane.b32.xlu0 %v2047, 48
      %v2997 = vpop.permute.xlu0 %2996
      %2998 = vrot.lane.b32.xlu0 %v2048, 48
      %v2999 = vpop.permute.xlu0 %2998
      %3000 = vrot.lane.b32.xlu0 %v2049, 48
      %v3001 = vpop.permute.xlu0 %3000
      %3002 = vrot.lane.b32.xlu0 %v2050, 48
      %v3003 = vpop.permute.xlu0 %3002
      %3004 = vrot.lane.b32.xlu0 %v2051, 48
      %v3005 = vpop.permute.xlu0 %3004
      %3006 = vrot.lane.b32.xlu0 %v2052, 48
      %v3007 = vpop.permute.xlu0 %3006
      %3008 = vrot.lane.b32.xlu0 %v2053, 48
      %v3009 = vpop.permute.xlu0 %3008
      %3010 = vrot.lane.b32.xlu0 %v2054, 48
      %v3011 = vpop.permute.xlu0 %3010
      %3012 = vrot.lane.b32.xlu0 %v2055, 48
      %v3013 = vpop.permute.xlu0 %3012
      %3014 = vrot.lane.b32.xlu0 %v2056, 48
      %v3015 = vpop.permute.xlu0 %3014
      %3016 = vrot.lane.b32.xlu0 %v2057, 48
      %v3017 = vpop.permute.xlu0 %3016
      %vm3050 = vcmask 48128
      %v3051 = vsel %vm3050, %v808, %v2091
      %v3052 = vsel %vm3050, %v809, %v2093
      %v3053 = vsel %vm3050, %v810, %v2095
      %v3054 = vsel %vm3050, %v811, %v2097
      %v3055 = vsel %vm3050, %v812, %v2099
      %v3056 = vsel %vm3050, %v813, %v2101
      %v3057 = vsel %vm3050, %v814, %v2103
      %v3058 = vsel %vm3050, %v815, %v2105
      %v3059 = vsel %vm3050, %v816, %v2107
      %v3060 = vsel %vm3050, %v817, %v2109
      %v3061 = vsel %vm3050, %v818, %v2111
      %v3062 = vsel %vm3050, %v819, %v2113
      %v3063 = vsel %vm3050, %v820, %v2115
      %v3064 = vsel %vm3050, %v821, %v2117
      %v3065 = vsel %vm3050, %v822, %v2119
      %v3066 = vsel %vm3050, %v823, %v2121
      %v3067 = vsel %vm3050, %v824, %v2123
      %v3068 = vsel %vm3050, %v825, %v2125
      %v3069 = vsel %vm3050, %v826, %v2127
      %v3070 = vsel %vm3050, %v827, %v2129
      %v3071 = vsel %vm3050, %v828, %v2131
      %v3072 = vsel %vm3050, %v829, %v2133
      %v3073 = vsel %vm3050, %v830, %v2135
      %v3074 = vsel %vm3050, %v831, %v2137
      %v3075 = vsel %vm3050, %v832, %v2139
      %v3076 = vsel %vm3050, %v833, %v2141
      %v3077 = vsel %vm3050, %v834, %v2143
      %v3078 = vsel %vm3050, %v835, %v2145
      %v3079 = vsel %vm3050, %v836, %v2147
      %v3080 = vsel %vm3050, %v837, %v2149
      %v3081 = vsel %vm3050, %v838, %v2151
      %v3082 = vsel %vm3050, %v839, %v2153
      %vm3083 = vcmask 97280
      %v3084 = vsel %vm3083, %v3051, %v2219
      %v3085 = vsel %vm3083, %v3052, %v2221
      %v3086 = vsel %vm3083, %v3053, %v2223
      %v3087 = vsel %vm3083, %v3054, %v2225
      %v3088 = vsel %vm3083, %v3055, %v2227
      %v3089 = vsel %vm3083, %v3056, %v2229
      %v3090 = vsel %vm3083, %v3057, %v2231
      %v3091 = vsel %vm3083, %v3058, %v2233
      %v3092 = vsel %vm3083, %v3059, %v2235
      %v3093 = vsel %vm3083, %v3060, %v2237
      %v3094 = vsel %vm3083, %v3061, %v2239
      %v3095 = vsel %vm3083, %v3062, %v2241
      %v3096 = vsel %vm3083, %v3063, %v2243
      %v3097 = vsel %vm3083, %v3064, %v2245
      %v3098 = vsel %vm3083, %v3065, %v2247
      %v3099 = vsel %vm3083, %v3066, %v2249
      %v3100 = vsel %vm3083, %v3067, %v2251
      %v3101 = vsel %vm3083, %v3068, %v2253
      %v3102 = vsel %vm3083, %v3069, %v2255
      %v3103 = vsel %vm3083, %v3070, %v2257
      %v3104 = vsel %vm3083, %v3071, %v2259
      %v3105 = vsel %vm3083, %v3072, %v2261
      %v3106 = vsel %vm3083, %v3073, %v2263
      %v3107 = vsel %vm3083, %v3074, %v2265
      %v3108 = vsel %vm3083, %v3075, %v2267
      %v3109 = vsel %vm3083, %v3076, %v2269
      %v3110 = vsel %vm3083, %v3077, %v2271
      %v3111 = vsel %vm3083, %v3078, %v2273
      %v3112 = vsel %vm3083, %v3079, %v2275
      %v3113 = vsel %vm3083, %v3080, %v2277
      %v3114 = vsel %vm3083, %v3081, %v2279
      %v3115 = vsel %vm3083, %v3082, %v2281
      %vm3116 = vcmask 146432
      %v3117 = vsel %vm3116, %v3084, %v2347
      %v3118 = vsel %vm3116, %v3085, %v2349
      %v3119 = vsel %vm3116, %v3086, %v2351
      %v3120 = vsel %vm3116, %v3087, %v2353
      %v3121 = vsel %vm3116, %v3088, %v2355
      %v3122 = vsel %vm3116, %v3089, %v2357
      %v3123 = vsel %vm3116, %v3090, %v2359
      %v3124 = vsel %vm3116, %v3091, %v2361
      %v3125 = vsel %vm3116, %v3092, %v2363
      %v3126 = vsel %vm3116, %v3093, %v2365
      %v3127 = vsel %vm3116, %v3094, %v2367
      %v3128 = vsel %vm3116, %v3095, %v2369
      %v3129 = vsel %vm3116, %v3096, %v2371
      %v3130 = vsel %vm3116, %v3097, %v2373
      %v3131 = vsel %vm3116, %v3098, %v2375
      %v3132 = vsel %vm3116, %v3099, %v2377
      %v3133 = vsel %vm3116, %v3100, %v2379
      %v3134 = vsel %vm3116, %v3101, %v2381
      %v3135 = vsel %vm3116, %v3102, %v2383
      %v3136 = vsel %vm3116, %v3103, %v2385
      %v3137 = vsel %vm3116, %v3104, %v2387
      %v3138 = vsel %vm3116, %v3105, %v2389
      %v3139 = vsel %vm3116, %v3106, %v2391
      %v3140 = vsel %vm3116, %v3107, %v2393
      %v3141 = vsel %vm3116, %v3108, %v2395
      %v3142 = vsel %vm3116, %v3109, %v2397
      %v3143 = vsel %vm3116, %v3110, %v2399
      %v3144 = vsel %vm3116, %v3111, %v2401
      %v3145 = vsel %vm3116, %v3112, %v2403
      %v3146 = vsel %vm3116, %v3113, %v2405
      %v3147 = vsel %vm3116, %v3114, %v2407
      %v3148 = vsel %vm3116, %v3115, %v2409
      %vm3149 = vcmask 195584
      %v3150 = vsel %vm3149, %v3117, %v2443
      %v3151 = vsel %vm3149, %v3118, %v2445
      %v3152 = vsel %vm3149, %v3119, %v2447
      %v3153 = vsel %vm3149, %v3120, %v2449
      %v3154 = vsel %vm3149, %v3121, %v2451
      %v3155 = vsel %vm3149, %v3122, %v2453
      %v3156 = vsel %vm3149, %v3123, %v2455
      %v3157 = vsel %vm3149, %v3124, %v2457
      %v3158 = vsel %vm3149, %v3125, %v2459
      %v3159 = vsel %vm3149, %v3126, %v2461
      %v3160 = vsel %vm3149, %v3127, %v2463
      %v3161 = vsel %vm3149, %v3128, %v2465
      %v3162 = vsel %vm3149, %v3129, %v2467
      %v3163 = vsel %vm3149, %v3130, %v2469
      %v3164 = vsel %vm3149, %v3131, %v2471
      %v3165 = vsel %vm3149, %v3132, %v2473
      %v3166 = vsel %vm3149, %v3133, %v2475
      %v3167 = vsel %vm3149, %v3134, %v2477
      %v3168 = vsel %vm3149, %v3135, %v2479
      %v3169 = vsel %vm3149, %v3136, %v2481
      %v3170 = vsel %vm3149, %v3137, %v2483
      %v3171 = vsel %vm3149, %v3138, %v2485
      %v3172 = vsel %vm3149, %v3139, %v2487
      %v3173 = vsel %vm3149, %v3140, %v2489
      %v3174 = vsel %vm3149, %v3141, %v2491
      %v3175 = vsel %vm3149, %v3142, %v2493
      %v3176 = vsel %vm3149, %v3143, %v2495
      %v3177 = vsel %vm3149, %v3144, %v2497
      %v3178 = vsel %vm3149, %v3145, %v2499
      %v3179 = vsel %vm3149, %v3146, %v2501
      %v3180 = vsel %vm3149, %v3147, %v2503
      %v3181 = vsel %vm3149, %v3148, %v2505
      %vm3182 = vcmask 244736
      %v3183 = vsel %vm3182, %v3150, %v2571
      %v3184 = vsel %vm3182, %v3151, %v2573
      %v3185 = vsel %vm3182, %v3152, %v2575
      %v3186 = vsel %vm3182, %v3153, %v2577
      %v3187 = vsel %vm3182, %v3154, %v2579
      %v3188 = vsel %vm3182, %v3155, %v2581
      %v3189 = vsel %vm3182, %v3156, %v2583
      %v3190 = vsel %vm3182, %v3157, %v2585
      %v3191 = vsel %vm3182, %v3158, %v2587
      %v3192 = vsel %vm3182, %v3159, %v2589
      %v3193 = vsel %vm3182, %v3160, %v2591
      %v3194 = vsel %vm3182, %v3161, %v2593
      %v3195 = vsel %vm3182, %v3162, %v2595
      %v3196 = vsel %vm3182, %v3163, %v2597
      %v3197 = vsel %vm3182, %v3164, %v2599
      %v3198 = vsel %vm3182, %v3165, %v2601
      %v3199 = vsel %vm3182, %v3166, %v2603
      %v3200 = vsel %vm3182, %v3167, %v2605
      %v3201 = vsel %vm3182, %v3168, %v2607
      %v3202 = vsel %vm3182, %v3169, %v2609
      %v3203 = vsel %vm3182, %v3170, %v2611
      %v3204 = vsel %vm3182, %v3171, %v2613
      %v3205 = vsel %vm3182, %v3172, %v2615
      %v3206 = vsel %vm3182, %v3173, %v2617
      %v3207 = vsel %vm3182, %v3174, %v2619
      %v3208 = vsel %vm3182, %v3175, %v2621
      %v3209 = vsel %vm3182, %v3176, %v2623
      %v3210 = vsel %vm3182, %v3177, %v2625
      %v3211 = vsel %vm3182, %v3178, %v2627
      %v3212 = vsel %vm3182, %v3179, %v2629
      %v3213 = vsel %vm3182, %v3180, %v2631
      %v3214 = vsel %vm3182, %v3181, %v2633
      %vm3215 = vcmask 293888
      %v3216 = vsel %vm3215, %v3183, %v2699
      %v3217 = vsel %vm3215, %v3184, %v2701
      %v3218 = vsel %vm3215, %v3185, %v2703
      %v3219 = vsel %vm3215, %v3186, %v2705
      %v3220 = vsel %vm3215, %v3187, %v2707
      %v3221 = vsel %vm3215, %v3188, %v2709
      %v3222 = vsel %vm3215, %v3189, %v2711
      %v3223 = vsel %vm3215, %v3190, %v2713
      %v3224 = vsel %vm3215, %v3191, %v2715
      %v3225 = vsel %vm3215, %v3192, %v2717
      %v3226 = vsel %vm3215, %v3193, %v2719
      %v3227 = vsel %vm3215, %v3194, %v2721
      %v3228 = vsel %vm3215, %v3195, %v2723
      %v3229 = vsel %vm3215, %v3196, %v2725
      %v3230 = vsel %vm3215, %v3197, %v2727
      %v3231 = vsel %vm3215, %v3198, %v2729
      %v3232 = vsel %vm3215, %v3199, %v2731
      %v3233 = vsel %vm3215, %v3200, %v2733
      %v3234 = vsel %vm3215, %v3201, %v2735
      %v3235 = vsel %vm3215, %v3202, %v2737
      %v3236 = vsel %vm3215, %v3203, %v2739
      %v3237 = vsel %vm3215, %v3204, %v2741
      %v3238 = vsel %vm3215, %v3205, %v2743
      %v3239 = vsel %vm3215, %v3206, %v2745
      %v3240 = vsel %vm3215, %v3207, %v2747
      %v3241 = vsel %vm3215, %v3208, %v2749
      %v3242 = vsel %vm3215, %v3209, %v2751
      %v3243 = vsel %vm3215, %v3210, %v2753
      %v3244 = vsel %vm3215, %v3211, %v2755
      %v3245 = vsel %vm3215, %v3212, %v2757
      %v3246 = vsel %vm3215, %v3213, %v2759
      %v3247 = vsel %vm3215, %v3214, %v2761
      %vm3248 = vcmask 343040
      %v3249 = vsel %vm3248, %v3216, %v2827
      %v3250 = vsel %vm3248, %v3217, %v2829
      %v3251 = vsel %vm3248, %v3218, %v2831
      %v3252 = vsel %vm3248, %v3219, %v2833
      %v3253 = vsel %vm3248, %v3220, %v2835
      %v3254 = vsel %vm3248, %v3221, %v2837
      %v3255 = vsel %vm3248, %v3222, %v2839
      %v3256 = vsel %vm3248, %v3223, %v2841
      %v3257 = vsel %vm3248, %v3224, %v2843
      %v3258 = vsel %vm3248, %v3225, %v2845
      %v3259 = vsel %vm3248, %v3226, %v2847
      %v3260 = vsel %vm3248, %v3227, %v2849
      %v3261 = vsel %vm3248, %v3228, %v2851
      %v3262 = vsel %vm3248, %v3229, %v2853
      %v3263 = vsel %vm3248, %v3230, %v2855
      %v3264 = vsel %vm3248, %v3231, %v2857
      %v3265 = vsel %vm3248, %v3232, %v2859
      %v3266 = vsel %vm3248, %v3233, %v2861
      %v3267 = vsel %vm3248, %v3234, %v2863
      %v3268 = vsel %vm3248, %v3235, %v2865
      %v3269 = vsel %vm3248, %v3236, %v2867
      %v3270 = vsel %vm3248, %v3237, %v2869
      %v3271 = vsel %vm3248, %v3238, %v2871
      %v3272 = vsel %vm3248, %v3239, %v2873
      %v3273 = vsel %vm3248, %v3240, %v2875
      %v3274 = vsel %vm3248, %v3241, %v2877
      %v3275 = vsel %vm3248, %v3242, %v2879
      %v3276 = vsel %vm3248, %v3243, %v2881
      %v3277 = vsel %vm3248, %v3244, %v2883
      %v3278 = vsel %vm3248, %v3245, %v2885
      %v3279 = vsel %vm3248, %v3246, %v2887
      %v3280 = vsel %vm3248, %v3247, %v2889
      %vm3281 = vcmask 392192
      %v3282 = vsel %vm3281, %v3249, %v2955
      %v3283 = vsel %vm3281, %v3250, %v2957
      %v3284 = vsel %vm3281, %v3251, %v2959
      %v3285 = vsel %vm3281, %v3252, %v2961
      %v3286 = vsel %vm3281, %v3253, %v2963
      %v3287 = vsel %vm3281, %v3254, %v2965
      %v3288 = vsel %vm3281, %v3255, %v2967
      %v3289 = vsel %vm3281, %v3256, %v2969
      %v3290 = vsel %vm3281, %v3257, %v2971
      %v3291 = vsel %vm3281, %v3258, %v2973
      %v3292 = vsel %vm3281, %v3259, %v2975
      %v3293 = vsel %vm3281, %v3260, %v2977
      %v3294 = vsel %vm3281, %v3261, %v2979
      %v3295 = vsel %vm3281, %v3262, %v2981
      %v3296 = vsel %vm3281, %v3263, %v2983
      %v3297 = vsel %vm3281, %v3264, %v2985
      %v3298 = vsel %vm3281, %v3265, %v2987
      %v3299 = vsel %vm3281, %v3266, %v2989
      %v3300 = vsel %vm3281, %v3267, %v2991
      %v3301 = vsel %vm3281, %v3268, %v2993
      %v3302 = vsel %vm3281, %v3269, %v2995
      %v3303 = vsel %vm3281, %v3270, %v2997
      %v3304 = vsel %vm3281, %v3271, %v2999
      %v3305 = vsel %vm3281, %v3272, %v3001
      %v3306 = vsel %vm3281, %v3273, %v3003
      %v3307 = vsel %vm3281, %v3274, %v3005
      %v3308 = vsel %vm3281, %v3275, %v3007
      %v3309 = vsel %vm3281, %v3276, %v3009
      %v3310 = vsel %vm3281, %v3277, %v3011
      %v3311 = vsel %vm3281, %v3278, %v3013
      %v3312 = vsel %vm3281, %v3279, %v3015
      %v3313 = vsel %vm3281, %v3280, %v3017
      %v3314 = vpack.c.bf16 %v3283, %v3282
      %v3315 = vpack.c.bf16 %v3285, %v3284
      %v3316 = vpack.c.bf16 %v3287, %v3286
      %v3317 = vpack.c.bf16 %v3289, %v3288
      %v3318 = vpack.c.bf16 %v3291, %v3290
      %v3319 = vpack.c.bf16 %v3293, %v3292
      %v3320 = vpack.c.bf16 %v3295, %v3294
      %v3321 = vpack.c.bf16 %v3297, %v3296
      %v3322 = vpack.c.bf16 %v3299, %v3298
      %v3323 = vpack.c.bf16 %v3301, %v3300
      %v3324 = vpack.c.bf16 %v3303, %v3302
      %v3325 = vpack.c.bf16 %v3305, %v3304
      %v3326 = vpack.c.bf16 %v3307, %v3306
      %v3327 = vpack.c.bf16 %v3309, %v3308
      %v3328 = vpack.c.bf16 %v3311, %v3310
      %v3329 = vpack.c.bf16 %v3313, %v3312
      %v3330 = vld [vmem:[%s4] sm:$0xf]
      %v3331 = vld [vmem:[%s4 + $0x4] sm:$0xf]
      %v3332 = vld [vmem:[%s4 + $0x8] sm:$0xf]
      %v3333 = vld [vmem:[%s4 + $0xc] sm:$0xf]
      %v3334 = vld [vmem:[%s4 + $0x10] sm:$0xf]
      %v3335 = vld [vmem:[%s4 + $0x14] sm:$0xf]
      %v3336 = vld [vmem:[%s4 + $0x18] sm:$0x7]
      %v3344 = vunpack.c.l.b16 %v3330
      %v3345 = vunpack.c.l.b16 %v3331
      %v3346 = vunpack.c.l.b16 %v3332
      %v3347 = vunpack.c.l.b16 %v3333
      %v3348 = vunpack.c.l.b16 %v3334
      %v3349 = vunpack.c.l.b16 %v3335
      %v3350 = vunpack.c.l.b16 %v3336
      %v3351 = vpack.c.b16 %v3345, %v3344
      %v3352 = vpack.c.b16 %v3347, %v3346
      %v3353 = vpack.c.b16 %v3349, %v3348
      %v3354 = vpack.c.b16 %v3350, %v3350
      %vm3358 = vcmask 441344
      %v3360 = vsel %vm3358, %v3314, 0
      %v3363 = vsel %vm3358, %v3315, 0
      %v3366 = vsel %vm3358, %v3316, 0
      %v3369 = vsel %vm3358, %v3317, 0
      %v3372 = vsel %vm3358, %v3318, 0
      %v3375 = vsel %vm3358, %v3319, 0
      %v3378 = vsel %vm3358, %v3320, 0
      %v3381 = vsel %vm3358, %v3321, 0
      %v3384 = vsel %vm3358, %v3322, 0
      %v3387 = vsel %vm3358, %v3323, 0
      %v3390 = vsel %vm3358, %v3324, 0
      %v3393 = vsel %vm3358, %v3325, 0
      %v3396 = vsel %vm3358, %v3326, 0
      %v3399 = vsel %vm3358, %v3327, 0
      %v3402 = vsel %vm3358, %v3328, 0
      %v3405 = vsel %vm3358, %v3329, 0
      %vm3407 = vcmask 1042432
      %v3409 = vsel %vm3407, %v3354, 0
      %3411 = vmatpush.bf16.msra.mxu0 0
      %3412 = vmatpush.bf16.msra.mxu0 0
      %3413 = vmatpush.bf16.msra.mxu0 0
      %3414 = vmatpush.bf16.msra.mxu0 0
      %3415 = vmatpush.bf16.msra.mxu0 %v3409
      %3416 = vmatpush.bf16.msra.mxu0 %v3353
      %3417 = vmatpush.bf16.msra.mxu0 %v3352
      %3418 = vmatpush.bf16.msra.mxu0 %v3351
      %3419 = vmatmul.bf16.gmra.mxu0 %v3360
      %v3420 = vpop.f32.mrf.mxu0
      %v3421 = vadd.f32 0.0, %v3420
      %v3422 = vpop.f32.mrf.mxu0
      %v3423 = vadd.f32 0.0, %v3422
      %3424 = vmatmul.bf16.gmra.mxu0 %v3363
      %v3425 = vpop.f32.mrf.mxu0
      %v3426 = vadd.f32 0.0, %v3425
      %v3427 = vpop.f32.mrf.mxu0
      %v3428 = vadd.f32 0.0, %v3427
      %3429 = vmatmul.bf16.gmra.mxu0 %v3366
      %v3430 = vpop.f32.mrf.mxu0
      %v3431 = vadd.f32 0.0, %v3430
      %v3432 = vpop.f32.mrf.mxu0
      %v3433 = vadd.f32 0.0, %v3432
      %3434 = vmatmul.bf16.gmra.mxu0 %v3369
      %v3435 = vpop.f32.mrf.mxu0
      %v3436 = vadd.f32 0.0, %v3435
      %v3437 = vpop.f32.mrf.mxu0
      %v3438 = vadd.f32 0.0, %v3437
      %3439 = vmatmul.bf16.gmra.mxu0 %v3372
      %v3440 = vpop.f32.mrf.mxu0
      %v3441 = vadd.f32 0.0, %v3440
      %v3442 = vpop.f32.mrf.mxu0
      %v3443 = vadd.f32 0.0, %v3442
      %3444 = vmatmul.bf16.gmra.mxu0 %v3375
      %v3445 = vpop.f32.mrf.mxu0
      %v3446 = vadd.f32 0.0, %v3445
      %v3447 = vpop.f32.mrf.mxu0
      %v3448 = vadd.f32 0.0, %v3447
      %3449 = vmatmul.bf16.gmra.mxu0 %v3378
      %v3450 = vpop.f32.mrf.mxu0
      %v3451 = vadd.f32 0.0, %v3450
      %v3452 = vpop.f32.mrf.mxu0
      %v3453 = vadd.f32 0.0, %v3452
      %3454 = vmatmul.bf16.gmra.mxu0 %v3381
      %v3455 = vpop.f32.mrf.mxu0
      %v3456 = vadd.f32 0.0, %v3455
      %v3457 = vpop.f32.mrf.mxu0
      %v3458 = vadd.f32 0.0, %v3457
      %3459 = vmatmul.bf16.gmra.mxu0 %v3384
      %v3460 = vpop.f32.mrf.mxu0
      %v3461 = vadd.f32 0.0, %v3460
      %v3462 = vpop.f32.mrf.mxu0
      %v3463 = vadd.f32 0.0, %v3462
      %3464 = vmatmul.bf16.gmra.mxu0 %v3387
      %v3465 = vpop.f32.mrf.mxu0
      %v3466 = vadd.f32 0.0, %v3465
      %v3467 = vpop.f32.mrf.mxu0
      %v3468 = vadd.f32 0.0, %v3467
      %3469 = vmatmul.bf16.gmra.mxu0 %v3390
      %v3470 = vpop.f32.mrf.mxu0
      %v3471 = vadd.f32 0.0, %v3470
      %v3472 = vpop.f32.mrf.mxu0
      %v3473 = vadd.f32 0.0, %v3472
      %3474 = vmatmul.bf16.gmra.mxu0 %v3393
      %v3475 = vpop.f32.mrf.mxu0
      %v3476 = vadd.f32 0.0, %v3475
      %v3477 = vpop.f32.mrf.mxu0
      %v3478 = vadd.f32 0.0, %v3477
      %3479 = vmatmul.bf16.gmra.mxu0 %v3396
      %v3480 = vpop.f32.mrf.mxu0
      %v3481 = vadd.f32 0.0, %v3480
      %v3482 = vpop.f32.mrf.mxu0
      %v3483 = vadd.f32 0.0, %v3482
      %3484 = vmatmul.bf16.gmra.mxu0 %v3399
      %v3485 = vpop.f32.mrf.mxu0
      %v3486 = vadd.f32 0.0, %v3485
      %v3487 = vpop.f32.mrf.mxu0
      %v3488 = vadd.f32 0.0, %v3487
      %3489 = vmatmul.bf16.gmra.mxu0 %v3402
      %v3490 = vpop.f32.mrf.mxu0
      %v3491 = vadd.f32 0.0, %v3490
      %v3492 = vpop.f32.mrf.mxu0
      %v3493 = vadd.f32 0.0, %v3492
      %3494 = vmatmul.bf16.gmra.mxu0 %v3405
      %v3495 = vpop.f32.mrf.mxu0
      %v3496 = vadd.f32 0.0, %v3495
      %v3497 = vpop.f32.mrf.mxu0
      %v3498 = vadd.f32 0.0, %v3497
      %3499 = vdwg.mxu0
      %v3500 = vsel %vm3050, %v3421, 0.0
      %v3501 = vsel %vm3050, %v3423, 0.0
      %v3502 = vadd.f32 %v3500, %v3501
      %v3503 = vsel %vm3050, %v3426, 0.0
      %v3504 = vadd.f32 %v3502, %v3503
      %v3505 = vsel %vm3050, %v3428, 0.0
      %v3506 = vadd.f32 %v3504, %v3505
      %v3507 = vsel %vm3050, %v3431, 0.0
      %v3508 = vadd.f32 %v3506, %v3507
      %v3509 = vsel %vm3050, %v3433, 0.0
      %v3510 = vadd.f32 %v3508, %v3509
      %v3511 = vsel %vm3050, %v3436, 0.0
      %v3512 = vadd.f32 %v3510, %v3511
      %v3513 = vsel %vm3050, %v3438, 0.0
      %v3514 = vadd.f32 %v3512, %v3513
      %v3515 = vsel %vm3050, %v3441, 0.0
      %v3516 = vadd.f32 %v3514, %v3515
      %v3517 = vsel %vm3050, %v3443, 0.0
      %v3518 = vadd.f32 %v3516, %v3517
      %v3519 = vsel %vm3050, %v3446, 0.0
      %v3520 = vadd.f32 %v3518, %v3519
      %v3521 = vsel %vm3050, %v3448, 0.0
      %v3522 = vadd.f32 %v3520, %v3521
      %v3523 = vsel %vm3050, %v3451, 0.0
      %v3524 = vadd.f32 %v3522, %v3523
      %v3525 = vsel %vm3050, %v3453, 0.0
      %v3526 = vadd.f32 %v3524, %v3525
      %v3527 = vsel %vm3050, %v3456, 0.0
      %v3528 = vadd.f32 %v3526, %v3527
      %v3529 = vsel %vm3050, %v3458, 0.0
      %v3530 = vadd.f32 %v3528, %v3529
      %v3531 = vsel %vm3050, %v3461, 0.0
      %v3532 = vadd.f32 %v3530, %v3531
      %v3533 = vsel %vm3050, %v3463, 0.0
      %v3534 = vadd.f32 %v3532, %v3533
      %v3535 = vsel %vm3050, %v3466, 0.0
      %v3536 = vadd.f32 %v3534, %v3535
      %v3537 = vsel %vm3050, %v3468, 0.0
      %v3538 = vadd.f32 %v3536, %v3537
      %v3539 = vsel %vm3050, %v3471, 0.0
      %v3540 = vadd.f32 %v3538, %v3539
      %v3541 = vsel %vm3050, %v3473, 0.0
      %v3542 = vadd.f32 %v3540, %v3541
      %v3543 = vsel %vm3050, %v3476, 0.0
      %v3544 = vadd.f32 %v3542, %v3543
      %v3545 = vsel %vm3050, %v3478, 0.0
      %v3546 = vadd.f32 %v3544, %v3545
      %v3547 = vsel %vm3050, %v3481, 0.0
      %v3548 = vadd.f32 %v3546, %v3547
      %v3549 = vsel %vm3050, %v3483, 0.0
      %v3550 = vadd.f32 %v3548, %v3549
      %v3551 = vsel %vm3050, %v3486, 0.0
      %v3552 = vadd.f32 %v3550, %v3551
      %v3553 = vsel %vm3050, %v3488, 0.0
      %v3554 = vadd.f32 %v3552, %v3553
      %v3555 = vsel %vm3050, %v3491, 0.0
      %v3556 = vadd.f32 %v3554, %v3555
      %v3557 = vsel %vm3050, %v3493, 0.0
      %v3558 = vadd.f32 %v3556, %v3557
      %v3559 = vsel %vm3050, %v3496, 0.0
      %v3560 = vadd.f32 %v3558, %v3559
      %v3561 = vsel %vm3050, %v3498, 0.0
      %v3562 = vadd.f32 %v3560, %v3561
      %v3563 = vrot.slane %v3562, 4
      %v3564 = vadd.f32 %v3562, %v3563
      %v3565 = vrot.slane %v3564, 2
      %v3566 = vadd.f32 %v3564, %v3565
      %v3567 = vrot.slane %v3566, 1
      %v3568 = vadd.f32 %v3566, %v3567
      %v3569 = vmul.f32 %v3421, %v3421
      %v3570 = vmul.f32 %v3423, %v3423
      %v3571 = vmul.f32 %v3426, %v3426
      %v3572 = vmul.f32 %v3428, %v3428
      %v3573 = vmul.f32 %v3431, %v3431
      %v3574 = vmul.f32 %v3433, %v3433
      %v3575 = vmul.f32 %v3436, %v3436
      %v3576 = vmul.f32 %v3438, %v3438
      %v3577 = vmul.f32 %v3441, %v3441
      %v3578 = vmul.f32 %v3443, %v3443
      %v3579 = vmul.f32 %v3446, %v3446
      %v3580 = vmul.f32 %v3448, %v3448
      %v3581 = vmul.f32 %v3451, %v3451
      %v3582 = vmul.f32 %v3453, %v3453
      %v3583 = vmul.f32 %v3456, %v3456
      %v3584 = vmul.f32 %v3458, %v3458
      %v3585 = vmul.f32 %v3461, %v3461
      %v3586 = vmul.f32 %v3463, %v3463
      %v3587 = vmul.f32 %v3466, %v3466
      %v3588 = vmul.f32 %v3468, %v3468
      %v3589 = vmul.f32 %v3471, %v3471
      %v3590 = vmul.f32 %v3473, %v3473
      %v3591 = vmul.f32 %v3476, %v3476
      %v3592 = vmul.f32 %v3478, %v3478
      %v3593 = vmul.f32 %v3481, %v3481
      %v3594 = vmul.f32 %v3483, %v3483
      %v3595 = vmul.f32 %v3486, %v3486
      %v3596 = vmul.f32 %v3488, %v3488
      %v3597 = vmul.f32 %v3491, %v3491
      %v3598 = vmul.f32 %v3493, %v3493
      %v3599 = vmul.f32 %v3496, %v3496
      %v3600 = vmul.f32 %v3498, %v3498
      %v3601 = vsel %vm3050, %v3569, 0.0
      %v3602 = vsel %vm3050, %v3570, 0.0
      %v3603 = vadd.f32 %v3601, %v3602
      %v3604 = vsel %vm3050, %v3571, 0.0
      %v3605 = vadd.f32 %v3603, %v3604
      %v3606 = vsel %vm3050, %v3572, 0.0
      %v3607 = vadd.f32 %v3605, %v3606
      %v3608 = vsel %vm3050, %v3573, 0.0
      %v3609 = vadd.f32 %v3607, %v3608
      %v3610 = vsel %vm3050, %v3574, 0.0
      %v3611 = vadd.f32 %v3609, %v3610
      %v3612 = vsel %vm3050, %v3575, 0.0
      %v3613 = vadd.f32 %v3611, %v3612
      %v3614 = vsel %vm3050, %v3576, 0.0
      %v3615 = vadd.f32 %v3613, %v3614
      %v3616 = vsel %vm3050, %v3577, 0.0
      %v3617 = vadd.f32 %v3615, %v3616
      %v3618 = vsel %vm3050, %v3578, 0.0
      %v3619 = vadd.f32 %v3617, %v3618
      %v3620 = vsel %vm3050, %v3579, 0.0
      %v3621 = vadd.f32 %v3619, %v3620
      %v3622 = vsel %vm3050, %v3580, 0.0
      %v3623 = vadd.f32 %v3621, %v3622
      %v3624 = vsel %vm3050, %v3581, 0.0
      %v3625 = vadd.f32 %v3623, %v3624
      %v3626 = vsel %vm3050, %v3582, 0.0
      %v3627 = vadd.f32 %v3625, %v3626
      %v3628 = vsel %vm3050, %v3583, 0.0
      %v3629 = vadd.f32 %v3627, %v3628
      %v3630 = vsel %vm3050, %v3584, 0.0
      %v3631 = vadd.f32 %v3629, %v3630
      %v3632 = vsel %vm3050, %v3585, 0.0
      %v3633 = vadd.f32 %v3631, %v3632
      %v3634 = vsel %vm3050, %v3586, 0.0
      %v3635 = vadd.f32 %v3633, %v3634
      %v3636 = vsel %vm3050, %v3587, 0.0
      %v3637 = vadd.f32 %v3635, %v3636
      %v3638 = vsel %vm3050, %v3588, 0.0
      %v3639 = vadd.f32 %v3637, %v3638
      %v3640 = vsel %vm3050, %v3589, 0.0
      %v3641 = vadd.f32 %v3639, %v3640
      %v3642 = vsel %vm3050, %v3590, 0.0
      %v3643 = vadd.f32 %v3641, %v3642
      %v3644 = vsel %vm3050, %v3591, 0.0
      %v3645 = vadd.f32 %v3643, %v3644
      %v3646 = vsel %vm3050, %v3592, 0.0
      %v3647 = vadd.f32 %v3645, %v3646
      %v3648 = vsel %vm3050, %v3593, 0.0
      %v3649 = vadd.f32 %v3647, %v3648
      %v3650 = vsel %vm3050, %v3594, 0.0
      %v3651 = vadd.f32 %v3649, %v3650
      %v3652 = vsel %vm3050, %v3595, 0.0
      %v3653 = vadd.f32 %v3651, %v3652
      %v3654 = vsel %vm3050, %v3596, 0.0
      %v3655 = vadd.f32 %v3653, %v3654
      %v3656 = vsel %vm3050, %v3597, 0.0
      %v3657 = vadd.f32 %v3655, %v3656
      %v3658 = vsel %vm3050, %v3598, 0.0
      %v3659 = vadd.f32 %v3657, %v3658
      %v3660 = vsel %vm3050, %v3599, 0.0
      %v3661 = vadd.f32 %v3659, %v3660
      %v3662 = vsel %vm3050, %v3600, 0.0
      %v3663 = vadd.f32 %v3661, %v3662
      %v3664 = vrot.slane %v3663, 4
      %v3665 = vadd.f32 %v3663, %v3664
      %v3666 = vrot.slane %v3665, 2
      %v3667 = vadd.f32 %v3665, %v3666
      %v3668 = vrot.slane %v3667, 1
      %v3669 = vadd.f32 %v3667, %v3668
      %v3670 = vrcp.pop 256.0
      %v3671 = vmul.f32 256.0, %v3670
      %v3672 = vsub.f32 1.0, %v3671
      %v3673 = vmul.f32 %v3670, %v3672
      %v3674 = vadd.f32 %v3670, %v3673
      %vm3675 = vweird.f32 %v3670
      %v3676 = vsel %vm3675, %v3670, %v3674
      %v3677 = vmul.f32 %v3568, %v3676
      %vm3678 = vcmask 97328
      %v3679 = vsel %vm3678, %v454, 0.0
      %v3680 = vsel %vm3678, %v455, 0.0
      %v3681 = vadd.f32 %v3679, %v3680
      %v3682 = vsel %vm3678, %v456, 0.0
      %v3683 = vadd.f32 %v3681, %v3682
      %v3684 = vsel %vm3678, %v457, 0.0
      %v3685 = vadd.f32 %v3683, %v3684
      %v3686 = vsel %vm3678, %v458, 0.0
      %v3687 = vadd.f32 %v3685, %v3686
      %v3688 = vsel %vm3678, %v459, 0.0
      %v3689 = vadd.f32 %v3687, %v3688
      %v3690 = vsel %vm3678, %v460, 0.0
      %v3691 = vadd.f32 %v3689, %v3690
      %v3692 = vsel %vm3678, %v461, 0.0
      %v3693 = vadd.f32 %v3691, %v3692
      %v3694 = vsel %vm3678, %v462, 0.0
      %v3695 = vadd.f32 %v3693, %v3694
      %v3696 = vsel %vm3678, %v463, 0.0
      %v3697 = vadd.f32 %v3695, %v3696
      %v3698 = vsel %vm3678, %v464, 0.0
      %v3699 = vadd.f32 %v3697, %v3698
      %v3700 = vsel %vm3678, %v465, 0.0
      %v3701 = vadd.f32 %v3699, %v3700
      %v3702 = vsel %vm3678, %v466, 0.0
      %v3703 = vadd.f32 %v3701, %v3702
      %v3704 = vsel %vm3678, %v467, 0.0
      %v3705 = vadd.f32 %v3703, %v3704
      %v3706 = vsel %vm3678, %v468, 0.0
      %v3707 = vadd.f32 %v3705, %v3706
      %v3708 = vsel %vm3678, %v469, 0.0
      %v3709 = vadd.f32 %v3707, %v3708
      %v3710 = vsel %vm3678, %v470, 0.0
      %v3711 = vadd.f32 %v3709, %v3710
      %v3712 = vsel %vm3678, %v471, 0.0
      %v3713 = vadd.f32 %v3711, %v3712
      %v3714 = vsel %vm3678, %v472, 0.0
      %v3715 = vadd.f32 %v3713, %v3714
      %v3716 = vsel %vm3678, %v473, 0.0
      %v3717 = vadd.f32 %v3715, %v3716
      %v3718 = vsel %vm3678, %v474, 0.0
      %v3719 = vadd.f32 %v3717, %v3718
      %v3720 = vsel %vm3678, %v475, 0.0
      %v3721 = vadd.f32 %v3719, %v3720
      %v3722 = vsel %vm3678, %v476, 0.0
      %v3723 = vadd.f32 %v3721, %v3722
      %v3724 = vsel %vm3678, %v477, 0.0
      %v3725 = vadd.f32 %v3723, %v3724
      %v3726 = vsel %vm3678, %v478, 0.0
      %v3727 = vadd.f32 %v3725, %v3726
      %v3728 = vsel %vm3678, %v479, 0.0
      %v3729 = vadd.f32 %v3727, %v3728
      %v3730 = vsel %vm3678, %v480, 0.0
      %v3731 = vadd.f32 %v3729, %v3730
      %v3732 = vsel %vm3678, %v481, 0.0
      %v3733 = vadd.f32 %v3731, %v3732
      %v3734 = vsel %vm3678, %v482, 0.0
      %v3735 = vadd.f32 %v3733, %v3734
      %v3736 = vsel %vm3678, %v483, 0.0
      %v3737 = vadd.f32 %v3735, %v3736
      %v3738 = vsel %vm3678, %v484, 0.0
      %v3739 = vadd.f32 %v3737, %v3738
      %v3740 = vsel %vm3678, %v485, 0.0
      %v3741 = vadd.f32 %v3739, %v3740
      %v3742 = vrot.slane %v3741, 4
      %v3743 = vadd.f32 %v3741, %v3742
      %v3744 = vrot.slane %v3743, 2
      %v3745 = vadd.f32 %v3743, %v3744
      %v3746 = vrot.slane %v3745, 1
      %v3747 = vadd.f32 %v3745, %v3746
      %v3748 = vmul.f32 %v3747, %v3676
      %v3749 = vsel %vm3050, %v3677, %v3748
      %v3750 = vld [vmem:[%s5] sm:$0xff]
      %v3751 = vld [vmem:[%s5 + $0x8] sm:$0xf]
      %v3753 = vsel %vm3083, %v3749, 0
      %vm3755 = vcmask 1043456
      %v3757 = vsel %vm3755, %v3751, 0
      %3759 = vmatpush.msra.mxu0 0.0
      %3760 = vmatpush.msra.mxu0 0.0
      %3761 = vmatpush.msra.mxu0 0.0
      %3762 = vmatpush.msra.mxu0 0.0
      %3763 = vmatpush.msra.mxu0 0.0
      %3764 = vmatpush.msra.mxu0 0.0
      %3765 = vmatpush.msra.mxu0 0.0
      %3766 = vmatpush.msra.mxu0 0.0
      %3767 = vmatpush.msra.mxu0 0.0
      %3768 = vmatpush.msra.mxu0 0.0
      %3769 = vmatpush.msra.mxu0 0.0
      %3770 = vmatpush.msra.mxu0 0.0
      %3771 = vmatpush.msra.mxu0 0.0
      %3772 = vmatpush.msra.mxu0 0.0
      %3773 = vmatpush.msra.mxu0 %v3757
      %3774 = vmatpush.msra.mxu0 %v3750
      %3775 = vmatmul.f32.gmra.mxu0 %v3753
      %v3776 = vpop.f32.mrf.mxu0
      %v3777 = vadd.f32 0.0, %v3776
      %3778 = vdwg.mxu0
      %v3779 = vmax.f32 %v3777, 0.0
      %v3780 = vld [vmem:[%s6] sm:$0x3]
      %vm3781 = vcmask 15360
      %v3783 = vsel %vm3781, %v3779, 0
      %vm3785 = vcmask 1041408
      %v3787 = vsel %vm3785, %v3780, 0
      %3789 = vmatpush.msra.mxu0 0.0
      %3790 = vmatpush.msra.mxu0 0.0
      %3791 = vmatpush.msra.mxu0 0.0
      %3792 = vmatpush.msra.mxu0 0.0
      %3793 = vmatpush.msra.mxu0 0.0
      %3794 = vmatpush.msra.mxu0 0.0
      %3795 = vmatpush.msra.mxu0 0.0
      %3796 = vmatpush.msra.mxu0 0.0
      %3797 = vmatpush.msra.mxu0 0.0
      %3798 = vmatpush.msra.mxu0 0.0
      %3799 = vmatpush.msra.mxu0 0.0
      %3800 = vmatpush.msra.mxu0 0.0
      %3801 = vmatpush.msra.mxu0 0.0
      %3802 = vmatpush.msra.mxu0 0.0
      %3803 = vmatpush.msra.mxu0 0.0
      %3804 = vmatpush.msra.mxu0 %v3787
      %3805 = vmatmul.f32.gmra.mxu0 %v3783
      %v3806 = vpop.f32.mrf.mxu0
      %v3807 = vadd.f32 0.0, %v3806
      %3808 = vdwg.mxu0
      %v3809 = vxor.u32 %v3807, 2147483648
      %v3810 = vmul.f32 %v3809, 1.442695
      %v3811 = vpow.pop %v3810
      %v3812 = vadd.f32 %v3811, 1.0
      %v3813 = vrcp.pop %v3812
      %v3814 = vmul.f32 %v3812, %v3813
      %v3815 = vsub.f32 1.0, %v3814
      %v3816 = vmul.f32 %v3813, %v3815
      %v3817 = vadd.f32 %v3813, %v3816
      %vm3818 = vweird.f32 %v3812
      %vm3819 = vweird.f32 %v3813
      %vm3820 = vmor %vm3818, %vm3819
      %v3821 = vsel %vm3820, %v3813, %v3817
      %v3822 = vand.u32 2147483647, %v3812
      %vm3823 = vcmp.eq.f32.partialorder %v3822, 8.507059e+37
      %v3824 = vand.u32 %v3812, 2147483648
      %v3825 = vor.u32 1.1754944e-38, %v3824
      %v3826 = vsel %vm3823, %v3825, %v3821
      %v3827 = vmul.f32 1.0, %v3826
      %v3828 = vperm.slane %v3827, 0
      %v3829 = vmul.f32 %v3421, %v3828
      %v3830 = vmul.f32 %v3423, %v3828
      %v3831 = vmul.f32 %v3426, %v3828
      %v3832 = vmul.f32 %v3428, %v3828
      %v3833 = vmul.f32 %v3431, %v3828
      %v3834 = vmul.f32 %v3433, %v3828
      %v3835 = vmul.f32 %v3436, %v3828
      %v3836 = vmul.f32 %v3438, %v3828
      %v3837 = vmul.f32 %v3441, %v3828
      %v3838 = vmul.f32 %v3443, %v3828
      %v3839 = vmul.f32 %v3446, %v3828
      %v3840 = vmul.f32 %v3448, %v3828
      %v3841 = vmul.f32 %v3451, %v3828
      %v3842 = vmul.f32 %v3453, %v3828
      %v3843 = vmul.f32 %v3456, %v3828
      %v3844 = vmul.f32 %v3458, %v3828
      %v3845 = vmul.f32 %v3461, %v3828
      %v3846 = vmul.f32 %v3463, %v3828
      %v3847 = vmul.f32 %v3466, %v3828
      %v3848 = vmul.f32 %v3468, %v3828
      %v3849 = vmul.f32 %v3471, %v3828
      %v3850 = vmul.f32 %v3473, %v3828
      %v3851 = vmul.f32 %v3476, %v3828
      %v3852 = vmul.f32 %v3478, %v3828
      %v3853 = vmul.f32 %v3481, %v3828
      %v3854 = vmul.f32 %v3483, %v3828
      %v3855 = vmul.f32 %v3486, %v3828
      %v3856 = vmul.f32 %v3488, %v3828
      %v3857 = vmul.f32 %v3491, %v3828
      %v3858 = vmul.f32 %v3493, %v3828
      %v3859 = vmul.f32 %v3496, %v3828
      %v3860 = vmul.f32 %v3498, %v3828
      %3861 = vrot.lane.b32.xlu0 %v454, 122
      %v3862 = vpop.permute.xlu0 %3861
      %3863 = vrot.lane.b32.xlu0 %v455, 122
      %v3864 = vpop.permute.xlu0 %3863
      %3865 = vrot.lane.b32.xlu0 %v456, 122
      %v3866 = vpop.permute.xlu0 %3865
      %3867 = vrot.lane.b32.xlu0 %v457, 122
      %v3868 = vpop.permute.xlu0 %3867
      %3869 = vrot.lane.b32.xlu0 %v458, 122
      %v3870 = vpop.permute.xlu0 %3869
      %3871 = vrot.lane.b32.xlu0 %v459, 122
      %v3872 = vpop.permute.xlu0 %3871
      %3873 = vrot.lane.b32.xlu0 %v460, 122
      %v3874 = vpop.permute.xlu0 %3873
      %3875 = vrot.lane.b32.xlu0 %v461, 122
      %v3876 = vpop.permute.xlu0 %3875
      %3877 = vrot.lane.b32.xlu0 %v462, 122
      %v3878 = vpop.permute.xlu0 %3877
      %3879 = vrot.lane.b32.xlu0 %v463, 122
      %v3880 = vpop.permute.xlu0 %3879
      %3881 = vrot.lane.b32.xlu0 %v464, 122
      %v3882 = vpop.permute.xlu0 %3881
      %3883 = vrot.lane.b32.xlu0 %v465, 122
      %v3884 = vpop.permute.xlu0 %3883
      %3885 = vrot.lane.b32.xlu0 %v466, 122
      %v3886 = vpop.permute.xlu0 %3885
      %3887 = vrot.lane.b32.xlu0 %v467, 122
      %v3888 = vpop.permute.xlu0 %3887
      %3889 = vrot.lane.b32.xlu0 %v468, 122
      %v3890 = vpop.permute.xlu0 %3889
      %3891 = vrot.lane.b32.xlu0 %v469, 122
      %v3892 = vpop.permute.xlu0 %3891
      %3893 = vrot.lane.b32.xlu0 %v470, 122
      %v3894 = vpop.permute.xlu0 %3893
      %3895 = vrot.lane.b32.xlu0 %v471, 122
      %v3896 = vpop.permute.xlu0 %3895
      %3897 = vrot.lane.b32.xlu0 %v472, 122
      %v3898 = vpop.permute.xlu0 %3897
      %3899 = vrot.lane.b32.xlu0 %v473, 122
      %v3900 = vpop.permute.xlu0 %3899
      %3901 = vrot.lane.b32.xlu0 %v474, 122
      %v3902 = vpop.permute.xlu0 %3901
      %3903 = vrot.lane.b32.xlu0 %v475, 122
      %v3904 = vpop.permute.xlu0 %3903
      %3905 = vrot.lane.b32.xlu0 %v476, 122
      %v3906 = vpop.permute.xlu0 %3905
      %3907 = vrot.lane.b32.xlu0 %v477, 122
      %v3908 = vpop.permute.xlu0 %3907
      %3909 = vrot.lane.b32.xlu0 %v478, 122
      %v3910 = vpop.permute.xlu0 %3909
      %3911 = vrot.lane.b32.xlu0 %v479, 122
      %v3912 = vpop.permute.xlu0 %3911
      %3913 = vrot.lane.b32.xlu0 %v480, 122
      %v3914 = vpop.permute.xlu0 %3913
      %3915 = vrot.lane.b32.xlu0 %v481, 122
      %v3916 = vpop.permute.xlu0 %3915
      %3917 = vrot.lane.b32.xlu0 %v482, 122
      %v3918 = vpop.permute.xlu0 %3917
      %3919 = vrot.lane.b32.xlu0 %v483, 122
      %v3920 = vpop.permute.xlu0 %3919
      %3921 = vrot.lane.b32.xlu0 %v484, 122
      %v3922 = vpop.permute.xlu0 %3921
      %3923 = vrot.lane.b32.xlu0 %v485, 122
      %v3924 = vpop.permute.xlu0 %3923
      %v3957 = vadd.f32 %v3829, %v3862
      %v3958 = vadd.f32 %v3830, %v3864
      %v3959 = vadd.f32 %v3831, %v3866
      %v3960 = vadd.f32 %v3832, %v3868
      %v3961 = vadd.f32 %v3833, %v3870
      %v3962 = vadd.f32 %v3834, %v3872
      %v3963 = vadd.f32 %v3835, %v3874
      %v3964 = vadd.f32 %v3836, %v3876
      %v3965 = vadd.f32 %v3837, %v3878
      %v3966 = vadd.f32 %v3838, %v3880
      %v3967 = vadd.f32 %v3839, %v3882
      %v3968 = vadd.f32 %v3840, %v3884
      %v3969 = vadd.f32 %v3841, %v3886
      %v3970 = vadd.f32 %v3842, %v3888
      %v3971 = vadd.f32 %v3843, %v3890
      %v3972 = vadd.f32 %v3844, %v3892
      %v3973 = vadd.f32 %v3845, %v3894
      %v3974 = vadd.f32 %v3846, %v3896
      %v3975 = vadd.f32 %v3847, %v3898
      %v3976 = vadd.f32 %v3848, %v3900
      %v3977 = vadd.f32 %v3849, %v3902
      %v3978 = vadd.f32 %v3850, %v3904
      %v3979 = vadd.f32 %v3851, %v3906
      %v3980 = vadd.f32 %v3852, %v3908
      %v3981 = vadd.f32 %v3853, %v3910
      %v3982 = vadd.f32 %v3854, %v3912
      %v3983 = vadd.f32 %v3855, %v3914
      %v3984 = vadd.f32 %v3856, %v3916
      %v3985 = vadd.f32 %v3857, %v3918
      %v3986 = vadd.f32 %v3858, %v3920
      %v3987 = vadd.f32 %v3859, %v3922
      %v3988 = vadd.f32 %v3860, %v3924
      %v3992 = vrot.slane %v3986, 7
      %v3993 = vrot.slane %v3987, 7
      %v3994 = vsel %vm521, %v3992, %v3993
      %v3995 = vrot.slane %v3988, 7
      %v3996 = vsel %vm521, %v3993, %v3995
      %v4029 = vrot.slane %v3957, 7
      %v4030 = vrot.slane %v3958, 7
      %v4031 = vsel %vm521, %v4029, %v4030
      %v4032 = vrot.slane %v3959, 7
      %v4033 = vsel %vm521, %v4030, %v4032
      %v4034 = vrot.slane %v3960, 7
      %v4035 = vsel %vm521, %v4032, %v4034
      %v4036 = vrot.slane %v3961, 7
      %v4037 = vsel %vm521, %v4034, %v4036
      %v4038 = vrot.slane %v3962, 7
      %v4039 = vsel %vm521, %v4036, %v4038
      %v4040 = vrot.slane %v3963, 7
      %v4041 = vsel %vm521, %v4038, %v4040
      %v4042 = vrot.slane %v3964, 7
      %v4043 = vsel %vm521, %v4040, %v4042
      %v4044 = vrot.slane %v3965, 7
      %v4045 = vsel %vm521, %v4042, %v4044
      %v4046 = vrot.slane %v3966, 7
      %v4047 = vsel %vm521, %v4044, %v4046
      %v4048 = vrot.slane %v3967, 7
      %v4049 = vsel %vm521, %v4046, %v4048
      %v4050 = vrot.slane %v3968, 7
      %v4051 = vsel %vm521, %v4048, %v4050
      %v4052 = vrot.slane %v3969, 7
      %v4053 = vsel %vm521, %v4050, %v4052
      %v4054 = vrot.slane %v3970, 7
      %v4055 = vsel %vm521, %v4052, %v4054
      %v4056 = vrot.slane %v3971, 7
      %v4057 = vsel %vm521, %v4054, %v4056
      %v4058 = vrot.slane %v3972, 7
      %v4059 = vsel %vm521, %v4056, %v4058
      %v4060 = vrot.slane %v3973, 7
      %v4061 = vsel %vm521, %v4058, %v4060
      %v4062 = vrot.slane %v3974, 7
      %v4063 = vsel %vm521, %v4060, %v4062
      %v4064 = vrot.slane %v3975, 7
      %v4065 = vsel %vm521, %v4062, %v4064
      %v4066 = vrot.slane %v3976, 7
      %v4067 = vsel %vm521, %v4064, %v4066
      %v4068 = vrot.slane %v3977, 7
      %v4069 = vsel %vm521, %v4066, %v4068
      %v4070 = vrot.slane %v3978, 7
      %v4071 = vsel %vm521, %v4068, %v4070
      %v4072 = vrot.slane %v3979, 7
      %v4073 = vsel %vm521, %v4070, %v4072
      %v4074 = vrot.slane %v3980, 7
      %v4075 = vsel %vm521, %v4072, %v4074
      %v4076 = vrot.slane %v3981, 7
      %v4077 = vsel %vm521, %v4074, %v4076
      %v4078 = vrot.slane %v3982, 7
      %v4079 = vsel %vm521, %v4076, %v4078
      %v4080 = vrot.slane %v3983, 7
      %v4081 = vsel %vm521, %v4078, %v4080
      %v4082 = vrot.slane %v3984, 7
      %v4083 = vsel %vm521, %v4080, %v4082
      %v4084 = vrot.slane %v3985, 7
      %v4085 = vsel %vm521, %v4082, %v4084
      %v4086 = vsel %vm521, %v4084, %v3992
      %v4117 = vsel %vm521, %v3995, %v4029
      %v4118 = vmul.f32 %v3994, %v651
      %v4119 = vmul.f32 %v3996, %v656
      %v4120 = vmul.f32 %v4117, %v661
      %v4121 = vmul.f32 %v4031, %v666
      %v4122 = vmul.f32 %v4033, %v671
      %v4123 = vmul.f32 %v4035, %v676
      %v4124 = vmul.f32 %v4037, %v681
      %v4125 = vmul.f32 %v4039, %v686
      %v4126 = vmul.f32 %v4041, %v691
      %v4127 = vmul.f32 %v4043, %v696
      %v4128 = vmul.f32 %v4045, %v701
      %v4129 = vmul.f32 %v4047, %v706
      %v4130 = vmul.f32 %v4049, %v711
      %v4131 = vmul.f32 %v4051, %v716
      %v4132 = vmul.f32 %v4053, %v721
      %v4133 = vmul.f32 %v4055, %v726
      %v4134 = vmul.f32 %v4057, %v731
      %v4135 = vmul.f32 %v4059, %v736
      %v4136 = vmul.f32 %v4061, %v741
      %v4137 = vmul.f32 %v4063, %v746
      %v4138 = vmul.f32 %v4065, %v751
      %v4139 = vmul.f32 %v4067, %v756
      %v4140 = vmul.f32 %v4069, %v761
      %v4141 = vmul.f32 %v4071, %v766
      %v4142 = vmul.f32 %v4073, %v771
      %v4143 = vmul.f32 %v4075, %v776
      %v4144 = vmul.f32 %v4077, %v781
      %v4145 = vmul.f32 %v4079, %v786
      %v4146 = vmul.f32 %v4081, %v791
      %v4147 = vmul.f32 %v4083, %v796
      %v4148 = vmul.f32 %v4085, %v801
      %v4149 = vmul.f32 %v4086, %v806
      %v4150 = vmul.f32 %v3987, %v842
      %v4151 = vmul.f32 %v3988, %v846
      %v4152 = vmul.f32 %v3957, %v850
      %v4153 = vmul.f32 %v3958, %v854
      %v4154 = vmul.f32 %v3959, %v858
      %v4155 = vmul.f32 %v3960, %v862
      %v4156 = vmul.f32 %v3961, %v866
      %v4157 = vmul.f32 %v3962, %v870
      %v4158 = vmul.f32 %v3963, %v874
      %v4159 = vmul.f32 %v3964, %v878
      %v4160 = vmul.f32 %v3965, %v882
      %v4161 = vmul.f32 %v3966, %v886
      %v4162 = vmul.f32 %v3967, %v890
      %v4163 = vmul.f32 %v3968, %v894
      %v4164 = vmul.f32 %v3969, %v898
      %v4165 = vmul.f32 %v3970, %v902
      %v4166 = vmul.f32 %v3971, %v906
      %v4167 = vmul.f32 %v3972, %v910
      %v4168 = vmul.f32 %v3973, %v914
      %v4169 = vmul.f32 %v3974, %v918
      %v4170 = vmul.f32 %v3975, %v922
      %v4171 = vmul.f32 %v3976, %v926
      %v4172 = vmul.f32 %v3977, %v930
      %v4173 = vmul.f32 %v3978, %v934
      %v4174 = vmul.f32 %v3979, %v938
      %v4175 = vmul.f32 %v3980, %v942
      %v4176 = vmul.f32 %v3981, %v946
      %v4177 = vmul.f32 %v3982, %v950
      %v4178 = vmul.f32 %v3983, %v954
      %v4179 = vmul.f32 %v3984, %v958
      %v4180 = vmul.f32 %v3985, %v962
      %v4181 = vmul.f32 %v3986, %v966
      %v4182 = vrot.slane %v3987, 1
      %v4183 = vrot.slane %v3988, 1
      %v4184 = vsel %vm1000, %v4182, %v4183
      %v4187 = vrot.slane %v3957, 1
      %v4188 = vrot.slane %v3958, 1
      %v4189 = vsel %vm1000, %v4187, %v4188
      %v4190 = vrot.slane %v3959, 1
      %v4191 = vsel %vm1000, %v4188, %v4190
      %v4192 = vrot.slane %v3960, 1
      %v4193 = vsel %vm1000, %v4190, %v4192
      %v4194 = vrot.slane %v3961, 1
      %v4195 = vsel %vm1000, %v4192, %v4194
      %v4196 = vrot.slane %v3962, 1
      %v4197 = vsel %vm1000, %v4194, %v4196
      %v4198 = vrot.slane %v3963, 1
      %v4199 = vsel %vm1000, %v4196, %v4198
      %v4200 = vrot.slane %v3964, 1
      %v4201 = vsel %vm1000, %v4198, %v4200
      %v4202 = vrot.slane %v3965, 1
      %v4203 = vsel %vm1000, %v4200, %v4202
      %v4204 = vrot.slane %v3966, 1
      %v4205 = vsel %vm1000, %v4202, %v4204
      %v4206 = vrot.slane %v3967, 1
      %v4207 = vsel %vm1000, %v4204, %v4206
      %v4208 = vrot.slane %v3968, 1
      %v4209 = vsel %vm1000, %v4206, %v4208
      %v4210 = vrot.slane %v3969, 1
      %v4211 = vsel %vm1000, %v4208, %v4210
      %v4212 = vrot.slane %v3970, 1
      %v4213 = vsel %vm1000, %v4210, %v4212
      %v4214 = vrot.slane %v3971, 1
      %v4215 = vsel %vm1000, %v4212, %v4214
      %v4216 = vrot.slane %v3972, 1
      %v4217 = vsel %vm1000, %v4214, %v4216
      %v4218 = vrot.slane %v3973, 1
      %v4219 = vsel %vm1000, %v4216, %v4218
      %v4220 = vrot.slane %v3974, 1
      %v4221 = vsel %vm1000, %v4218, %v4220
      %v4222 = vrot.slane %v3975, 1
      %v4223 = vsel %vm1000, %v4220, %v4222
      %v4224 = vrot.slane %v3976, 1
      %v4225 = vsel %vm1000, %v4222, %v4224
      %v4226 = vrot.slane %v3977, 1
      %v4227 = vsel %vm1000, %v4224, %v4226
      %v4228 = vrot.slane %v3978, 1
      %v4229 = vsel %vm1000, %v4226, %v4228
      %v4230 = vrot.slane %v3979, 1
      %v4231 = vsel %vm1000, %v4228, %v4230
      %v4232 = vrot.slane %v3980, 1
      %v4233 = vsel %vm1000, %v4230, %v4232
      %v4234 = vrot.slane %v3981, 1
      %v4235 = vsel %vm1000, %v4232, %v4234
      %v4236 = vrot.slane %v3982, 1
      %v4237 = vsel %vm1000, %v4234, %v4236
      %v4238 = vrot.slane %v3983, 1
      %v4239 = vsel %vm1000, %v4236, %v4238
      %v4240 = vrot.slane %v3984, 1
      %v4241 = vsel %vm1000, %v4238, %v4240
      %v4242 = vrot.slane %v3985, 1
      %v4243 = vsel %vm1000, %v4240, %v4242
      %v4244 = vrot.slane %v3986, 1
      %v4245 = vsel %vm1000, %v4242, %v4244
      %v4246 = vsel %vm1000, %v4244, %v4182
      %v4278 = vsel %vm1000, %v4183, %v4187
      %v4279 = vmul.f32 %v4184, %v1100
      %v4280 = vmul.f32 %v4278, %v1104
      %v4281 = vmul.f32 %v4189, %v1108
      %v4282 = vmul.f32 %v4191, %v1112
      %v4283 = vmul.f32 %v4193, %v1116
      %v4284 = vmul.f32 %v4195, %v1120
      %v4285 = vmul.f32 %v4197, %v1124
      %v4286 = vmul.f32 %v4199, %v1128
      %v4287 = vmul.f32 %v4201, %v1132
      %v4288 = vmul.f32 %v4203, %v1136
      %v4289 = vmul.f32 %v4205, %v1140
      %v4290 = vmul.f32 %v4207, %v1144
      %v4291 = vmul.f32 %v4209, %v1148
      %v4292 = vmul.f32 %v4211, %v1152
      %v4293 = vmul.f32 %v4213, %v1156
      %v4294 = vmul.f32 %v4215, %v1160
      %v4295 = vmul.f32 %v4217, %v1164
      %v4296 = vmul.f32 %v4219, %v1168
      %v4297 = vmul.f32 %v4221, %v1172
      %v4298 = vmul.f32 %v4223, %v1176
      %v4299 = vmul.f32 %v4225, %v1180
      %v4300 = vmul.f32 %v4227, %v1184
      %v4301 = vmul.f32 %v4229, %v1188
      %v4302 = vmul.f32 %v4231, %v1192
      %v4303 = vmul.f32 %v4233, %v1196
      %v4304 = vmul.f32 %v4235, %v1200
      %v4305 = vmul.f32 %v4237, %v1204
      %v4306 = vmul.f32 %v4239, %v1208
      %v4307 = vmul.f32 %v4241, %v1212
      %v4308 = vmul.f32 %v4243, %v1216
      %v4309 = vmul.f32 %v4245, %v1220
      %v4310 = vmul.f32 %v4246, %v1224
      %v4311 = vmul.f32 %v4117, %v1260
      %v4312 = vmul.f32 %v4031, %v1264
      %v4313 = vmul.f32 %v4033, %v1268
      %v4314 = vmul.f32 %v4035, %v1272
      %v4315 = vmul.f32 %v4037, %v1276
      %v4316 = vmul.f32 %v4039, %v1280
      %v4317 = vmul.f32 %v4041, %v1284
      %v4318 = vmul.f32 %v4043, %v1288
      %v4319 = vmul.f32 %v4045, %v1292
      %v4320 = vmul.f32 %v4047, %v1296
      %v4321 = vmul.f32 %v4049, %v1300
      %v4322 = vmul.f32 %v4051, %v1304
      %v4323 = vmul.f32 %v4053, %v1308
      %v4324 = vmul.f32 %v4055, %v1312
      %v4325 = vmul.f32 %v4057, %v1316
      %v4326 = vmul.f32 %v4059, %v1320
      %v4327 = vmul.f32 %v4061, %v1324
      %v4328 = vmul.f32 %v4063, %v1328
      %v4329 = vmul.f32 %v4065, %v1332
      %v4330 = vmul.f32 %v4067, %v1336
      %v4331 = vmul.f32 %v4069, %v1340
      %v4332 = vmul.f32 %v4071, %v1344
      %v4333 = vmul.f32 %v4073, %v1348
      %v4334 = vmul.f32 %v4075, %v1352
      %v4335 = vmul.f32 %v4077, %v1356
      %v4336 = vmul.f32 %v4079, %v1360
      %v4337 = vmul.f32 %v4081, %v1364
      %v4338 = vmul.f32 %v4083, %v1368
      %v4339 = vmul.f32 %v4085, %v1372
      %v4340 = vmul.f32 %v4086, %v1376
      %v4341 = vmul.f32 %v3994, %v1380
      %v4342 = vmul.f32 %v3996, %v1384
      %v4343 = vmul.f32 %v4189, %v1420
      %v4344 = vmul.f32 %v4191, %v1424
      %v4345 = vmul.f32 %v4193, %v1428
      %v4346 = vmul.f32 %v4195, %v1432
      %v4347 = vmul.f32 %v4197, %v1436
      %v4348 = vmul.f32 %v4199, %v1440
      %v4349 = vmul.f32 %v4201, %v1444
      %v4350 = vmul.f32 %v4203, %v1448
      %v4351 = vmul.f32 %v4205, %v1452
      %v4352 = vmul.f32 %v4207, %v1456
      %v4353 = vmul.f32 %v4209, %v1460
      %v4354 = vmul.f32 %v4211, %v1464
      %v4355 = vmul.f32 %v4213, %v1468
      %v4356 = vmul.f32 %v4215, %v1472
      %v4357 = vmul.f32 %v4217, %v1476
      %v4358 = vmul.f32 %v4219, %v1480
      %v4359 = vmul.f32 %v4221, %v1484
      %v4360 = vmul.f32 %v4223, %v1488
      %v4361 = vmul.f32 %v4225, %v1492
      %v4362 = vmul.f32 %v4227, %v1496
      %v4363 = vmul.f32 %v4229, %v1500
      %v4364 = vmul.f32 %v4231, %v1504
      %v4365 = vmul.f32 %v4233, %v1508
      %v4366 = vmul.f32 %v4235, %v1512
      %v4367 = vmul.f32 %v4237, %v1516
      %v4368 = vmul.f32 %v4239, %v1520
      %v4369 = vmul.f32 %v4241, %v1524
      %v4370 = vmul.f32 %v4243, %v1528
      %v4371 = vmul.f32 %v4245, %v1532
      %v4372 = vmul.f32 %v4246, %v1536
      %v4373 = vmul.f32 %v4184, %v1540
      %v4374 = vmul.f32 %v4278, %v1544
      %v4375 = vmul.f32 %v4033, %v1580
      %v4376 = vmul.f32 %v4035, %v1584
      %v4377 = vmul.f32 %v4037, %v1588
      %v4378 = vmul.f32 %v4039, %v1592
      %v4379 = vmul.f32 %v4041, %v1596
      %v4380 = vmul.f32 %v4043, %v1600
      %v4381 = vmul.f32 %v4045, %v1604
      %v4382 = vmul.f32 %v4047, %v1608
      %v4383 = vmul.f32 %v4049, %v1612
      %v4384 = vmul.f32 %v4051, %v1616
      %v4385 = vmul.f32 %v4053, %v1620
      %v4386 = vmul.f32 %v4055, %v1624
      %v4387 = vmul.f32 %v4057, %v1628
      %v4388 = vmul.f32 %v4059, %v1632
      %v4389 = vmul.f32 %v4061, %v1636
      %v4390 = vmul.f32 %v4063, %v1640
      %v4391 = vmul.f32 %v4065, %v1644
      %v4392 = vmul.f32 %v4067, %v1648
      %v4393 = vmul.f32 %v4069, %v1652
      %v4394 = vmul.f32 %v4071, %v1656
      %v4395 = vmul.f32 %v4073, %v1660
      %v4396 = vmul.f32 %v4075, %v1664
      %v4397 = vmul.f32 %v4077, %v1668
      %v4398 = vmul.f32 %v4079, %v1672
      %v4399 = vmul.f32 %v4081, %v1676
      %v4400 = vmul.f32 %v4083, %v1680
      %v4401 = vmul.f32 %v4085, %v1684
      %v4402 = vmul.f32 %v4086, %v1688
      %v4403 = vmul.f32 %v3994, %v1692
      %v4404 = vmul.f32 %v3996, %v1696
      %v4405 = vmul.f32 %v4117, %v1700
      %v4406 = vmul.f32 %v4031, %v1704
      %v4407 = vmul.f32 %v3959, %v1740
      %v4408 = vmul.f32 %v3960, %v1744
      %v4409 = vmul.f32 %v3961, %v1748
      %v4410 = vmul.f32 %v3962, %v1752
      %v4411 = vmul.f32 %v3963, %v1756
      %v4412 = vmul.f32 %v3964, %v1760
      %v4413 = vmul.f32 %v3965, %v1764
      %v4414 = vmul.f32 %v3966, %v1768
      %v4415 = vmul.f32 %v3967, %v1772
      %v4416 = vmul.f32 %v3968, %v1776
      %v4417 = vmul.f32 %v3969, %v1780
      %v4418 = vmul.f32 %v3970, %v1784
      %v4419 = vmul.f32 %v3971, %v1788
      %v4420 = vmul.f32 %v3972, %v1792
      %v4421 = vmul.f32 %v3973, %v1796
      %v4422 = vmul.f32 %v3974, %v1800
      %v4423 = vmul.f32 %v3975, %v1804
      %v4424 = vmul.f32 %v3976, %v1808
      %v4425 = vmul.f32 %v3977, %v1812
      %v4426 = vmul.f32 %v3978, %v1816
      %v4427 = vmul.f32 %v3979, %v1820
      %v4428 = vmul.f32 %v3980, %v1824
      %v4429 = vmul.f32 %v3981, %v1828
      %v4430 = vmul.f32 %v3982, %v1832
      %v4431 = vmul.f32 %v3983, %v1836
      %v4432 = vmul.f32 %v3984, %v1840
      %v4433 = vmul.f32 %v3985, %v1844
      %v4434 = vmul.f32 %v3986, %v1848
      %v4435 = vmul.f32 %v3987, %v1852
      %v4436 = vmul.f32 %v3988, %v1856
      %v4437 = vmul.f32 %v3957, %v1860
      %v4438 = vmul.f32 %v3958, %v1864
      %v4439 = vmul.f32 %v4193, %v1900
      %v4440 = vmul.f32 %v4195, %v1904
      %v4441 = vmul.f32 %v4197, %v1908
      %v4442 = vmul.f32 %v4199, %v1912
      %v4443 = vmul.f32 %v4201, %v1916
      %v4444 = vmul.f32 %v4203, %v1920
      %v4445 = vmul.f32 %v4205, %v1924
      %v4446 = vmul.f32 %v4207, %v1928
      %v4447 = vmul.f32 %v4209, %v1932
      %v4448 = vmul.f32 %v4211, %v1936
      %v4449 = vmul.f32 %v4213, %v1940
      %v4450 = vmul.f32 %v4215, %v1944
      %v4451 = vmul.f32 %v4217, %v1948
      %v4452 = vmul.f32 %v4219, %v1952
      %v4453 = vmul.f32 %v4221, %v1956
      %v4454 = vmul.f32 %v4223, %v1960
      %v4455 = vmul.f32 %v4225, %v1964
      %v4456 = vmul.f32 %v4227, %v1968
      %v4457 = vmul.f32 %v4229, %v1972
      %v4458 = vmul.f32 %v4231, %v1976
      %v4459 = vmul.f32 %v4233, %v1980
      %v4460 = vmul.f32 %v4235, %v1984
      %v4461 = vmul.f32 %v4237, %v1988
      %v4462 = vmul.f32 %v4239, %v1992
      %v4463 = vmul.f32 %v4241, %v1996
      %v4464 = vmul.f32 %v4243, %v2000
      %v4465 = vmul.f32 %v4245, %v2004
      %v4466 = vmul.f32 %v4246, %v2008
      %v4467 = vmul.f32 %v4184, %v2012
      %v4468 = vmul.f32 %v4278, %v2016
      %v4469 = vmul.f32 %v4189, %v2020
      %v4470 = vmul.f32 %v4191, %v2024
      %4503 = vrot.lane.b32.xlu0 %v4150, 6
      %v4504 = vpop.permute.xlu0 %4503
      %4505 = vrot.lane.b32.xlu0 %v4151, 6
      %v4506 = vpop.permute.xlu0 %4505
      %4507 = vrot.lane.b32.xlu0 %v4152, 6
      %v4508 = vpop.permute.xlu0 %4507
      %4509 = vrot.lane.b32.xlu0 %v4153, 6
      %v4510 = vpop.permute.xlu0 %4509
      %4511 = vrot.lane.b32.xlu0 %v4154, 6
      %v4512 = vpop.permute.xlu0 %4511
      %4513 = vrot.lane.b32.xlu0 %v4155, 6
      %v4514 = vpop.permute.xlu0 %4513
      %4515 = vrot.lane.b32.xlu0 %v4156, 6
      %v4516 = vpop.permute.xlu0 %4515
      %4517 = vrot.lane.b32.xlu0 %v4157, 6
      %v4518 = vpop.permute.xlu0 %4517
      %4519 = vrot.lane.b32.xlu0 %v4158, 6
      %v4520 = vpop.permute.xlu0 %4519
      %4521 = vrot.lane.b32.xlu0 %v4159, 6
      %v4522 = vpop.permute.xlu0 %4521
      %4523 = vrot.lane.b32.xlu0 %v4160, 6
      %v4524 = vpop.permute.xlu0 %4523
      %4525 = vrot.lane.b32.xlu0 %v4161, 6
      %v4526 = vpop.permute.xlu0 %4525
      %4527 = vrot.lane.b32.xlu0 %v4162, 6
      %v4528 = vpop.permute.xlu0 %4527
      %4529 = vrot.lane.b32.xlu0 %v4163, 6
      %v4530 = vpop.permute.xlu0 %4529
      %4531 = vrot.lane.b32.xlu0 %v4164, 6
      %v4532 = vpop.permute.xlu0 %4531
      %4533 = vrot.lane.b32.xlu0 %v4165, 6
      %v4534 = vpop.permute.xlu0 %4533
      %4535 = vrot.lane.b32.xlu0 %v4166, 6
      %v4536 = vpop.permute.xlu0 %4535
      %4537 = vrot.lane.b32.xlu0 %v4167, 6
      %v4538 = vpop.permute.xlu0 %4537
      %4539 = vrot.lane.b32.xlu0 %v4168, 6
      %v4540 = vpop.permute.xlu0 %4539
      %4541 = vrot.lane.b32.xlu0 %v4169, 6
      %v4542 = vpop.permute.xlu0 %4541
      %4543 = vrot.lane.b32.xlu0 %v4170, 6
      %v4544 = vpop.permute.xlu0 %4543
      %4545 = vrot.lane.b32.xlu0 %v4171, 6
      %v4546 = vpop.permute.xlu0 %4545
      %4547 = vrot.lane.b32.xlu0 %v4172, 6
      %v4548 = vpop.permute.xlu0 %4547
      %4549 = vrot.lane.b32.xlu0 %v4173, 6
      %v4550 = vpop.permute.xlu0 %4549
      %4551 = vrot.lane.b32.xlu0 %v4174, 6
      %v4552 = vpop.permute.xlu0 %4551
      %4553 = vrot.lane.b32.xlu0 %v4175, 6
      %v4554 = vpop.permute.xlu0 %4553
      %4555 = vrot.lane.b32.xlu0 %v4176, 6
      %v4556 = vpop.permute.xlu0 %4555
      %4557 = vrot.lane.b32.xlu0 %v4177, 6
      %v4558 = vpop.permute.xlu0 %4557
      %4559 = vrot.lane.b32.xlu0 %v4178, 6
      %v4560 = vpop.permute.xlu0 %4559
      %4561 = vrot.lane.b32.xlu0 %v4179, 6
      %v4562 = vpop.permute.xlu0 %4561
      %4563 = vrot.lane.b32.xlu0 %v4180, 6
      %v4564 = vpop.permute.xlu0 %4563
      %4565 = vrot.lane.b32.xlu0 %v4181, 6
      %v4566 = vpop.permute.xlu0 %4565
      %4631 = vrot.lane.b32.xlu0 %v4279, 12
      %v4632 = vpop.permute.xlu0 %4631
      %4633 = vrot.lane.b32.xlu0 %v4280, 12
      %v4634 = vpop.permute.xlu0 %4633
      %4635 = vrot.lane.b32.xlu0 %v4281, 12
      %v4636 = vpop.permute.xlu0 %4635
      %4637 = vrot.lane.b32.xlu0 %v4282, 12
      %v4638 = vpop.permute.xlu0 %4637
      %4639 = vrot.lane.b32.xlu0 %v4283, 12
      %v4640 = vpop.permute.xlu0 %4639
      %4641 = vrot.lane.b32.xlu0 %v4284, 12
      %v4642 = vpop.permute.xlu0 %4641
      %4643 = vrot.lane.b32.xlu0 %v4285, 12
      %v4644 = vpop.permute.xlu0 %4643
      %4645 = vrot.lane.b32.xlu0 %v4286, 12
      %v4646 = vpop.permute.xlu0 %4645
      %4647 = vrot.lane.b32.xlu0 %v4287, 12
      %v4648 = vpop.permute.xlu0 %4647
      %4649 = vrot.lane.b32.xlu0 %v4288, 12
      %v4650 = vpop.permute.xlu0 %4649
      %4651 = vrot.lane.b32.xlu0 %v4289, 12
      %v4652 = vpop.permute.xlu0 %4651
      %4653 = vrot.lane.b32.xlu0 %v4290, 12
      %v4654 = vpop.permute.xlu0 %4653
      %4655 = vrot.lane.b32.xlu0 %v4291, 12
      %v4656 = vpop.permute.xlu0 %4655
      %4657 = vrot.lane.b32.xlu0 %v4292, 12
      %v4658 = vpop.permute.xlu0 %4657
      %4659 = vrot.lane.b32.xlu0 %v4293, 12
      %v4660 = vpop.permute.xlu0 %4659
      %4661 = vrot.lane.b32.xlu0 %v4294, 12
      %v4662 = vpop.permute.xlu0 %4661
      %4663 = vrot.lane.b32.xlu0 %v4295, 12
      %v4664 = vpop.permute.xlu0 %4663
      %4665 = vrot.lane.b32.xlu0 %v4296, 12
      %v4666 = vpop.permute.xlu0 %4665
      %4667 = vrot.lane.b32.xlu0 %v4297, 12
      %v4668 = vpop.permute.xlu0 %4667
      %4669 = vrot.lane.b32.xlu0 %v4298, 12
      %v4670 = vpop.permute.xlu0 %4669
      %4671 = vrot.lane.b32.xlu0 %v4299, 12
      %v4672 = vpop.permute.xlu0 %4671
      %4673 = vrot.lane.b32.xlu0 %v4300, 12
      %v4674 = vpop.permute.xlu0 %4673
      %4675 = vrot.lane.b32.xlu0 %v4301, 12
      %v4676 = vpop.permute.xlu0 %4675
      %4677 = vrot.lane.b32.xlu0 %v4302, 12
      %v4678 = vpop.permute.xlu0 %4677
      %4679 = vrot.lane.b32.xlu0 %v4303, 12
      %v4680 = vpop.permute.xlu0 %4679
      %4681 = vrot.lane.b32.xlu0 %v4304, 12
      %v4682 = vpop.permute.xlu0 %4681
      %4683 = vrot.lane.b32.xlu0 %v4305, 12
      %v4684 = vpop.permute.xlu0 %4683
      %4685 = vrot.lane.b32.xlu0 %v4306, 12
      %v4686 = vpop.permute.xlu0 %4685
      %4687 = vrot.lane.b32.xlu0 %v4307, 12
      %v4688 = vpop.permute.xlu0 %4687
      %4689 = vrot.lane.b32.xlu0 %v4308, 12
      %v4690 = vpop.permute.xlu0 %4689
      %4691 = vrot.lane.b32.xlu0 %v4309, 12
      %v4692 = vpop.permute.xlu0 %4691
      %4693 = vrot.lane.b32.xlu0 %v4310, 12
      %v4694 = vpop.permute.xlu0 %4693
      %4759 = vrot.lane.b32.xlu0 %v4311, 18
      %v4760 = vpop.permute.xlu0 %4759
      %4761 = vrot.lane.b32.xlu0 %v4312, 18
      %v4762 = vpop.permute.xlu0 %4761
      %4763 = vrot.lane.b32.xlu0 %v4313, 18
      %v4764 = vpop.permute.xlu0 %4763
      %4765 = vrot.lane.b32.xlu0 %v4314, 18
      %v4766 = vpop.permute.xlu0 %4765
      %4767 = vrot.lane.b32.xlu0 %v4315, 18
      %v4768 = vpop.permute.xlu0 %4767
      %4769 = vrot.lane.b32.xlu0 %v4316, 18
      %v4770 = vpop.permute.xlu0 %4769
      %4771 = vrot.lane.b32.xlu0 %v4317, 18
      %v4772 = vpop.permute.xlu0 %4771
      %4773 = vrot.lane.b32.xlu0 %v4318, 18
      %v4774 = vpop.permute.xlu0 %4773
      %4775 = vrot.lane.b32.xlu0 %v4319, 18
      %v4776 = vpop.permute.xlu0 %4775
      %4777 = vrot.lane.b32.xlu0 %v4320, 18
      %v4778 = vpop.permute.xlu0 %4777
      %4779 = vrot.lane.b32.xlu0 %v4321, 18
      %v4780 = vpop.permute.xlu0 %4779
      %4781 = vrot.lane.b32.xlu0 %v4322, 18
      %v4782 = vpop.permute.xlu0 %4781
      %4783 = vrot.lane.b32.xlu0 %v4323, 18
      %v4784 = vpop.permute.xlu0 %4783
      %4785 = vrot.lane.b32.xlu0 %v4324, 18
      %v4786 = vpop.permute.xlu0 %4785
      %4787 = vrot.lane.b32.xlu0 %v4325, 18
      %v4788 = vpop.permute.xlu0 %4787
      %4789 = vrot.lane.b32.xlu0 %v4326, 18
      %v4790 = vpop.permute.xlu0 %4789
      %4791 = vrot.lane.b32.xlu0 %v4327, 18
      %v4792 = vpop.permute.xlu0 %4791
      %4793 = vrot.lane.b32.xlu0 %v4328, 18
      %v4794 = vpop.permute.xlu0 %4793
      %4795 = vrot.lane.b32.xlu0 %v4329, 18
      %v4796 = vpop.permute.xlu0 %4795
      %4797 = vrot.lane.b32.xlu0 %v4330, 18
      %v4798 = vpop.permute.xlu0 %4797
      %4799 = vrot.lane.b32.xlu0 %v4331, 18
      %v4800 = vpop.permute.xlu0 %4799
      %4801 = vrot.lane.b32.xlu0 %v4332, 18
      %v4802 = vpop.permute.xlu0 %4801
      %4803 = vrot.lane.b32.xlu0 %v4333, 18
      %v4804 = vpop.permute.xlu0 %4803
      %4805 = vrot.lane.b32.xlu0 %v4334, 18
      %v4806 = vpop.permute.xlu0 %4805
      %4807 = vrot.lane.b32.xlu0 %v4335, 18
      %v4808 = vpop.permute.xlu0 %4807
      %4809 = vrot.lane.b32.xlu0 %v4336, 18
      %v4810 = vpop.permute.xlu0 %4809
      %4811 = vrot.lane.b32.xlu0 %v4337, 18
      %v4812 = vpop.permute.xlu0 %4811
      %4813 = vrot.lane.b32.xlu0 %v4338, 18
      %v4814 = vpop.permute.xlu0 %4813
      %4815 = vrot.lane.b32.xlu0 %v4339, 18
      %v4816 = vpop.permute.xlu0 %4815
      %4817 = vrot.lane.b32.xlu0 %v4340, 18
      %v4818 = vpop.permute.xlu0 %4817
      %4819 = vrot.lane.b32.xlu0 %v4341, 18
      %v4820 = vpop.permute.xlu0 %4819
      %4821 = vrot.lane.b32.xlu0 %v4342, 18
      %v4822 = vpop.permute.xlu0 %4821
      %4855 = vrot.lane.b32.xlu0 %v3957, 24
      %v4856 = vpop.permute.xlu0 %4855
      %4857 = vrot.lane.b32.xlu0 %v3958, 24
      %v4858 = vpop.permute.xlu0 %4857
      %4859 = vrot.lane.b32.xlu0 %v3959, 24
      %v4860 = vpop.permute.xlu0 %4859
      %4861 = vrot.lane.b32.xlu0 %v3960, 24
      %v4862 = vpop.permute.xlu0 %4861
      %4863 = vrot.lane.b32.xlu0 %v3961, 24
      %v4864 = vpop.permute.xlu0 %4863
      %4865 = vrot.lane.b32.xlu0 %v3962, 24
      %v4866 = vpop.permute.xlu0 %4865
      %4867 = vrot.lane.b32.xlu0 %v3963, 24
      %v4868 = vpop.permute.xlu0 %4867
      %4869 = vrot.lane.b32.xlu0 %v3964, 24
      %v4870 = vpop.permute.xlu0 %4869
      %4871 = vrot.lane.b32.xlu0 %v3965, 24
      %v4872 = vpop.permute.xlu0 %4871
      %4873 = vrot.lane.b32.xlu0 %v3966, 24
      %v4874 = vpop.permute.xlu0 %4873
      %4875 = vrot.lane.b32.xlu0 %v3967, 24
      %v4876 = vpop.permute.xlu0 %4875
      %4877 = vrot.lane.b32.xlu0 %v3968, 24
      %v4878 = vpop.permute.xlu0 %4877
      %4879 = vrot.lane.b32.xlu0 %v3969, 24
      %v4880 = vpop.permute.xlu0 %4879
      %4881 = vrot.lane.b32.xlu0 %v3970, 24
      %v4882 = vpop.permute.xlu0 %4881
      %4883 = vrot.lane.b32.xlu0 %v3971, 24
      %v4884 = vpop.permute.xlu0 %4883
      %4885 = vrot.lane.b32.xlu0 %v3972, 24
      %v4886 = vpop.permute.xlu0 %4885
      %4887 = vrot.lane.b32.xlu0 %v3973, 24
      %v4888 = vpop.permute.xlu0 %4887
      %4889 = vrot.lane.b32.xlu0 %v3974, 24
      %v4890 = vpop.permute.xlu0 %4889
      %4891 = vrot.lane.b32.xlu0 %v3975, 24
      %v4892 = vpop.permute.xlu0 %4891
      %4893 = vrot.lane.b32.xlu0 %v3976, 24
      %v4894 = vpop.permute.xlu0 %4893
      %4895 = vrot.lane.b32.xlu0 %v3977, 24
      %v4896 = vpop.permute.xlu0 %4895
      %4897 = vrot.lane.b32.xlu0 %v3978, 24
      %v4898 = vpop.permute.xlu0 %4897
      %4899 = vrot.lane.b32.xlu0 %v3979, 24
      %v4900 = vpop.permute.xlu0 %4899
      %4901 = vrot.lane.b32.xlu0 %v3980, 24
      %v4902 = vpop.permute.xlu0 %4901
      %4903 = vrot.lane.b32.xlu0 %v3981, 24
      %v4904 = vpop.permute.xlu0 %4903
      %4905 = vrot.lane.b32.xlu0 %v3982, 24
      %v4906 = vpop.permute.xlu0 %4905
      %4907 = vrot.lane.b32.xlu0 %v3983, 24
      %v4908 = vpop.permute.xlu0 %4907
      %4909 = vrot.lane.b32.xlu0 %v3984, 24
      %v4910 = vpop.permute.xlu0 %4909
      %4911 = vrot.lane.b32.xlu0 %v3985, 24
      %v4912 = vpop.permute.xlu0 %4911
      %4913 = vrot.lane.b32.xlu0 %v3986, 24
      %v4914 = vpop.permute.xlu0 %4913
      %4915 = vrot.lane.b32.xlu0 %v3987, 24
      %v4916 = vpop.permute.xlu0 %4915
      %4917 = vrot.lane.b32.xlu0 %v3988, 24
      %v4918 = vpop.permute.xlu0 %4917
      %4983 = vrot.lane.b32.xlu0 %v4343, 30
      %v4984 = vpop.permute.xlu0 %4983
      %4985 = vrot.lane.b32.xlu0 %v4344, 30
      %v4986 = vpop.permute.xlu0 %4985
      %4987 = vrot.lane.b32.xlu0 %v4345, 30
      %v4988 = vpop.permute.xlu0 %4987
      %4989 = vrot.lane.b32.xlu0 %v4346, 30
      %v4990 = vpop.permute.xlu0 %4989
      %4991 = vrot.lane.b32.xlu0 %v4347, 30
      %v4992 = vpop.permute.xlu0 %4991
      %4993 = vrot.lane.b32.xlu0 %v4348, 30
      %v4994 = vpop.permute.xlu0 %4993
      %4995 = vrot.lane.b32.xlu0 %v4349, 30
      %v4996 = vpop.permute.xlu0 %4995
      %4997 = vrot.lane.b32.xlu0 %v4350, 30
      %v4998 = vpop.permute.xlu0 %4997
      %4999 = vrot.lane.b32.xlu0 %v4351, 30
      %v5000 = vpop.permute.xlu0 %4999
      %5001 = vrot.lane.b32.xlu0 %v4352, 30
      %v5002 = vpop.permute.xlu0 %5001
      %5003 = vrot.lane.b32.xlu0 %v4353, 30
      %v5004 = vpop.permute.xlu0 %5003
      %5005 = vrot.lane.b32.xlu0 %v4354, 30
      %v5006 = vpop.permute.xlu0 %5005
      %5007 = vrot.lane.b32.xlu0 %v4355, 30
      %v5008 = vpop.permute.xlu0 %5007
      %5009 = vrot.lane.b32.xlu0 %v4356, 30
      %v5010 = vpop.permute.xlu0 %5009
      %5011 = vrot.lane.b32.xlu0 %v4357, 30
      %v5012 = vpop.permute.xlu0 %5011
      %5013 = vrot.lane.b32.xlu0 %v4358, 30
      %v5014 = vpop.permute.xlu0 %5013
      %5015 = vrot.lane.b32.xlu0 %v4359, 30
      %v5016 = vpop.permute.xlu0 %5015
      %5017 = vrot.lane.b32.xlu0 %v4360, 30
      %v5018 = vpop.permute.xlu0 %5017
      %5019 = vrot.lane.b32.xlu0 %v4361, 30
      %v5020 = vpop.permute.xlu0 %5019
      %5021 = vrot.lane.b32.xlu0 %v4362, 30
      %v5022 = vpop.permute.xlu0 %5021
      %5023 = vrot.lane.b32.xlu0 %v4363, 30
      %v5024 = vpop.permute.xlu0 %5023
      %5025 = vrot.lane.b32.xlu0 %v4364, 30
      %v5026 = vpop.permute.xlu0 %5025
      %5027 = vrot.lane.b32.xlu0 %v4365, 30
      %v5028 = vpop.permute.xlu0 %5027
      %5029 = vrot.lane.b32.xlu0 %v4366, 30
      %v5030 = vpop.permute.xlu0 %5029
      %5031 = vrot.lane.b32.xlu0 %v4367, 30
      %v5032 = vpop.permute.xlu0 %5031
      %5033 = vrot.lane.b32.xlu0 %v4368, 30
      %v5034 = vpop.permute.xlu0 %5033
      %5035 = vrot.lane.b32.xlu0 %v4369, 30
      %v5036 = vpop.permute.xlu0 %5035
      %5037 = vrot.lane.b32.xlu0 %v4370, 30
      %v5038 = vpop.permute.xlu0 %5037
      %5039 = vrot.lane.b32.xlu0 %v4371, 30
      %v5040 = vpop.permute.xlu0 %5039
      %5041 = vrot.lane.b32.xlu0 %v4372, 30
      %v5042 = vpop.permute.xlu0 %5041
      %5043 = vrot.lane.b32.xlu0 %v4373, 30
      %v5044 = vpop.permute.xlu0 %5043
      %5045 = vrot.lane.b32.xlu0 %v4374, 30
      %v5046 = vpop.permute.xlu0 %5045
      %5111 = vrot.lane.b32.xlu0 %v4375, 36
      %v5112 = vpop.permute.xlu0 %5111
      %5113 = vrot.lane.b32.xlu0 %v4376, 36
      %v5114 = vpop.permute.xlu0 %5113
      %5115 = vrot.lane.b32.xlu0 %v4377, 36
      %v5116 = vpop.permute.xlu0 %5115
      %5117 = vrot.lane.b32.xlu0 %v4378, 36
      %v5118 = vpop.permute.xlu0 %5117
      %5119 = vrot.lane.b32.xlu0 %v4379, 36
      %v5120 = vpop.permute.xlu0 %5119
      %5121 = vrot.lane.b32.xlu0 %v4380, 36
      %v5122 = vpop.permute.xlu0 %5121
      %5123 = vrot.lane.b32.xlu0 %v4381, 36
      %v5124 = vpop.permute.xlu0 %5123
      %5125 = vrot.lane.b32.xlu0 %v4382, 36
      %v5126 = vpop.permute.xlu0 %5125
      %5127 = vrot.lane.b32.xlu0 %v4383, 36
      %v5128 = vpop.permute.xlu0 %5127
      %5129 = vrot.lane.b32.xlu0 %v4384, 36
      %v5130 = vpop.permute.xlu0 %5129
      %5131 = vrot.lane.b32.xlu0 %v4385, 36
      %v5132 = vpop.permute.xlu0 %5131
      %5133 = vrot.lane.b32.xlu0 %v4386, 36
      %v5134 = vpop.permute.xlu0 %5133
      %5135 = vrot.lane.b32.xlu0 %v4387, 36
      %v5136 = vpop.permute.xlu0 %5135
      %5137 = vrot.lane.b32.xlu0 %v4388, 36
      %v5138 = vpop.permute.xlu0 %5137
      %5139 = vrot.lane.b32.xlu0 %v4389, 36
      %v5140 = vpop.permute.xlu0 %5139
      %5141 = vrot.lane.b32.xlu0 %v4390, 36
      %v5142 = vpop.permute.xlu0 %5141
      %5143 = vrot.lane.b32.xlu0 %v4391, 36
      %v5144 = vpop.permute.xlu0 %5143
      %5145 = vrot.lane.b32.xlu0 %v4392, 36
      %v5146 = vpop.permute.xlu0 %5145
      %5147 = vrot.lane.b32.xlu0 %v4393, 36
      %v5148 = vpop.permute.xlu0 %5147
      %5149 = vrot.lane.b32.xlu0 %v4394, 36
      %v5150 = vpop.permute.xlu0 %5149
      %5151 = vrot.lane.b32.xlu0 %v4395, 36
      %v5152 = vpop.permute.xlu0 %5151
      %5153 = vrot.lane.b32.xlu0 %v4396, 36
      %v5154 = vpop.permute.xlu0 %5153
      %5155 = vrot.lane.b32.xlu0 %v4397, 36
      %v5156 = vpop.permute.xlu0 %5155
      %5157 = vrot.lane.b32.xlu0 %v4398, 36
      %v5158 = vpop.permute.xlu0 %5157
      %5159 = vrot.lane.b32.xlu0 %v4399, 36
      %v5160 = vpop.permute.xlu0 %5159
      %5161 = vrot.lane.b32.xlu0 %v4400, 36
      %v5162 = vpop.permute.xlu0 %5161
      %5163 = vrot.lane.b32.xlu0 %v4401, 36
      %v5164 = vpop.permute.xlu0 %5163
      %5165 = vrot.lane.b32.xlu0 %v4402, 36
      %v5166 = vpop.permute.xlu0 %5165
      %5167 = vrot.lane.b32.xlu0 %v4403, 36
      %v5168 = vpop.permute.xlu0 %5167
      %5169 = vrot.lane.b32.xlu0 %v4404, 36
      %v5170 = vpop.permute.xlu0 %5169
      %5171 = vrot.lane.b32.xlu0 %v4405, 36
      %v5172 = vpop.permute.xlu0 %5171
      %5173 = vrot.lane.b32.xlu0 %v4406, 36
      %v5174 = vpop.permute.xlu0 %5173
      %5239 = vrot.lane.b32.xlu0 %v4407, 42
      %v5240 = vpop.permute.xlu0 %5239
      %5241 = vrot.lane.b32.xlu0 %v4408, 42
      %v5242 = vpop.permute.xlu0 %5241
      %5243 = vrot.lane.b32.xlu0 %v4409, 42
      %v5244 = vpop.permute.xlu0 %5243
      %5245 = vrot.lane.b32.xlu0 %v4410, 42
      %v5246 = vpop.permute.xlu0 %5245
      %5247 = vrot.lane.b32.xlu0 %v4411, 42
      %v5248 = vpop.permute.xlu0 %5247
      %5249 = vrot.lane.b32.xlu0 %v4412, 42
      %v5250 = vpop.permute.xlu0 %5249
      %5251 = vrot.lane.b32.xlu0 %v4413, 42
      %v5252 = vpop.permute.xlu0 %5251
      %5253 = vrot.lane.b32.xlu0 %v4414, 42
      %v5254 = vpop.permute.xlu0 %5253
      %5255 = vrot.lane.b32.xlu0 %v4415, 42
      %v5256 = vpop.permute.xlu0 %5255
      %5257 = vrot.lane.b32.xlu0 %v4416, 42
      %v5258 = vpop.permute.xlu0 %5257
      %5259 = vrot.lane.b32.xlu0 %v4417, 42
      %v5260 = vpop.permute.xlu0 %5259
      %5261 = vrot.lane.b32.xlu0 %v4418, 42
      %v5262 = vpop.permute.xlu0 %5261
      %5263 = vrot.lane.b32.xlu0 %v4419, 42
      %v5264 = vpop.permute.xlu0 %5263
      %5265 = vrot.lane.b32.xlu0 %v4420, 42
      %v5266 = vpop.permute.xlu0 %5265
      %5267 = vrot.lane.b32.xlu0 %v4421, 42
      %v5268 = vpop.permute.xlu0 %5267
      %5269 = vrot.lane.b32.xlu0 %v4422, 42
      %v5270 = vpop.permute.xlu0 %5269
      %5271 = vrot.lane.b32.xlu0 %v4423, 42
      %v5272 = vpop.permute.xlu0 %5271
      %5273 = vrot.lane.b32.xlu0 %v4424, 42
      %v5274 = vpop.permute.xlu0 %5273
      %5275 = vrot.lane.b32.xlu0 %v4425, 42
      %v5276 = vpop.permute.xlu0 %5275
      %5277 = vrot.lane.b32.xlu0 %v4426, 42
      %v5278 = vpop.permute.xlu0 %5277
      %5279 = vrot.lane.b32.xlu0 %v4427, 42
      %v5280 = vpop.permute.xlu0 %5279
      %5281 = vrot.lane.b32.xlu0 %v4428, 42
      %v5282 = vpop.permute.xlu0 %5281
      %5283 = vrot.lane.b32.xlu0 %v4429, 42
      %v5284 = vpop.permute.xlu0 %5283
      %5285 = vrot.lane.b32.xlu0 %v4430, 42
      %v5286 = vpop.permute.xlu0 %5285
      %5287 = vrot.lane.b32.xlu0 %v4431, 42
      %v5288 = vpop.permute.xlu0 %5287
      %5289 = vrot.lane.b32.xlu0 %v4432, 42
      %v5290 = vpop.permute.xlu0 %5289
      %5291 = vrot.lane.b32.xlu0 %v4433, 42
      %v5292 = vpop.permute.xlu0 %5291
      %5293 = vrot.lane.b32.xlu0 %v4434, 42
      %v5294 = vpop.permute.xlu0 %5293
      %5295 = vrot.lane.b32.xlu0 %v4435, 42
      %v5296 = vpop.permute.xlu0 %5295
      %5297 = vrot.lane.b32.xlu0 %v4436, 42
      %v5298 = vpop.permute.xlu0 %5297
      %5299 = vrot.lane.b32.xlu0 %v4437, 42
      %v5300 = vpop.permute.xlu0 %5299
      %5301 = vrot.lane.b32.xlu0 %v4438, 42
      %v5302 = vpop.permute.xlu0 %5301
      %5367 = vrot.lane.b32.xlu0 %v4439, 48
      %v5368 = vpop.permute.xlu0 %5367
      %5369 = vrot.lane.b32.xlu0 %v4440, 48
      %v5370 = vpop.permute.xlu0 %5369
      %5371 = vrot.lane.b32.xlu0 %v4441, 48
      %v5372 = vpop.permute.xlu0 %5371
      %5373 = vrot.lane.b32.xlu0 %v4442, 48
      %v5374 = vpop.permute.xlu0 %5373
      %5375 = vrot.lane.b32.xlu0 %v4443, 48
      %v5376 = vpop.permute.xlu0 %5375
      %5377 = vrot.lane.b32.xlu0 %v4444, 48
      %v5378 = vpop.permute.xlu0 %5377
      %5379 = vrot.lane.b32.xlu0 %v4445, 48
      %v5380 = vpop.permute.xlu0 %5379
      %5381 = vrot.lane.b32.xlu0 %v4446, 48
      %v5382 = vpop.permute.xlu0 %5381
      %5383 = vrot.lane.b32.xlu0 %v4447, 48
      %v5384 = vpop.permute.xlu0 %5383
      %5385 = vrot.lane.b32.xlu0 %v4448, 48
      %v5386 = vpop.permute.xlu0 %5385
      %5387 = vrot.lane.b32.xlu0 %v4449, 48
      %v5388 = vpop.permute.xlu0 %5387
      %5389 = vrot.lane.b32.xlu0 %v4450, 48
      %v5390 = vpop.permute.xlu0 %5389
      %5391 = vrot.lane.b32.xlu0 %v4451, 48
      %v5392 = vpop.permute.xlu0 %5391
      %5393 = vrot.lane.b32.xlu0 %v4452, 48
      %v5394 = vpop.permute.xlu0 %5393
      %5395 = vrot.lane.b32.xlu0 %v4453, 48
      %v5396 = vpop.permute.xlu0 %5395
      %5397 = vrot.lane.b32.xlu0 %v4454, 48
      %v5398 = vpop.permute.xlu0 %5397
      %5399 = vrot.lane.b32.xlu0 %v4455, 48
      %v5400 = vpop.permute.xlu0 %5399
      %5401 = vrot.lane.b32.xlu0 %v4456, 48
      %v5402 = vpop.permute.xlu0 %5401
      %5403 = vrot.lane.b32.xlu0 %v4457, 48
      %v5404 = vpop.permute.xlu0 %5403
      %5405 = vrot.lane.b32.xlu0 %v4458, 48
      %v5406 = vpop.permute.xlu0 %5405
      %5407 = vrot.lane.b32.xlu0 %v4459, 48
      %v5408 = vpop.permute.xlu0 %5407
      %5409 = vrot.lane.b32.xlu0 %v4460, 48
      %v5410 = vpop.permute.xlu0 %5409
      %5411 = vrot.lane.b32.xlu0 %v4461, 48
      %v5412 = vpop.permute.xlu0 %5411
      %5413 = vrot.lane.b32.xlu0 %v4462, 48
      %v5414 = vpop.permute.xlu0 %5413
      %5415 = vrot.lane.b32.xlu0 %v4463, 48
      %v5416 = vpop.permute.xlu0 %5415
      %5417 = vrot.lane.b32.xlu0 %v4464, 48
      %v5418 = vpop.permute.xlu0 %5417
      %5419 = vrot.lane.b32.xlu0 %v4465, 48
      %v5420 = vpop.permute.xlu0 %5419
      %5421 = vrot.lane.b32.xlu0 %v4466, 48
      %v5422 = vpop.permute.xlu0 %5421
      %5423 = vrot.lane.b32.xlu0 %v4467, 48
      %v5424 = vpop.permute.xlu0 %5423
      %5425 = vrot.lane.b32.xlu0 %v4468, 48
      %v5426 = vpop.permute.xlu0 %5425
      %5427 = vrot.lane.b32.xlu0 %v4469, 48
      %v5428 = vpop.permute.xlu0 %5427
      %5429 = vrot.lane.b32.xlu0 %v4470, 48
      %v5430 = vpop.permute.xlu0 %5429
      %v5463 = vsel %vm3050, %v4118, %v4504
      %v5464 = vsel %vm3050, %v4119, %v4506
      %v5465 = vsel %vm3050, %v4120, %v4508
      %v5466 = vsel %vm3050, %v4121, %v4510
      %v5467 = vsel %vm3050, %v4122, %v4512
      %v5468 = vsel %vm3050, %v4123, %v4514
      %v5469 = vsel %vm3050, %v4124, %v4516
      %v5470 = vsel %vm3050, %v4125, %v4518
      %v5471 = vsel %vm3050, %v4126, %v4520
      %v5472 = vsel %vm3050, %v4127, %v4522
      %v5473 = vsel %vm3050, %v4128, %v4524
      %v5474 = vsel %vm3050, %v4129, %v4526
      %v5475 = vsel %vm3050, %v4130, %v4528
      %v5476 = vsel %vm3050, %v4131, %v4530
      %v5477 = vsel %vm3050, %v4132, %v4532
      %v5478 = vsel %vm3050, %v4133, %v4534
      %v5479 = vsel %vm3050, %v4134, %v4536
      %v5480 = vsel %vm3050, %v4135, %v4538
      %v5481 = vsel %vm3050, %v4136, %v4540
      %v5482 = vsel %vm3050, %v4137, %v4542
      %v5483 = vsel %vm3050, %v4138, %v4544
      %v5484 = vsel %vm3050, %v4139, %v4546
      %v5485 = vsel %vm3050, %v4140, %v4548
      %v5486 = vsel %vm3050, %v4141, %v4550
      %v5487 = vsel %vm3050, %v4142, %v4552
      %v5488 = vsel %vm3050, %v4143, %v4554
      %v5489 = vsel %vm3050, %v4144, %v4556
      %v5490 = vsel %vm3050, %v4145, %v4558
      %v5491 = vsel %vm3050, %v4146, %v4560
      %v5492 = vsel %vm3050, %v4147, %v4562
      %v5493 = vsel %vm3050, %v4148, %v4564
      %v5494 = vsel %vm3050, %v4149, %v4566
      %v5495 = vsel %vm3083, %v5463, %v4632
      %v5496 = vsel %vm3083, %v5464, %v4634
      %v5497 = vsel %vm3083, %v5465, %v4636
      %v5498 = vsel %vm3083, %v5466, %v4638
      %v5499 = vsel %vm3083, %v5467, %v4640
      %v5500 = vsel %vm3083, %v5468, %v4642
      %v5501 = vsel %vm3083, %v5469, %v4644
      %v5502 = vsel %vm3083, %v5470, %v4646
      %v5503 = vsel %vm3083, %v5471, %v4648
      %v5504 = vsel %vm3083, %v5472, %v4650
      %v5505 = vsel %vm3083, %v5473, %v4652
      %v5506 = vsel %vm3083, %v5474, %v4654
      %v5507 = vsel %vm3083, %v5475, %v4656
      %v5508 = vsel %vm3083, %v5476, %v4658
      %v5509 = vsel %vm3083, %v5477, %v4660
      %v5510 = vsel %vm3083, %v5478, %v4662
      %v5511 = vsel %vm3083, %v5479, %v4664
      %v5512 = vsel %vm3083, %v5480, %v4666
      %v5513 = vsel %vm3083, %v5481, %v4668
      %v5514 = vsel %vm3083, %v5482, %v4670
      %v5515 = vsel %vm3083, %v5483, %v4672
      %v5516 = vsel %vm3083, %v5484, %v4674
      %v5517 = vsel %vm3083, %v5485, %v4676
      %v5518 = vsel %vm3083, %v5486, %v4678
      %v5519 = vsel %vm3083, %v5487, %v4680
      %v5520 = vsel %vm3083, %v5488, %v4682
      %v5521 = vsel %vm3083, %v5489, %v4684
      %v5522 = vsel %vm3083, %v5490, %v4686
      %v5523 = vsel %vm3083, %v5491, %v4688
      %v5524 = vsel %vm3083, %v5492, %v4690
      %v5525 = vsel %vm3083, %v5493, %v4692
      %v5526 = vsel %vm3083, %v5494, %v4694
      %v5527 = vsel %vm3116, %v5495, %v4760
      %v5528 = vsel %vm3116, %v5496, %v4762
      %v5529 = vsel %vm3116, %v5497, %v4764
      %v5530 = vsel %vm3116, %v5498, %v4766
      %v5531 = vsel %vm3116, %v5499, %v4768
      %v5532 = vsel %vm3116, %v5500, %v4770
      %v5533 = vsel %vm3116, %v5501, %v4772
      %v5534 = vsel %vm3116, %v5502, %v4774
      %v5535 = vsel %vm3116, %v5503, %v4776
      %v5536 = vsel %vm3116, %v5504, %v4778
      %v5537 = vsel %vm3116, %v5505, %v4780
      %v5538 = vsel %vm3116, %v5506, %v4782
      %v5539 = vsel %vm3116, %v5507, %v4784
      %v5540 = vsel %vm3116, %v5508, %v4786
      %v5541 = vsel %vm3116, %v5509, %v4788
      %v5542 = vsel %vm3116, %v5510, %v4790
      %v5543 = vsel %vm3116, %v5511, %v4792
      %v5544 = vsel %vm3116, %v5512, %v4794
      %v5545 = vsel %vm3116, %v5513, %v4796
      %v5546 = vsel %vm3116, %v5514, %v4798
      %v5547 = vsel %vm3116, %v5515, %v4800
      %v5548 = vsel %vm3116, %v5516, %v4802
      %v5549 = vsel %vm3116, %v5517, %v4804
      %v5550 = vsel %vm3116, %v5518, %v4806
      %v5551 = vsel %vm3116, %v5519, %v4808
      %v5552 = vsel %vm3116, %v5520, %v4810
      %v5553 = vsel %vm3116, %v5521, %v4812
      %v5554 = vsel %vm3116, %v5522, %v4814
      %v5555 = vsel %vm3116, %v5523, %v4816
      %v5556 = vsel %vm3116, %v5524, %v4818
      %v5557 = vsel %vm3116, %v5525, %v4820
      %v5558 = vsel %vm3116, %v5526, %v4822
      %v5559 = vsel %vm3149, %v5527, %v4856
      %v5560 = vsel %vm3149, %v5528, %v4858
      %v5561 = vsel %vm3149, %v5529, %v4860
      %v5562 = vsel %vm3149, %v5530, %v4862
      %v5563 = vsel %vm3149, %v5531, %v4864
      %v5564 = vsel %vm3149, %v5532, %v4866
      %v5565 = vsel %vm3149, %v5533, %v4868
      %v5566 = vsel %vm3149, %v5534, %v4870
      %v5567 = vsel %vm3149, %v5535, %v4872
      %v5568 = vsel %vm3149, %v5536, %v4874
      %v5569 = vsel %vm3149, %v5537, %v4876
      %v5570 = vsel %vm3149, %v5538, %v4878
      %v5571 = vsel %vm3149, %v5539, %v4880
      %v5572 = vsel %vm3149, %v5540, %v4882
      %v5573 = vsel %vm3149, %v5541, %v4884
      %v5574 = vsel %vm3149, %v5542, %v4886
      %v5575 = vsel %vm3149, %v5543, %v4888
      %v5576 = vsel %vm3149, %v5544, %v4890
      %v5577 = vsel %vm3149, %v5545, %v4892
      %v5578 = vsel %vm3149, %v5546, %v4894
      %v5579 = vsel %vm3149, %v5547, %v4896
      %v5580 = vsel %vm3149, %v5548, %v4898
      %v5581 = vsel %vm3149, %v5549, %v4900
      %v5582 = vsel %vm3149, %v5550, %v4902
      %v5583 = vsel %vm3149, %v5551, %v4904
      %v5584 = vsel %vm3149, %v5552, %v4906
      %v5585 = vsel %vm3149, %v5553, %v4908
      %v5586 = vsel %vm3149, %v5554, %v4910
      %v5587 = vsel %vm3149, %v5555, %v4912
      %v5588 = vsel %vm3149, %v5556, %v4914
      %v5589 = vsel %vm3149, %v5557, %v4916
      %v5590 = vsel %vm3149, %v5558, %v4918
      %v5591 = vsel %vm3182, %v5559, %v4984
      %v5592 = vsel %vm3182, %v5560, %v4986
      %v5593 = vsel %vm3182, %v5561, %v4988
      %v5594 = vsel %vm3182, %v5562, %v4990
      %v5595 = vsel %vm3182, %v5563, %v4992
      %v5596 = vsel %vm3182, %v5564, %v4994
      %v5597 = vsel %vm3182, %v5565, %v4996
      %v5598 = vsel %vm3182, %v5566, %v4998
      %v5599 = vsel %vm3182, %v5567, %v5000
      %v5600 = vsel %vm3182, %v5568, %v5002
      %v5601 = vsel %vm3182, %v5569, %v5004
      %v5602 = vsel %vm3182, %v5570, %v5006
      %v5603 = vsel %vm3182, %v5571, %v5008
      %v5604 = vsel %vm3182, %v5572, %v5010
      %v5605 = vsel %vm3182, %v5573, %v5012
      %v5606 = vsel %vm3182, %v5574, %v5014
      %v5607 = vsel %vm3182, %v5575, %v5016
      %v5608 = vsel %vm3182, %v5576, %v5018
      %v5609 = vsel %vm3182, %v5577, %v5020
      %v5610 = vsel %vm3182, %v5578, %v5022
      %v5611 = vsel %vm3182, %v5579, %v5024
      %v5612 = vsel %vm3182, %v5580, %v5026
      %v5613 = vsel %vm3182, %v5581, %v5028
      %v5614 = vsel %vm3182, %v5582, %v5030
      %v5615 = vsel %vm3182, %v5583, %v5032
      %v5616 = vsel %vm3182, %v5584, %v5034
      %v5617 = vsel %vm3182, %v5585, %v5036
      %v5618 = vsel %vm3182, %v5586, %v5038
      %v5619 = vsel %vm3182, %v5587, %v5040
      %v5620 = vsel %vm3182, %v5588, %v5042
      %v5621 = vsel %vm3182, %v5589, %v5044
      %v5622 = vsel %vm3182, %v5590, %v5046
      %v5623 = vsel %vm3215, %v5591, %v5112
      %v5624 = vsel %vm3215, %v5592, %v5114
      %v5625 = vsel %vm3215, %v5593, %v5116
      %v5626 = vsel %vm3215, %v5594, %v5118
      %v5627 = vsel %vm3215, %v5595, %v5120
      %v5628 = vsel %vm3215, %v5596, %v5122
      %v5629 = vsel %vm3215, %v5597, %v5124
      %v5630 = vsel %vm3215, %v5598, %v5126
      %v5631 = vsel %vm3215, %v5599, %v5128
      %v5632 = vsel %vm3215, %v5600, %v5130
      %v5633 = vsel %vm3215, %v5601, %v5132
      %v5634 = vsel %vm3215, %v5602, %v5134
      %v5635 = vsel %vm3215, %v5603, %v5136
      %v5636 = vsel %vm3215, %v5604, %v5138
      %v5637 = vsel %vm3215, %v5605, %v5140
      %v5638 = vsel %vm3215, %v5606, %v5142
      %v5639 = vsel %vm3215, %v5607, %v5144
      %v5640 = vsel %vm3215, %v5608, %v5146
      %v5641 = vsel %vm3215, %v5609, %v5148
      %v5642 = vsel %vm3215, %v5610, %v5150
      %v5643 = vsel %vm3215, %v5611, %v5152
      %v5644 = vsel %vm3215, %v5612, %v5154
      %v5645 = vsel %vm3215, %v5613, %v5156
      %v5646 = vsel %vm3215, %v5614, %v5158
      %v5647 = vsel %vm3215, %v5615, %v5160
      %v5648 = vsel %vm3215, %v5616, %v5162
      %v5649 = vsel %vm3215, %v5617, %v5164
      %v5650 = vsel %vm3215, %v5618, %v5166
      %v5651 = vsel %vm3215, %v5619, %v5168
      %v5652 = vsel %vm3215, %v5620, %v5170
      %v5653 = vsel %vm3215, %v5621, %v5172
      %v5654 = vsel %vm3215, %v5622, %v5174
      %v5655 = vsel %vm3248, %v5623, %v5240
      %v5656 = vsel %vm3248, %v5624, %v5242
      %v5657 = vsel %vm3248, %v5625, %v5244
      %v5658 = vsel %vm3248, %v5626, %v5246
      %v5659 = vsel %vm3248, %v5627, %v5248
      %v5660 = vsel %vm3248, %v5628, %v5250
      %v5661 = vsel %vm3248, %v5629, %v5252
      %v5662 = vsel %vm3248, %v5630, %v5254
      %v5663 = vsel %vm3248, %v5631, %v5256
      %v5664 = vsel %vm3248, %v5632, %v5258
      %v5665 = vsel %vm3248, %v5633, %v5260
      %v5666 = vsel %vm3248, %v5634, %v5262
      %v5667 = vsel %vm3248, %v5635, %v5264
      %v5668 = vsel %vm3248, %v5636, %v5266
      %v5669 = vsel %vm3248, %v5637, %v5268
      %v5670 = vsel %vm3248, %v5638, %v5270
      %v5671 = vsel %vm3248, %v5639, %v5272
      %v5672 = vsel %vm3248, %v5640, %v5274
      %v5673 = vsel %vm3248, %v5641, %v5276
      %v5674 = vsel %vm3248, %v5642, %v5278
      %v5675 = vsel %vm3248, %v5643, %v5280
      %v5676 = vsel %vm3248, %v5644, %v5282
      %v5677 = vsel %vm3248, %v5645, %v5284
      %v5678 = vsel %vm3248, %v5646, %v5286
      %v5679 = vsel %vm3248, %v5647, %v5288
      %v5680 = vsel %vm3248, %v5648, %v5290
      %v5681 = vsel %vm3248, %v5649, %v5292
      %v5682 = vsel %vm3248, %v5650, %v5294
      %v5683 = vsel %vm3248, %v5651, %v5296
      %v5684 = vsel %vm3248, %v5652, %v5298
      %v5685 = vsel %vm3248, %v5653, %v5300
      %v5686 = vsel %vm3248, %v5654, %v5302
      %v5687 = vsel %vm3281, %v5655, %v5368
      %v5688 = vsel %vm3281, %v5656, %v5370
      %v5689 = vsel %vm3281, %v5657, %v5372
      %v5690 = vsel %vm3281, %v5658, %v5374
      %v5691 = vsel %vm3281, %v5659, %v5376
      %v5692 = vsel %vm3281, %v5660, %v5378
      %v5693 = vsel %vm3281, %v5661, %v5380
      %v5694 = vsel %vm3281, %v5662, %v5382
      %v5695 = vsel %vm3281, %v5663, %v5384
      %v5696 = vsel %vm3281, %v5664, %v5386
      %v5697 = vsel %vm3281, %v5665, %v5388
      %v5698 = vsel %vm3281, %v5666, %v5390
      %v5699 = vsel %vm3281, %v5667, %v5392
      %v5700 = vsel %vm3281, %v5668, %v5394
      %v5701 = vsel %vm3281, %v5669, %v5396
      %v5702 = vsel %vm3281, %v5670, %v5398
      %v5703 = vsel %vm3281, %v5671, %v5400
      %v5704 = vsel %vm3281, %v5672, %v5402
      %v5705 = vsel %vm3281, %v5673, %v5404
      %v5706 = vsel %vm3281, %v5674, %v5406
      %v5707 = vsel %vm3281, %v5675, %v5408
      %v5708 = vsel %vm3281, %v5676, %v5410
      %v5709 = vsel %vm3281, %v5677, %v5412
      %v5710 = vsel %vm3281, %v5678, %v5414
      %v5711 = vsel %vm3281, %v5679, %v5416
      %v5712 = vsel %vm3281, %v5680, %v5418
      %v5713 = vsel %vm3281, %v5681, %v5420
      %v5714 = vsel %vm3281, %v5682, %v5422
      %v5715 = vsel %vm3281, %v5683, %v5424
      %v5716 = vsel %vm3281, %v5684, %v5426
      %v5717 = vsel %vm3281, %v5685, %v5428
      %v5718 = vsel %vm3281, %v5686, %v5430
      %v5719 = vpack.c.bf16 %v5688, %v5687
      %v5720 = vpack.c.bf16 %v5690, %v5689
      %v5721 = vpack.c.bf16 %v5692, %v5691
      %v5722 = vpack.c.bf16 %v5694, %v5693
      %v5723 = vpack.c.bf16 %v5696, %v5695
      %v5724 = vpack.c.bf16 %v5698, %v5697
      %v5725 = vpack.c.bf16 %v5700, %v5699
      %v5726 = vpack.c.bf16 %v5702, %v5701
      %v5727 = vpack.c.bf16 %v5704, %v5703
      %v5728 = vpack.c.bf16 %v5706, %v5705
      %v5729 = vpack.c.bf16 %v5708, %v5707
      %v5730 = vpack.c.bf16 %v5710, %v5709
      %v5731 = vpack.c.bf16 %v5712, %v5711
      %v5732 = vpack.c.bf16 %v5714, %v5713
      %v5733 = vpack.c.bf16 %v5716, %v5715
      %v5734 = vpack.c.bf16 %v5718, %v5717
      %s5735 = scalar_lea.vmem %s4, 28
      %v5736 = vld [vmem:[%s5735] sm:$0xf]
      %v5737 = vld [vmem:[%s5735 + $0x4] sm:$0xf]
      %v5738 = vld [vmem:[%s5735 + $0x8] sm:$0xf]
      %v5739 = vld [vmem:[%s5735 + $0xc] sm:$0xf]
      %v5740 = vld [vmem:[%s5735 + $0x10] sm:$0xf]
      %v5741 = vld [vmem:[%s5735 + $0x14] sm:$0xf]
      %v5742 = vld [vmem:[%s5735 + $0x18] sm:$0x7]
      %v5750 = vunpack.c.l.b16 %v5736
      %v5751 = vunpack.c.l.b16 %v5737
      %v5752 = vunpack.c.l.b16 %v5738
      %v5753 = vunpack.c.l.b16 %v5739
      %v5754 = vunpack.c.l.b16 %v5740
      %v5755 = vunpack.c.l.b16 %v5741
      %v5756 = vunpack.c.l.b16 %v5742
      %v5757 = vpack.c.b16 %v5751, %v5750
      %v5758 = vpack.c.b16 %v5753, %v5752
      %v5759 = vpack.c.b16 %v5755, %v5754
      %v5760 = vpack.c.b16 %v5756, %v5756
      %v5765 = vsel %vm3358, %v5719, 0
      %v5768 = vsel %vm3358, %v5720, 0
      %v5771 = vsel %vm3358, %v5721, 0
      %v5774 = vsel %vm3358, %v5722, 0
      %v5777 = vsel %vm3358, %v5723, 0
      %v5780 = vsel %vm3358, %v5724, 0
      %v5783 = vsel %vm3358, %v5725, 0
      %v5786 = vsel %vm3358, %v5726, 0
      %v5789 = vsel %vm3358, %v5727, 0
      %v5792 = vsel %vm3358, %v5728, 0
      %v5795 = vsel %vm3358, %v5729, 0
      %v5798 = vsel %vm3358, %v5730, 0
      %v5801 = vsel %vm3358, %v5731, 0
      %v5804 = vsel %vm3358, %v5732, 0
      %v5807 = vsel %vm3358, %v5733, 0
      %v5810 = vsel %vm3358, %v5734, 0
      %v5813 = vsel %vm3407, %v5760, 0
      %5815 = vmatpush.bf16.msra.mxu0 0
      %5816 = vmatpush.bf16.msra.mxu0 0
      %5817 = vmatpush.bf16.msra.mxu0 0
      %5818 = vmatpush.bf16.msra.mxu0 0
      %5819 = vmatpush.bf16.msra.mxu0 %v5813
      %5820 = vmatpush.bf16.msra.mxu0 %v5759
      %5821 = vmatpush.bf16.msra.mxu0 %v5758
      %5822 = vmatpush.bf16.msra.mxu0 %v5757
      %5823 = vmatmul.bf16.gmra.mxu0 %v5765
      %v5824 = vpop.f32.mrf.mxu0
      %v5825 = vadd.f32 0.0, %v5824
      %v5826 = vpop.f32.mrf.mxu0
      %v5827 = vadd.f32 0.0, %v5826
      %5828 = vmatmul.bf16.gmra.mxu0 %v5768
      %v5829 = vpop.f32.mrf.mxu0
      %v5830 = vadd.f32 0.0, %v5829
      %v5831 = vpop.f32.mrf.mxu0
      %v5832 = vadd.f32 0.0, %v5831
      %5833 = vmatmul.bf16.gmra.mxu0 %v5771
      %v5834 = vpop.f32.mrf.mxu0
      %v5835 = vadd.f32 0.0, %v5834
      %v5836 = vpop.f32.mrf.mxu0
      %v5837 = vadd.f32 0.0, %v5836
      %5838 = vmatmul.bf16.gmra.mxu0 %v5774
      %v5839 = vpop.f32.mrf.mxu0
      %v5840 = vadd.f32 0.0, %v5839
      %v5841 = vpop.f32.mrf.mxu0
      %v5842 = vadd.f32 0.0, %v5841
      %5843 = vmatmul.bf16.gmra.mxu0 %v5777
      %v5844 = vpop.f32.mrf.mxu0
      %v5845 = vadd.f32 0.0, %v5844
      %v5846 = vpop.f32.mrf.mxu0
      %v5847 = vadd.f32 0.0, %v5846
      %5848 = vmatmul.bf16.gmra.mxu0 %v5780
      %v5849 = vpop.f32.mrf.mxu0
      %v5850 = vadd.f32 0.0, %v5849
      %v5851 = vpop.f32.mrf.mxu0
      %v5852 = vadd.f32 0.0, %v5851
      %5853 = vmatmul.bf16.gmra.mxu0 %v5783
      %v5854 = vpop.f32.mrf.mxu0
      %v5855 = vadd.f32 0.0, %v5854
      %v5856 = vpop.f32.mrf.mxu0
      %v5857 = vadd.f32 0.0, %v5856
      %5858 = vmatmul.bf16.gmra.mxu0 %v5786
      %v5859 = vpop.f32.mrf.mxu0
      %v5860 = vadd.f32 0.0, %v5859
      %v5861 = vpop.f32.mrf.mxu0
      %v5862 = vadd.f32 0.0, %v5861
      %5863 = vmatmul.bf16.gmra.mxu0 %v5789
      %v5864 = vpop.f32.mrf.mxu0
      %v5865 = vadd.f32 0.0, %v5864
      %v5866 = vpop.f32.mrf.mxu0
      %v5867 = vadd.f32 0.0, %v5866
      %5868 = vmatmul.bf16.gmra.mxu0 %v5792
      %v5869 = vpop.f32.mrf.mxu0
      %v5870 = vadd.f32 0.0, %v5869
      %v5871 = vpop.f32.mrf.mxu0
      %v5872 = vadd.f32 0.0, %v5871
      %5873 = vmatmul.bf16.gmra.mxu0 %v5795
      %v5874 = vpop.f32.mrf.mxu0
      %v5875 = vadd.f32 0.0, %v5874
      %v5876 = vpop.f32.mrf.mxu0
      %v5877 = vadd.f32 0.0, %v5876
      %5878 = vmatmul.bf16.gmra.mxu0 %v5798
      %v5879 = vpop.f32.mrf.mxu0
      %v5880 = vadd.f32 0.0, %v5879
      %v5881 = vpop.f32.mrf.mxu0
      %v5882 = vadd.f32 0.0, %v5881
      %5883 = vmatmul.bf16.gmra.mxu0 %v5801
      %v5884 = vpop.f32.mrf.mxu0
      %v5885 = vadd.f32 0.0, %v5884
      %v5886 = vpop.f32.mrf.mxu0
      %v5887 = vadd.f32 0.0, %v5886
      %5888 = vmatmul.bf16.gmra.mxu0 %v5804
      %v5889 = vpop.f32.mrf.mxu0
      %v5890 = vadd.f32 0.0, %v5889
      %v5891 = vpop.f32.mrf.mxu0
      %v5892 = vadd.f32 0.0, %v5891
      %5893 = vmatmul.bf16.gmra.mxu0 %v5807
      %v5894 = vpop.f32.mrf.mxu0
      %v5895 = vadd.f32 0.0, %v5894
      %v5896 = vpop.f32.mrf.mxu0
      %v5897 = vadd.f32 0.0, %v5896
      %5898 = vmatmul.bf16.gmra.mxu0 %v5810
      %v5899 = vpop.f32.mrf.mxu0
      %v5900 = vadd.f32 0.0, %v5899
      %v5901 = vpop.f32.mrf.mxu0
      %v5902 = vadd.f32 0.0, %v5901
      %5903 = vdwg.mxu0
      %v5904 = vsel %vm3050, %v5825, 0.0
      %v5905 = vsel %vm3050, %v5827, 0.0
      %v5906 = vadd.f32 %v5904, %v5905
      %v5907 = vsel %vm3050, %v5830, 0.0
      %v5908 = vadd.f32 %v5906, %v5907
      %v5909 = vsel %vm3050, %v5832, 0.0
      %v5910 = vadd.f32 %v5908, %v5909
      %v5911 = vsel %vm3050, %v5835, 0.0
      %v5912 = vadd.f32 %v5910, %v5911
      %v5913 = vsel %vm3050, %v5837, 0.0
      %v5914 = vadd.f32 %v5912, %v5913
      %v5915 = vsel %vm3050, %v5840, 0.0
      %v5916 = vadd.f32 %v5914, %v5915
      %v5917 = vsel %vm3050, %v5842, 0.0
      %v5918 = vadd.f32 %v5916, %v5917
      %v5919 = vsel %vm3050, %v5845, 0.0
      %v5920 = vadd.f32 %v5918, %v5919
      %v5921 = vsel %vm3050, %v5847, 0.0
      %v5922 = vadd.f32 %v5920, %v5921
      %v5923 = vsel %vm3050, %v5850, 0.0
      %v5924 = vadd.f32 %v5922, %v5923
      %v5925 = vsel %vm3050, %v5852, 0.0
      %v5926 = vadd.f32 %v5924, %v5925
      %v5927 = vsel %vm3050, %v5855, 0.0
      %v5928 = vadd.f32 %v5926, %v5927
      %v5929 = vsel %vm3050, %v5857, 0.0
      %v5930 = vadd.f32 %v5928, %v5929
      %v5931 = vsel %vm3050, %v5860, 0.0
      %v5932 = vadd.f32 %v5930, %v5931
      %v5933 = vsel %vm3050, %v5862, 0.0
      %v5934 = vadd.f32 %v5932, %v5933
      %v5935 = vsel %vm3050, %v5865, 0.0
      %v5936 = vadd.f32 %v5934, %v5935
      %v5937 = vsel %vm3050, %v5867, 0.0
      %v5938 = vadd.f32 %v5936, %v5937
      %v5939 = vsel %vm3050, %v5870, 0.0
      %v5940 = vadd.f32 %v5938, %v5939
      %v5941 = vsel %vm3050, %v5872, 0.0
      %v5942 = vadd.f32 %v5940, %v5941
      %v5943 = vsel %vm3050, %v5875, 0.0
      %v5944 = vadd.f32 %v5942, %v5943
      %v5945 = vsel %vm3050, %v5877, 0.0
      %v5946 = vadd.f32 %v5944, %v5945
      %v5947 = vsel %vm3050, %v5880, 0.0
      %v5948 = vadd.f32 %v5946, %v5947
      %v5949 = vsel %vm3050, %v5882, 0.0
      %v5950 = vadd.f32 %v5948, %v5949
      %v5951 = vsel %vm3050, %v5885, 0.0
      %v5952 = vadd.f32 %v5950, %v5951
      %v5953 = vsel %vm3050, %v5887, 0.0
      %v5954 = vadd.f32 %v5952, %v5953
      %v5955 = vsel %vm3050, %v5890, 0.0
      %v5956 = vadd.f32 %v5954, %v5955
      %v5957 = vsel %vm3050, %v5892, 0.0
      %v5958 = vadd.f32 %v5956, %v5957
      %v5959 = vsel %vm3050, %v5895, 0.0
      %v5960 = vadd.f32 %v5958, %v5959
      %v5961 = vsel %vm3050, %v5897, 0.0
      %v5962 = vadd.f32 %v5960, %v5961
      %v5963 = vsel %vm3050, %v5900, 0.0
      %v5964 = vadd.f32 %v5962, %v5963
      %v5965 = vsel %vm3050, %v5902, 0.0
      %v5966 = vadd.f32 %v5964, %v5965
      %v5967 = vrot.slane %v5966, 4
      %v5968 = vadd.f32 %v5966, %v5967
      %v5969 = vrot.slane %v5968, 2
      %v5970 = vadd.f32 %v5968, %v5969
      %v5971 = vrot.slane %v5970, 1
      %v5972 = vadd.f32 %v5970, %v5971
      %v5973 = vmul.f32 %v5825, %v5825
      %v5974 = vmul.f32 %v5827, %v5827
      %v5975 = vmul.f32 %v5830, %v5830
      %v5976 = vmul.f32 %v5832, %v5832
      %v5977 = vmul.f32 %v5835, %v5835
      %v5978 = vmul.f32 %v5837, %v5837
      %v5979 = vmul.f32 %v5840, %v5840
      %v5980 = vmul.f32 %v5842, %v5842
      %v5981 = vmul.f32 %v5845, %v5845
      %v5982 = vmul.f32 %v5847, %v5847
      %v5983 = vmul.f32 %v5850, %v5850
      %v5984 = vmul.f32 %v5852, %v5852
      %v5985 = vmul.f32 %v5855, %v5855
      %v5986 = vmul.f32 %v5857, %v5857
      %v5987 = vmul.f32 %v5860, %v5860
      %v5988 = vmul.f32 %v5862, %v5862
      %v5989 = vmul.f32 %v5865, %v5865
      %v5990 = vmul.f32 %v5867, %v5867
      %v5991 = vmul.f32 %v5870, %v5870
      %v5992 = vmul.f32 %v5872, %v5872
      %v5993 = vmul.f32 %v5875, %v5875
      %v5994 = vmul.f32 %v5877, %v5877
      %v5995 = vmul.f32 %v5880, %v5880
      %v5996 = vmul.f32 %v5882, %v5882
      %v5997 = vmul.f32 %v5885, %v5885
      %v5998 = vmul.f32 %v5887, %v5887
      %v5999 = vmul.f32 %v5890, %v5890
      %v6000 = vmul.f32 %v5892, %v5892
      %v6001 = vmul.f32 %v5895, %v5895
      %v6002 = vmul.f32 %v5897, %v5897
      %v6003 = vmul.f32 %v5900, %v5900
      %v6004 = vmul.f32 %v5902, %v5902
      %v6005 = vsel %vm3050, %v5973, 0.0
      %v6006 = vsel %vm3050, %v5974, 0.0
      %v6007 = vadd.f32 %v6005, %v6006
      %v6008 = vsel %vm3050, %v5975, 0.0
      %v6009 = vadd.f32 %v6007, %v6008
      %v6010 = vsel %vm3050, %v5976, 0.0
      %v6011 = vadd.f32 %v6009, %v6010
      %v6012 = vsel %vm3050, %v5977, 0.0
      %v6013 = vadd.f32 %v6011, %v6012
      %v6014 = vsel %vm3050, %v5978, 0.0
      %v6015 = vadd.f32 %v6013, %v6014
      %v6016 = vsel %vm3050, %v5979, 0.0
      %v6017 = vadd.f32 %v6015, %v6016
      %v6018 = vsel %vm3050, %v5980, 0.0
      %v6019 = vadd.f32 %v6017, %v6018
      %v6020 = vsel %vm3050, %v5981, 0.0
      %v6021 = vadd.f32 %v6019, %v6020
      %v6022 = vsel %vm3050, %v5982, 0.0
      %v6023 = vadd.f32 %v6021, %v6022
      %v6024 = vsel %vm3050, %v5983, 0.0
      %v6025 = vadd.f32 %v6023, %v6024
      %v6026 = vsel %vm3050, %v5984, 0.0
      %v6027 = vadd.f32 %v6025, %v6026
      %v6028 = vsel %vm3050, %v5985, 0.0
      %v6029 = vadd.f32 %v6027, %v6028
      %v6030 = vsel %vm3050, %v5986, 0.0
      %v6031 = vadd.f32 %v6029, %v6030
      %v6032 = vsel %vm3050, %v5987, 0.0
      %v6033 = vadd.f32 %v6031, %v6032
      %v6034 = vsel %vm3050, %v5988, 0.0
      %v6035 = vadd.f32 %v6033, %v6034
      %v6036 = vsel %vm3050, %v5989, 0.0
      %v6037 = vadd.f32 %v6035, %v6036
      %v6038 = vsel %vm3050, %v5990, 0.0
      %v6039 = vadd.f32 %v6037, %v6038
      %v6040 = vsel %vm3050, %v5991, 0.0
      %v6041 = vadd.f32 %v6039, %v6040
      %v6042 = vsel %vm3050, %v5992, 0.0
      %v6043 = vadd.f32 %v6041, %v6042
      %v6044 = vsel %vm3050, %v5993, 0.0
      %v6045 = vadd.f32 %v6043, %v6044
      %v6046 = vsel %vm3050, %v5994, 0.0
      %v6047 = vadd.f32 %v6045, %v6046
      %v6048 = vsel %vm3050, %v5995, 0.0
      %v6049 = vadd.f32 %v6047, %v6048
      %v6050 = vsel %vm3050, %v5996, 0.0
      %v6051 = vadd.f32 %v6049, %v6050
      %v6052 = vsel %vm3050, %v5997, 0.0
      %v6053 = vadd.f32 %v6051, %v6052
      %v6054 = vsel %vm3050, %v5998, 0.0
      %v6055 = vadd.f32 %v6053, %v6054
      %v6056 = vsel %vm3050, %v5999, 0.0
      %v6057 = vadd.f32 %v6055, %v6056
      %v6058 = vsel %vm3050, %v6000, 0.0
      %v6059 = vadd.f32 %v6057, %v6058
      %v6060 = vsel %vm3050, %v6001, 0.0
      %v6061 = vadd.f32 %v6059, %v6060
      %v6062 = vsel %vm3050, %v6002, 0.0
      %v6063 = vadd.f32 %v6061, %v6062
      %v6064 = vsel %vm3050, %v6003, 0.0
      %v6065 = vadd.f32 %v6063, %v6064
      %v6066 = vsel %vm3050, %v6004, 0.0
      %v6067 = vadd.f32 %v6065, %v6066
      %v6068 = vrot.slane %v6067, 4
      %v6069 = vadd.f32 %v6067, %v6068
      %v6070 = vrot.slane %v6069, 2
      %v6071 = vadd.f32 %v6069, %v6070
      %v6072 = vrot.slane %v6071, 1
      %v6073 = vadd.f32 %v6071, %v6072
      %v6074 = vmul.f32 %v5972, %v3676
      %vm6075 = vcmask 146528
      %v6076 = vsel %vm6075, %v454, 0.0
      %v6077 = vsel %vm6075, %v455, 0.0
      %v6078 = vadd.f32 %v6076, %v6077
      %v6079 = vsel %vm6075, %v456, 0.0
      %v6080 = vadd.f32 %v6078, %v6079
      %v6081 = vsel %vm6075, %v457, 0.0
      %v6082 = vadd.f32 %v6080, %v6081
      %v6083 = vsel %vm6075, %v458, 0.0
      %v6084 = vadd.f32 %v6082, %v6083
      %v6085 = vsel %vm6075, %v459, 0.0
      %v6086 = vadd.f32 %v6084, %v6085
      %v6087 = vsel %vm6075, %v460, 0.0
      %v6088 = vadd.f32 %v6086, %v6087
      %v6089 = vsel %vm6075, %v461, 0.0
      %v6090 = vadd.f32 %v6088, %v6089
      %v6091 = vsel %vm6075, %v462, 0.0
      %v6092 = vadd.f32 %v6090, %v6091
      %v6093 = vsel %vm6075, %v463, 0.0
      %v6094 = vadd.f32 %v6092, %v6093
      %v6095 = vsel %vm6075, %v464, 0.0
      %v6096 = vadd.f32 %v6094, %v6095
      %v6097 = vsel %vm6075, %v465, 0.0
      %v6098 = vadd.f32 %v6096, %v6097
      %v6099 = vsel %vm6075, %v466, 0.0
      %v6100 = vadd.f32 %v6098, %v6099
      %v6101 = vsel %vm6075, %v467, 0.0
      %v6102 = vadd.f32 %v6100, %v6101
      %v6103 = vsel %vm6075, %v468, 0.0
      %v6104 = vadd.f32 %v6102, %v6103
      %v6105 = vsel %vm6075, %v469, 0.0
      %v6106 = vadd.f32 %v6104, %v6105
      %v6107 = vsel %vm6075, %v470, 0.0
      %v6108 = vadd.f32 %v6106, %v6107
      %v6109 = vsel %vm6075, %v471, 0.0
      %v6110 = vadd.f32 %v6108, %v6109
      %v6111 = vsel %vm6075, %v472, 0.0
      %v6112 = vadd.f32 %v6110, %v6111
      %v6113 = vsel %vm6075, %v473, 0.0
      %v6114 = vadd.f32 %v6112, %v6113
      %v6115 = vsel %vm6075, %v474, 0.0
      %v6116 = vadd.f32 %v6114, %v6115
      %v6117 = vsel %vm6075, %v475, 0.0
      %v6118 = vadd.f32 %v6116, %v6117
      %v6119 = vsel %vm6075, %v476, 0.0
      %v6120 = vadd.f32 %v6118, %v6119
      %v6121 = vsel %vm6075, %v477, 0.0
      %v6122 = vadd.f32 %v6120, %v6121
      %v6123 = vsel %vm6075, %v478, 0.0
      %v6124 = vadd.f32 %v6122, %v6123
      %v6125 = vsel %vm6075, %v479, 0.0
      %v6126 = vadd.f32 %v6124, %v6125
      %v6127 = vsel %vm6075, %v480, 0.0
      %v6128 = vadd.f32 %v6126, %v6127
      %v6129 = vsel %vm6075, %v481, 0.0
      %v6130 = vadd.f32 %v6128, %v6129
      %v6131 = vsel %vm6075, %v482, 0.0
      %v6132 = vadd.f32 %v6130, %v6131
      %v6133 = vsel %vm6075, %v483, 0.0
      %v6134 = vadd.f32 %v6132, %v6133
      %v6135 = vsel %vm6075, %v484, 0.0
      %v6136 = vadd.f32 %v6134, %v6135
      %v6137 = vsel %vm6075, %v485, 0.0
      %v6138 = vadd.f32 %v6136, %v6137
      %v6139 = vrot.slane %v6138, 4
      %v6140 = vadd.f32 %v6138, %v6139
      %v6141 = vrot.slane %v6140, 2
      %v6142 = vadd.f32 %v6140, %v6141
      %v6143 = vrot.slane %v6142, 1
      %v6144 = vadd.f32 %v6142, %v6143
      %v6145 = vmul.f32 %v6144, %v3676
      %6147 = vrot.lane.b32.xlu0 %v6145, 122
      %v6148 = vpop.permute.xlu0 %6147
      %v6150 = vsel %vm3050, %v6074, %v6148
      %s6151 = scalar_lea.vmem %s5, 16
      %v6152 = vld [vmem:[%s6151] sm:$0xff]
      %v6153 = vld [vmem:[%s6151 + $0x8] sm:$0xf]
      %v6155 = vsel %vm3083, %v6150, 0
      %v6158 = vsel %vm3755, %v6153, 0
      %6160 = vmatpush.msra.mxu0 0.0
      %6161 = vmatpush.msra.mxu0 0.0
      %6162 = vmatpush.msra.mxu0 0.0
      %6163 = vmatpush.msra.mxu0 0.0
      %6164 = vmatpush.msra.mxu0 0.0
      %6165 = vmatpush.msra.mxu0 0.0
      %6166 = vmatpush.msra.mxu0 0.0
      %6167 = vmatpush.msra.mxu0 0.0
      %6168 = vmatpush.msra.mxu0 0.0
      %6169 = vmatpush.msra.mxu0 0.0
      %6170 = vmatpush.msra.mxu0 0.0
      %6171 = vmatpush.msra.mxu0 0.0
      %6172 = vmatpush.msra.mxu0 0.0
      %6173 = vmatpush.msra.mxu0 0.0
      %6174 = vmatpush.msra.mxu0 %v6158
      %6175 = vmatpush.msra.mxu0 %v6152
      %6176 = vmatmul.f32.gmra.mxu0 %v6155
      %v6177 = vpop.f32.mrf.mxu0
      %v6178 = vadd.f32 0.0, %v6177
      %6179 = vdwg.mxu0
      %v6180 = vmax.f32 %v6178, 0.0
      %s6181 = scalar_lea.vmem %s6, 2
      %v6182 = vld [vmem:[%s6181] sm:$0x3]
      %v6184 = vsel %vm3781, %v6180, 0
      %v6187 = vsel %vm3785, %v6182, 0
      %6189 = vmatpush.msra.mxu0 0.0
      %6190 = vmatpush.msra.mxu0 0.0
      %6191 = vmatpush.msra.mxu0 0.0
      %6192 = vmatpush.msra.mxu0 0.0
      %6193 = vmatpush.msra.mxu0 0.0
      %6194 = vmatpush.msra.mxu0 0.0
      %6195 = vmatpush.msra.mxu0 0.0
      %6196 = vmatpush.msra.mxu0 0.0
      %6197 = vmatpush.msra.mxu0 0.0
      %6198 = vmatpush.msra.mxu0 0.0
      %6199 = vmatpush.msra.mxu0 0.0
      %6200 = vmatpush.msra.mxu0 0.0
      %6201 = vmatpush.msra.mxu0 0.0
      %6202 = vmatpush.msra.mxu0 0.0
      %6203 = vmatpush.msra.mxu0 0.0
      %6204 = vmatpush.msra.mxu0 %v6187
      %6205 = vmatmul.f32.gmra.mxu0 %v6184
      %v6206 = vpop.f32.mrf.mxu0
      %v6207 = vadd.f32 0.0, %v6206
      %6208 = vdwg.mxu0
      %v6209 = vxor.u32 %v6207, 2147483648
      %v6210 = vmul.f32 %v6209, 1.442695
      %v6211 = vpow.pop %v6210
      %v6212 = vadd.f32 %v6211, 1.0
      %v6213 = vrcp.pop %v6212
      %v6214 = vmul.f32 %v6212, %v6213
      %v6215 = vsub.f32 1.0, %v6214
      %v6216 = vmul.f32 %v6213, %v6215
      %v6217 = vadd.f32 %v6213, %v6216
      %vm6218 = vweird.f32 %v6212
      %vm6219 = vweird.f32 %v6213
      %vm6220 = vmor %vm6218, %vm6219
      %v6221 = vsel %vm6220, %v6213, %v6217
      %v6222 = vand.u32 2147483647, %v6212
      %vm6223 = vcmp.eq.f32.partialorder %v6222, 8.507059e+37
      %v6224 = vand.u32 %v6212, 2147483648
      %v6225 = vor.u32 1.1754944e-38, %v6224
      %v6226 = vsel %vm6223, %v6225, %v6221
      %v6227 = vmul.f32 1.0, %v6226
      %v6228 = vperm.slane %v6227, 0
      %v6229 = vmul.f32 %v5825, %v6228
      %v6230 = vmul.f32 %v5827, %v6228
      %v6231 = vmul.f32 %v5830, %v6228
      %v6232 = vmul.f32 %v5832, %v6228
      %v6233 = vmul.f32 %v5835, %v6228
      %v6234 = vmul.f32 %v5837, %v6228
      %v6235 = vmul.f32 %v5840, %v6228
      %v6236 = vmul.f32 %v5842, %v6228
      %v6237 = vmul.f32 %v5845, %v6228
      %v6238 = vmul.f32 %v5847, %v6228
      %v6239 = vmul.f32 %v5850, %v6228
      %v6240 = vmul.f32 %v5852, %v6228
      %v6241 = vmul.f32 %v5855, %v6228
      %v6242 = vmul.f32 %v5857, %v6228
      %v6243 = vmul.f32 %v5860, %v6228
      %v6244 = vmul.f32 %v5862, %v6228
      %v6245 = vmul.f32 %v5865, %v6228
      %v6246 = vmul.f32 %v5867, %v6228
      %v6247 = vmul.f32 %v5870, %v6228
      %v6248 = vmul.f32 %v5872, %v6228
      %v6249 = vmul.f32 %v5875, %v6228
      %v6250 = vmul.f32 %v5877, %v6228
      %v6251 = vmul.f32 %v5880, %v6228
      %v6252 = vmul.f32 %v5882, %v6228
      %v6253 = vmul.f32 %v5885, %v6228
      %v6254 = vmul.f32 %v5887, %v6228
      %v6255 = vmul.f32 %v5890, %v6228
      %v6256 = vmul.f32 %v5892, %v6228
      %v6257 = vmul.f32 %v5895, %v6228
      %v6258 = vmul.f32 %v5897, %v6228
      %v6259 = vmul.f32 %v5900, %v6228
      %v6260 = vmul.f32 %v5902, %v6228
      %6261 = vrot.lane.b32.xlu0 %v454, 116
      %v6262 = vpop.permute.xlu0 %6261
      %6263 = vrot.lane.b32.xlu0 %v455, 116
      %v6264 = vpop.permute.xlu0 %6263
      %6265 = vrot.lane.b32.xlu0 %v456, 116
      %v6266 = vpop.permute.xlu0 %6265
      %6267 = vrot.lane.b32.xlu0 %v457, 116
      %v6268 = vpop.permute.xlu0 %6267
      %6269 = vrot.lane.b32.xlu0 %v458, 116
      %v6270 = vpop.permute.xlu0 %6269
      %6271 = vrot.lane.b32.xlu0 %v459, 116
      %v6272 = vpop.permute.xlu0 %6271
      %6273 = vrot.lane.b32.xlu0 %v460, 116
      %v6274 = vpop.permute.xlu0 %6273
      %6275 = vrot.lane.b32.xlu0 %v461, 116
      %v6276 = vpop.permute.xlu0 %6275
      %6277 = vrot.lane.b32.xlu0 %v462, 116
      %v6278 = vpop.permute.xlu0 %6277
      %6279 = vrot.lane.b32.xlu0 %v463, 116
      %v6280 = vpop.permute.xlu0 %6279
      %6281 = vrot.lane.b32.xlu0 %v464, 116
      %v6282 = vpop.permute.xlu0 %6281
      %6283 = vrot.lane.b32.xlu0 %v465, 116
      %v6284 = vpop.permute.xlu0 %6283
      %6285 = vrot.lane.b32.xlu0 %v466, 116
      %v6286 = vpop.permute.xlu0 %6285
      %6287 = vrot.lane.b32.xlu0 %v467, 116
      %v6288 = vpop.permute.xlu0 %6287
      %6289 = vrot.lane.b32.xlu0 %v468, 116
      %v6290 = vpop.permute.xlu0 %6289
      %6291 = vrot.lane.b32.xlu0 %v469, 116
      %v6292 = vpop.permute.xlu0 %6291
      %6293 = vrot.lane.b32.xlu0 %v470, 116
      %v6294 = vpop.permute.xlu0 %6293
      %6295 = vrot.lane.b32.xlu0 %v471, 116
      %v6296 = vpop.permute.xlu0 %6295
      %6297 = vrot.lane.b32.xlu0 %v472, 116
      %v6298 = vpop.permute.xlu0 %6297
      %6299 = vrot.lane.b32.xlu0 %v473, 116
      %v6300 = vpop.permute.xlu0 %6299
      %6301 = vrot.lane.b32.xlu0 %v474, 116
      %v6302 = vpop.permute.xlu0 %6301
      %6303 = vrot.lane.b32.xlu0 %v475, 116
      %v6304 = vpop.permute.xlu0 %6303
      %6305 = vrot.lane.b32.xlu0 %v476, 116
      %v6306 = vpop.permute.xlu0 %6305
      %6307 = vrot.lane.b32.xlu0 %v477, 116
      %v6308 = vpop.permute.xlu0 %6307
      %6309 = vrot.lane.b32.xlu0 %v478, 116
      %v6310 = vpop.permute.xlu0 %6309
      %6311 = vrot.lane.b32.xlu0 %v479, 116
      %v6312 = vpop.permute.xlu0 %6311
      %6313 = vrot.lane.b32.xlu0 %v480, 116
      %v6314 = vpop.permute.xlu0 %6313
      %6315 = vrot.lane.b32.xlu0 %v481, 116
      %v6316 = vpop.permute.xlu0 %6315
      %6317 = vrot.lane.b32.xlu0 %v482, 116
      %v6318 = vpop.permute.xlu0 %6317
      %6319 = vrot.lane.b32.xlu0 %v483, 116
      %v6320 = vpop.permute.xlu0 %6319
      %6321 = vrot.lane.b32.xlu0 %v484, 116
      %v6322 = vpop.permute.xlu0 %6321
      %6323 = vrot.lane.b32.xlu0 %v485, 116
      %v6324 = vpop.permute.xlu0 %6323
      %v6357 = vadd.f32 %v6229, %v6262
      %v6358 = vadd.f32 %v6230, %v6264
      %v6359 = vadd.f32 %v6231, %v6266
      %v6360 = vadd.f32 %v6232, %v6268
      %v6361 = vadd.f32 %v6233, %v6270
      %v6362 = vadd.f32 %v6234, %v6272
      %v6363 = vadd.f32 %v6235, %v6274
      %v6364 = vadd.f32 %v6236, %v6276
      %v6365 = vadd.f32 %v6237, %v6278
      %v6366 = vadd.f32 %v6238, %v6280
      %v6367 = vadd.f32 %v6239, %v6282
      %v6368 = vadd.f32 %v6240, %v6284
      %v6369 = vadd.f32 %v6241, %v6286
      %v6370 = vadd.f32 %v6242, %v6288
      %v6371 = vadd.f32 %v6243, %v6290
      %v6372 = vadd.f32 %v6244, %v6292
      %v6373 = vadd.f32 %v6245, %v6294
      %v6374 = vadd.f32 %v6246, %v6296
      %v6375 = vadd.f32 %v6247, %v6298
      %v6376 = vadd.f32 %v6248, %v6300
      %v6377 = vadd.f32 %v6249, %v6302
      %v6378 = vadd.f32 %v6250, %v6304
      %v6379 = vadd.f32 %v6251, %v6306
      %v6380 = vadd.f32 %v6252, %v6308
      %v6381 = vadd.f32 %v6253, %v6310
      %v6382 = vadd.f32 %v6254, %v6312
      %v6383 = vadd.f32 %v6255, %v6314
      %v6384 = vadd.f32 %v6256, %v6316
      %v6385 = vadd.f32 %v6257, %v6318
      %v6386 = vadd.f32 %v6258, %v6320
      %v6387 = vadd.f32 %v6259, %v6322
      %v6388 = vadd.f32 %v6260, %v6324
      %v6392 = vrot.slane %v6386, 7
      %v6393 = vrot.slane %v6387, 7
      %v6394 = vsel %vm521, %v6392, %v6393
      %v6395 = vrot.slane %v6388, 7
      %v6396 = vsel %vm521, %v6393, %v6395
      %v6429 = vrot.slane %v6357, 7
      %v6430 = vrot.slane %v6358, 7
      %v6431 = vsel %vm521, %v6429, %v6430
      %v6432 = vrot.slane %v6359, 7
      %v6433 = vsel %vm521, %v6430, %v6432
      %v6434 = vrot.slane %v6360, 7
      %v6435 = vsel %vm521, %v6432, %v6434
      %v6436 = vrot.slane %v6361, 7
      %v6437 = vsel %vm521, %v6434, %v6436
      %v6438 = vrot.slane %v6362, 7
      %v6439 = vsel %vm521, %v6436, %v6438
      %v6440 = vrot.slane %v6363, 7
      %v6441 = vsel %vm521, %v6438, %v6440
      %v6442 = vrot.slane %v6364, 7
      %v6443 = vsel %vm521, %v6440, %v6442
      %v6444 = vrot.slane %v6365, 7
      %v6445 = vsel %vm521, %v6442, %v6444
      %v6446 = vrot.slane %v6366, 7
      %v6447 = vsel %vm521, %v6444, %v6446
      %v6448 = vrot.slane %v6367, 7
      %v6449 = vsel %vm521, %v6446, %v6448
      %v6450 = vrot.slane %v6368, 7
      %v6451 = vsel %vm521, %v6448, %v6450
      %v6452 = vrot.slane %v6369, 7
      %v6453 = vsel %vm521, %v6450, %v6452
      %v6454 = vrot.slane %v6370, 7
      %v6455 = vsel %vm521, %v6452, %v6454
      %v6456 = vrot.slane %v6371, 7
      %v6457 = vsel %vm521, %v6454, %v6456
      %v6458 = vrot.slane %v6372, 7
      %v6459 = vsel %vm521, %v6456, %v6458
      %v6460 = vrot.slane %v6373, 7
      %v6461 = vsel %vm521, %v6458, %v6460
      %v6462 = vrot.slane %v6374, 7
      %v6463 = vsel %vm521, %v6460, %v6462
      %v6464 = vrot.slane %v6375, 7
      %v6465 = vsel %vm521, %v6462, %v6464
      %v6466 = vrot.slane %v6376, 7
      %v6467 = vsel %vm521, %v6464, %v6466
      %v6468 = vrot.slane %v6377, 7
      %v6469 = vsel %vm521, %v6466, %v6468
      %v6470 = vrot.slane %v6378, 7
      %v6471 = vsel %vm521, %v6468, %v6470
      %v6472 = vrot.slane %v6379, 7
      %v6473 = vsel %vm521, %v6470, %v6472
      %v6474 = vrot.slane %v6380, 7
      %v6475 = vsel %vm521, %v6472, %v6474
      %v6476 = vrot.slane %v6381, 7
      %v6477 = vsel %vm521, %v6474, %v6476
      %v6478 = vrot.slane %v6382, 7
      %v6479 = vsel %vm521, %v6476, %v6478
      %v6480 = vrot.slane %v6383, 7
      %v6481 = vsel %vm521, %v6478, %v6480
      %v6482 = vrot.slane %v6384, 7
      %v6483 = vsel %vm521, %v6480, %v6482
      %v6484 = vrot.slane %v6385, 7
      %v6485 = vsel %vm521, %v6482, %v6484
      %v6486 = vsel %vm521, %v6484, %v6392
      %v6517 = vsel %vm521, %v6395, %v6429
      %v6518 = vmul.f32 %v6394, %v651
      %v6519 = vmul.f32 %v6396, %v656
      %v6520 = vmul.f32 %v6517, %v661
      %v6521 = vmul.f32 %v6431, %v666
      %v6522 = vmul.f32 %v6433, %v671
      %v6523 = vmul.f32 %v6435, %v676
      %v6524 = vmul.f32 %v6437, %v681
      %v6525 = vmul.f32 %v6439, %v686
      %v6526 = vmul.f32 %v6441, %v691
      %v6527 = vmul.f32 %v6443, %v696
      %v6528 = vmul.f32 %v6445, %v701
      %v6529 = vmul.f32 %v6447, %v706
      %v6530 = vmul.f32 %v6449, %v711
      %v6531 = vmul.f32 %v6451, %v716
      %v6532 = vmul.f32 %v6453, %v721
      %v6533 = vmul.f32 %v6455, %v726
      %v6534 = vmul.f32 %v6457, %v731
      %v6535 = vmul.f32 %v6459, %v736
      %v6536 = vmul.f32 %v6461, %v741
      %v6537 = vmul.f32 %v6463, %v746
      %v6538 = vmul.f32 %v6465, %v751
      %v6539 = vmul.f32 %v6467, %v756
      %v6540 = vmul.f32 %v6469, %v761
      %v6541 = vmul.f32 %v6471, %v766
      %v6542 = vmul.f32 %v6473, %v771
      %v6543 = vmul.f32 %v6475, %v776
      %v6544 = vmul.f32 %v6477, %v781
      %v6545 = vmul.f32 %v6479, %v786
      %v6546 = vmul.f32 %v6481, %v791
      %v6547 = vmul.f32 %v6483, %v796
      %v6548 = vmul.f32 %v6485, %v801
      %v6549 = vmul.f32 %v6486, %v806
      %v6550 = vmul.f32 %v6387, %v842
      %v6551 = vmul.f32 %v6388, %v846
      %v6552 = vmul.f32 %v6357, %v850
      %v6553 = vmul.f32 %v6358, %v854
      %v6554 = vmul.f32 %v6359, %v858
      %v6555 = vmul.f32 %v6360, %v862
      %v6556 = vmul.f32 %v6361, %v866
      %v6557 = vmul.f32 %v6362, %v870
      %v6558 = vmul.f32 %v6363, %v874
      %v6559 = vmul.f32 %v6364, %v878
      %v6560 = vmul.f32 %v6365, %v882
      %v6561 = vmul.f32 %v6366, %v886
      %v6562 = vmul.f32 %v6367, %v890
      %v6563 = vmul.f32 %v6368, %v894
      %v6564 = vmul.f32 %v6369, %v898
      %v6565 = vmul.f32 %v6370, %v902
      %v6566 = vmul.f32 %v6371, %v906
      %v6567 = vmul.f32 %v6372, %v910
      %v6568 = vmul.f32 %v6373, %v914
      %v6569 = vmul.f32 %v6374, %v918
      %v6570 = vmul.f32 %v6375, %v922
      %v6571 = vmul.f32 %v6376, %v926
      %v6572 = vmul.f32 %v6377, %v930
      %v6573 = vmul.f32 %v6378, %v934
      %v6574 = vmul.f32 %v6379, %v938
      %v6575 = vmul.f32 %v6380, %v942
      %v6576 = vmul.f32 %v6381, %v946
      %v6577 = vmul.f32 %v6382, %v950
      %v6578 = vmul.f32 %v6383, %v954
      %v6579 = vmul.f32 %v6384, %v958
      %v6580 = vmul.f32 %v6385, %v962
      %v6581 = vmul.f32 %v6386, %v966
      %v6582 = vrot.slane %v6387, 1
      %v6583 = vrot.slane %v6388, 1
      %v6584 = vsel %vm1000, %v6582, %v6583
      %v6587 = vrot.slane %v6357, 1
      %v6588 = vrot.slane %v6358, 1
      %v6589 = vsel %vm1000, %v6587, %v6588
      %v6590 = vrot.slane %v6359, 1
      %v6591 = vsel %vm1000, %v6588, %v6590
      %v6592 = vrot.slane %v6360, 1
      %v6593 = vsel %vm1000, %v6590, %v6592
      %v6594 = vrot.slane %v6361, 1
      %v6595 = vsel %vm1000, %v6592, %v6594
      %v6596 = vrot.slane %v6362, 1
      %v6597 = vsel %vm1000, %v6594, %v6596
      %v6598 = vrot.slane %v6363, 1
      %v6599 = vsel %vm1000, %v6596, %v6598
      %v6600 = vrot.slane %v6364, 1
      %v6601 = vsel %vm1000, %v6598, %v6600
      %v6602 = vrot.slane %v6365, 1
      %v6603 = vsel %vm1000, %v6600, %v6602
      %v6604 = vrot.slane %v6366, 1
      %v6605 = vsel %vm1000, %v6602, %v6604
      %v6606 = vrot.slane %v6367, 1
      %v6607 = vsel %vm1000, %v6604, %v6606
      %v6608 = vrot.slane %v6368, 1
      %v6609 = vsel %vm1000, %v6606, %v6608
      %v6610 = vrot.slane %v6369, 1
      %v6611 = vsel %vm1000, %v6608, %v6610
      %v6612 = vrot.slane %v6370, 1
      %v6613 = vsel %vm1000, %v6610, %v6612
      %v6614 = vrot.slane %v6371, 1
      %v6615 = vsel %vm1000, %v6612, %v6614
      %v6616 = vrot.slane %v6372, 1
      %v6617 = vsel %vm1000, %v6614, %v6616
      %v6618 = vrot.slane %v6373, 1
      %v6619 = vsel %vm1000, %v6616, %v6618
      %v6620 = vrot.slane %v6374, 1
      %v6621 = vsel %vm1000, %v6618, %v6620
      %v6622 = vrot.slane %v6375, 1
      %v6623 = vsel %vm1000, %v6620, %v6622
      %v6624 = vrot.slane %v6376, 1
      %v6625 = vsel %vm1000, %v6622, %v6624
      %v6626 = vrot.slane %v6377, 1
      %v6627 = vsel %vm1000, %v6624, %v6626
      %v6628 = vrot.slane %v6378, 1
      %v6629 = vsel %vm1000, %v6626, %v6628
      %v6630 = vrot.slane %v6379, 1
      %v6631 = vsel %vm1000, %v6628, %v6630
      %v6632 = vrot.slane %v6380, 1
      %v6633 = vsel %vm1000, %v6630, %v6632
      %v6634 = vrot.slane %v6381, 1
      %v6635 = vsel %vm1000, %v6632, %v6634
      %v6636 = vrot.slane %v6382, 1
      %v6637 = vsel %vm1000, %v6634, %v6636
      %v6638 = vrot.slane %v6383, 1
      %v6639 = vsel %vm1000, %v6636, %v6638
      %v6640 = vrot.slane %v6384, 1
      %v6641 = vsel %vm1000, %v6638, %v6640
      %v6642 = vrot.slane %v6385, 1
      %v6643 = vsel %vm1000, %v6640, %v6642
      %v6644 = vrot.slane %v6386, 1
      %v6645 = vsel %vm1000, %v6642, %v6644
      %v6646 = vsel %vm1000, %v6644, %v6582
      %v6678 = vsel %vm1000, %v6583, %v6587
      %v6679 = vmul.f32 %v6584, %v1100
      %v6680 = vmul.f32 %v6678, %v1104
      %v6681 = vmul.f32 %v6589, %v1108
      %v6682 = vmul.f32 %v6591, %v1112
      %v6683 = vmul.f32 %v6593, %v1116
      %v6684 = vmul.f32 %v6595, %v1120
      %v6685 = vmul.f32 %v6597, %v1124
      %v6686 = vmul.f32 %v6599, %v1128
      %v6687 = vmul.f32 %v6601, %v1132
      %v6688 = vmul.f32 %v6603, %v1136
      %v6689 = vmul.f32 %v6605, %v1140
      %v6690 = vmul.f32 %v6607, %v1144
      %v6691 = vmul.f32 %v6609, %v1148
      %v6692 = vmul.f32 %v6611, %v1152
      %v6693 = vmul.f32 %v6613, %v1156
      %v6694 = vmul.f32 %v6615, %v1160
      %v6695 = vmul.f32 %v6617, %v1164
      %v6696 = vmul.f32 %v6619, %v1168
      %v6697 = vmul.f32 %v6621, %v1172
      %v6698 = vmul.f32 %v6623, %v1176
      %v6699 = vmul.f32 %v6625, %v1180
      %v6700 = vmul.f32 %v6627, %v1184
      %v6701 = vmul.f32 %v6629, %v1188
      %v6702 = vmul.f32 %v6631, %v1192
      %v6703 = vmul.f32 %v6633, %v1196
      %v6704 = vmul.f32 %v6635, %v1200
      %v6705 = vmul.f32 %v6637, %v1204
      %v6706 = vmul.f32 %v6639, %v1208
      %v6707 = vmul.f32 %v6641, %v1212
      %v6708 = vmul.f32 %v6643, %v1216
      %v6709 = vmul.f32 %v6645, %v1220
      %v6710 = vmul.f32 %v6646, %v1224
      %v6711 = vmul.f32 %v6517, %v1260
      %v6712 = vmul.f32 %v6431, %v1264
      %v6713 = vmul.f32 %v6433, %v1268
      %v6714 = vmul.f32 %v6435, %v1272
      %v6715 = vmul.f32 %v6437, %v1276
      %v6716 = vmul.f32 %v6439, %v1280
      %v6717 = vmul.f32 %v6441, %v1284
      %v6718 = vmul.f32 %v6443, %v1288
      %v6719 = vmul.f32 %v6445, %v1292
      %v6720 = vmul.f32 %v6447, %v1296
      %v6721 = vmul.f32 %v6449, %v1300
      %v6722 = vmul.f32 %v6451, %v1304
      %v6723 = vmul.f32 %v6453, %v1308
      %v6724 = vmul.f32 %v6455, %v1312
      %v6725 = vmul.f32 %v6457, %v1316
      %v6726 = vmul.f32 %v6459, %v1320
      %v6727 = vmul.f32 %v6461, %v1324
      %v6728 = vmul.f32 %v6463, %v1328
      %v6729 = vmul.f32 %v6465, %v1332
      %v6730 = vmul.f32 %v6467, %v1336
      %v6731 = vmul.f32 %v6469, %v1340
      %v6732 = vmul.f32 %v6471, %v1344
      %v6733 = vmul.f32 %v6473, %v1348
      %v6734 = vmul.f32 %v6475, %v1352
      %v6735 = vmul.f32 %v6477, %v1356
      %v6736 = vmul.f32 %v6479, %v1360
      %v6737 = vmul.f32 %v6481, %v1364
      %v6738 = vmul.f32 %v6483, %v1368
      %v6739 = vmul.f32 %v6485, %v1372
      %v6740 = vmul.f32 %v6486, %v1376
      %v6741 = vmul.f32 %v6394, %v1380
      %v6742 = vmul.f32 %v6396, %v1384
      %v6743 = vmul.f32 %v6589, %v1420
      %v6744 = vmul.f32 %v6591, %v1424
      %v6745 = vmul.f32 %v6593, %v1428
      %v6746 = vmul.f32 %v6595, %v1432
      %v6747 = vmul.f32 %v6597, %v1436
      %v6748 = vmul.f32 %v6599, %v1440
      %v6749 = vmul.f32 %v6601, %v1444
      %v6750 = vmul.f32 %v6603, %v1448
      %v6751 = vmul.f32 %v6605, %v1452
      %v6752 = vmul.f32 %v6607, %v1456
      %v6753 = vmul.f32 %v6609, %v1460
      %v6754 = vmul.f32 %v6611, %v1464
      %v6755 = vmul.f32 %v6613, %v1468
      %v6756 = vmul.f32 %v6615, %v1472
      %v6757 = vmul.f32 %v6617, %v1476
      %v6758 = vmul.f32 %v6619, %v1480
      %v6759 = vmul.f32 %v6621, %v1484
      %v6760 = vmul.f32 %v6623, %v1488
      %v6761 = vmul.f32 %v6625, %v1492
      %v6762 = vmul.f32 %v6627, %v1496
      %v6763 = vmul.f32 %v6629, %v1500
      %v6764 = vmul.f32 %v6631, %v1504
      %v6765 = vmul.f32 %v6633, %v1508
      %v6766 = vmul.f32 %v6635, %v1512
      %v6767 = vmul.f32 %v6637, %v1516
      %v6768 = vmul.f32 %v6639, %v1520
      %v6769 = vmul.f32 %v6641, %v1524
      %v6770 = vmul.f32 %v6643, %v1528
      %v6771 = vmul.f32 %v6645, %v1532
      %v6772 = vmul.f32 %v6646, %v1536
      %v6773 = vmul.f32 %v6584, %v1540
      %v6774 = vmul.f32 %v6678, %v1544
      %v6775 = vmul.f32 %v6433, %v1580
      %v6776 = vmul.f32 %v6435, %v1584
      %v6777 = vmul.f32 %v6437, %v1588
      %v6778 = vmul.f32 %v6439, %v1592
      %v6779 = vmul.f32 %v6441, %v1596
      %v6780 = vmul.f32 %v6443, %v1600
      %v6781 = vmul.f32 %v6445, %v1604
      %v6782 = vmul.f32 %v6447, %v1608
      %v6783 = vmul.f32 %v6449, %v1612
      %v6784 = vmul.f32 %v6451, %v1616
      %v6785 = vmul.f32 %v6453, %v1620
      %v6786 = vmul.f32 %v6455, %v1624
      %v6787 = vmul.f32 %v6457, %v1628
      %v6788 = vmul.f32 %v6459, %v1632
      %v6789 = vmul.f32 %v6461, %v1636
      %v6790 = vmul.f32 %v6463, %v1640
      %v6791 = vmul.f32 %v6465, %v1644
      %v6792 = vmul.f32 %v6467, %v1648
      %v6793 = vmul.f32 %v6469, %v1652
      %v6794 = vmul.f32 %v6471, %v1656
      %v6795 = vmul.f32 %v6473, %v1660
      %v6796 = vmul.f32 %v6475, %v1664
      %v6797 = vmul.f32 %v6477, %v1668
      %v6798 = vmul.f32 %v6479, %v1672
      %v6799 = vmul.f32 %v6481, %v1676
      %v6800 = vmul.f32 %v6483, %v1680
      %v6801 = vmul.f32 %v6485, %v1684
      %v6802 = vmul.f32 %v6486, %v1688
      %v6803 = vmul.f32 %v6394, %v1692
      %v6804 = vmul.f32 %v6396, %v1696
      %v6805 = vmul.f32 %v6517, %v1700
      %v6806 = vmul.f32 %v6431, %v1704
      %v6807 = vmul.f32 %v6359, %v1740
      %v6808 = vmul.f32 %v6360, %v1744
      %v6809 = vmul.f32 %v6361, %v1748
      %v6810 = vmul.f32 %v6362, %v1752
      %v6811 = vmul.f32 %v6363, %v1756
      %v6812 = vmul.f32 %v6364, %v1760
      %v6813 = vmul.f32 %v6365, %v1764
      %v6814 = vmul.f32 %v6366, %v1768
      %v6815 = vmul.f32 %v6367, %v1772
      %v6816 = vmul.f32 %v6368, %v1776
      %v6817 = vmul.f32 %v6369, %v1780
      %v6818 = vmul.f32 %v6370, %v1784
      %v6819 = vmul.f32 %v6371, %v1788
      %v6820 = vmul.f32 %v6372, %v1792
      %v6821 = vmul.f32 %v6373, %v1796
      %v6822 = vmul.f32 %v6374, %v1800
      %v6823 = vmul.f32 %v6375, %v1804
      %v6824 = vmul.f32 %v6376, %v1808
      %v6825 = vmul.f32 %v6377, %v1812
      %v6826 = vmul.f32 %v6378, %v1816
      %v6827 = vmul.f32 %v6379, %v1820
      %v6828 = vmul.f32 %v6380, %v1824
      %v6829 = vmul.f32 %v6381, %v1828
      %v6830 = vmul.f32 %v6382, %v1832
      %v6831 = vmul.f32 %v6383, %v1836
      %v6832 = vmul.f32 %v6384, %v1840
      %v6833 = vmul.f32 %v6385, %v1844
      %v6834 = vmul.f32 %v6386, %v1848
      %v6835 = vmul.f32 %v6387, %v1852
      %v6836 = vmul.f32 %v6388, %v1856
      %v6837 = vmul.f32 %v6357, %v1860
      %v6838 = vmul.f32 %v6358, %v1864
      %v6839 = vmul.f32 %v6593, %v1900
      %v6840 = vmul.f32 %v6595, %v1904
      %v6841 = vmul.f32 %v6597, %v1908
      %v6842 = vmul.f32 %v6599, %v1912
      %v6843 = vmul.f32 %v6601, %v1916
      %v6844 = vmul.f32 %v6603, %v1920
      %v6845 = vmul.f32 %v6605, %v1924
      %v6846 = vmul.f32 %v6607, %v1928
      %v6847 = vmul.f32 %v6609, %v1932
      %v6848 = vmul.f32 %v6611, %v1936
      %v6849 = vmul.f32 %v6613, %v1940
      %v6850 = vmul.f32 %v6615, %v1944
      %v6851 = vmul.f32 %v6617, %v1948
      %v6852 = vmul.f32 %v6619, %v1952
      %v6853 = vmul.f32 %v6621, %v1956
      %v6854 = vmul.f32 %v6623, %v1960
      %v6855 = vmul.f32 %v6625, %v1964
      %v6856 = vmul.f32 %v6627, %v1968
      %v6857 = vmul.f32 %v6629, %v1972
      %v6858 = vmul.f32 %v6631, %v1976
      %v6859 = vmul.f32 %v6633, %v1980
      %v6860 = vmul.f32 %v6635, %v1984
      %v6861 = vmul.f32 %v6637, %v1988
      %v6862 = vmul.f32 %v6639, %v1992
      %v6863 = vmul.f32 %v6641, %v1996
      %v6864 = vmul.f32 %v6643, %v2000
      %v6865 = vmul.f32 %v6645, %v2004
      %v6866 = vmul.f32 %v6646, %v2008
      %v6867 = vmul.f32 %v6584, %v2012
      %v6868 = vmul.f32 %v6678, %v2016
      %v6869 = vmul.f32 %v6589, %v2020
      %v6870 = vmul.f32 %v6591, %v2024
      %6903 = vrot.lane.b32.xlu0 %v6550, 6
      %v6904 = vpop.permute.xlu0 %6903
      %6905 = vrot.lane.b32.xlu0 %v6551, 6
      %v6906 = vpop.permute.xlu0 %6905
      %6907 = vrot.lane.b32.xlu0 %v6552, 6
      %v6908 = vpop.permute.xlu0 %6907
      %6909 = vrot.lane.b32.xlu0 %v6553, 6
      %v6910 = vpop.permute.xlu0 %6909
      %6911 = vrot.lane.b32.xlu0 %v6554, 6
      %v6912 = vpop.permute.xlu0 %6911
      %6913 = vrot.lane.b32.xlu0 %v6555, 6
      %v6914 = vpop.permute.xlu0 %6913
      %6915 = vrot.lane.b32.xlu0 %v6556, 6
      %v6916 = vpop.permute.xlu0 %6915
      %6917 = vrot.lane.b32.xlu0 %v6557, 6
      %v6918 = vpop.permute.xlu0 %6917
      %6919 = vrot.lane.b32.xlu0 %v6558, 6
      %v6920 = vpop.permute.xlu0 %6919
      %6921 = vrot.lane.b32.xlu0 %v6559, 6
      %v6922 = vpop.permute.xlu0 %6921
      %6923 = vrot.lane.b32.xlu0 %v6560, 6
      %v6924 = vpop.permute.xlu0 %6923
      %6925 = vrot.lane.b32.xlu0 %v6561, 6
      %v6926 = vpop.permute.xlu0 %6925
      %6927 = vrot.lane.b32.xlu0 %v6562, 6
      %v6928 = vpop.permute.xlu0 %6927
      %6929 = vrot.lane.b32.xlu0 %v6563, 6
      %v6930 = vpop.permute.xlu0 %6929
      %6931 = vrot.lane.b32.xlu0 %v6564, 6
      %v6932 = vpop.permute.xlu0 %6931
      %6933 = vrot.lane.b32.xlu0 %v6565, 6
      %v6934 = vpop.permute.xlu0 %6933
      %6935 = vrot.lane.b32.xlu0 %v6566, 6
      %v6936 = vpop.permute.xlu0 %6935
      %6937 = vrot.lane.b32.xlu0 %v6567, 6
      %v6938 = vpop.permute.xlu0 %6937
      %6939 = vrot.lane.b32.xlu0 %v6568, 6
      %v6940 = vpop.permute.xlu0 %6939
      %6941 = vrot.lane.b32.xlu0 %v6569, 6
      %v6942 = vpop.permute.xlu0 %6941
      %6943 = vrot.lane.b32.xlu0 %v6570, 6
      %v6944 = vpop.permute.xlu0 %6943
      %6945 = vrot.lane.b32.xlu0 %v6571, 6
      %v6946 = vpop.permute.xlu0 %6945
      %6947 = vrot.lane.b32.xlu0 %v6572, 6
      %v6948 = vpop.permute.xlu0 %6947
      %6949 = vrot.lane.b32.xlu0 %v6573, 6
      %v6950 = vpop.permute.xlu0 %6949
      %6951 = vrot.lane.b32.xlu0 %v6574, 6
      %v6952 = vpop.permute.xlu0 %6951
      %6953 = vrot.lane.b32.xlu0 %v6575, 6
      %v6954 = vpop.permute.xlu0 %6953
      %6955 = vrot.lane.b32.xlu0 %v6576, 6
      %v6956 = vpop.permute.xlu0 %6955
      %6957 = vrot.lane.b32.xlu0 %v6577, 6
      %v6958 = vpop.permute.xlu0 %6957
      %6959 = vrot.lane.b32.xlu0 %v6578, 6
      %v6960 = vpop.permute.xlu0 %6959
      %6961 = vrot.lane.b32.xlu0 %v6579, 6
      %v6962 = vpop.permute.xlu0 %6961
      %6963 = vrot.lane.b32.xlu0 %v6580, 6
      %v6964 = vpop.permute.xlu0 %6963
      %6965 = vrot.lane.b32.xlu0 %v6581, 6
      %v6966 = vpop.permute.xlu0 %6965
      %7031 = vrot.lane.b32.xlu0 %v6679, 12
      %v7032 = vpop.permute.xlu0 %7031
      %7033 = vrot.lane.b32.xlu0 %v6680, 12
      %v7034 = vpop.permute.xlu0 %7033
      %7035 = vrot.lane.b32.xlu0 %v6681, 12
      %v7036 = vpop.permute.xlu0 %7035
      %7037 = vrot.lane.b32.xlu0 %v6682, 12
      %v7038 = vpop.permute.xlu0 %7037
      %7039 = vrot.lane.b32.xlu0 %v6683, 12
      %v7040 = vpop.permute.xlu0 %7039
      %7041 = vrot.lane.b32.xlu0 %v6684, 12
      %v7042 = vpop.permute.xlu0 %7041
      %7043 = vrot.lane.b32.xlu0 %v6685, 12
      %v7044 = vpop.permute.xlu0 %7043
      %7045 = vrot.lane.b32.xlu0 %v6686, 12
      %v7046 = vpop.permute.xlu0 %7045
      %7047 = vrot.lane.b32.xlu0 %v6687, 12
      %v7048 = vpop.permute.xlu0 %7047
      %7049 = vrot.lane.b32.xlu0 %v6688, 12
      %v7050 = vpop.permute.xlu0 %7049
      %7051 = vrot.lane.b32.xlu0 %v6689, 12
      %v7052 = vpop.permute.xlu0 %7051
      %7053 = vrot.lane.b32.xlu0 %v6690, 12
      %v7054 = vpop.permute.xlu0 %7053
      %7055 = vrot.lane.b32.xlu0 %v6691, 12
      %v7056 = vpop.permute.xlu0 %7055
      %7057 = vrot.lane.b32.xlu0 %v6692, 12
      %v7058 = vpop.permute.xlu0 %7057
      %7059 = vrot.lane.b32.xlu0 %v6693, 12
      %v7060 = vpop.permute.xlu0 %7059
      %7061 = vrot.lane.b32.xlu0 %v6694, 12
      %v7062 = vpop.permute.xlu0 %7061
      %7063 = vrot.lane.b32.xlu0 %v6695, 12
      %v7064 = vpop.permute.xlu0 %7063
      %7065 = vrot.lane.b32.xlu0 %v6696, 12
      %v7066 = vpop.permute.xlu0 %7065
      %7067 = vrot.lane.b32.xlu0 %v6697, 12
      %v7068 = vpop.permute.xlu0 %7067
      %7069 = vrot.lane.b32.xlu0 %v6698, 12
      %v7070 = vpop.permute.xlu0 %7069
      %7071 = vrot.lane.b32.xlu0 %v6699, 12
      %v7072 = vpop.permute.xlu0 %7071
      %7073 = vrot.lane.b32.xlu0 %v6700, 12
      %v7074 = vpop.permute.xlu0 %7073
      %7075 = vrot.lane.b32.xlu0 %v6701, 12
      %v7076 = vpop.permute.xlu0 %7075
      %7077 = vrot.lane.b32.xlu0 %v6702, 12
      %v7078 = vpop.permute.xlu0 %7077
      %7079 = vrot.lane.b32.xlu0 %v6703, 12
      %v7080 = vpop.permute.xlu0 %7079
      %7081 = vrot.lane.b32.xlu0 %v6704, 12
      %v7082 = vpop.permute.xlu0 %7081
      %7083 = vrot.lane.b32.xlu0 %v6705, 12
      %v7084 = vpop.permute.xlu0 %7083
      %7085 = vrot.lane.b32.xlu0 %v6706, 12
      %v7086 = vpop.permute.xlu0 %7085
      %7087 = vrot.lane.b32.xlu0 %v6707, 12
      %v7088 = vpop.permute.xlu0 %7087
      %7089 = vrot.lane.b32.xlu0 %v6708, 12
      %v7090 = vpop.permute.xlu0 %7089
      %7091 = vrot.lane.b32.xlu0 %v6709, 12
      %v7092 = vpop.permute.xlu0 %7091
      %7093 = vrot.lane.b32.xlu0 %v6710, 12
      %v7094 = vpop.permute.xlu0 %7093
      %7159 = vrot.lane.b32.xlu0 %v6711, 18
      %v7160 = vpop.permute.xlu0 %7159
      %7161 = vrot.lane.b32.xlu0 %v6712, 18
      %v7162 = vpop.permute.xlu0 %7161
      %7163 = vrot.lane.b32.xlu0 %v6713, 18
      %v7164 = vpop.permute.xlu0 %7163
      %7165 = vrot.lane.b32.xlu0 %v6714, 18
      %v7166 = vpop.permute.xlu0 %7165
      %7167 = vrot.lane.b32.xlu0 %v6715, 18
      %v7168 = vpop.permute.xlu0 %7167
      %7169 = vrot.lane.b32.xlu0 %v6716, 18
      %v7170 = vpop.permute.xlu0 %7169
      %7171 = vrot.lane.b32.xlu0 %v6717, 18
      %v7172 = vpop.permute.xlu0 %7171
      %7173 = vrot.lane.b32.xlu0 %v6718, 18
      %v7174 = vpop.permute.xlu0 %7173
      %7175 = vrot.lane.b32.xlu0 %v6719, 18
      %v7176 = vpop.permute.xlu0 %7175
      %7177 = vrot.lane.b32.xlu0 %v6720, 18
      %v7178 = vpop.permute.xlu0 %7177
      %7179 = vrot.lane.b32.xlu0 %v6721, 18
      %v7180 = vpop.permute.xlu0 %7179
      %7181 = vrot.lane.b32.xlu0 %v6722, 18
      %v7182 = vpop.permute.xlu0 %7181
      %7183 = vrot.lane.b32.xlu0 %v6723, 18
      %v7184 = vpop.permute.xlu0 %7183
      %7185 = vrot.lane.b32.xlu0 %v6724, 18
      %v7186 = vpop.permute.xlu0 %7185
      %7187 = vrot.lane.b32.xlu0 %v6725, 18
      %v7188 = vpop.permute.xlu0 %7187
      %7189 = vrot.lane.b32.xlu0 %v6726, 18
      %v7190 = vpop.permute.xlu0 %7189
      %7191 = vrot.lane.b32.xlu0 %v6727, 18
      %v7192 = vpop.permute.xlu0 %7191
      %7193 = vrot.lane.b32.xlu0 %v6728, 18
      %v7194 = vpop.permute.xlu0 %7193
      %7195 = vrot.lane.b32.xlu0 %v6729, 18
      %v7196 = vpop.permute.xlu0 %7195
      %7197 = vrot.lane.b32.xlu0 %v6730, 18
      %v7198 = vpop.permute.xlu0 %7197
      %7199 = vrot.lane.b32.xlu0 %v6731, 18
      %v7200 = vpop.permute.xlu0 %7199
      %7201 = vrot.lane.b32.xlu0 %v6732, 18
      %v7202 = vpop.permute.xlu0 %7201
      %7203 = vrot.lane.b32.xlu0 %v6733, 18
      %v7204 = vpop.permute.xlu0 %7203
      %7205 = vrot.lane.b32.xlu0 %v6734, 18
      %v7206 = vpop.permute.xlu0 %7205
      %7207 = vrot.lane.b32.xlu0 %v6735, 18
      %v7208 = vpop.permute.xlu0 %7207
      %7209 = vrot.lane.b32.xlu0 %v6736, 18
      %v7210 = vpop.permute.xlu0 %7209
      %7211 = vrot.lane.b32.xlu0 %v6737, 18
      %v7212 = vpop.permute.xlu0 %7211
      %7213 = vrot.lane.b32.xlu0 %v6738, 18
      %v7214 = vpop.permute.xlu0 %7213
      %7215 = vrot.lane.b32.xlu0 %v6739, 18
      %v7216 = vpop.permute.xlu0 %7215
      %7217 = vrot.lane.b32.xlu0 %v6740, 18
      %v7218 = vpop.permute.xlu0 %7217
      %7219 = vrot.lane.b32.xlu0 %v6741, 18
      %v7220 = vpop.permute.xlu0 %7219
      %7221 = vrot.lane.b32.xlu0 %v6742, 18
      %v7222 = vpop.permute.xlu0 %7221
      %7255 = vrot.lane.b32.xlu0 %v6357, 24
      %v7256 = vpop.permute.xlu0 %7255
      %7257 = vrot.lane.b32.xlu0 %v6358, 24
      %v7258 = vpop.permute.xlu0 %7257
      %7259 = vrot.lane.b32.xlu0 %v6359, 24
      %v7260 = vpop.permute.xlu0 %7259
      %7261 = vrot.lane.b32.xlu0 %v6360, 24
      %v7262 = vpop.permute.xlu0 %7261
      %7263 = vrot.lane.b32.xlu0 %v6361, 24
      %v7264 = vpop.permute.xlu0 %7263
      %7265 = vrot.lane.b32.xlu0 %v6362, 24
      %v7266 = vpop.permute.xlu0 %7265
      %7267 = vrot.lane.b32.xlu0 %v6363, 24
      %v7268 = vpop.permute.xlu0 %7267
      %7269 = vrot.lane.b32.xlu0 %v6364, 24
      %v7270 = vpop.permute.xlu0 %7269
      %7271 = vrot.lane.b32.xlu0 %v6365, 24
      %v7272 = vpop.permute.xlu0 %7271
      %7273 = vrot.lane.b32.xlu0 %v6366, 24
      %v7274 = vpop.permute.xlu0 %7273
      %7275 = vrot.lane.b32.xlu0 %v6367, 24
      %v7276 = vpop.permute.xlu0 %7275
      %7277 = vrot.lane.b32.xlu0 %v6368, 24
      %v7278 = vpop.permute.xlu0 %7277
      %7279 = vrot.lane.b32.xlu0 %v6369, 24
      %v7280 = vpop.permute.xlu0 %7279
      %7281 = vrot.lane.b32.xlu0 %v6370, 24
      %v7282 = vpop.permute.xlu0 %7281
      %7283 = vrot.lane.b32.xlu0 %v6371, 24
      %v7284 = vpop.permute.xlu0 %7283
      %7285 = vrot.lane.b32.xlu0 %v6372, 24
      %v7286 = vpop.permute.xlu0 %7285
      %7287 = vrot.lane.b32.xlu0 %v6373, 24
      %v7288 = vpop.permute.xlu0 %7287
      %7289 = vrot.lane.b32.xlu0 %v6374, 24
      %v7290 = vpop.permute.xlu0 %7289
      %7291 = vrot.lane.b32.xlu0 %v6375, 24
      %v7292 = vpop.permute.xlu0 %7291
      %7293 = vrot.lane.b32.xlu0 %v6376, 24
      %v7294 = vpop.permute.xlu0 %7293
      %7295 = vrot.lane.b32.xlu0 %v6377, 24
      %v7296 = vpop.permute.xlu0 %7295
      %7297 = vrot.lane.b32.xlu0 %v6378, 24
      %v7298 = vpop.permute.xlu0 %7297
      %7299 = vrot.lane.b32.xlu0 %v6379, 24
      %v7300 = vpop.permute.xlu0 %7299
      %7301 = vrot.lane.b32.xlu0 %v6380, 24
      %v7302 = vpop.permute.xlu0 %7301
      %7303 = vrot.lane.b32.xlu0 %v6381, 24
      %v7304 = vpop.permute.xlu0 %7303
      %7305 = vrot.lane.b32.xlu0 %v6382, 24
      %v7306 = vpop.permute.xlu0 %7305
      %7307 = vrot.lane.b32.xlu0 %v6383, 24
      %v7308 = vpop.permute.xlu0 %7307
      %7309 = vrot.lane.b32.xlu0 %v6384, 24
      %v7310 = vpop.permute.xlu0 %7309
      %7311 = vrot.lane.b32.xlu0 %v6385, 24
      %v7312 = vpop.permute.xlu0 %7311
      %7313 = vrot.lane.b32.xlu0 %v6386, 24
      %v7314 = vpop.permute.xlu0 %7313
      %7315 = vrot.lane.b32.xlu0 %v6387, 24
      %v7316 = vpop.permute.xlu0 %7315
      %7317 = vrot.lane.b32.xlu0 %v6388, 24
      %v7318 = vpop.permute.xlu0 %7317
      %7383 = vrot.lane.b32.xlu0 %v6743, 30
      %v7384 = vpop.permute.xlu0 %7383
      %7385 = vrot.lane.b32.xlu0 %v6744, 30
      %v7386 = vpop.permute.xlu0 %7385
      %7387 = vrot.lane.b32.xlu0 %v6745, 30
      %v7388 = vpop.permute.xlu0 %7387
      %7389 = vrot.lane.b32.xlu0 %v6746, 30
      %v7390 = vpop.permute.xlu0 %7389
      %7391 = vrot.lane.b32.xlu0 %v6747, 30
      %v7392 = vpop.permute.xlu0 %7391
      %7393 = vrot.lane.b32.xlu0 %v6748, 30
      %v7394 = vpop.permute.xlu0 %7393
      %7395 = vrot.lane.b32.xlu0 %v6749, 30
      %v7396 = vpop.permute.xlu0 %7395
      %7397 = vrot.lane.b32.xlu0 %v6750, 30
      %v7398 = vpop.permute.xlu0 %7397
      %7399 = vrot.lane.b32.xlu0 %v6751, 30
      %v7400 = vpop.permute.xlu0 %7399
      %7401 = vrot.lane.b32.xlu0 %v6752, 30
      %v7402 = vpop.permute.xlu0 %7401
      %7403 = vrot.lane.b32.xlu0 %v6753, 30
      %v7404 = vpop.permute.xlu0 %7403
      %7405 = vrot.lane.b32.xlu0 %v6754, 30
      %v7406 = vpop.permute.xlu0 %7405
      %7407 = vrot.lane.b32.xlu0 %v6755, 30
      %v7408 = vpop.permute.xlu0 %7407
      %7409 = vrot.lane.b32.xlu0 %v6756, 30
      %v7410 = vpop.permute.xlu0 %7409
      %7411 = vrot.lane.b32.xlu0 %v6757, 30
      %v7412 = vpop.permute.xlu0 %7411
      %7413 = vrot.lane.b32.xlu0 %v6758, 30
      %v7414 = vpop.permute.xlu0 %7413
      %7415 = vrot.lane.b32.xlu0 %v6759, 30
      %v7416 = vpop.permute.xlu0 %7415
      %7417 = vrot.lane.b32.xlu0 %v6760, 30
      %v7418 = vpop.permute.xlu0 %7417
      %7419 = vrot.lane.b32.xlu0 %v6761, 30
      %v7420 = vpop.permute.xlu0 %7419
      %7421 = vrot.lane.b32.xlu0 %v6762, 30
      %v7422 = vpop.permute.xlu0 %7421
      %7423 = vrot.lane.b32.xlu0 %v6763, 30
      %v7424 = vpop.permute.xlu0 %7423
      %7425 = vrot.lane.b32.xlu0 %v6764, 30
      %v7426 = vpop.permute.xlu0 %7425
      %7427 = vrot.lane.b32.xlu0 %v6765, 30
      %v7428 = vpop.permute.xlu0 %7427
      %7429 = vrot.lane.b32.xlu0 %v6766, 30
      %v7430 = vpop.permute.xlu0 %7429
      %7431 = vrot.lane.b32.xlu0 %v6767, 30
      %v7432 = vpop.permute.xlu0 %7431
      %7433 = vrot.lane.b32.xlu0 %v6768, 30
      %v7434 = vpop.permute.xlu0 %7433
      %7435 = vrot.lane.b32.xlu0 %v6769, 30
      %v7436 = vpop.permute.xlu0 %7435
      %7437 = vrot.lane.b32.xlu0 %v6770, 30
      %v7438 = vpop.permute.xlu0 %7437
      %7439 = vrot.lane.b32.xlu0 %v6771, 30
      %v7440 = vpop.permute.xlu0 %7439
      %7441 = vrot.lane.b32.xlu0 %v6772, 30
      %v7442 = vpop.permute.xlu0 %7441
      %7443 = vrot.lane.b32.xlu0 %v6773, 30
      %v7444 = vpop.permute.xlu0 %7443
      %7445 = vrot.lane.b32.xlu0 %v6774, 30
      %v7446 = vpop.permute.xlu0 %7445
      %7511 = vrot.lane.b32.xlu0 %v6775, 36
      %v7512 = vpop.permute.xlu0 %7511
      %7513 = vrot.lane.b32.xlu0 %v6776, 36
      %v7514 = vpop.permute.xlu0 %7513
      %7515 = vrot.lane.b32.xlu0 %v6777, 36
      %v7516 = vpop.permute.xlu0 %7515
      %7517 = vrot.lane.b32.xlu0 %v6778, 36
      %v7518 = vpop.permute.xlu0 %7517
      %7519 = vrot.lane.b32.xlu0 %v6779, 36
      %v7520 = vpop.permute.xlu0 %7519
      %7521 = vrot.lane.b32.xlu0 %v6780, 36
      %v7522 = vpop.permute.xlu0 %7521
      %7523 = vrot.lane.b32.xlu0 %v6781, 36
      %v7524 = vpop.permute.xlu0 %7523
      %7525 = vrot.lane.b32.xlu0 %v6782, 36
      %v7526 = vpop.permute.xlu0 %7525
      %7527 = vrot.lane.b32.xlu0 %v6783, 36
      %v7528 = vpop.permute.xlu0 %7527
      %7529 = vrot.lane.b32.xlu0 %v6784, 36
      %v7530 = vpop.permute.xlu0 %7529
      %7531 = vrot.lane.b32.xlu0 %v6785, 36
      %v7532 = vpop.permute.xlu0 %7531
      %7533 = vrot.lane.b32.xlu0 %v6786, 36
      %v7534 = vpop.permute.xlu0 %7533
      %7535 = vrot.lane.b32.xlu0 %v6787, 36
      %v7536 = vpop.permute.xlu0 %7535
      %7537 = vrot.lane.b32.xlu0 %v6788, 36
      %v7538 = vpop.permute.xlu0 %7537
      %7539 = vrot.lane.b32.xlu0 %v6789, 36
      %v7540 = vpop.permute.xlu0 %7539
      %7541 = vrot.lane.b32.xlu0 %v6790, 36
      %v7542 = vpop.permute.xlu0 %7541
      %7543 = vrot.lane.b32.xlu0 %v6791, 36
      %v7544 = vpop.permute.xlu0 %7543
      %7545 = vrot.lane.b32.xlu0 %v6792, 36
      %v7546 = vpop.permute.xlu0 %7545
      %7547 = vrot.lane.b32.xlu0 %v6793, 36
      %v7548 = vpop.permute.xlu0 %7547
      %7549 = vrot.lane.b32.xlu0 %v6794, 36
      %v7550 = vpop.permute.xlu0 %7549
      %7551 = vrot.lane.b32.xlu0 %v6795, 36
      %v7552 = vpop.permute.xlu0 %7551
      %7553 = vrot.lane.b32.xlu0 %v6796, 36
      %v7554 = vpop.permute.xlu0 %7553
      %7555 = vrot.lane.b32.xlu0 %v6797, 36
      %v7556 = vpop.permute.xlu0 %7555
      %7557 = vrot.lane.b32.xlu0 %v6798, 36
      %v7558 = vpop.permute.xlu0 %7557
      %7559 = vrot.lane.b32.xlu0 %v6799, 36
      %v7560 = vpop.permute.xlu0 %7559
      %7561 = vrot.lane.b32.xlu0 %v6800, 36
      %v7562 = vpop.permute.xlu0 %7561
      %7563 = vrot.lane.b32.xlu0 %v6801, 36
      %v7564 = vpop.permute.xlu0 %7563
      %7565 = vrot.lane.b32.xlu0 %v6802, 36
      %v7566 = vpop.permute.xlu0 %7565
      %7567 = vrot.lane.b32.xlu0 %v6803, 36
      %v7568 = vpop.permute.xlu0 %7567
      %7569 = vrot.lane.b32.xlu0 %v6804, 36
      %v7570 = vpop.permute.xlu0 %7569
      %7571 = vrot.lane.b32.xlu0 %v6805, 36
      %v7572 = vpop.permute.xlu0 %7571
      %7573 = vrot.lane.b32.xlu0 %v6806, 36
      %v7574 = vpop.permute.xlu0 %7573
      %7639 = vrot.lane.b32.xlu0 %v6807, 42
      %v7640 = vpop.permute.xlu0 %7639
      %7641 = vrot.lane.b32.xlu0 %v6808, 42
      %v7642 = vpop.permute.xlu0 %7641
      %7643 = vrot.lane.b32.xlu0 %v6809, 42
      %v7644 = vpop.permute.xlu0 %7643
      %7645 = vrot.lane.b32.xlu0 %v6810, 42
      %v7646 = vpop.permute.xlu0 %7645
      %7647 = vrot.lane.b32.xlu0 %v6811, 42
      %v7648 = vpop.permute.xlu0 %7647
      %7649 = vrot.lane.b32.xlu0 %v6812, 42
      %v7650 = vpop.permute.xlu0 %7649
      %7651 = vrot.lane.b32.xlu0 %v6813, 42
      %v7652 = vpop.permute.xlu0 %7651
      %7653 = vrot.lane.b32.xlu0 %v6814, 42
      %v7654 = vpop.permute.xlu0 %7653
      %7655 = vrot.lane.b32.xlu0 %v6815, 42
      %v7656 = vpop.permute.xlu0 %7655
      %7657 = vrot.lane.b32.xlu0 %v6816, 42
      %v7658 = vpop.permute.xlu0 %7657
      %7659 = vrot.lane.b32.xlu0 %v6817, 42
      %v7660 = vpop.permute.xlu0 %7659
      %7661 = vrot.lane.b32.xlu0 %v6818, 42
      %v7662 = vpop.permute.xlu0 %7661
      %7663 = vrot.lane.b32.xlu0 %v6819, 42
      %v7664 = vpop.permute.xlu0 %7663
      %7665 = vrot.lane.b32.xlu0 %v6820, 42
      %v7666 = vpop.permute.xlu0 %7665
      %7667 = vrot.lane.b32.xlu0 %v6821, 42
      %v7668 = vpop.permute.xlu0 %7667
      %7669 = vrot.lane.b32.xlu0 %v6822, 42
      %v7670 = vpop.permute.xlu0 %7669
      %7671 = vrot.lane.b32.xlu0 %v6823, 42
      %v7672 = vpop.permute.xlu0 %7671
      %7673 = vrot.lane.b32.xlu0 %v6824, 42
      %v7674 = vpop.permute.xlu0 %7673
      %7675 = vrot.lane.b32.xlu0 %v6825, 42
      %v7676 = vpop.permute.xlu0 %7675
      %7677 = vrot.lane.b32.xlu0 %v6826, 42
      %v7678 = vpop.permute.xlu0 %7677
      %7679 = vrot.lane.b32.xlu0 %v6827, 42
      %v7680 = vpop.permute.xlu0 %7679
      %7681 = vrot.lane.b32.xlu0 %v6828, 42
      %v7682 = vpop.permute.xlu0 %7681
      %7683 = vrot.lane.b32.xlu0 %v6829, 42
      %v7684 = vpop.permute.xlu0 %7683
      %7685 = vrot.lane.b32.xlu0 %v6830, 42
      %v7686 = vpop.permute.xlu0 %7685
      %7687 = vrot.lane.b32.xlu0 %v6831, 42
      %v7688 = vpop.permute.xlu0 %7687
      %7689 = vrot.lane.b32.xlu0 %v6832, 42
      %v7690 = vpop.permute.xlu0 %7689
      %7691 = vrot.lane.b32.xlu0 %v6833, 42
      %v7692 = vpop.permute.xlu0 %7691
      %7693 = vrot.lane.b32.xlu0 %v6834, 42
      %v7694 = vpop.permute.xlu0 %7693
      %7695 = vrot.lane.b32.xlu0 %v6835, 42
      %v7696 = vpop.permute.xlu0 %7695
      %7697 = vrot.lane.b32.xlu0 %v6836, 42
      %v7698 = vpop.permute.xlu0 %7697
      %7699 = vrot.lane.b32.xlu0 %v6837, 42
      %v7700 = vpop.permute.xlu0 %7699
      %7701 = vrot.lane.b32.xlu0 %v6838, 42
      %v7702 = vpop.permute.xlu0 %7701
      %7767 = vrot.lane.b32.xlu0 %v6839, 48
      %v7768 = vpop.permute.xlu0 %7767
      %7769 = vrot.lane.b32.xlu0 %v6840, 48
      %v7770 = vpop.permute.xlu0 %7769
      %7771 = vrot.lane.b32.xlu0 %v6841, 48
      %v7772 = vpop.permute.xlu0 %7771
      %7773 = vrot.lane.b32.xlu0 %v6842, 48
      %v7774 = vpop.permute.xlu0 %7773
      %7775 = vrot.lane.b32.xlu0 %v6843, 48
      %v7776 = vpop.permute.xlu0 %7775
      %7777 = vrot.lane.b32.xlu0 %v6844, 48
      %v7778 = vpop.permute.xlu0 %7777
      %7779 = vrot.lane.b32.xlu0 %v6845, 48
      %v7780 = vpop.permute.xlu0 %7779
      %7781 = vrot.lane.b32.xlu0 %v6846, 48
      %v7782 = vpop.permute.xlu0 %7781
      %7783 = vrot.lane.b32.xlu0 %v6847, 48
      %v7784 = vpop.permute.xlu0 %7783
      %7785 = vrot.lane.b32.xlu0 %v6848, 48
      %v7786 = vpop.permute.xlu0 %7785
      %7787 = vrot.lane.b32.xlu0 %v6849, 48
      %v7788 = vpop.permute.xlu0 %7787
      %7789 = vrot.lane.b32.xlu0 %v6850, 48
      %v7790 = vpop.permute.xlu0 %7789
      %7791 = vrot.lane.b32.xlu0 %v6851, 48
      %v7792 = vpop.permute.xlu0 %7791
      %7793 = vrot.lane.b32.xlu0 %v6852, 48
      %v7794 = vpop.permute.xlu0 %7793
      %7795 = vrot.lane.b32.xlu0 %v6853, 48
      %v7796 = vpop.permute.xlu0 %7795
      %7797 = vrot.lane.b32.xlu0 %v6854, 48
      %v7798 = vpop.permute.xlu0 %7797
      %7799 = vrot.lane.b32.xlu0 %v6855, 48
      %v7800 = vpop.permute.xlu0 %7799
      %7801 = vrot.lane.b32.xlu0 %v6856, 48
      %v7802 = vpop.permute.xlu0 %7801
      %7803 = vrot.lane.b32.xlu0 %v6857, 48
      %v7804 = vpop.permute.xlu0 %7803
      %7805 = vrot.lane.b32.xlu0 %v6858, 48
      %v7806 = vpop.permute.xlu0 %7805
      %7807 = vrot.lane.b32.xlu0 %v6859, 48
      %v7808 = vpop.permute.xlu0 %7807
      %7809 = vrot.lane.b32.xlu0 %v6860, 48
      %v7810 = vpop.permute.xlu0 %7809
      %7811 = vrot.lane.b32.xlu0 %v6861, 48
      %v7812 = vpop.permute.xlu0 %7811
      %7813 = vrot.lane.b32.xlu0 %v6862, 48
      %v7814 = vpop.permute.xlu0 %7813
      %7815 = vrot.lane.b32.xlu0 %v6863, 48
      %v7816 = vpop.permute.xlu0 %7815
      %7817 = vrot.lane.b32.xlu0 %v6864, 48
      %v7818 = vpop.permute.xlu0 %7817
      %7819 = vrot.lane.b32.xlu0 %v6865, 48
      %v7820 = vpop.permute.xlu0 %7819
      %7821 = vrot.lane.b32.xlu0 %v6866, 48
      %v7822 = vpop.permute.xlu0 %7821
      %7823 = vrot.lane.b32.xlu0 %v6867, 48
      %v7824 = vpop.permute.xlu0 %7823
      %7825 = vrot.lane.b32.xlu0 %v6868, 48
      %v7826 = vpop.permute.xlu0 %7825
      %7827 = vrot.lane.b32.xlu0 %v6869, 48
      %v7828 = vpop.permute.xlu0 %7827
      %7829 = vrot.lane.b32.xlu0 %v6870, 48
      %v7830 = vpop.permute.xlu0 %7829
      %v7863 = vsel %vm3050, %v6518, %v6904
      %v7864 = vsel %vm3050, %v6519, %v6906
      %v7865 = vsel %vm3050, %v6520, %v6908
      %v7866 = vsel %vm3050, %v6521, %v6910
      %v7867 = vsel %vm3050, %v6522, %v6912
      %v7868 = vsel %vm3050, %v6523, %v6914
      %v7869 = vsel %vm3050, %v6524, %v6916
      %v7870 = vsel %vm3050, %v6525, %v6918
      %v7871 = vsel %vm3050, %v6526, %v6920
      %v7872 = vsel %vm3050, %v6527, %v6922
      %v7873 = vsel %vm3050, %v6528, %v6924
      %v7874 = vsel %vm3050, %v6529, %v6926
      %v7875 = vsel %vm3050, %v6530, %v6928
      %v7876 = vsel %vm3050, %v6531, %v6930
      %v7877 = vsel %vm3050, %v6532, %v6932
      %v7878 = vsel %vm3050, %v6533, %v6934
      %v7879 = vsel %vm3050, %v6534, %v6936
      %v7880 = vsel %vm3050, %v6535, %v6938
      %v7881 = vsel %vm3050, %v6536, %v6940
      %v7882 = vsel %vm3050, %v6537, %v6942
      %v7883 = vsel %vm3050, %v6538, %v6944
      %v7884 = vsel %vm3050, %v6539, %v6946
      %v7885 = vsel %vm3050, %v6540, %v6948
      %v7886 = vsel %vm3050, %v6541, %v6950
      %v7887 = vsel %vm3050, %v6542, %v6952
      %v7888 = vsel %vm3050, %v6543, %v6954
      %v7889 = vsel %vm3050, %v6544, %v6956
      %v7890 = vsel %vm3050, %v6545, %v6958
      %v7891 = vsel %vm3050, %v6546, %v6960
      %v7892 = vsel %vm3050, %v6547, %v6962
      %v7893 = vsel %vm3050, %v6548, %v6964
      %v7894 = vsel %vm3050, %v6549, %v6966
      %v7895 = vsel %vm3083, %v7863, %v7032
      %v7896 = vsel %vm3083, %v7864, %v7034
      %v7897 = vsel %vm3083, %v7865, %v7036
      %v7898 = vsel %vm3083, %v7866, %v7038
      %v7899 = vsel %vm3083, %v7867, %v7040
      %v7900 = vsel %vm3083, %v7868, %v7042
      %v7901 = vsel %vm3083, %v7869, %v7044
      %v7902 = vsel %vm3083, %v7870, %v7046
      %v7903 = vsel %vm3083, %v7871, %v7048
      %v7904 = vsel %vm3083, %v7872, %v7050
      %v7905 = vsel %vm3083, %v7873, %v7052
      %v7906 = vsel %vm3083, %v7874, %v7054
      %v7907 = vsel %vm3083, %v7875, %v7056
      %v7908 = vsel %vm3083, %v7876, %v7058
      %v7909 = vsel %vm3083, %v7877, %v7060
      %v7910 = vsel %vm3083, %v7878, %v7062
      %v7911 = vsel %vm3083, %v7879, %v7064
      %v7912 = vsel %vm3083, %v7880, %v7066
      %v7913 = vsel %vm3083, %v7881, %v7068
      %v7914 = vsel %vm3083, %v7882, %v7070
      %v7915 = vsel %vm3083, %v7883, %v7072
      %v7916 = vsel %vm3083, %v7884, %v7074
      %v7917 = vsel %vm3083, %v7885, %v7076
      %v7918 = vsel %vm3083, %v7886, %v7078
      %v7919 = vsel %vm3083, %v7887, %v7080
      %v7920 = vsel %vm3083, %v7888, %v7082
      %v7921 = vsel %vm3083, %v7889, %v7084
      %v7922 = vsel %vm3083, %v7890, %v7086
      %v7923 = vsel %vm3083, %v7891, %v7088
      %v7924 = vsel %vm3083, %v7892, %v7090
      %v7925 = vsel %vm3083, %v7893, %v7092
      %v7926 = vsel %vm3083, %v7894, %v7094
      %v7927 = vsel %vm3116, %v7895, %v7160
      %v7928 = vsel %vm3116, %v7896, %v7162
      %v7929 = vsel %vm3116, %v7897, %v7164
      %v7930 = vsel %vm3116, %v7898, %v7166
      %v7931 = vsel %vm3116, %v7899, %v7168
      %v7932 = vsel %vm3116, %v7900, %v7170
      %v7933 = vsel %vm3116, %v7901, %v7172
      %v7934 = vsel %vm3116, %v7902, %v7174
      %v7935 = vsel %vm3116, %v7903, %v7176
      %v7936 = vsel %vm3116, %v7904, %v7178
      %v7937 = vsel %vm3116, %v7905, %v7180
      %v7938 = vsel %vm3116, %v7906, %v7182
      %v7939 = vsel %vm3116, %v7907, %v7184
      %v7940 = vsel %vm3116, %v7908, %v7186
      %v7941 = vsel %vm3116, %v7909, %v7188
      %v7942 = vsel %vm3116, %v7910, %v7190
      %v7943 = vsel %vm3116, %v7911, %v7192
      %v7944 = vsel %vm3116, %v7912, %v7194
      %v7945 = vsel %vm3116, %v7913, %v7196
      %v7946 = vsel %vm3116, %v7914, %v7198
      %v7947 = vsel %vm3116, %v7915, %v7200
      %v7948 = vsel %vm3116, %v7916, %v7202
      %v7949 = vsel %vm3116, %v7917, %v7204
      %v7950 = vsel %vm3116, %v7918, %v7206
      %v7951 = vsel %vm3116, %v7919, %v7208
      %v7952 = vsel %vm3116, %v7920, %v7210
      %v7953 = vsel %vm3116, %v7921, %v7212
      %v7954 = vsel %vm3116, %v7922, %v7214
      %v7955 = vsel %vm3116, %v7923, %v7216
      %v7956 = vsel %vm3116, %v7924, %v7218
      %v7957 = vsel %vm3116, %v7925, %v7220
      %v7958 = vsel %vm3116, %v7926, %v7222
      %v7959 = vsel %vm3149, %v7927, %v7256
      %v7960 = vsel %vm3149, %v7928, %v7258
      %v7961 = vsel %vm3149, %v7929, %v7260
      %v7962 = vsel %vm3149, %v7930, %v7262
      %v7963 = vsel %vm3149, %v7931, %v7264
      %v7964 = vsel %vm3149, %v7932, %v7266
      %v7965 = vsel %vm3149, %v7933, %v7268
      %v7966 = vsel %vm3149, %v7934, %v7270
      %v7967 = vsel %vm3149, %v7935, %v7272
      %v7968 = vsel %vm3149, %v7936, %v7274
      %v7969 = vsel %vm3149, %v7937, %v7276
      %v7970 = vsel %vm3149, %v7938, %v7278
      %v7971 = vsel %vm3149, %v7939, %v7280
      %v7972 = vsel %vm3149, %v7940, %v7282
      %v7973 = vsel %vm3149, %v7941, %v7284
      %v7974 = vsel %vm3149, %v7942, %v7286
      %v7975 = vsel %vm3149, %v7943, %v7288
      %v7976 = vsel %vm3149, %v7944, %v7290
      %v7977 = vsel %vm3149, %v7945, %v7292
      %v7978 = vsel %vm3149, %v7946, %v7294
      %v7979 = vsel %vm3149, %v7947, %v7296
      %v7980 = vsel %vm3149, %v7948, %v7298
      %v7981 = vsel %vm3149, %v7949, %v7300
      %v7982 = vsel %vm3149, %v7950, %v7302
      %v7983 = vsel %vm3149, %v7951, %v7304
      %v7984 = vsel %vm3149, %v7952, %v7306
      %v7985 = vsel %vm3149, %v7953, %v7308
      %v7986 = vsel %vm3149, %v7954, %v7310
      %v7987 = vsel %vm3149, %v7955, %v7312
      %v7988 = vsel %vm3149, %v7956, %v7314
      %v7989 = vsel %vm3149, %v7957, %v7316
      %v7990 = vsel %vm3149, %v7958, %v7318
      %v7991 = vsel %vm3182, %v7959, %v7384
      %v7992 = vsel %vm3182, %v7960, %v7386
      %v7993 = vsel %vm3182, %v7961, %v7388
      %v7994 = vsel %vm3182, %v7962, %v7390
      %v7995 = vsel %vm3182, %v7963, %v7392
      %v7996 = vsel %vm3182, %v7964, %v7394
      %v7997 = vsel %vm3182, %v7965, %v7396
      %v7998 = vsel %vm3182, %v7966, %v7398
      %v7999 = vsel %vm3182, %v7967, %v7400
      %v8000 = vsel %vm3182, %v7968, %v7402
      %v8001 = vsel %vm3182, %v7969, %v7404
      %v8002 = vsel %vm3182, %v7970, %v7406
      %v8003 = vsel %vm3182, %v7971, %v7408
      %v8004 = vsel %vm3182, %v7972, %v7410
      %v8005 = vsel %vm3182, %v7973, %v7412
      %v8006 = vsel %vm3182, %v7974, %v7414
      %v8007 = vsel %vm3182, %v7975, %v7416
      %v8008 = vsel %vm3182, %v7976, %v7418
      %v8009 = vsel %vm3182, %v7977, %v7420
      %v8010 = vsel %vm3182, %v7978, %v7422
      %v8011 = vsel %vm3182, %v7979, %v7424
      %v8012 = vsel %vm3182, %v7980, %v7426
      %v8013 = vsel %vm3182, %v7981, %v7428
      %v8014 = vsel %vm3182, %v7982, %v7430
      %v8015 = vsel %vm3182, %v7983, %v7432
      %v8016 = vsel %vm3182, %v7984, %v7434
      %v8017 = vsel %vm3182, %v7985, %v7436
      %v8018 = vsel %vm3182, %v7986, %v7438
      %v8019 = vsel %vm3182, %v7987, %v7440
      %v8020 = vsel %vm3182, %v7988, %v7442
      %v8021 = vsel %vm3182, %v7989, %v7444
      %v8022 = vsel %vm3182, %v7990, %v7446
      %v8023 = vsel %vm3215, %v7991, %v7512
      %v8024 = vsel %vm3215, %v7992, %v7514
      %v8025 = vsel %vm3215, %v7993, %v7516
      %v8026 = vsel %vm3215, %v7994, %v7518
      %v8027 = vsel %vm3215, %v7995, %v7520
      %v8028 = vsel %vm3215, %v7996, %v7522
      %v8029 = vsel %vm3215, %v7997, %v7524
      %v8030 = vsel %vm3215, %v7998, %v7526
      %v8031 = vsel %vm3215, %v7999, %v7528
      %v8032 = vsel %vm3215, %v8000, %v7530
      %v8033 = vsel %vm3215, %v8001, %v7532
      %v8034 = vsel %vm3215, %v8002, %v7534
      %v8035 = vsel %vm3215, %v8003, %v7536
      %v8036 = vsel %vm3215, %v8004, %v7538
      %v8037 = vsel %vm3215, %v8005, %v7540
      %v8038 = vsel %vm3215, %v8006, %v7542
      %v8039 = vsel %vm3215, %v8007, %v7544
      %v8040 = vsel %vm3215, %v8008, %v7546
      %v8041 = vsel %vm3215, %v8009, %v7548
      %v8042 = vsel %vm3215, %v8010, %v7550
      %v8043 = vsel %vm3215, %v8011, %v7552
      %v8044 = vsel %vm3215, %v8012, %v7554
      %v8045 = vsel %vm3215, %v8013, %v7556
      %v8046 = vsel %vm3215, %v8014, %v7558
      %v8047 = vsel %vm3215, %v8015, %v7560
      %v8048 = vsel %vm3215, %v8016, %v7562
      %v8049 = vsel %vm3215, %v8017, %v7564
      %v8050 = vsel %vm3215, %v8018, %v7566
      %v8051 = vsel %vm3215, %v8019, %v7568
      %v8052 = vsel %vm3215, %v8020, %v7570
      %v8053 = vsel %vm3215, %v8021, %v7572
      %v8054 = vsel %vm3215, %v8022, %v7574
      %v8055 = vsel %vm3248, %v8023, %v7640
      %v8056 = vsel %vm3248, %v8024, %v7642
      %v8057 = vsel %vm3248, %v8025, %v7644
      %v8058 = vsel %vm3248, %v8026, %v7646
      %v8059 = vsel %vm3248, %v8027, %v7648
      %v8060 = vsel %vm3248, %v8028, %v7650
      %v8061 = vsel %vm3248, %v8029, %v7652
      %v8062 = vsel %vm3248, %v8030, %v7654
      %v8063 = vsel %vm3248, %v8031, %v7656
      %v8064 = vsel %vm3248, %v8032, %v7658
      %v8065 = vsel %vm3248, %v8033, %v7660
      %v8066 = vsel %vm3248, %v8034, %v7662
      %v8067 = vsel %vm3248, %v8035, %v7664
      %v8068 = vsel %vm3248, %v8036, %v7666
      %v8069 = vsel %vm3248, %v8037, %v7668
      %v8070 = vsel %vm3248, %v8038, %v7670
      %v8071 = vsel %vm3248, %v8039, %v7672
      %v8072 = vsel %vm3248, %v8040, %v7674
      %v8073 = vsel %vm3248, %v8041, %v7676
      %v8074 = vsel %vm3248, %v8042, %v7678
      %v8075 = vsel %vm3248, %v8043, %v7680
      %v8076 = vsel %vm3248, %v8044, %v7682
      %v8077 = vsel %vm3248, %v8045, %v7684
      %v8078 = vsel %vm3248, %v8046, %v7686
      %v8079 = vsel %vm3248, %v8047, %v7688
      %v8080 = vsel %vm3248, %v8048, %v7690
      %v8081 = vsel %vm3248, %v8049, %v7692
      %v8082 = vsel %vm3248, %v8050, %v7694
      %v8083 = vsel %vm3248, %v8051, %v7696
      %v8084 = vsel %vm3248, %v8052, %v7698
      %v8085 = vsel %vm3248, %v8053, %v7700
      %v8086 = vsel %vm3248, %v8054, %v7702
      %v8087 = vsel %vm3281, %v8055, %v7768
      %v8088 = vsel %vm3281, %v8056, %v7770
      %v8089 = vsel %vm3281, %v8057, %v7772
      %v8090 = vsel %vm3281, %v8058, %v7774
      %v8091 = vsel %vm3281, %v8059, %v7776
      %v8092 = vsel %vm3281, %v8060, %v7778
      %v8093 = vsel %vm3281, %v8061, %v7780
      %v8094 = vsel %vm3281, %v8062, %v7782
      %v8095 = vsel %vm3281, %v8063, %v7784
      %v8096 = vsel %vm3281, %v8064, %v7786
      %v8097 = vsel %vm3281, %v8065, %v7788
      %v8098 = vsel %vm3281, %v8066, %v7790
      %v8099 = vsel %vm3281, %v8067, %v7792
      %v8100 = vsel %vm3281, %v8068, %v7794
      %v8101 = vsel %vm3281, %v8069, %v7796
      %v8102 = vsel %vm3281, %v8070, %v7798
      %v8103 = vsel %vm3281, %v8071, %v7800
      %v8104 = vsel %vm3281, %v8072, %v7802
      %v8105 = vsel %vm3281, %v8073, %v7804
      %v8106 = vsel %vm3281, %v8074, %v7806
      %v8107 = vsel %vm3281, %v8075, %v7808
      %v8108 = vsel %vm3281, %v8076, %v7810
      %v8109 = vsel %vm3281, %v8077, %v7812
      %v8110 = vsel %vm3281, %v8078, %v7814
      %v8111 = vsel %vm3281, %v8079, %v7816
      %v8112 = vsel %vm3281, %v8080, %v7818
      %v8113 = vsel %vm3281, %v8081, %v7820
      %v8114 = vsel %vm3281, %v8082, %v7822
      %v8115 = vsel %vm3281, %v8083, %v7824
      %v8116 = vsel %vm3281, %v8084, %v7826
      %v8117 = vsel %vm3281, %v8085, %v7828
      %v8118 = vsel %vm3281, %v8086, %v7830
      %v8119 = vpack.c.bf16 %v8088, %v8087
      %v8120 = vpack.c.bf16 %v8090, %v8089
      %v8121 = vpack.c.bf16 %v8092, %v8091
      %v8122 = vpack.c.bf16 %v8094, %v8093
      %v8123 = vpack.c.bf16 %v8096, %v8095
      %v8124 = vpack.c.bf16 %v8098, %v8097
      %v8125 = vpack.c.bf16 %v8100, %v8099
      %v8126 = vpack.c.bf16 %v8102, %v8101
      %v8127 = vpack.c.bf16 %v8104, %v8103
      %v8128 = vpack.c.bf16 %v8106, %v8105
      %v8129 = vpack.c.bf16 %v8108, %v8107
      %v8130 = vpack.c.bf16 %v8110, %v8109
      %v8131 = vpack.c.bf16 %v8112, %v8111
      %v8132 = vpack.c.bf16 %v8114, %v8113
      %v8133 = vpack.c.bf16 %v8116, %v8115
      %v8134 = vpack.c.bf16 %v8118, %v8117
      %s8135 = scalar_lea.vmem %s4, 56
      %v8136 = vld [vmem:[%s8135] sm:$0xf]
      %v8137 = vld [vmem:[%s8135 + $0x4] sm:$0xf]
      %v8138 = vld [vmem:[%s8135 + $0x8] sm:$0xf]
      %v8139 = vld [vmem:[%s8135 + $0xc] sm:$0xf]
      %v8140 = vld [vmem:[%s8135 + $0x10] sm:$0xf]
      %v8141 = vld [vmem:[%s8135 + $0x14] sm:$0xf]
      %v8142 = vld [vmem:[%s8135 + $0x18] sm:$0x7]
      %v8150 = vunpack.c.l.b16 %v8136
      %v8151 = vunpack.c.l.b16 %v8137
      %v8152 = vunpack.c.l.b16 %v8138
      %v8153 = vunpack.c.l.b16 %v8139
      %v8154 = vunpack.c.l.b16 %v8140
      %v8155 = vunpack.c.l.b16 %v8141
      %v8156 = vunpack.c.l.b16 %v8142
      %v8157 = vpack.c.b16 %v8151, %v8150
      %v8158 = vpack.c.b16 %v8153, %v8152
      %v8159 = vpack.c.b16 %v8155, %v8154
      %v8160 = vpack.c.b16 %v8156, %v8156
      %v8165 = vsel %vm3358, %v8119, 0
      %v8168 = vsel %vm3358, %v8120, 0
      %v8171 = vsel %vm3358, %v8121, 0
      %v8174 = vsel %vm3358, %v8122, 0
      %v8177 = vsel %vm3358, %v8123, 0
      %v8180 = vsel %vm3358, %v8124, 0
      %v8183 = vsel %vm3358, %v8125, 0
      %v8186 = vsel %vm3358, %v8126, 0
      %v8189 = vsel %vm3358, %v8127, 0
      %v8192 = vsel %vm3358, %v8128, 0
      %v8195 = vsel %vm3358, %v8129, 0
      %v8198 = vsel %vm3358, %v8130, 0
      %v8201 = vsel %vm3358, %v8131, 0
      %v8204 = vsel %vm3358, %v8132, 0
      %v8207 = vsel %vm3358, %v8133, 0
      %v8210 = vsel %vm3358, %v8134, 0
      %v8213 = vsel %vm3407, %v8160, 0
      %8215 = vmatpush.bf16.msra.mxu0 0
      %8216 = vmatpush.bf16.msra.mxu0 0
      %8217 = vmatpush.bf16.msra.mxu0 0
      %8218 = vmatpush.bf16.msra.mxu0 0
      %8219 = vmatpush.bf16.msra.mxu0 %v8213
      %8220 = vmatpush.bf16.msra.mxu0 %v8159
      %8221 = vmatpush.bf16.msra.mxu0 %v8158
      %8222 = vmatpush.bf16.msra.mxu0 %v8157
      %8223 = vmatmul.bf16.gmra.mxu0 %v8165
      %v8224 = vpop.f32.mrf.mxu0
      %v8225 = vadd.f32 0.0, %v8224
      %v8226 = vpop.f32.mrf.mxu0
      %v8227 = vadd.f32 0.0, %v8226
      %8228 = vmatmul.bf16.gmra.mxu0 %v8168
      %v8229 = vpop.f32.mrf.mxu0
      %v8230 = vadd.f32 0.0, %v8229
      %v8231 = vpop.f32.mrf.mxu0
      %v8232 = vadd.f32 0.0, %v8231
      %8233 = vmatmul.bf16.gmra.mxu0 %v8171
      %v8234 = vpop.f32.mrf.mxu0
      %v8235 = vadd.f32 0.0, %v8234
      %v8236 = vpop.f32.mrf.mxu0
      %v8237 = vadd.f32 0.0, %v8236
      %8238 = vmatmul.bf16.gmra.mxu0 %v8174
      %v8239 = vpop.f32.mrf.mxu0
      %v8240 = vadd.f32 0.0, %v8239
      %v8241 = vpop.f32.mrf.mxu0
      %v8242 = vadd.f32 0.0, %v8241
      %8243 = vmatmul.bf16.gmra.mxu0 %v8177
      %v8244 = vpop.f32.mrf.mxu0
      %v8245 = vadd.f32 0.0, %v8244
      %v8246 = vpop.f32.mrf.mxu0
      %v8247 = vadd.f32 0.0, %v8246
      %8248 = vmatmul.bf16.gmra.mxu0 %v8180
      %v8249 = vpop.f32.mrf.mxu0
      %v8250 = vadd.f32 0.0, %v8249
      %v8251 = vpop.f32.mrf.mxu0
      %v8252 = vadd.f32 0.0, %v8251
      %8253 = vmatmul.bf16.gmra.mxu0 %v8183
      %v8254 = vpop.f32.mrf.mxu0
      %v8255 = vadd.f32 0.0, %v8254
      %v8256 = vpop.f32.mrf.mxu0
      %v8257 = vadd.f32 0.0, %v8256
      %8258 = vmatmul.bf16.gmra.mxu0 %v8186
      %v8259 = vpop.f32.mrf.mxu0
      %v8260 = vadd.f32 0.0, %v8259
      %v8261 = vpop.f32.mrf.mxu0
      %v8262 = vadd.f32 0.0, %v8261
      %8263 = vmatmul.bf16.gmra.mxu0 %v8189
      %v8264 = vpop.f32.mrf.mxu0
      %v8265 = vadd.f32 0.0, %v8264
      %v8266 = vpop.f32.mrf.mxu0
      %v8267 = vadd.f32 0.0, %v8266
      %8268 = vmatmul.bf16.gmra.mxu0 %v8192
      %v8269 = vpop.f32.mrf.mxu0
      %v8270 = vadd.f32 0.0, %v8269
      %v8271 = vpop.f32.mrf.mxu0
      %v8272 = vadd.f32 0.0, %v8271
      %8273 = vmatmul.bf16.gmra.mxu0 %v8195
      %v8274 = vpop.f32.mrf.mxu0
      %v8275 = vadd.f32 0.0, %v8274
      %v8276 = vpop.f32.mrf.mxu0
      %v8277 = vadd.f32 0.0, %v8276
      %8278 = vmatmul.bf16.gmra.mxu0 %v8198
      %v8279 = vpop.f32.mrf.mxu0
      %v8280 = vadd.f32 0.0, %v8279
      %v8281 = vpop.f32.mrf.mxu0
      %v8282 = vadd.f32 0.0, %v8281
      %8283 = vmatmul.bf16.gmra.mxu0 %v8201
      %v8284 = vpop.f32.mrf.mxu0
      %v8285 = vadd.f32 0.0, %v8284
      %v8286 = vpop.f32.mrf.mxu0
      %v8287 = vadd.f32 0.0, %v8286
      %8288 = vmatmul.bf16.gmra.mxu0 %v8204
      %v8289 = vpop.f32.mrf.mxu0
      %v8290 = vadd.f32 0.0, %v8289
      %v8291 = vpop.f32.mrf.mxu0
      %v8292 = vadd.f32 0.0, %v8291
      %8293 = vmatmul.bf16.gmra.mxu0 %v8207
      %v8294 = vpop.f32.mrf.mxu0
      %v8295 = vadd.f32 0.0, %v8294
      %v8296 = vpop.f32.mrf.mxu0
      %v8297 = vadd.f32 0.0, %v8296
      %8298 = vmatmul.bf16.gmra.mxu0 %v8210
      %v8299 = vpop.f32.mrf.mxu0
      %v8300 = vadd.f32 0.0, %v8299
      %v8301 = vpop.f32.mrf.mxu0
      %v8302 = vadd.f32 0.0, %v8301
      %8303 = vdwg.mxu0
      %v8304 = vsel %vm3050, %v8225, 0.0
      %v8305 = vsel %vm3050, %v8227, 0.0
      %v8306 = vadd.f32 %v8304, %v8305
      %v8307 = vsel %vm3050, %v8230, 0.0
      %v8308 = vadd.f32 %v8306, %v8307
      %v8309 = vsel %vm3050, %v8232, 0.0
      %v8310 = vadd.f32 %v8308, %v8309
      %v8311 = vsel %vm3050, %v8235, 0.0
      %v8312 = vadd.f32 %v8310, %v8311
      %v8313 = vsel %vm3050, %v8237, 0.0
      %v8314 = vadd.f32 %v8312, %v8313
      %v8315 = vsel %vm3050, %v8240, 0.0
      %v8316 = vadd.f32 %v8314, %v8315
      %v8317 = vsel %vm3050, %v8242, 0.0
      %v8318 = vadd.f32 %v8316, %v8317
      %v8319 = vsel %vm3050, %v8245, 0.0
      %v8320 = vadd.f32 %v8318, %v8319
      %v8321 = vsel %vm3050, %v8247, 0.0
      %v8322 = vadd.f32 %v8320, %v8321
      %v8323 = vsel %vm3050, %v8250, 0.0
      %v8324 = vadd.f32 %v8322, %v8323
      %v8325 = vsel %vm3050, %v8252, 0.0
      %v8326 = vadd.f32 %v8324, %v8325
      %v8327 = vsel %vm3050, %v8255, 0.0
      %v8328 = vadd.f32 %v8326, %v8327
      %v8329 = vsel %vm3050, %v8257, 0.0
      %v8330 = vadd.f32 %v8328, %v8329
      %v8331 = vsel %vm3050, %v8260, 0.0
      %v8332 = vadd.f32 %v8330, %v8331
      %v8333 = vsel %vm3050, %v8262, 0.0
      %v8334 = vadd.f32 %v8332, %v8333
      %v8335 = vsel %vm3050, %v8265, 0.0
      %v8336 = vadd.f32 %v8334, %v8335
      %v8337 = vsel %vm3050, %v8267, 0.0
      %v8338 = vadd.f32 %v8336, %v8337
      %v8339 = vsel %vm3050, %v8270, 0.0
      %v8340 = vadd.f32 %v8338, %v8339
      %v8341 = vsel %vm3050, %v8272, 0.0
      %v8342 = vadd.f32 %v8340, %v8341
      %v8343 = vsel %vm3050, %v8275, 0.0
      %v8344 = vadd.f32 %v8342, %v8343
      %v8345 = vsel %vm3050, %v8277, 0.0
      %v8346 = vadd.f32 %v8344, %v8345
      %v8347 = vsel %vm3050, %v8280, 0.0
      %v8348 = vadd.f32 %v8346, %v8347
      %v8349 = vsel %vm3050, %v8282, 0.0
      %v8350 = vadd.f32 %v8348, %v8349
      %v8351 = vsel %vm3050, %v8285, 0.0
      %v8352 = vadd.f32 %v8350, %v8351
      %v8353 = vsel %vm3050, %v8287, 0.0
      %v8354 = vadd.f32 %v8352, %v8353
      %v8355 = vsel %vm3050, %v8290, 0.0
      %v8356 = vadd.f32 %v8354, %v8355
      %v8357 = vsel %vm3050, %v8292, 0.0
      %v8358 = vadd.f32 %v8356, %v8357
      %v8359 = vsel %vm3050, %v8295, 0.0
      %v8360 = vadd.f32 %v8358, %v8359
      %v8361 = vsel %vm3050, %v8297, 0.0
      %v8362 = vadd.f32 %v8360, %v8361
      %v8363 = vsel %vm3050, %v8300, 0.0
      %v8364 = vadd.f32 %v8362, %v8363
      %v8365 = vsel %vm3050, %v8302, 0.0
      %v8366 = vadd.f32 %v8364, %v8365
      %v8367 = vrot.slane %v8366, 4
      %v8368 = vadd.f32 %v8366, %v8367
      %v8369 = vrot.slane %v8368, 2
      %v8370 = vadd.f32 %v8368, %v8369
      %v8371 = vrot.slane %v8370, 1
      %v8372 = vadd.f32 %v8370, %v8371
      %v8373 = vmul.f32 %v8225, %v8225
      %v8374 = vmul.f32 %v8227, %v8227
      %v8375 = vmul.f32 %v8230, %v8230
      %v8376 = vmul.f32 %v8232, %v8232
      %v8377 = vmul.f32 %v8235, %v8235
      %v8378 = vmul.f32 %v8237, %v8237
      %v8379 = vmul.f32 %v8240, %v8240
      %v8380 = vmul.f32 %v8242, %v8242
      %v8381 = vmul.f32 %v8245, %v8245
      %v8382 = vmul.f32 %v8247, %v8247
      %v8383 = vmul.f32 %v8250, %v8250
      %v8384 = vmul.f32 %v8252, %v8252
      %v8385 = vmul.f32 %v8255, %v8255
      %v8386 = vmul.f32 %v8257, %v8257
      %v8387 = vmul.f32 %v8260, %v8260
      %v8388 = vmul.f32 %v8262, %v8262
      %v8389 = vmul.f32 %v8265, %v8265
      %v8390 = vmul.f32 %v8267, %v8267
      %v8391 = vmul.f32 %v8270, %v8270
      %v8392 = vmul.f32 %v8272, %v8272
      %v8393 = vmul.f32 %v8275, %v8275
      %v8394 = vmul.f32 %v8277, %v8277
      %v8395 = vmul.f32 %v8280, %v8280
      %v8396 = vmul.f32 %v8282, %v8282
      %v8397 = vmul.f32 %v8285, %v8285
      %v8398 = vmul.f32 %v8287, %v8287
      %v8399 = vmul.f32 %v8290, %v8290
      %v8400 = vmul.f32 %v8292, %v8292
      %v8401 = vmul.f32 %v8295, %v8295
      %v8402 = vmul.f32 %v8297, %v8297
      %v8403 = vmul.f32 %v8300, %v8300
      %v8404 = vmul.f32 %v8302, %v8302
      %v8405 = vsel %vm3050, %v8373, 0.0
      %v8406 = vsel %vm3050, %v8374, 0.0
      %v8407 = vadd.f32 %v8405, %v8406
      %v8408 = vsel %vm3050, %v8375, 0.0
      %v8409 = vadd.f32 %v8407, %v8408
      %v8410 = vsel %vm3050, %v8376, 0.0
      %v8411 = vadd.f32 %v8409, %v8410
      %v8412 = vsel %vm3050, %v8377, 0.0
      %v8413 = vadd.f32 %v8411, %v8412
      %v8414 = vsel %vm3050, %v8378, 0.0
      %v8415 = vadd.f32 %v8413, %v8414
      %v8416 = vsel %vm3050, %v8379, 0.0
      %v8417 = vadd.f32 %v8415, %v8416
      %v8418 = vsel %vm3050, %v8380, 0.0
      %v8419 = vadd.f32 %v8417, %v8418
      %v8420 = vsel %vm3050, %v8381, 0.0
      %v8421 = vadd.f32 %v8419, %v8420
      %v8422 = vsel %vm3050, %v8382, 0.0
      %v8423 = vadd.f32 %v8421, %v8422
      %v8424 = vsel %vm3050, %v8383, 0.0
      %v8425 = vadd.f32 %v8423, %v8424
      %v8426 = vsel %vm3050, %v8384, 0.0
      %v8427 = vadd.f32 %v8425, %v8426
      %v8428 = vsel %vm3050, %v8385, 0.0
      %v8429 = vadd.f32 %v8427, %v8428
      %v8430 = vsel %vm3050, %v8386, 0.0
      %v8431 = vadd.f32 %v8429, %v8430
      %v8432 = vsel %vm3050, %v8387, 0.0
      %v8433 = vadd.f32 %v8431, %v8432
      %v8434 = vsel %vm3050, %v8388, 0.0
      %v8435 = vadd.f32 %v8433, %v8434
      %v8436 = vsel %vm3050, %v8389, 0.0
      %v8437 = vadd.f32 %v8435, %v8436
      %v8438 = vsel %vm3050, %v8390, 0.0
      %v8439 = vadd.f32 %v8437, %v8438
      %v8440 = vsel %vm3050, %v8391, 0.0
      %v8441 = vadd.f32 %v8439, %v8440
      %v8442 = vsel %vm3050, %v8392, 0.0
      %v8443 = vadd.f32 %v8441, %v8442
      %v8444 = vsel %vm3050, %v8393, 0.0
      %v8445 = vadd.f32 %v8443, %v8444
      %v8446 = vsel %vm3050, %v8394, 0.0
      %v8447 = vadd.f32 %v8445, %v8446
      %v8448 = vsel %vm3050, %v8395, 0.0
      %v8449 = vadd.f32 %v8447, %v8448
      %v8450 = vsel %vm3050, %v8396, 0.0
      %v8451 = vadd.f32 %v8449, %v8450
      %v8452 = vsel %vm3050, %v8397, 0.0
      %v8453 = vadd.f32 %v8451, %v8452
      %v8454 = vsel %vm3050, %v8398, 0.0
      %v8455 = vadd.f32 %v8453, %v8454
      %v8456 = vsel %vm3050, %v8399, 0.0
      %v8457 = vadd.f32 %v8455, %v8456
      %v8458 = vsel %vm3050, %v8400, 0.0
      %v8459 = vadd.f32 %v8457, %v8458
      %v8460 = vsel %vm3050, %v8401, 0.0
      %v8461 = vadd.f32 %v8459, %v8460
      %v8462 = vsel %vm3050, %v8402, 0.0
      %v8463 = vadd.f32 %v8461, %v8462
      %v8464 = vsel %vm3050, %v8403, 0.0
      %v8465 = vadd.f32 %v8463, %v8464
      %v8466 = vsel %vm3050, %v8404, 0.0
      %v8467 = vadd.f32 %v8465, %v8466
      %v8468 = vrot.slane %v8467, 4
      %v8469 = vadd.f32 %v8467, %v8468
      %v8470 = vrot.slane %v8469, 2
      %v8471 = vadd.f32 %v8469, %v8470
      %v8472 = vrot.slane %v8471, 1
      %v8473 = vadd.f32 %v8471, %v8472
      %8506 = vrot.lane.b32.xlu0 %v5825, 6
      %v8507 = vpop.permute.xlu0 %8506
      %8508 = vrot.lane.b32.xlu0 %v5827, 6
      %v8509 = vpop.permute.xlu0 %8508
      %8510 = vrot.lane.b32.xlu0 %v5830, 6
      %v8511 = vpop.permute.xlu0 %8510
      %8512 = vrot.lane.b32.xlu0 %v5832, 6
      %v8513 = vpop.permute.xlu0 %8512
      %8514 = vrot.lane.b32.xlu0 %v5835, 6
      %v8515 = vpop.permute.xlu0 %8514
      %8516 = vrot.lane.b32.xlu0 %v5837, 6
      %v8517 = vpop.permute.xlu0 %8516
      %8518 = vrot.lane.b32.xlu0 %v5840, 6
      %v8519 = vpop.permute.xlu0 %8518
      %8520 = vrot.lane.b32.xlu0 %v5842, 6
      %v8521 = vpop.permute.xlu0 %8520
      %8522 = vrot.lane.b32.xlu0 %v5845, 6
      %v8523 = vpop.permute.xlu0 %8522
      %8524 = vrot.lane.b32.xlu0 %v5847, 6
      %v8525 = vpop.permute.xlu0 %8524
      %8526 = vrot.lane.b32.xlu0 %v5850, 6
      %v8527 = vpop.permute.xlu0 %8526
      %8528 = vrot.lane.b32.xlu0 %v5852, 6
      %v8529 = vpop.permute.xlu0 %8528
      %8530 = vrot.lane.b32.xlu0 %v5855, 6
      %v8531 = vpop.permute.xlu0 %8530
      %8532 = vrot.lane.b32.xlu0 %v5857, 6
      %v8533 = vpop.permute.xlu0 %8532
      %8534 = vrot.lane.b32.xlu0 %v5860, 6
      %v8535 = vpop.permute.xlu0 %8534
      %8536 = vrot.lane.b32.xlu0 %v5862, 6
      %v8537 = vpop.permute.xlu0 %8536
      %8538 = vrot.lane.b32.xlu0 %v5865, 6
      %v8539 = vpop.permute.xlu0 %8538
      %8540 = vrot.lane.b32.xlu0 %v5867, 6
      %v8541 = vpop.permute.xlu0 %8540
      %8542 = vrot.lane.b32.xlu0 %v5870, 6
      %v8543 = vpop.permute.xlu0 %8542
      %8544 = vrot.lane.b32.xlu0 %v5872, 6
      %v8545 = vpop.permute.xlu0 %8544
      %8546 = vrot.lane.b32.xlu0 %v5875, 6
      %v8547 = vpop.permute.xlu0 %8546
      %8548 = vrot.lane.b32.xlu0 %v5877, 6
      %v8549 = vpop.permute.xlu0 %8548
      %8550 = vrot.lane.b32.xlu0 %v5880, 6
      %v8551 = vpop.permute.xlu0 %8550
      %8552 = vrot.lane.b32.xlu0 %v5882, 6
      %v8553 = vpop.permute.xlu0 %8552
      %8554 = vrot.lane.b32.xlu0 %v5885, 6
      %v8555 = vpop.permute.xlu0 %8554
      %8556 = vrot.lane.b32.xlu0 %v5887, 6
      %v8557 = vpop.permute.xlu0 %8556
      %8558 = vrot.lane.b32.xlu0 %v5890, 6
      %v8559 = vpop.permute.xlu0 %8558
      %8560 = vrot.lane.b32.xlu0 %v5892, 6
      %v8561 = vpop.permute.xlu0 %8560
      %8562 = vrot.lane.b32.xlu0 %v5895, 6
      %v8563 = vpop.permute.xlu0 %8562
      %8564 = vrot.lane.b32.xlu0 %v5897, 6
      %v8565 = vpop.permute.xlu0 %8564
      %8566 = vrot.lane.b32.xlu0 %v5900, 6
      %v8567 = vpop.permute.xlu0 %8566
      %8568 = vrot.lane.b32.xlu0 %v5902, 6
      %v8569 = vpop.permute.xlu0 %8568
      %8634 = vrot.lane.b32.xlu0 %v8225, 12
      %v8635 = vpop.permute.xlu0 %8634
      %8636 = vrot.lane.b32.xlu0 %v8227, 12
      %v8637 = vpop.permute.xlu0 %8636
      %8638 = vrot.lane.b32.xlu0 %v8230, 12
      %v8639 = vpop.permute.xlu0 %8638
      %8640 = vrot.lane.b32.xlu0 %v8232, 12
      %v8641 = vpop.permute.xlu0 %8640
      %8642 = vrot.lane.b32.xlu0 %v8235, 12
      %v8643 = vpop.permute.xlu0 %8642
      %8644 = vrot.lane.b32.xlu0 %v8237, 12
      %v8645 = vpop.permute.xlu0 %8644
      %8646 = vrot.lane.b32.xlu0 %v8240, 12
      %v8647 = vpop.permute.xlu0 %8646
      %8648 = vrot.lane.b32.xlu0 %v8242, 12
      %v8649 = vpop.permute.xlu0 %8648
      %8650 = vrot.lane.b32.xlu0 %v8245, 12
      %v8651 = vpop.permute.xlu0 %8650
      %8652 = vrot.lane.b32.xlu0 %v8247, 12
      %v8653 = vpop.permute.xlu0 %8652
      %8654 = vrot.lane.b32.xlu0 %v8250, 12
      %v8655 = vpop.permute.xlu0 %8654
      %8656 = vrot.lane.b32.xlu0 %v8252, 12
      %v8657 = vpop.permute.xlu0 %8656
      %8658 = vrot.lane.b32.xlu0 %v8255, 12
      %v8659 = vpop.permute.xlu0 %8658
      %8660 = vrot.lane.b32.xlu0 %v8257, 12
      %v8661 = vpop.permute.xlu0 %8660
      %8662 = vrot.lane.b32.xlu0 %v8260, 12
      %v8663 = vpop.permute.xlu0 %8662
      %8664 = vrot.lane.b32.xlu0 %v8262, 12
      %v8665 = vpop.permute.xlu0 %8664
      %8666 = vrot.lane.b32.xlu0 %v8265, 12
      %v8667 = vpop.permute.xlu0 %8666
      %8668 = vrot.lane.b32.xlu0 %v8267, 12
      %v8669 = vpop.permute.xlu0 %8668
      %8670 = vrot.lane.b32.xlu0 %v8270, 12
      %v8671 = vpop.permute.xlu0 %8670
      %8672 = vrot.lane.b32.xlu0 %v8272, 12
      %v8673 = vpop.permute.xlu0 %8672
      %8674 = vrot.lane.b32.xlu0 %v8275, 12
      %v8675 = vpop.permute.xlu0 %8674
      %8676 = vrot.lane.b32.xlu0 %v8277, 12
      %v8677 = vpop.permute.xlu0 %8676
      %8678 = vrot.lane.b32.xlu0 %v8280, 12
      %v8679 = vpop.permute.xlu0 %8678
      %8680 = vrot.lane.b32.xlu0 %v8282, 12
      %v8681 = vpop.permute.xlu0 %8680
      %8682 = vrot.lane.b32.xlu0 %v8285, 12
      %v8683 = vpop.permute.xlu0 %8682
      %8684 = vrot.lane.b32.xlu0 %v8287, 12
      %v8685 = vpop.permute.xlu0 %8684
      %8686 = vrot.lane.b32.xlu0 %v8290, 12
      %v8687 = vpop.permute.xlu0 %8686
      %8688 = vrot.lane.b32.xlu0 %v8292, 12
      %v8689 = vpop.permute.xlu0 %8688
      %8690 = vrot.lane.b32.xlu0 %v8295, 12
      %v8691 = vpop.permute.xlu0 %8690
      %8692 = vrot.lane.b32.xlu0 %v8297, 12
      %v8693 = vpop.permute.xlu0 %8692
      %8694 = vrot.lane.b32.xlu0 %v8300, 12
      %v8695 = vpop.permute.xlu0 %8694
      %8696 = vrot.lane.b32.xlu0 %v8302, 12
      %v8697 = vpop.permute.xlu0 %8696
      %v8730 = vsel %vm3050, %v3421, %v8507
      %v8731 = vsel %vm3050, %v3423, %v8509
      %v8732 = vsel %vm3050, %v3426, %v8511
      %v8733 = vsel %vm3050, %v3428, %v8513
      %v8734 = vsel %vm3050, %v3431, %v8515
      %v8735 = vsel %vm3050, %v3433, %v8517
      %v8736 = vsel %vm3050, %v3436, %v8519
      %v8737 = vsel %vm3050, %v3438, %v8521
      %v8738 = vsel %vm3050, %v3441, %v8523
      %v8739 = vsel %vm3050, %v3443, %v8525
      %v8740 = vsel %vm3050, %v3446, %v8527
      %v8741 = vsel %vm3050, %v3448, %v8529
      %v8742 = vsel %vm3050, %v3451, %v8531
      %v8743 = vsel %vm3050, %v3453, %v8533
      %v8744 = vsel %vm3050, %v3456, %v8535
      %v8745 = vsel %vm3050, %v3458, %v8537
      %v8746 = vsel %vm3050, %v3461, %v8539
      %v8747 = vsel %vm3050, %v3463, %v8541
      %v8748 = vsel %vm3050, %v3466, %v8543
      %v8749 = vsel %vm3050, %v3468, %v8545
      %v8750 = vsel %vm3050, %v3471, %v8547
      %v8751 = vsel %vm3050, %v3473, %v8549
      %v8752 = vsel %vm3050, %v3476, %v8551
      %v8753 = vsel %vm3050, %v3478, %v8553
      %v8754 = vsel %vm3050, %v3481, %v8555
      %v8755 = vsel %vm3050, %v3483, %v8557
      %v8756 = vsel %vm3050, %v3486, %v8559
      %v8757 = vsel %vm3050, %v3488, %v8561
      %v8758 = vsel %vm3050, %v3491, %v8563
      %v8759 = vsel %vm3050, %v3493, %v8565
      %v8760 = vsel %vm3050, %v3496, %v8567
      %v8761 = vsel %vm3050, %v3498, %v8569
      %v8762 = vsel %vm3083, %v8730, %v8635
      %v8763 = vsel %vm3083, %v8731, %v8637
      %v8764 = vsel %vm3083, %v8732, %v8639
      %v8765 = vsel %vm3083, %v8733, %v8641
      %v8766 = vsel %vm3083, %v8734, %v8643
      %v8767 = vsel %vm3083, %v8735, %v8645
      %v8768 = vsel %vm3083, %v8736, %v8647
      %v8769 = vsel %vm3083, %v8737, %v8649
      %v8770 = vsel %vm3083, %v8738, %v8651
      %v8771 = vsel %vm3083, %v8739, %v8653
      %v8772 = vsel %vm3083, %v8740, %v8655
      %v8773 = vsel %vm3083, %v8741, %v8657
      %v8774 = vsel %vm3083, %v8742, %v8659
      %v8775 = vsel %vm3083, %v8743, %v8661
      %v8776 = vsel %vm3083, %v8744, %v8663
      %v8777 = vsel %vm3083, %v8745, %v8665
      %v8778 = vsel %vm3083, %v8746, %v8667
      %v8779 = vsel %vm3083, %v8747, %v8669
      %v8780 = vsel %vm3083, %v8748, %v8671
      %v8781 = vsel %vm3083, %v8749, %v8673
      %v8782 = vsel %vm3083, %v8750, %v8675
      %v8783 = vsel %vm3083, %v8751, %v8677
      %v8784 = vsel %vm3083, %v8752, %v8679
      %v8785 = vsel %vm3083, %v8753, %v8681
      %v8786 = vsel %vm3083, %v8754, %v8683
      %v8787 = vsel %vm3083, %v8755, %v8685
      %v8788 = vsel %vm3083, %v8756, %v8687
      %v8789 = vsel %vm3083, %v8757, %v8689
      %v8790 = vsel %vm3083, %v8758, %v8691
      %v8791 = vsel %vm3083, %v8759, %v8693
      %v8792 = vsel %vm3083, %v8760, %v8695
      %v8793 = vsel %vm3083, %v8761, %v8697
      %v8794 = vsel %vm3116, %v8762, %v454
      %v8795 = vsel %vm3116, %v8763, %v455
      %v8796 = vsel %vm3116, %v8764, %v456
      %v8797 = vsel %vm3116, %v8765, %v457
      %v8798 = vsel %vm3116, %v8766, %v458
      %v8799 = vsel %vm3116, %v8767, %v459
      %v8800 = vsel %vm3116, %v8768, %v460
      %v8801 = vsel %vm3116, %v8769, %v461
      %v8802 = vsel %vm3116, %v8770, %v462
      %v8803 = vsel %vm3116, %v8771, %v463
      %v8804 = vsel %vm3116, %v8772, %v464
      %v8805 = vsel %vm3116, %v8773, %v465
      %v8806 = vsel %vm3116, %v8774, %v466
      %v8807 = vsel %vm3116, %v8775, %v467
      %v8808 = vsel %vm3116, %v8776, %v468
      %v8809 = vsel %vm3116, %v8777, %v469
      %v8810 = vsel %vm3116, %v8778, %v470
      %v8811 = vsel %vm3116, %v8779, %v471
      %v8812 = vsel %vm3116, %v8780, %v472
      %v8813 = vsel %vm3116, %v8781, %v473
      %v8814 = vsel %vm3116, %v8782, %v474
      %v8815 = vsel %vm3116, %v8783, %v475
      %v8816 = vsel %vm3116, %v8784, %v476
      %v8817 = vsel %vm3116, %v8785, %v477
      %v8818 = vsel %vm3116, %v8786, %v478
      %v8819 = vsel %vm3116, %v8787, %v479
      %v8820 = vsel %vm3116, %v8788, %v480
      %v8821 = vsel %vm3116, %v8789, %v481
      %v8822 = vsel %vm3116, %v8790, %v482
      %v8823 = vsel %vm3116, %v8791, %v483
      %v8824 = vsel %vm3116, %v8792, %v484
      %v8825 = vsel %vm3116, %v8793, %v485
      %v8826 = vpack.c.bf16 %v8794, %v8794
      %v8827 = vpack.c.bf16 %v8795, %v8795
      %v8828 = vpack.c.bf16 %v8796, %v8796
      %v8829 = vpack.c.bf16 %v8797, %v8797
      %v8830 = vpack.c.bf16 %v8798, %v8798
      %v8831 = vpack.c.bf16 %v8799, %v8799
      %v8832 = vpack.c.bf16 %v8800, %v8800
      %v8833 = vpack.c.bf16 %v8801, %v8801
      %v8834 = vpack.c.bf16 %v8802, %v8802
      %v8835 = vpack.c.bf16 %v8803, %v8803
      %v8836 = vpack.c.bf16 %v8804, %v8804
      %v8837 = vpack.c.bf16 %v8805, %v8805
      %v8838 = vpack.c.bf16 %v8806, %v8806
      %v8839 = vpack.c.bf16 %v8807, %v8807
      %v8840 = vpack.c.bf16 %v8808, %v8808
      %v8841 = vpack.c.bf16 %v8809, %v8809
      %v8842 = vpack.c.bf16 %v8810, %v8810
      %v8843 = vpack.c.bf16 %v8811, %v8811
      %v8844 = vpack.c.bf16 %v8812, %v8812
      %v8845 = vpack.c.bf16 %v8813, %v8813
      %v8846 = vpack.c.bf16 %v8814, %v8814
      %v8847 = vpack.c.bf16 %v8815, %v8815
      %v8848 = vpack.c.bf16 %v8816, %v8816
      %v8849 = vpack.c.bf16 %v8817, %v8817
      %v8850 = vpack.c.bf16 %v8818, %v8818
      %v8851 = vpack.c.bf16 %v8819, %v8819
      %v8852 = vpack.c.bf16 %v8820, %v8820
      %v8853 = vpack.c.bf16 %v8821, %v8821
      %v8854 = vpack.c.bf16 %v8822, %v8822
      %v8855 = vpack.c.bf16 %v8823, %v8823
      %v8856 = vpack.c.bf16 %v8824, %v8824
      %v8857 = vpack.c.bf16 %v8825, %v8825
      %vm8858 = vcmask 191488
      %8859 = vst.msk [vmem:[%s312] sm:$0xf] %vm8858, %v8826
      %8860 = vst.msk [vmem:[%s312 + $0x4] sm:$0xf] %vm8858, %v8827
      %8861 = vst.msk [vmem:[%s312 + $0x8] sm:$0xf] %vm8858, %v8828
      %8862 = vst.msk [vmem:[%s312 + $0xc] sm:$0xf] %vm8858, %v8829
      %8863 = vst.msk [vmem:[%s312 + $0x10] sm:$0xf] %vm8858, %v8830
      %8864 = vst.msk [vmem:[%s312 + $0x14] sm:$0xf] %vm8858, %v8831
      %8865 = vst.msk [vmem:[%s312 + $0x18] sm:$0xf] %vm8858, %v8832
      %8866 = vst.msk [vmem:[%s312 + $0x1c] sm:$0xf] %vm8858, %v8833
      %8867 = vst.msk [vmem:[%s312 + $0x20] sm:$0xf] %vm8858, %v8834
      %8868 = vst.msk [vmem:[%s312 + $0x24] sm:$0xf] %vm8858, %v8835
      %8869 = vst.msk [vmem:[%s312 + $0x28] sm:$0xf] %vm8858, %v8836
      %8870 = vst.msk [vmem:[%s312 + $0x2c] sm:$0xf] %vm8858, %v8837
      %8871 = vst.msk [vmem:[%s312 + $0x30] sm:$0xf] %vm8858, %v8838
      %8872 = vst.msk [vmem:[%s312 + $0x34] sm:$0xf] %vm8858, %v8839
      %8873 = vst.msk [vmem:[%s312 + $0x38] sm:$0xf] %vm8858, %v8840
      %8874 = vst.msk [vmem:[%s312 + $0x3c] sm:$0xf] %vm8858, %v8841
      %8875 = vst.msk [vmem:[%s312 + $0x40] sm:$0xf] %vm8858, %v8842
      %8876 = vst.msk [vmem:[%s312 + $0x44] sm:$0xf] %vm8858, %v8843
      %8877 = vst.msk [vmem:[%s312 + $0x48] sm:$0xf] %vm8858, %v8844
      %8878 = vst.msk [vmem:[%s312 + $0x4c] sm:$0xf] %vm8858, %v8845
      %8879 = vst.msk [vmem:[%s312 + $0x50] sm:$0xf] %vm8858, %v8846
      %8880 = vst.msk [vmem:[%s312 + $0x54] sm:$0xf] %vm8858, %v8847
      %8881 = vst.msk [vmem:[%s312 + $0x58] sm:$0xf] %vm8858, %v8848
      %8882 = vst.msk [vmem:[%s312 + $0x5c] sm:$0xf] %vm8858, %v8849
      %8883 = vst.msk [vmem:[%s312 + $0x60] sm:$0xf] %vm8858, %v8850
      %8884 = vst.msk [vmem:[%s312 + $0x64] sm:$0xf] %vm8858, %v8851
      %8885 = vst.msk [vmem:[%s312 + $0x68] sm:$0xf] %vm8858, %v8852
      %8886 = vst.msk [vmem:[%s312 + $0x6c] sm:$0xf] %vm8858, %v8853
      %8887 = vst.msk [vmem:[%s312 + $0x70] sm:$0xf] %vm8858, %v8854
      %8888 = vst.msk [vmem:[%s312 + $0x74] sm:$0xf] %vm8858, %v8855
      %8889 = vst.msk [vmem:[%s312 + $0x78] sm:$0xf] %vm8858, %v8856
      %8890 = vst.msk [vmem:[%s312 + $0x7c] sm:$0xf] %vm8858, %v8857
      %8892 = vrot.lane.b32.xlu0 %v5972, 6
      %v8893 = vpop.permute.xlu0 %8892
      %8896 = vrot.lane.b32.xlu0 %v8372, 12
      %v8897 = vpop.permute.xlu0 %8896
      %v8899 = vsel %vm3050, %v3568, %v8893
      %v8900 = vsel %vm3083, %v8899, %v8897
      %8902 = vrot.lane.b32.xlu0 %v6073, 6
      %v8903 = vpop.permute.xlu0 %8902
      %8906 = vrot.lane.b32.xlu0 %v8473, 12
      %v8907 = vpop.permute.xlu0 %8906
      %v8909 = vsel %vm3050, %v3669, %v8903
      %v8910 = vsel %vm3083, %v8909, %v8907
      %v8912 = vrot.slane %v8910, 7
      %v8914 = vsel %vm521, %v8900, %v8912
      %vm8915 = vcmask 140288
      %8916 = vst.msk [vmem:[%s316] sm:$0x3] %vm8915, %v8914
      %p8917 = scmp.lt.s32.totalorder %s20, 1
      %s8918 = scalar_select %p8917, %s20, 1
      %s8919 = smul.addr %s8918, 32
      %s8920 = smul.addr %s8919, 4
      %s8921 = scalar_lea.vmem %s7, %s8920
      %p8922 = scmp.lt.s32.totalorder %s20, 1
      %s8923 = scalar_select %p8922, %s20, 1
      %s8924 = smul.addr %s8923, 2
      %s8925 = scalar_lea.vmem %s8, %s8924
      // Predicated region
      $region49: #{_lambda_.5} parent=47 // pred_check
        %p8926 = pneg %p190
      $region50: #{_lambda_.5} parent=47 // pred_check_branch
        %8928 = sbr.rel (%p8926) target = $region52
      $region51: #{_lambda_.5} parent=47 // pred_region
        _
      $region52: #{_lambda_.5} parent=47 // pred_fallthru
        _
      // Predicated region
      $region53: #{_lambda_.5} parent=47 // pred_check
        %p8929 = pneg %p216
      $region54: #{_lambda_.5} parent=47 // pred_check_branch
        %8931 = sbr.rel (%p8929) target = $region56
      $region55: #{_lambda_.5} parent=47 // pred_region
        _
      $region56: #{_lambda_.5} parent=47 // pred_fallthru
        _
    $region48: #{_lambda_.5} parent=5 // pred_fallthru
      _
    %p8932 = scmp.le.s32.totalorder 2, %s15
    // Predicated region
    $region57: #{_lambda_.5} parent=5 // pred_check
      %p8933 = pneg %p8932
    $region58: #{_lambda_.5} parent=5 // pred_check_branch
      %8935 = sbr.rel (%p8933) target = $region60
    $region59: #{_lambda_.5} parent=5 // pred_region
      %s8936 = ssub.s32 %s15, 2
      // Predicated region
      $region61: #{_lambda_.5} parent=59 // pred_check
        %p8937 = pneg %p196
      $region62: #{_lambda_.5} parent=59 // pred_check_branch
        %8939 = sbr.rel (%p8937) target = $region64
      $region63: #{_lambda_.5} parent=59 // pred_region
        %p8940 = scmp.lt.s32.totalorder %s21, 1
        %s8941 = scalar_select %p8940, %s21, 1
        %s8942 = smul.addr %s8941, 32
        %s8943 = smul.addr %s8942, 4
        %s8944 = scalar_lea.vmem %s7, %s8943
      $region64: #{_lambda_.5} parent=59 // pred_fallthru
        _
      // Predicated region
      $region65: #{_lambda_.5} parent=59 // pred_check
        %p8945 = pneg %p222
      $region66: #{_lambda_.5} parent=59 // pred_check_branch
        %8947 = sbr.rel (%p8945) target = $region68
      $region67: #{_lambda_.5} parent=59 // pred_region
        %p8948 = scmp.lt.s32.totalorder %s21, 1
        %s8949 = scalar_select %p8948, %s21, 1
        %s8950 = smul.addr %s8949, 2
        %s8951 = scalar_lea.vmem %s8, %s8950
      $region68: #{_lambda_.5} parent=59 // pred_fallthru
        _
    $region60: #{_lambda_.5} parent=5 // pred_fallthru
      _
  $region6: #{_lambda_.5} parent=0 // loop_footer
    %s19 = sadd.s32 1, %s15
  $region7: #{_lambda_.5} parent=0 // loop_footer_branch
    %14 = sbr.rel target = $region3
  $region8: #{_lambda_.5} parent=0 // loop_exit
    _

</llo_original>
